<compile_context>
chip_gen: v5e
topology: v5e:2x2
jax: 0.10.0
libtpu: 0.0.40
codegen_flags: <defaults>
</compile_context>

<pallas_src>
import jax
import jax.numpy as jnp
from jax import lax
from jax.experimental import pallas as pl
from jax.experimental.pallas import tpu as pltpu

# ------------------------------ static geometry ----------------------------

_IN_HW = 28                      # input spatial size (forced by fc1 = 32*5*5)
_C1, _C2 = 16, 32                # conv output channels
_CONV1_HW = _IN_HW - 2           # 26
_POOL1_HW = _CONV1_HW // 2       # 13
_CONV2_HW = _POOL1_HW - 2        # 11
_POOL2_HW = _CONV2_HW // 2       # 5
_K1 = 3 * _IN_HW                 # 84  : stage-1 merged contraction (3 rows)
_H1_LANES = 256                  # stage-1 pooled lanes (13*16 = 208 real + pad)
_N1 = 2 * _H1_LANES              # 512 : stage-1 matmul N = [even-w | odd-w]
_H2_LANES = 256                  # stage-2 pooled lanes (5*32 = 160 real + pad)
_N2 = 2 * _H2_LANES              # 512
_HID = 128
_OUT = 10

_DOT = jnp.bfloat16              # MXU operand dtype (f32 accumulation)


# ------------------------------ fused kernel -------------------------------

def _cnn_fused_kernel(x_ref, bw1_ref, b1_ref, bw2_ref, b2_ref,
                      w1_ref, fb1_ref, w2_ref, fb2_ref, o_ref, h1_ref):
    """Whole network for one batch tile of TB samples.

    x_ref  : [TB, 784]        flattened 28x28 input                      (f32)
    bw1_ref: [84, 512]        conv1 band weights, cols = [even-w | odd-w](bf16)
    b1_ref : [1, 256]         conv1 bias packed to pooled lanes          (f32)
    bw2_ref: [3, 256, 512]    conv2 band weights, one per vertical tap   (bf16)
    b2_ref : [1, 256]         conv2 bias packed to pooled lanes          (f32)
    w1_ref : [5, 256, 128]    fc1 split by pooled row (NCHW flatten folded in)
    fb1_ref: [1, 128]         fc1 bias
    w2_ref : [128, 10]        fc2 weights (transposed)
    fb2_ref: [1, 10]          fc2 bias
    o_ref  : [TB, 10]         logits
    h1_ref : VMEM scratch [13*TB, 256] f32 — stage-1 pooled activations.
    """
    tb = x_ref.shape[0]

    # ---- stage 1: conv1 (3x3 valid) + 2x2 max-pool + bias + ReLU ----------
    for r in range(_POOL1_HW):                       # 13 pooled rows (static)
        def conv1_row(i):                            # conv1 row i -> [TB, 512]
            # three consecutive image rows are contiguous lanes -> K = 84
            lhs = x_ref[:, pl.ds(_IN_HW * i, _K1)].astype(_DOT)
            return jnp.dot(lhs, bw1_ref[...], preferred_element_type=jnp.float32)

        vmax = jnp.maximum(conv1_row(2 * r), conv1_row(2 * r + 1))   # vertical pool
        pooled = jnp.maximum(vmax[:, :_H1_LANES], vmax[:, _H1_LANES:])  # horiz pool
        h1_ref[pl.ds(r * tb, tb), :] = jnp.maximum(pooled + b1_ref[...], 0.0)

    # ---- stage 2: conv2 + pool + bias + ReLU, fused into fc1 accumulation --
    fc1_acc = jnp.zeros((tb, _HID), jnp.float32)
    for hp in range(_POOL2_HW):                      # 5 pooled rows (static)
        def conv2_row(i2):                           # conv2 row i2 -> [TB, 512]
            acc = None
            for dv in range(3):                      # vertical kernel taps
                lhs = h1_ref[pl.ds((i2 + dv) * tb, tb), :].astype(_DOT)
                part = jnp.dot(lhs, bw2_ref[dv],
                               preferred_element_type=jnp.float32)
                acc = part if acc is None else acc + part
            return acc

        vmax = jnp.maximum(conv2_row(2 * hp), conv2_row(2 * hp + 1))
        pooled = jnp.maximum(vmax[:, :_H2_LANES], vmax[:, _H2_LANES:])
        h2_row = jnp.maximum(pooled + b2_ref[...], 0.0)              # [TB, 256]
        fc1_acc = fc1_acc + jnp.dot(h2_row.astype(_DOT), w1_ref[hp],
                                    preferred_element_type=jnp.float32)

    # ---- fc1 bias/ReLU + fc2 ------------------------------------------------
    h = jnp.maximum(fc1_acc + fb1_ref[...], 0.0)
    o_ref[...] = jnp.dot(h.astype(_DOT), w2_ref[...],
                         preferred_element_type=jnp.float32) + fb2_ref[...]


# ------------------------------ kernel wrapper -----------------------------

def _round_up(x, m):
    return (x + m - 1) // m * m


def _fused_forward(x_flat, prep, tb):
    bp = x_flat.shape[0]
    return pl.pallas_call(
        _cnn_fused_kernel,
        out_shape=jax.ShapeDtypeStruct((bp, _OUT), jnp.float32),
        grid=(bp // tb,),
        in_specs=[
            pl.BlockSpec((tb, _IN_HW * _IN_HW), lambda i: (i, 0)),
            pl.BlockSpec((_K1, _N1), lambda i: (0, 0)),            # resident
            pl.BlockSpec((1, _H1_LANES), lambda i: (0, 0)),
            pl.BlockSpec((3, _H1_LANES, _N2), lambda i: (0, 0, 0)),
            pl.BlockSpec((1, _H2_LANES), lambda i: (0, 0)),
            pl.BlockSpec((_POOL2_HW, _H2_LANES, _HID), lambda i: (0, 0, 0)),
            pl.BlockSpec((1, _HID), lambda i: (0, 0)),
            pl.BlockSpec((_HID, _OUT), lambda i: (0, 0)),
            pl.BlockSpec((1, _OUT), lambda i: (0, 0)),
        ],
        out_specs=pl.BlockSpec((tb, _OUT), lambda i: (i, 0)),
        scratch_shapes=[pltpu.VMEM((_POOL1_HW * tb, _H1_LANES), jnp.float32)],
        compiler_params=pltpu.CompilerParams(
            dimension_semantics=("parallel",),        # batch tiles
            vmem_limit_bytes=32 * 1024 * 1024,        # ~4 MiB actually used
        ),
    )(x_flat, prep["bw1"], prep["b1"], prep["bw2"], prep["b2"],
      prep["w1"], prep["fb1"], prep["w2"], prep["fb2"])


def cnn_forward(prep, x_nchw, *, batch_tile=64):
    """Forward pass matching the PyTorch CNN module.  x_nchw: [B,1,28,28]."""
    B = x_nchw.shape[0]
    assert x_nchw.shape[1:] == (1, _IN_HW, _IN_HW)
    x = x_nchw.reshape(B, _IN_HW * _IN_HW).astype(jnp.float32)   # free reshape
    tb = batch_tile if B >= batch_tile else _round_up(max(B, 1), 8)
    bp = _round_up(B, tb)
    if bp != B:                                   # pad odd batch sizes
        x = jnp.pad(x, ((0, bp - B), (0, 0)))
    out = _fused_forward(x, prep, tb)
    return out[:B]


# --------------------------- parameter preparation --------------------------

def init_params(key):
    """PyTorch-layout parameters with nn.Conv2d / nn.Linear default init."""
    ks = jax.random.split(key, 8)

    def u(k, shape, fan_in):
        bound = 1.0 / jnp.sqrt(jnp.float32(fan_in))
        return jax.random.uniform(k, shape, jnp.float32, -bound, bound)

    return {
        "conv1_w": u(ks[0], (_C1, 1, 3, 3), 9),
        "conv1_b": u(ks[1], (_C1,), 9),
        "conv2_w": u(ks[2], (_C2, _C1, 3, 3), _C1 * 9),
        "conv2_b": u(ks[3], (_C2,), _C1 * 9),
        "fc1_w":   u(ks[4], (_HID, _C2 * _POOL2_HW * _POOL2_HW), 800),  # [out,in]
        "fc1_b":   u(ks[5], (_HID,), 800),
        "fc2_w":   u(ks[6], (_OUT, _HID), _HID),
        "fc2_b":   u(ks[7], (_OUT,), _HID),
    }


def prepare_params(p):
    """One-time folding of the 3x3 window structure, packed pooled-lane layout,
    PyTorch NCHW flatten order and fc transposes into the parameters."""
    f32 = jnp.float32

    # --- conv1 band weights: [84, 512]; row t = di*28 + j --------------------
    # cols [0,256): even conv columns w=2*wp; cols [256,512): odd w=2*wp+1.
    w1c = p["conv1_w"][:, 0]                          # [16, 3, 3]  (c, di, dj)
    t = jnp.arange(_K1)
    di, j = t // _IN_HW, t % _IN_HW
    col = jnp.arange(_N1)
    half, rem = col // _H1_LANES, col % _H1_LANES
    wp, c = rem // _C1, rem % _C1
    w = 2 * wp + half
    dj = j[:, None] - w[None, :]                      # [84, 512]
    valid = (wp[None, :] < _POOL1_HW) & (dj >= 0) & (dj <= 2)
    vals = w1c[c[None, :], di[:, None], jnp.clip(dj, 0, 2)]
    bw1 = jnp.where(valid, vals, 0.0).astype(_DOT)

    lane1 = jnp.arange(_H1_LANES)
    b1 = jnp.where(lane1 < _POOL1_HW * _C1,
                   p["conv1_b"][lane1 % _C1], 0.0).reshape(1, -1).astype(f32)

    # --- conv2 band weights over the pooled stage-1 layout: [3, 256, 512] ----
    li = jnp.arange(_H1_LANES)                        # in lane = wp1*16 + ci
    wp1, ci = li // _C1, li % _C1
    col2 = jnp.arange(_N2)
    half2, rem2 = col2 // _H2_LANES, col2 % _H2_LANES
    wp2, co = rem2 // _C2, rem2 % _C2
    w2 = 2 * wp2 + half2
    dh = wp1[:, None] - w2[None, :]                   # [256, 512]
    valid2 = ((wp1[:, None] < _POOL1_HW) & (wp2[None, :] < _POOL2_HW)
              & (dh >= 0) & (dh <= 2))
    dv = jnp.arange(3)
    vals2 = p["conv2_w"][co[None, None, :], ci[None, :, None],
                         dv[:, None, None], jnp.clip(dh, 0, 2)[None, :, :]]
    bw2 = jnp.where(valid2[None], vals2, 0.0).astype(_DOT)

    lane2 = jnp.arange(_H2_LANES)
    b2 = jnp.where(lane2 < _POOL2_HW * _C2,
                   p["conv2_b"][lane2 % _C2], 0.0).reshape(1, -1).astype(f32)

    # --- fc1: split by pooled row hp, NCHW flatten folded in: [5, 256, 128] --
    m = jnp.arange(_H2_LANES)                         # lane = wp2*32 + co
    wpf, cf = m // _C2, m % _C2
    hp = jnp.arange(_POOL2_HW)
    torch_col = (cf[None, :] * (_POOL2_HW * _POOL2_HW)
                 + hp[:, None] * _POOL2_HW
                 + jnp.clip(wpf, 0, _POOL2_HW - 1)[None, :])
    w1s = jnp.where((wpf < _POOL2_HW)[None, :, None],
                    p["fc1_w"].T[torch_col], 0.0).astype(_DOT)
    fb1 = p["fc1_b"].reshape(1, -1).astype(f32)
    w2fc = p["fc2_w"].T.astype(_DOT)                  # [128, 10]
    fb2 = p["fc2_b"].reshape(1, -1).astype(f32)

    return {"bw1": bw1, "b1": b1, "bw2": bw2, "b2": b2,
            "w1": w1s, "fb1": fb1, "w2": w2fc, "fb2": fb2}


# ------------------------------ pure-JAX reference --------------------------

def cnn_reference(p, x_nchw):
    dn = ("NCHW", "OIHW", "NCHW")
    y = lax.conv_general_dilated(x_nchw.astype(jnp.float32), p["conv1_w"],
                                 (1, 1), "VALID", dimension_numbers=dn)
    y = y + p["conv1_b"].reshape(1, -1, 1, 1)
    y = lax.reduce_window(y, -jnp.inf, lax.max, (1, 1, 2, 2), (1, 1, 2, 2), "VALID")
    y = jnp.maximum(y, 0.0)
    y = lax.conv_general_dilated(y, p["conv2_w"], (1, 1), "VALID",
                                 dimension_numbers=dn)
    y = y + p["conv2_b"].reshape(1, -1, 1, 1)
    y = lax.reduce_window(y, -jnp.inf, lax.max, (1, 1, 2, 2), (1, 1, 2, 2), "VALID")
    y = jnp.maximum(y, 0.0)
    y = y.reshape(y.shape[0], -1)                     # NCHW flatten
    y = jnp.maximum(y @ p["fc1_w"].T + p["fc1_b"], 0.0)
    return y @ p["fc2_w"].T + p["fc2_b"]


# --------------------------------- demo -------------------------------------

if __name__ == "__main__":
    key = jax.random.PRNGKey(0)
    pkey, xkey = jax.random.split(key)
    params = init_params(pkey)
    prep = prepare_params(params)     # one-time layout folding (outside forward)

    # MNIST-sized input (28x28 is forced by fc1 = 32*5*5).  Small batch demo.
    x = jax.random.normal(xkey, (2, 1, _IN_HW, _IN_HW), dtype=jnp.float32)

    out = jax.block_until_ready(jax.jit(cnn_forward)(prep, x))
    assert out.shape == (2, _OUT) and out.dtype == jnp.float32

    ref = cnn_reference(params, x)
    err = float(jnp.max(jnp.abs(out - ref)))
    assert err < 7.5e-2, f"kernel/reference mismatch: max |err| = {err}"
    print("KERNEL_OK")
</pallas_src>

<mosaic_0001>
module attributes {stable_mosaic.version = 11 : i64} {
  func.func @_cnn_fused_kernel(%arg0: i32, %arg1: memref<8x784xf32, #tpu.memory_space<vmem>>, %arg2: memref<84x512xbf16, #tpu.memory_space<vmem>>, %arg3: memref<1x256xf32, #tpu.memory_space<vmem>>, %arg4: memref<3x256x512xbf16, #tpu.memory_space<vmem>>, %arg5: memref<1x256xf32, #tpu.memory_space<vmem>>, %arg6: memref<5x256x128xbf16, #tpu.memory_space<vmem>>, %arg7: memref<1x128xf32, #tpu.memory_space<vmem>>, %arg8: memref<128x10xbf16, #tpu.memory_space<vmem>>, %arg9: memref<1x10xf32, #tpu.memory_space<vmem>>, %arg10: memref<8x10xf32, #tpu.memory_space<vmem>>, %arg11: memref<104x256xf32, #tpu.memory_space<vmem>>) attributes {dimension_semantics = [#tpu.dimension_semantics<parallel>], iteration_bounds = array<i64: 1>, scalar_prefetch = 0 : i64, scratch_operands = 1 : i64, tpu.core_type = #tpu.core_type<tc>, window_params = [{transform_indices = @transform_0, window_bounds = array<i64: 8, 784>}, {pipeline_mode = #tpu.pipeline_mode<synchronous>, transform_indices = @transform_1, window_bounds = array<i64: 84, 512>}, {pipeline_mode = #tpu.pipeline_mode<synchronous>, transform_indices = @transform_2, window_bounds = array<i64: 1, 256>}, {pipeline_mode = #tpu.pipeline_mode<synchronous>, transform_indices = @transform_3, window_bounds = array<i64: 3, 256, 512>}, {pipeline_mode = #tpu.pipeline_mode<synchronous>, transform_indices = @transform_4, window_bounds = array<i64: 1, 256>}, {pipeline_mode = #tpu.pipeline_mode<synchronous>, transform_indices = @transform_5, window_bounds = array<i64: 5, 256, 128>}, {pipeline_mode = #tpu.pipeline_mode<synchronous>, transform_indices = @transform_6, window_bounds = array<i64: 1, 128>}, {pipeline_mode = #tpu.pipeline_mode<synchronous>, transform_indices = @transform_7, window_bounds = array<i64: 128, 10>}, {pipeline_mode = #tpu.pipeline_mode<synchronous>, transform_indices = @transform_8, window_bounds = array<i64: 1, 10>}, {transform_indices = @transform_9, window_bounds = array<i64: 8, 10>}]} {
    %c0 = arith.constant 0 : index
    %c0_0 = arith.constant 0 : index
    %0 = vector.load %arg1[%c0, %c0_0] : memref<8x784xf32, #tpu.memory_space<vmem>>, vector<8x84xf32>
    %1 = arith.truncf %0 : vector<8x84xf32> to vector<8x84xbf16>
    %c0_1 = arith.constant 0 : index
    %c0_2 = arith.constant 0 : index
    %2 = vector.load %arg2[%c0_1, %c0_2] : memref<84x512xbf16, #tpu.memory_space<vmem>>, vector<84x512xbf16>
    %cst = arith.constant dense<0.000000e+00> : vector<8x512xf32>
    %3 = tpu.matmul %1, %2, %cst {dimension_numbers = #tpu.dot_dimension_numbers<[1], [0], [0], [1], [0, 0, 1, 1], [], []>} : vector<8x84xbf16>, vector<84x512xbf16>, vector<8x512xf32> -> vector<8x512xf32>
    %c0_3 = arith.constant 0 : index
    %c28 = arith.constant 28 : index
    %4 = vector.load %arg1[%c0_3, %c28] : memref<8x784xf32, #tpu.memory_space<vmem>>, vector<8x84xf32>
    %5 = arith.truncf %4 : vector<8x84xf32> to vector<8x84xbf16>
    %c0_4 = arith.constant 0 : index
    %c0_5 = arith.constant 0 : index
    %6 = vector.load %arg2[%c0_4, %c0_5] : memref<84x512xbf16, #tpu.memory_space<vmem>>, vector<84x512xbf16>
    %cst_6 = arith.constant dense<0.000000e+00> : vector<8x512xf32>
    %7 = tpu.matmul %5, %6, %cst_6 {dimension_numbers = #tpu.dot_dimension_numbers<[1], [0], [0], [1], [0, 0, 1, 1], [], []>} : vector<8x84xbf16>, vector<84x512xbf16>, vector<8x512xf32> -> vector<8x512xf32>
    %8 = arith.maximumf %3, %7 : vector<8x512xf32>
    %9 = vector.extract_strided_slice %8 {offsets = [0, 0], sizes = [8, 256], strides = [1, 1]} : vector<8x512xf32> to vector<8x256xf32>
    %10 = vector.extract_strided_slice %8 {offsets = [0, 256], sizes = [8, 256], strides = [1, 1]} : vector<8x512xf32> to vector<8x256xf32>
    %11 = arith.maximumf %9, %10 : vector<8x256xf32>
    %c0_7 = arith.constant 0 : index
    %c0_8 = arith.constant 0 : index
    %12 = vector.load %arg3[%c0_7, %c0_8] : memref<1x256xf32, #tpu.memory_space<vmem>>, vector<1x256xf32>
    %13 = vector.broadcast %12 : vector<1x256xf32> to vector<8x256xf32>
    %14 = arith.addf %11, %13 : vector<8x256xf32>
    %cst_9 = arith.constant 0.000000e+00 : f32
    %15 = vector.broadcast %cst_9 : f32 to vector<8x256xf32>
    %16 = arith.maximumf %14, %15 : vector<8x256xf32>
    %c0_10 = arith.constant 0 : index
    %c0_11 = arith.constant 0 : index
    %17 = vector.load %arg11[%c0_10, %c0_11] : memref<104x256xf32, #tpu.memory_space<vmem>>, vector<8x256xf32>
    tpu.vector_store %arg11[%c0_10, %c0_11], %16 {strides = array<i32>} : memref<104x256xf32, #tpu.memory_space<vmem>>, vector<8x256xf32>,
    %c0_12 = arith.constant 0 : index
    %c56 = arith.constant 56 : index
    %18 = vector.load %arg1[%c0_12, %c56] : memref<8x784xf32, #tpu.memory_space<vmem>>, vector<8x84xf32>
    %19 = arith.truncf %18 : vector<8x84xf32> to vector<8x84xbf16>
    %c0_13 = arith.constant 0 : index
    %c0_14 = arith.constant 0 : index
    %20 = vector.load %arg2[%c0_13, %c0_14] : memref<84x512xbf16, #tpu.memory_space<vmem>>, vector<84x512xbf16>
    %cst_15 = arith.constant dense<0.000000e+00> : vector<8x512xf32>
    %21 = tpu.matmul %19, %20, %cst_15 {dimension_numbers = #tpu.dot_dimension_numbers<[1], [0], [0], [1], [0, 0, 1, 1], [], []>} : vector<8x84xbf16>, vector<84x512xbf16>, vector<8x512xf32> -> vector<8x512xf32>
    %c0_16 = arith.constant 0 : index
    %c84 = arith.constant 84 : index
    %22 = vector.load %arg1[%c0_16, %c84] : memref<8x784xf32, #tpu.memory_space<vmem>>, vector<8x84xf32>
    %23 = arith.truncf %22 : vector<8x84xf32> to vector<8x84xbf16>
    %c0_17 = arith.constant 0 : index
    %c0_18 = arith.constant 0 : index
    %24 = vector.load %arg2[%c0_17, %c0_18] : memref<84x512xbf16, #tpu.memory_space<vmem>>, vector<84x512xbf16>
    %cst_19 = arith.constant dense<0.000000e+00> : vector<8x512xf32>
    %25 = tpu.matmul %23, %24, %cst_19 {dimension_numbers = #tpu.dot_dimension_numbers<[1], [0], [0], [1], [0, 0, 1, 1], [], []>} : vector<8x84xbf16>, vector<84x512xbf16>, vector<8x512xf32> -> vector<8x512xf32>
    %26 = arith.maximumf %21, %25 : vector<8x512xf32>
    %27 = vector.extract_strided_slice %26 {offsets = [0, 0], sizes = [8, 256], strides = [1, 1]} : vector<8x512xf32> to vector<8x256xf32>
    %28 = vector.extract_strided_slice %26 {offsets = [0, 256], sizes = [8, 256], strides = [1, 1]} : vector<8x512xf32> to vector<8x256xf32>
    %29 = arith.maximumf %27, %28 : vector<8x256xf32>
    %c0_20 = arith.constant 0 : index
    %c0_21 = arith.constant 0 : index
    %30 = vector.load %arg3[%c0_20, %c0_21] : memref<1x256xf32, #tpu.memory_space<vmem>>, vector<1x256xf32>
    %31 = vector.broadcast %30 : vector<1x256xf32> to vector<8x256xf32>
    %32 = arith.addf %29, %31 : vector<8x256xf32>
    %cst_22 = arith.constant 0.000000e+00 : f32
    %33 = vector.broadcast %cst_22 : f32 to vector<8x256xf32>
    %34 = arith.maximumf %32, %33 : vector<8x256xf32>
    %c8 = arith.constant 8 : index
    %c0_23 = arith.constant 0 : index
    %35 = vector.load %arg11[%c8, %c0_23] : memref<104x256xf32, #tpu.memory_space<vmem>>, vector<8x256xf32>
    tpu.vector_store %arg11[%c8, %c0_23], %34 {strides = array<i32>} : memref<104x256xf32, #tpu.memory_space<vmem>>, vector<8x256xf32>,
    %c0_24 = arith.constant 0 : index
    %c112 = arith.constant 112 : index
    %36 = vector.load %arg1[%c0_24, %c112] : memref<8x784xf32, #tpu.memory_space<vmem>>, vector<8x84xf32>
    %37 = arith.truncf %36 : vector<8x84xf32> to vector<8x84xbf16>
    %c0_25 = arith.constant 0 : index
    %c0_26 = arith.constant 0 : index
    %38 = vector.load %arg2[%c0_25, %c0_26] : memref<84x512xbf16, #tpu.memory_space<vmem>>, vector<84x512xbf16>
    %cst_27 = arith.constant dense<0.000000e+00> : vector<8x512xf32>
    %39 = tpu.matmul %37, %38, %cst_27 {dimension_numbers = #tpu.dot_dimension_numbers<[1], [0], [0], [1], [0, 0, 1, 1], [], []>} : vector<8x84xbf16>, vector<84x512xbf16>, vector<8x512xf32> -> vector<8x512xf32>
    %c0_28 = arith.constant 0 : index
    %c140 = arith.constant 140 : index
    %40 = vector.load %arg1[%c0_28, %c140] : memref<8x784xf32, #tpu.memory_space<vmem>>, vector<8x84xf32>
    %41 = arith.truncf %40 : vector<8x84xf32> to vector<8x84xbf16>
    %c0_29 = arith.constant 0 : index
    %c0_30 = arith.constant 0 : index
    %42 = vector.load %arg2[%c0_29, %c0_30] : memref<84x512xbf16, #tpu.memory_space<vmem>>, vector<84x512xbf16>
    %cst_31 = arith.constant dense<0.000000e+00> : vector<8x512xf32>
    %43 = tpu.matmul %41, %42, %cst_31 {dimension_numbers = #tpu.dot_dimension_numbers<[1], [0], [0], [1], [0, 0, 1, 1], [], []>} : vector<8x84xbf16>, vector<84x512xbf16>, vector<8x512xf32> -> vector<8x512xf32>
    %44 = arith.maximumf %39, %43 : vector<8x512xf32>
    %45 = vector.extract_strided_slice %44 {offsets = [0, 0], sizes = [8, 256], strides = [1, 1]} : vector<8x512xf32> to vector<8x256xf32>
    %46 = vector.extract_strided_slice %44 {offsets = [0, 256], sizes = [8, 256], strides = [1, 1]} : vector<8x512xf32> to vector<8x256xf32>
    %47 = arith.maximumf %45, %46 : vector<8x256xf32>
    %c0_32 = arith.constant 0 : index
    %c0_33 = arith.constant 0 : index
    %48 = vector.load %arg3[%c0_32, %c0_33] : memref<1x256xf32, #tpu.memory_space<vmem>>, vector<1x256xf32>
    %49 = vector.broadcast %48 : vector<1x256xf32> to vector<8x256xf32>
    %50 = arith.addf %47, %49 : vector<8x256xf32>
    %cst_34 = arith.constant 0.000000e+00 : f32
    %51 = vector.broadcast %cst_34 : f32 to vector<8x256xf32>
    %52 = arith.maximumf %50, %51 : vector<8x256xf32>
    %c16 = arith.constant 16 : index
    %c0_35 = arith.constant 0 : index
    %53 = vector.load %arg11[%c16, %c0_35] : memref<104x256xf32, #tpu.memory_space<vmem>>, vector<8x256xf32>
    tpu.vector_store %arg11[%c16, %c0_35], %52 {strides = array<i32>} : memref<104x256xf32, #tpu.memory_space<vmem>>, vector<8x256xf32>,
    %c0_36 = arith.constant 0 : index
    %c168 = arith.constant 168 : index
    %54 = vector.load %arg1[%c0_36, %c168] : memref<8x784xf32, #tpu.memory_space<vmem>>, vector<8x84xf32>
    %55 = arith.truncf %54 : vector<8x84xf32> to vector<8x84xbf16>
    %c0_37 = arith.constant 0 : index
    %c0_38 = arith.constant 0 : index
    %56 = vector.load %arg2[%c0_37, %c0_38] : memref<84x512xbf16, #tpu.memory_space<vmem>>, vector<84x512xbf16>
    %cst_39 = arith.constant dense<0.000000e+00> : vector<8x512xf32>
    %57 = tpu.matmul %55, %56, %cst_39 {dimension_numbers = #tpu.dot_dimension_numbers<[1], [0], [0], [1], [0, 0, 1, 1], [], []>} : vector<8x84xbf16>, vector<84x512xbf16>, vector<8x512xf32> -> vector<8x512xf32>
    %c0_40 = arith.constant 0 : index
    %c196 = arith.constant 196 : index
    %58 = vector.load %arg1[%c0_40, %c196] : memref<8x784xf32, #tpu.memory_space<vmem>>, vector<8x84xf32>
    %59 = arith.truncf %58 : vector<8x84xf32> to vector<8x84xbf16>
    %c0_41 = arith.constant 0 : index
    %c0_42 = arith.constant 0 : index
    %60 = vector.load %arg2[%c0_41, %c0_42] : memref<84x512xbf16, #tpu.memory_space<vmem>>, vector<84x512xbf16>
    %cst_43 = arith.constant dense<0.000000e+00> : vector<8x512xf32>
    %61 = tpu.matmul %59, %60, %cst_43 {dimension_numbers = #tpu.dot_dimension_numbers<[1], [0], [0], [1], [0, 0, 1, 1], [], []>} : vector<8x84xbf16>, vector<84x512xbf16>, vector<8x512xf32> -> vector<8x512xf32>
    %62 = arith.maximumf %57, %61 : vector<8x512xf32>
    %63 = vector.extract_strided_slice %62 {offsets = [0, 0], sizes = [8, 256], strides = [1, 1]} : vector<8x512xf32> to vector<8x256xf32>
    %64 = vector.extract_strided_slice %62 {offsets = [0, 256], sizes = [8, 256], strides = [1, 1]} : vector<8x512xf32> to vector<8x256xf32>
    %65 = arith.maximumf %63, %64 : vector<8x256xf32>
    %c0_44 = arith.constant 0 : index
    %c0_45 = arith.constant 0 : index
    %66 = vector.load %arg3[%c0_44, %c0_45] : memref<1x256xf32, #tpu.memory_space<vmem>>, vector<1x256xf32>
    %67 = vector.broadcast %66 : vector<1x256xf32> to vector<8x256xf32>
    %68 = arith.addf %65, %67 : vector<8x256xf32>
    %cst_46 = arith.constant 0.000000e+00 : f32
    %69 = vector.broadcast %cst_46 : f32 to vector<8x256xf32>
    %70 = arith.maximumf %68, %69 : vector<8x256xf32>
    %c24 = arith.constant 24 : index
    %c0_47 = arith.constant 0 : index
    %71 = vector.load %arg11[%c24, %c0_47] : memref<104x256xf32, #tpu.memory_space<vmem>>, vector<8x256xf32>
    tpu.vector_store %arg11[%c24, %c0_47], %70 {strides = array<i32>} : memref<104x256xf32, #tpu.memory_space<vmem>>, vector<8x256xf32>,
    %c0_48 = arith.constant 0 : index
    %c224 = arith.constant 224 : index
    %72 = vector.load %arg1[%c0_48, %c224] : memref<8x784xf32, #tpu.memory_space<vmem>>, vector<8x84xf32>
    %73 = arith.truncf %72 : vector<8x84xf32> to vector<8x84xbf16>
    %c0_49 = arith.constant 0 : index
    %c0_50 = arith.constant 0 : index
    %74 = vector.load %arg2[%c0_49, %c0_50] : memref<84x512xbf16, #tpu.memory_space<vmem>>, vector<84x512xbf16>
    %cst_51 = arith.constant dense<0.000000e+00> : vector<8x512xf32>
    %75 = tpu.matmul %73, %74, %cst_51 {dimension_numbers = #tpu.dot_dimension_numbers<[1], [0], [0], [1], [0, 0, 1, 1], [], []>} : vector<8x84xbf16>, vector<84x512xbf16>, vector<8x512xf32> -> vector<8x512xf32>
    %c0_52 = arith.constant 0 : index
    %c252 = arith.constant 252 : index
    %76 = vector.load %arg1[%c0_52, %c252] : memref<8x784xf32, #tpu.memory_space<vmem>>, vector<8x84xf32>
    %77 = arith.truncf %76 : vector<8x84xf32> to vector<8x84xbf16>
    %c0_53 = arith.constant 0 : index
    %c0_54 = arith.constant 0 : index
    %78 = vector.load %arg2[%c0_53, %c0_54] : memref<84x512xbf16, #tpu.memory_space<vmem>>, vector<84x512xbf16>
    %cst_55 = arith.constant dense<0.000000e+00> : vector<8x512xf32>
    %79 = tpu.matmul %77, %78, %cst_55 {dimension_numbers = #tpu.dot_dimension_numbers<[1], [0], [0], [1], [0, 0, 1, 1], [], []>} : vector<8x84xbf16>, vector<84x512xbf16>, vector<8x512xf32> -> vector<8x512xf32>
    %80 = arith.maximumf %75, %79 : vector<8x512xf32>
    %81 = vector.extract_strided_slice %80 {offsets = [0, 0], sizes = [8, 256], strides = [1, 1]} : vector<8x512xf32> to vector<8x256xf32>
    %82 = vector.extract_strided_slice %80 {offsets = [0, 256], sizes = [8, 256], strides = [1, 1]} : vector<8x512xf32> to vector<8x256xf32>
    %83 = arith.maximumf %81, %82 : vector<8x256xf32>
    %c0_56 = arith.constant 0 : index
    %c0_57 = arith.constant 0 : index
    %84 = vector.load %arg3[%c0_56, %c0_57] : memref<1x256xf32, #tpu.memory_space<vmem>>, vector<1x256xf32>
    %85 = vector.broadcast %84 : vector<1x256xf32> to vector<8x256xf32>
    %86 = arith.addf %83, %85 : vector<8x256xf32>
    %cst_58 = arith.constant 0.000000e+00 : f32
    %87 = vector.broadcast %cst_58 : f32 to vector<8x256xf32>
    %88 = arith.maximumf %86, %87 : vector<8x256xf32>
    %c32 = arith.constant 32 : index
    %c0_59 = arith.constant 0 : index
    %89 = vector.load %arg11[%c32, %c0_59] : memref<104x256xf32, #tpu.memory_space<vmem>>, vector<8x256xf32>
    tpu.vector_store %arg11[%c32, %c0_59], %88 {strides = array<i32>} : memref<104x256xf32, #tpu.memory_space<vmem>>, vector<8x256xf32>,
    %c0_60 = arith.constant 0 : index
    %c280 = arith.constant 280 : index
    %90 = vector.load %arg1[%c0_60, %c280] : memref<8x784xf32, #tpu.memory_space<vmem>>, vector<8x84xf32>
    %91 = arith.truncf %90 : vector<8x84xf32> to vector<8x84xbf16>
    %c0_61 = arith.constant 0 : index
    %c0_62 = arith.constant 0 : index
    %92 = vector.load %arg2[%c0_61, %c0_62] : memref<84x512xbf16, #tpu.memory_space<vmem>>, vector<84x512xbf16>
    %cst_63 = arith.constant dense<0.000000e+00> : vector<8x512xf32>
    %93 = tpu.matmul %91, %92, %cst_63 {dimension_numbers = #tpu.dot_dimension_numbers<[1], [0], [0], [1], [0, 0, 1, 1], [], []>} : vector<8x84xbf16>, vector<84x512xbf16>, vector<8x512xf32> -> vector<8x512xf32>
    %c0_64 = arith.constant 0 : index
    %c308 = arith.constant 308 : index
    %94 = vector.load %arg1[%c0_64, %c308] : memref<8x784xf32, #tpu.memory_space<vmem>>, vector<8x84xf32>
    %95 = arith.truncf %94 : vector<8x84xf32> to vector<8x84xbf16>
    %c0_65 = arith.constant 0 : index
    %c0_66 = arith.constant 0 : index
    %96 = vector.load %arg2[%c0_65, %c0_66] : memref<84x512xbf16, #tpu.memory_space<vmem>>, vector<84x512xbf16>
    %cst_67 = arith.constant dense<0.000000e+00> : vector<8x512xf32>
    %97 = tpu.matmul %95, %96, %cst_67 {dimension_numbers = #tpu.dot_dimension_numbers<[1], [0], [0], [1], [0, 0, 1, 1], [], []>} : vector<8x84xbf16>, vector<84x512xbf16>, vector<8x512xf32> -> vector<8x512xf32>
    %98 = arith.maximumf %93, %97 : vector<8x512xf32>
    %99 = vector.extract_strided_slice %98 {offsets = [0, 0], sizes = [8, 256], strides = [1, 1]} : vector<8x512xf32> to vector<8x256xf32>
    %100 = vector.extract_strided_slice %98 {offsets = [0, 256], sizes = [8, 256], strides = [1, 1]} : vector<8x512xf32> to vector<8x256xf32>
    %101 = arith.maximumf %99, %100 : vector<8x256xf32>
    %c0_68 = arith.constant 0 : index
    %c0_69 = arith.constant 0 : index
    %102 = vector.load %arg3[%c0_68, %c0_69] : memref<1x256xf32, #tpu.memory_space<vmem>>, vector<1x256xf32>
    %103 = vector.broadcast %102 : vector<1x256xf32> to vector<8x256xf32>
    %104 = arith.addf %101, %103 : vector<8x256xf32>
    %cst_70 = arith.constant 0.000000e+00 : f32
    %105 = vector.broadcast %cst_70 : f32 to vector<8x256xf32>
    %106 = arith.maximumf %104, %105 : vector<8x256xf32>
    %c40 = arith.constant 40 : index
    %c0_71 = arith.constant 0 : index
    %107 = vector.load %arg11[%c40, %c0_71] : memref<104x256xf32, #tpu.memory_space<vmem>>, vector<8x256xf32>
    tpu.vector_store %arg11[%c40, %c0_71], %106 {strides = array<i32>} : memref<104x256xf32, #tpu.memory_space<vmem>>, vector<8x256xf32>,
    %c0_72 = arith.constant 0 : index
    %c336 = arith.constant 336 : index
    %108 = vector.load %arg1[%c0_72, %c336] : memref<8x784xf32, #tpu.memory_space<vmem>>, vector<8x84xf32>
    %109 = arith.truncf %108 : vector<8x84xf32> to vector<8x84xbf16>
    %c0_73 = arith.constant 0 : index
    %c0_74 = arith.constant 0 : index
    %110 = vector.load %arg2[%c0_73, %c0_74] : memref<84x512xbf16, #tpu.memory_space<vmem>>, vector<84x512xbf16>
    %cst_75 = arith.constant dense<0.000000e+00> : vector<8x512xf32>
    %111 = tpu.matmul %109, %110, %cst_75 {dimension_numbers = #tpu.dot_dimension_numbers<[1], [0], [0], [1], [0, 0, 1, 1], [], []>} : vector<8x84xbf16>, vector<84x512xbf16>, vector<8x512xf32> -> vector<8x512xf32>
    %c0_76 = arith.constant 0 : index
    %c364 = arith.constant 364 : index
    %112 = vector.load %arg1[%c0_76, %c364] : memref<8x784xf32, #tpu.memory_space<vmem>>, vector<8x84xf32>
    %113 = arith.truncf %112 : vector<8x84xf32> to vector<8x84xbf16>
    %c0_77 = arith.constant 0 : index
    %c0_78 = arith.constant 0 : index
    %114 = vector.load %arg2[%c0_77, %c0_78] : memref<84x512xbf16, #tpu.memory_space<vmem>>, vector<84x512xbf16>
    %cst_79 = arith.constant dense<0.000000e+00> : vector<8x512xf32>
    %115 = tpu.matmul %113, %114, %cst_79 {dimension_numbers = #tpu.dot_dimension_numbers<[1], [0], [0], [1], [0, 0, 1, 1], [], []>} : vector<8x84xbf16>, vector<84x512xbf16>, vector<8x512xf32> -> vector<8x512xf32>
    %116 = arith.maximumf %111, %115 : vector<8x512xf32>
    %117 = vector.extract_strided_slice %116 {offsets = [0, 0], sizes = [8, 256], strides = [1, 1]} : vector<8x512xf32> to vector<8x256xf32>
    %118 = vector.extract_strided_slice %116 {offsets = [0, 256], sizes = [8, 256], strides = [1, 1]} : vector<8x512xf32> to vector<8x256xf32>
    %119 = arith.maximumf %117, %118 : vector<8x256xf32>
    %c0_80 = arith.constant 0 : index
    %c0_81 = arith.constant 0 : index
    %120 = vector.load %arg3[%c0_80, %c0_81] : memref<1x256xf32, #tpu.memory_space<vmem>>, vector<1x256xf32>
    %121 = vector.broadcast %120 : vector<1x256xf32> to vector<8x256xf32>
    %122 = arith.addf %119, %121 : vector<8x256xf32>
    %cst_82 = arith.constant 0.000000e+00 : f32
    %123 = vector.broadcast %cst_82 : f32 to vector<8x256xf32>
    %124 = arith.maximumf %122, %123 : vector<8x256xf32>
    %c48 = arith.constant 48 : index
    %c0_83 = arith.constant 0 : index
    %125 = vector.load %arg11[%c48, %c0_83] : memref<104x256xf32, #tpu.memory_space<vmem>>, vector<8x256xf32>
    tpu.vector_store %arg11[%c48, %c0_83], %124 {strides = array<i32>} : memref<104x256xf32, #tpu.memory_space<vmem>>, vector<8x256xf32>,
    %c0_84 = arith.constant 0 : index
    %c392 = arith.constant 392 : index
    %126 = vector.load %arg1[%c0_84, %c392] : memref<8x784xf32, #tpu.memory_space<vmem>>, vector<8x84xf32>
    %127 = arith.truncf %126 : vector<8x84xf32> to vector<8x84xbf16>
    %c0_85 = arith.constant 0 : index
    %c0_86 = arith.constant 0 : index
    %128 = vector.load %arg2[%c0_85, %c0_86] : memref<84x512xbf16, #tpu.memory_space<vmem>>, vector<84x512xbf16>
    %cst_87 = arith.constant dense<0.000000e+00> : vector<8x512xf32>
    %129 = tpu.matmul %127, %128, %cst_87 {dimension_numbers = #tpu.dot_dimension_numbers<[1], [0], [0], [1], [0, 0, 1, 1], [], []>} : vector<8x84xbf16>, vector<84x512xbf16>, vector<8x512xf32> -> vector<8x512xf32>
    %c0_88 = arith.constant 0 : index
    %c420 = arith.constant 420 : index
    %130 = vector.load %arg1[%c0_88, %c420] : memref<8x784xf32, #tpu.memory_space<vmem>>, vector<8x84xf32>
    %131 = arith.truncf %130 : vector<8x84xf32> to vector<8x84xbf16>
    %c0_89 = arith.constant 0 : index
    %c0_90 = arith.constant 0 : index
    %132 = vector.load %arg2[%c0_89, %c0_90] : memref<84x512xbf16, #tpu.memory_space<vmem>>, vector<84x512xbf16>
    %cst_91 = arith.constant dense<0.000000e+00> : vector<8x512xf32>
    %133 = tpu.matmul %131, %132, %cst_91 {dimension_numbers = #tpu.dot_dimension_numbers<[1], [0], [0], [1], [0, 0, 1, 1], [], []>} : vector<8x84xbf16>, vector<84x512xbf16>, vector<8x512xf32> -> vector<8x512xf32>
    %134 = arith.maximumf %129, %133 : vector<8x512xf32>
    %135 = vector.extract_strided_slice %134 {offsets = [0, 0], sizes = [8, 256], strides = [1, 1]} : vector<8x512xf32> to vector<8x256xf32>
    %136 = vector.extract_strided_slice %134 {offsets = [0, 256], sizes = [8, 256], strides = [1, 1]} : vector<8x512xf32> to vector<8x256xf32>
    %137 = arith.maximumf %135, %136 : vector<8x256xf32>
    %c0_92 = arith.constant 0 : index
    %c0_93 = arith.constant 0 : index
    %138 = vector.load %arg3[%c0_92, %c0_93] : memref<1x256xf32, #tpu.memory_space<vmem>>, vector<1x256xf32>
    %139 = vector.broadcast %138 : vector<1x256xf32> to vector<8x256xf32>
    %140 = arith.addf %137, %139 : vector<8x256xf32>
    %cst_94 = arith.constant 0.000000e+00 : f32
    %141 = vector.broadcast %cst_94 : f32 to vector<8x256xf32>
    %142 = arith.maximumf %140, %141 : vector<8x256xf32>
    %c56_95 = arith.constant 56 : index
    %c0_96 = arith.constant 0 : index
    %143 = vector.load %arg11[%c56_95, %c0_96] : memref<104x256xf32, #tpu.memory_space<vmem>>, vector<8x256xf32>
    tpu.vector_store %arg11[%c56_95, %c0_96], %142 {strides = array<i32>} : memref<104x256xf32, #tpu.memory_space<vmem>>, vector<8x256xf32>,
    %c0_97 = arith.constant 0 : index
    %c448 = arith.constant 448 : index
    %144 = vector.load %arg1[%c0_97, %c448] : memref<8x784xf32, #tpu.memory_space<vmem>>, vector<8x84xf32>
    %145 = arith.truncf %144 : vector<8x84xf32> to vector<8x84xbf16>
    %c0_98 = arith.constant 0 : index
    %c0_99 = arith.constant 0 : index
    %146 = vector.load %arg2[%c0_98, %c0_99] : memref<84x512xbf16, #tpu.memory_space<vmem>>, vector<84x512xbf16>
    %cst_100 = arith.constant dense<0.000000e+00> : vector<8x512xf32>
    %147 = tpu.matmul %145, %146, %cst_100 {dimension_numbers = #tpu.dot_dimension_numbers<[1], [0], [0], [1], [0, 0, 1, 1], [], []>} : vector<8x84xbf16>, vector<84x512xbf16>, vector<8x512xf32> -> vector<8x512xf32>
    %c0_101 = arith.constant 0 : index
    %c476 = arith.constant 476 : index
    %148 = vector.load %arg1[%c0_101, %c476] : memref<8x784xf32, #tpu.memory_space<vmem>>, vector<8x84xf32>
    %149 = arith.truncf %148 : vector<8x84xf32> to vector<8x84xbf16>
    %c0_102 = arith.constant 0 : index
    %c0_103 = arith.constant 0 : index
    %150 = vector.load %arg2[%c0_102, %c0_103] : memref<84x512xbf16, #tpu.memory_space<vmem>>, vector<84x512xbf16>
    %cst_104 = arith.constant dense<0.000000e+00> : vector<8x512xf32>
    %151 = tpu.matmul %149, %150, %cst_104 {dimension_numbers = #tpu.dot_dimension_numbers<[1], [0], [0], [1], [0, 0, 1, 1], [], []>} : vector<8x84xbf16>, vector<84x512xbf16>, vector<8x512xf32> -> vector<8x512xf32>
    %152 = arith.maximumf %147, %151 : vector<8x512xf32>
    %153 = vector.extract_strided_slice %152 {offsets = [0, 0], sizes = [8, 256], strides = [1, 1]} : vector<8x512xf32> to vector<8x256xf32>
    %154 = vector.extract_strided_slice %152 {offsets = [0, 256], sizes = [8, 256], strides = [1, 1]} : vector<8x512xf32> to vector<8x256xf32>
    %155 = arith.maximumf %153, %154 : vector<8x256xf32>
    %c0_105 = arith.constant 0 : index
    %c0_106 = arith.constant 0 : index
    %156 = vector.load %arg3[%c0_105, %c0_106] : memref<1x256xf32, #tpu.memory_space<vmem>>, vector<1x256xf32>
    %157 = vector.broadcast %156 : vector<1x256xf32> to vector<8x256xf32>
    %158 = arith.addf %155, %157 : vector<8x256xf32>
    %cst_107 = arith.constant 0.000000e+00 : f32
    %159 = vector.broadcast %cst_107 : f32 to vector<8x256xf32>
    %160 = arith.maximumf %158, %159 : vector<8x256xf32>
    %c64 = arith.constant 64 : index
    %c0_108 = arith.constant 0 : index
    %161 = vector.load %arg11[%c64, %c0_108] : memref<104x256xf32, #tpu.memory_space<vmem>>, vector<8x256xf32>
    tpu.vector_store %arg11[%c64, %c0_108], %160 {strides = array<i32>} : memref<104x256xf32, #tpu.memory_space<vmem>>, vector<8x256xf32>,
    %c0_109 = arith.constant 0 : index
    %c504 = arith.constant 504 : index
    %162 = vector.load %arg1[%c0_109, %c504] : memref<8x784xf32, #tpu.memory_space<vmem>>, vector<8x84xf32>
    %163 = arith.truncf %162 : vector<8x84xf32> to vector<8x84xbf16>
    %c0_110 = arith.constant 0 : index
    %c0_111 = arith.constant 0 : index
    %164 = vector.load %arg2[%c0_110, %c0_111] : memref<84x512xbf16, #tpu.memory_space<vmem>>, vector<84x512xbf16>
    %cst_112 = arith.constant dense<0.000000e+00> : vector<8x512xf32>
    %165 = tpu.matmul %163, %164, %cst_112 {dimension_numbers = #tpu.dot_dimension_numbers<[1], [0], [0], [1], [0, 0, 1, 1], [], []>} : vector<8x84xbf16>, vector<84x512xbf16>, vector<8x512xf32> -> vector<8x512xf32>
    %c0_113 = arith.constant 0 : index
    %c532 = arith.constant 532 : index
    %166 = vector.load %arg1[%c0_113, %c532] : memref<8x784xf32, #tpu.memory_space<vmem>>, vector<8x84xf32>
    %167 = arith.truncf %166 : vector<8x84xf32> to vector<8x84xbf16>
    %c0_114 = arith.constant 0 : index
    %c0_115 = arith.constant 0 : index
    %168 = vector.load %arg2[%c0_114, %c0_115] : memref<84x512xbf16, #tpu.memory_space<vmem>>, vector<84x512xbf16>
    %cst_116 = arith.constant dense<0.000000e+00> : vector<8x512xf32>
    %169 = tpu.matmul %167, %168, %cst_116 {dimension_numbers = #tpu.dot_dimension_numbers<[1], [0], [0], [1], [0, 0, 1, 1], [], []>} : vector<8x84xbf16>, vector<84x512xbf16>, vector<8x512xf32> -> vector<8x512xf32>
    %170 = arith.maximumf %165, %169 : vector<8x512xf32>
    %171 = vector.extract_strided_slice %170 {offsets = [0, 0], sizes = [8, 256], strides = [1, 1]} : vector<8x512xf32> to vector<8x256xf32>
    %172 = vector.extract_strided_slice %170 {offsets = [0, 256], sizes = [8, 256], strides = [1, 1]} : vector<8x512xf32> to vector<8x256xf32>
    %173 = arith.maximumf %171, %172 : vector<8x256xf32>
    %c0_117 = arith.constant 0 : index
    %c0_118 = arith.constant 0 : index
    %174 = vector.load %arg3[%c0_117, %c0_118] : memref<1x256xf32, #tpu.memory_space<vmem>>, vector<1x256xf32>
    %175 = vector.broadcast %174 : vector<1x256xf32> to vector<8x256xf32>
    %176 = arith.addf %173, %175 : vector<8x256xf32>
    %cst_119 = arith.constant 0.000000e+00 : f32
    %177 = vector.broadcast %cst_119 : f32 to vector<8x256xf32>
    %178 = arith.maximumf %176, %177 : vector<8x256xf32>
    %c72 = arith.constant 72 : index
    %c0_120 = arith.constant 0 : index
    %179 = vector.load %arg11[%c72, %c0_120] : memref<104x256xf32, #tpu.memory_space<vmem>>, vector<8x256xf32>
    tpu.vector_store %arg11[%c72, %c0_120], %178 {strides = array<i32>} : memref<104x256xf32, #tpu.memory_space<vmem>>, vector<8x256xf32>,
    %c0_121 = arith.constant 0 : index
    %c560 = arith.constant 560 : index
    %180 = vector.load %arg1[%c0_121, %c560] : memref<8x784xf32, #tpu.memory_space<vmem>>, vector<8x84xf32>
    %181 = arith.truncf %180 : vector<8x84xf32> to vector<8x84xbf16>
    %c0_122 = arith.constant 0 : index
    %c0_123 = arith.constant 0 : index
    %182 = vector.load %arg2[%c0_122, %c0_123] : memref<84x512xbf16, #tpu.memory_space<vmem>>, vector<84x512xbf16>
    %cst_124 = arith.constant dense<0.000000e+00> : vector<8x512xf32>
    %183 = tpu.matmul %181, %182, %cst_124 {dimension_numbers = #tpu.dot_dimension_numbers<[1], [0], [0], [1], [0, 0, 1, 1], [], []>} : vector<8x84xbf16>, vector<84x512xbf16>, vector<8x512xf32> -> vector<8x512xf32>
    %c0_125 = arith.constant 0 : index
    %c588 = arith.constant 588 : index
    %184 = vector.load %arg1[%c0_125, %c588] : memref<8x784xf32, #tpu.memory_space<vmem>>, vector<8x84xf32>
    %185 = arith.truncf %184 : vector<8x84xf32> to vector<8x84xbf16>
    %c0_126 = arith.constant 0 : index
    %c0_127 = arith.constant 0 : index
    %186 = vector.load %arg2[%c0_126, %c0_127] : memref<84x512xbf16, #tpu.memory_space<vmem>>, vector<84x512xbf16>
    %cst_128 = arith.constant dense<0.000000e+00> : vector<8x512xf32>
    %187 = tpu.matmul %185, %186, %cst_128 {dimension_numbers = #tpu.dot_dimension_numbers<[1], [0], [0], [1], [0, 0, 1, 1], [], []>} : vector<8x84xbf16>, vector<84x512xbf16>, vector<8x512xf32> -> vector<8x512xf32>
    %188 = arith.maximumf %183, %187 : vector<8x512xf32>
    %189 = vector.extract_strided_slice %188 {offsets = [0, 0], sizes = [8, 256], strides = [1, 1]} : vector<8x512xf32> to vector<8x256xf32>
    %190 = vector.extract_strided_slice %188 {offsets = [0, 256], sizes = [8, 256], strides = [1, 1]} : vector<8x512xf32> to vector<8x256xf32>
    %191 = arith.maximumf %189, %190 : vector<8x256xf32>
    %c0_129 = arith.constant 0 : index
    %c0_130 = arith.constant 0 : index
    %192 = vector.load %arg3[%c0_129, %c0_130] : memref<1x256xf32, #tpu.memory_space<vmem>>, vector<1x256xf32>
    %193 = vector.broadcast %192 : vector<1x256xf32> to vector<8x256xf32>
    %194 = arith.addf %191, %193 : vector<8x256xf32>
    %cst_131 = arith.constant 0.000000e+00 : f32
    %195 = vector.broadcast %cst_131 : f32 to vector<8x256xf32>
    %196 = arith.maximumf %194, %195 : vector<8x256xf32>
    %c80 = arith.constant 80 : index
    %c0_132 = arith.constant 0 : index
    %197 = vector.load %arg11[%c80, %c0_132] : memref<104x256xf32, #tpu.memory_space<vmem>>, vector<8x256xf32>
    tpu.vector_store %arg11[%c80, %c0_132], %196 {strides = array<i32>} : memref<104x256xf32, #tpu.memory_space<vmem>>, vector<8x256xf32>,
    %c0_133 = arith.constant 0 : index
    %c616 = arith.constant 616 : index
    %198 = vector.load %arg1[%c0_133, %c616] : memref<8x784xf32, #tpu.memory_space<vmem>>, vector<8x84xf32>
    %199 = arith.truncf %198 : vector<8x84xf32> to vector<8x84xbf16>
    %c0_134 = arith.constant 0 : index
    %c0_135 = arith.constant 0 : index
    %200 = vector.load %arg2[%c0_134, %c0_135] : memref<84x512xbf16, #tpu.memory_space<vmem>>, vector<84x512xbf16>
    %cst_136 = arith.constant dense<0.000000e+00> : vector<8x512xf32>
    %201 = tpu.matmul %199, %200, %cst_136 {dimension_numbers = #tpu.dot_dimension_numbers<[1], [0], [0], [1], [0, 0, 1, 1], [], []>} : vector<8x84xbf16>, vector<84x512xbf16>, vector<8x512xf32> -> vector<8x512xf32>
    %c0_137 = arith.constant 0 : index
    %c644 = arith.constant 644 : index
    %202 = vector.load %arg1[%c0_137, %c644] : memref<8x784xf32, #tpu.memory_space<vmem>>, vector<8x84xf32>
    %203 = arith.truncf %202 : vector<8x84xf32> to vector<8x84xbf16>
    %c0_138 = arith.constant 0 : index
    %c0_139 = arith.constant 0 : index
    %204 = vector.load %arg2[%c0_138, %c0_139] : memref<84x512xbf16, #tpu.memory_space<vmem>>, vector<84x512xbf16>
    %cst_140 = arith.constant dense<0.000000e+00> : vector<8x512xf32>
    %205 = tpu.matmul %203, %204, %cst_140 {dimension_numbers = #tpu.dot_dimension_numbers<[1], [0], [0], [1], [0, 0, 1, 1], [], []>} : vector<8x84xbf16>, vector<84x512xbf16>, vector<8x512xf32> -> vector<8x512xf32>
    %206 = arith.maximumf %201, %205 : vector<8x512xf32>
    %207 = vector.extract_strided_slice %206 {offsets = [0, 0], sizes = [8, 256], strides = [1, 1]} : vector<8x512xf32> to vector<8x256xf32>
    %208 = vector.extract_strided_slice %206 {offsets = [0, 256], sizes = [8, 256], strides = [1, 1]} : vector<8x512xf32> to vector<8x256xf32>
    %209 = arith.maximumf %207, %208 : vector<8x256xf32>
    %c0_141 = arith.constant 0 : index
    %c0_142 = arith.constant 0 : index
    %210 = vector.load %arg3[%c0_141, %c0_142] : memref<1x256xf32, #tpu.memory_space<vmem>>, vector<1x256xf32>
    %211 = vector.broadcast %210 : vector<1x256xf32> to vector<8x256xf32>
    %212 = arith.addf %209, %211 : vector<8x256xf32>
    %cst_143 = arith.constant 0.000000e+00 : f32
    %213 = vector.broadcast %cst_143 : f32 to vector<8x256xf32>
    %214 = arith.maximumf %212, %213 : vector<8x256xf32>
    %c88 = arith.constant 88 : index
    %c0_144 = arith.constant 0 : index
    %215 = vector.load %arg11[%c88, %c0_144] : memref<104x256xf32, #tpu.memory_space<vmem>>, vector<8x256xf32>
    tpu.vector_store %arg11[%c88, %c0_144], %214 {strides = array<i32>} : memref<104x256xf32, #tpu.memory_space<vmem>>, vector<8x256xf32>,
    %c0_145 = arith.constant 0 : index
    %c672 = arith.constant 672 : index
    %216 = vector.load %arg1[%c0_145, %c672] : memref<8x784xf32, #tpu.memory_space<vmem>>, vector<8x84xf32>
    %217 = arith.truncf %216 : vector<8x84xf32> to vector<8x84xbf16>
    %c0_146 = arith.constant 0 : index
    %c0_147 = arith.constant 0 : index
    %218 = vector.load %arg2[%c0_146, %c0_147] : memref<84x512xbf16, #tpu.memory_space<vmem>>, vector<84x512xbf16>
    %cst_148 = arith.constant dense<0.000000e+00> : vector<8x512xf32>
    %219 = tpu.matmul %217, %218, %cst_148 {dimension_numbers = #tpu.dot_dimension_numbers<[1], [0], [0], [1], [0, 0, 1, 1], [], []>} : vector<8x84xbf16>, vector<84x512xbf16>, vector<8x512xf32> -> vector<8x512xf32>
    %c0_149 = arith.constant 0 : index
    %c700 = arith.constant 700 : index
    %220 = vector.load %arg1[%c0_149, %c700] : memref<8x784xf32, #tpu.memory_space<vmem>>, vector<8x84xf32>
    %221 = arith.truncf %220 : vector<8x84xf32> to vector<8x84xbf16>
    %c0_150 = arith.constant 0 : index
    %c0_151 = arith.constant 0 : index
    %222 = vector.load %arg2[%c0_150, %c0_151] : memref<84x512xbf16, #tpu.memory_space<vmem>>, vector<84x512xbf16>
    %cst_152 = arith.constant dense<0.000000e+00> : vector<8x512xf32>
    %223 = tpu.matmul %221, %222, %cst_152 {dimension_numbers = #tpu.dot_dimension_numbers<[1], [0], [0], [1], [0, 0, 1, 1], [], []>} : vector<8x84xbf16>, vector<84x512xbf16>, vector<8x512xf32> -> vector<8x512xf32>
    %224 = arith.maximumf %219, %223 : vector<8x512xf32>
    %225 = vector.extract_strided_slice %224 {offsets = [0, 0], sizes = [8, 256], strides = [1, 1]} : vector<8x512xf32> to vector<8x256xf32>
    %226 = vector.extract_strided_slice %224 {offsets = [0, 256], sizes = [8, 256], strides = [1, 1]} : vector<8x512xf32> to vector<8x256xf32>
    %227 = arith.maximumf %225, %226 : vector<8x256xf32>
    %c0_153 = arith.constant 0 : index
    %c0_154 = arith.constant 0 : index
    %228 = vector.load %arg3[%c0_153, %c0_154] : memref<1x256xf32, #tpu.memory_space<vmem>>, vector<1x256xf32>
    %229 = vector.broadcast %228 : vector<1x256xf32> to vector<8x256xf32>
    %230 = arith.addf %227, %229 : vector<8x256xf32>
    %cst_155 = arith.constant 0.000000e+00 : f32
    %231 = vector.broadcast %cst_155 : f32 to vector<8x256xf32>
    %232 = arith.maximumf %230, %231 : vector<8x256xf32>
    %c96 = arith.constant 96 : index
    %c0_156 = arith.constant 0 : index
    %233 = vector.load %arg11[%c96, %c0_156] : memref<104x256xf32, #tpu.memory_space<vmem>>, vector<8x256xf32>
    tpu.vector_store %arg11[%c96, %c0_156], %232 {strides = array<i32>} : memref<104x256xf32, #tpu.memory_space<vmem>>, vector<8x256xf32>,
    %cst_157 = arith.constant 0.000000e+00 : f32
    %234 = vector.broadcast %cst_157 : f32 to vector<8x128xf32>
    %c0_158 = arith.constant 0 : index
    %c0_159 = arith.constant 0 : index
    %235 = vector.load %arg11[%c0_158, %c0_159] : memref<104x256xf32, #tpu.memory_space<vmem>>, vector<8x256xf32>
    %236 = arith.truncf %235 : vector<8x256xf32> to vector<8x256xbf16>
    %c0_160 = arith.constant 0 : index
    %c0_161 = arith.constant 0 : index
    %c0_162 = arith.constant 0 : index
    %237 = vector.load %arg4[%c0_160, %c0_161, %c0_162] : memref<3x256x512xbf16, #tpu.memory_space<vmem>>, vector<1x256x512xbf16>
    %238 = vector.shape_cast %237 : vector<1x256x512xbf16> to vector<256x512xbf16>
    %cst_163 = arith.constant dense<0.000000e+00> : vector<8x512xf32>
    %239 = tpu.matmul %236, %238, %cst_163 {dimension_numbers = #tpu.dot_dimension_numbers<[1], [0], [0], [1], [0, 0, 1, 1], [], []>} : vector<8x256xbf16>, vector<256x512xbf16>, vector<8x512xf32> -> vector<8x512xf32>
    %c8_164 = arith.constant 8 : index
    %c0_165 = arith.constant 0 : index
    %240 = vector.load %arg11[%c8_164, %c0_165] : memref<104x256xf32, #tpu.memory_space<vmem>>, vector<8x256xf32>
    %241 = arith.truncf %240 : vector<8x256xf32> to vector<8x256xbf16>
    %c1 = arith.constant 1 : index
    %c0_166 = arith.constant 0 : index
    %c0_167 = arith.constant 0 : index
    %242 = vector.load %arg4[%c1, %c0_166, %c0_167] : memref<3x256x512xbf16, #tpu.memory_space<vmem>>, vector<1x256x512xbf16>
    %243 = vector.shape_cast %242 : vector<1x256x512xbf16> to vector<256x512xbf16>
    %cst_168 = arith.constant dense<0.000000e+00> : vector<8x512xf32>
    %244 = tpu.matmul %241, %243, %cst_168 {dimension_numbers = #tpu.dot_dimension_numbers<[1], [0], [0], [1], [0, 0, 1, 1], [], []>} : vector<8x256xbf16>, vector<256x512xbf16>, vector<8x512xf32> -> vector<8x512xf32>
    %245 = arith.addf %239, %244 : vector<8x512xf32>
    %c16_169 = arith.constant 16 : index
    %c0_170 = arith.constant 0 : index
    %246 = vector.load %arg11[%c16_169, %c0_170] : memref<104x256xf32, #tpu.memory_space<vmem>>, vector<8x256xf32>
    %247 = arith.truncf %246 : vector<8x256xf32> to vector<8x256xbf16>
    %c2 = arith.constant 2 : index
    %c0_171 = arith.constant 0 : index
    %c0_172 = arith.constant 0 : index
    %248 = vector.load %arg4[%c2, %c0_171, %c0_172] : memref<3x256x512xbf16, #tpu.memory_space<vmem>>, vector<1x256x512xbf16>
    %249 = vector.shape_cast %248 : vector<1x256x512xbf16> to vector<256x512xbf16>
    %cst_173 = arith.constant dense<0.000000e+00> : vector<8x512xf32>
    %250 = tpu.matmul %247, %249, %cst_173 {dimension_numbers = #tpu.dot_dimension_numbers<[1], [0], [0], [1], [0, 0, 1, 1], [], []>} : vector<8x256xbf16>, vector<256x512xbf16>, vector<8x512xf32> -> vector<8x512xf32>
    %251 = arith.addf %245, %250 : vector<8x512xf32>
    %c8_174 = arith.constant 8 : index
    %c0_175 = arith.constant 0 : index
    %252 = vector.load %arg11[%c8_174, %c0_175] : memref<104x256xf32, #tpu.memory_space<vmem>>, vector<8x256xf32>
    %253 = arith.truncf %252 : vector<8x256xf32> to vector<8x256xbf16>
    %c0_176 = arith.constant 0 : index
    %c0_177 = arith.constant 0 : index
    %c0_178 = arith.constant 0 : index
    %254 = vector.load %arg4[%c0_176, %c0_177, %c0_178] : memref<3x256x512xbf16, #tpu.memory_space<vmem>>, vector<1x256x512xbf16>
    %255 = vector.shape_cast %254 : vector<1x256x512xbf16> to vector<256x512xbf16>
    %cst_179 = arith.constant dense<0.000000e+00> : vector<8x512xf32>
    %256 = tpu.matmul %253, %255, %cst_179 {dimension_numbers = #tpu.dot_dimension_numbers<[1], [0], [0], [1], [0, 0, 1, 1], [], []>} : vector<8x256xbf16>, vector<256x512xbf16>, vector<8x512xf32> -> vector<8x512xf32>
    %c16_180 = arith.constant 16 : index
    %c0_181 = arith.constant 0 : index
    %257 = vector.load %arg11[%c16_180, %c0_181] : memref<104x256xf32, #tpu.memory_space<vmem>>, vector<8x256xf32>
    %258 = arith.truncf %257 : vector<8x256xf32> to vector<8x256xbf16>
    %c1_182 = arith.constant 1 : index
    %c0_183 = arith.constant 0 : index
    %c0_184 = arith.constant 0 : index
    %259 = vector.load %arg4[%c1_182, %c0_183, %c0_184] : memref<3x256x512xbf16, #tpu.memory_space<vmem>>, vector<1x256x512xbf16>
    %260 = vector.shape_cast %259 : vector<1x256x512xbf16> to vector<256x512xbf16>
    %cst_185 = arith.constant dense<0.000000e+00> : vector<8x512xf32>
    %261 = tpu.matmul %258, %260, %cst_185 {dimension_numbers = #tpu.dot_dimension_numbers<[1], [0], [0], [1], [0, 0, 1, 1], [], []>} : vector<8x256xbf16>, vector<256x512xbf16>, vector<8x512xf32> -> vector<8x512xf32>
    %262 = arith.addf %256, %261 : vector<8x512xf32>
    %c24_186 = arith.constant 24 : index
    %c0_187 = arith.constant 0 : index
    %263 = vector.load %arg11[%c24_186, %c0_187] : memref<104x256xf32, #tpu.memory_space<vmem>>, vector<8x256xf32>
    %264 = arith.truncf %263 : vector<8x256xf32> to vector<8x256xbf16>
    %c2_188 = arith.constant 2 : index
    %c0_189 = arith.constant 0 : index
    %c0_190 = arith.constant 0 : index
    %265 = vector.load %arg4[%c2_188, %c0_189, %c0_190] : memref<3x256x512xbf16, #tpu.memory_space<vmem>>, vector<1x256x512xbf16>
    %266 = vector.shape_cast %265 : vector<1x256x512xbf16> to vector<256x512xbf16>
    %cst_191 = arith.constant dense<0.000000e+00> : vector<8x512xf32>
    %267 = tpu.matmul %264, %266, %cst_191 {dimension_numbers = #tpu.dot_dimension_numbers<[1], [0], [0], [1], [0, 0, 1, 1], [], []>} : vector<8x256xbf16>, vector<256x512xbf16>, vector<8x512xf32> -> vector<8x512xf32>
    %268 = arith.addf %262, %267 : vector<8x512xf32>
    %269 = arith.maximumf %251, %268 : vector<8x512xf32>
    %270 = vector.extract_strided_slice %269 {offsets = [0, 0], sizes = [8, 256], strides = [1, 1]} : vector<8x512xf32> to vector<8x256xf32>
    %271 = vector.extract_strided_slice %269 {offsets = [0, 256], sizes = [8, 256], strides = [1, 1]} : vector<8x512xf32> to vector<8x256xf32>
    %272 = arith.maximumf %270, %271 : vector<8x256xf32>
    %c0_192 = arith.constant 0 : index
    %c0_193 = arith.constant 0 : index
    %273 = vector.load %arg5[%c0_192, %c0_193] : memref<1x256xf32, #tpu.memory_space<vmem>>, vector<1x256xf32>
    %274 = vector.broadcast %273 : vector<1x256xf32> to vector<8x256xf32>
    %275 = arith.addf %272, %274 : vector<8x256xf32>
    %cst_194 = arith.constant 0.000000e+00 : f32
    %276 = vector.broadcast %cst_194 : f32 to vector<8x256xf32>
    %277 = arith.maximumf %275, %276 : vector<8x256xf32>
    %278 = arith.truncf %277 : vector<8x256xf32> to vector<8x256xbf16>
    %c0_195 = arith.constant 0 : index
    %c0_196 = arith.constant 0 : index
    %c0_197 = arith.constant 0 : index
    %279 = vector.load %arg6[%c0_195, %c0_196, %c0_197] : memref<5x256x128xbf16, #tpu.memory_space<vmem>>, vector<1x256x128xbf16>
    %280 = vector.shape_cast %279 : vector<1x256x128xbf16> to vector<256x128xbf16>
    %cst_198 = arith.constant dense<0.000000e+00> : vector<8x128xf32>
    %281 = tpu.matmul %278, %280, %cst_198 {dimension_numbers = #tpu.dot_dimension_numbers<[1], [0], [0], [1], [0, 0, 1, 1], [], []>} : vector<8x256xbf16>, vector<256x128xbf16>, vector<8x128xf32> -> vector<8x128xf32>
    %282 = arith.addf %234, %281 : vector<8x128xf32>
    %c16_199 = arith.constant 16 : index
    %c0_200 = arith.constant 0 : index
    %283 = vector.load %arg11[%c16_199, %c0_200] : memref<104x256xf32, #tpu.memory_space<vmem>>, vector<8x256xf32>
    %284 = arith.truncf %283 : vector<8x256xf32> to vector<8x256xbf16>
    %c0_201 = arith.constant 0 : index
    %c0_202 = arith.constant 0 : index
    %c0_203 = arith.constant 0 : index
    %285 = vector.load %arg4[%c0_201, %c0_202, %c0_203] : memref<3x256x512xbf16, #tpu.memory_space<vmem>>, vector<1x256x512xbf16>
    %286 = vector.shape_cast %285 : vector<1x256x512xbf16> to vector<256x512xbf16>
    %cst_204 = arith.constant dense<0.000000e+00> : vector<8x512xf32>
    %287 = tpu.matmul %284, %286, %cst_204 {dimension_numbers = #tpu.dot_dimension_numbers<[1], [0], [0], [1], [0, 0, 1, 1], [], []>} : vector<8x256xbf16>, vector<256x512xbf16>, vector<8x512xf32> -> vector<8x512xf32>
    %c24_205 = arith.constant 24 : index
    %c0_206 = arith.constant 0 : index
    %288 = vector.load %arg11[%c24_205, %c0_206] : memref<104x256xf32, #tpu.memory_space<vmem>>, vector<8x256xf32>
    %289 = arith.truncf %288 : vector<8x256xf32> to vector<8x256xbf16>
    %c1_207 = arith.constant 1 : index
    %c0_208 = arith.constant 0 : index
    %c0_209 = arith.constant 0 : index
    %290 = vector.load %arg4[%c1_207, %c0_208, %c0_209] : memref<3x256x512xbf16, #tpu.memory_space<vmem>>, vector<1x256x512xbf16>
    %291 = vector.shape_cast %290 : vector<1x256x512xbf16> to vector<256x512xbf16>
    %cst_210 = arith.constant dense<0.000000e+00> : vector<8x512xf32>
    %292 = tpu.matmul %289, %291, %cst_210 {dimension_numbers = #tpu.dot_dimension_numbers<[1], [0], [0], [1], [0, 0, 1, 1], [], []>} : vector<8x256xbf16>, vector<256x512xbf16>, vector<8x512xf32> -> vector<8x512xf32>
    %293 = arith.addf %287, %292 : vector<8x512xf32>
    %c32_211 = arith.constant 32 : index
    %c0_212 = arith.constant 0 : index
    %294 = vector.load %arg11[%c32_211, %c0_212] : memref<104x256xf32, #tpu.memory_space<vmem>>, vector<8x256xf32>
    %295 = arith.truncf %294 : vector<8x256xf32> to vector<8x256xbf16>
    %c2_213 = arith.constant 2 : index
    %c0_214 = arith.constant 0 : index
    %c0_215 = arith.constant 0 : index
    %296 = vector.load %arg4[%c2_213, %c0_214, %c0_215] : memref<3x256x512xbf16, #tpu.memory_space<vmem>>, vector<1x256x512xbf16>
    %297 = vector.shape_cast %296 : vector<1x256x512xbf16> to vector<256x512xbf16>
    %cst_216 = arith.constant dense<0.000000e+00> : vector<8x512xf32>
    %298 = tpu.matmul %295, %297, %cst_216 {dimension_numbers = #tpu.dot_dimension_numbers<[1], [0], [0], [1], [0, 0, 1, 1], [], []>} : vector<8x256xbf16>, vector<256x512xbf16>, vector<8x512xf32> -> vector<8x512xf32>
    %299 = arith.addf %293, %298 : vector<8x512xf32>
    %c24_217 = arith.constant 24 : index
    %c0_218 = arith.constant 0 : index
    %300 = vector.load %arg11[%c24_217, %c0_218] : memref<104x256xf32, #tpu.memory_space<vmem>>, vector<8x256xf32>
    %301 = arith.truncf %300 : vector<8x256xf32> to vector<8x256xbf16>
    %c0_219 = arith.constant 0 : index
    %c0_220 = arith.constant 0 : index
    %c0_221 = arith.constant 0 : index
    %302 = vector.load %arg4[%c0_219, %c0_220, %c0_221] : memref<3x256x512xbf16, #tpu.memory_space<vmem>>, vector<1x256x512xbf16>
    %303 = vector.shape_cast %302 : vector<1x256x512xbf16> to vector<256x512xbf16>
    %cst_222 = arith.constant dense<0.000000e+00> : vector<8x512xf32>
    %304 = tpu.matmul %301, %303, %cst_222 {dimension_numbers = #tpu.dot_dimension_numbers<[1], [0], [0], [1], [0, 0, 1, 1], [], []>} : vector<8x256xbf16>, vector<256x512xbf16>, vector<8x512xf32> -> vector<8x512xf32>
    %c32_223 = arith.constant 32 : index
    %c0_224 = arith.constant 0 : index
    %305 = vector.load %arg11[%c32_223, %c0_224] : memref<104x256xf32, #tpu.memory_space<vmem>>, vector<8x256xf32>
    %306 = arith.truncf %305 : vector<8x256xf32> to vector<8x256xbf16>
    %c1_225 = arith.constant 1 : index
    %c0_226 = arith.constant 0 : index
    %c0_227 = arith.constant 0 : index
    %307 = vector.load %arg4[%c1_225, %c0_226, %c0_227] : memref<3x256x512xbf16, #tpu.memory_space<vmem>>, vector<1x256x512xbf16>
    %308 = vector.shape_cast %307 : vector<1x256x512xbf16> to vector<256x512xbf16>
    %cst_228 = arith.constant dense<0.000000e+00> : vector<8x512xf32>
    %309 = tpu.matmul %306, %308, %cst_228 {dimension_numbers = #tpu.dot_dimension_numbers<[1], [0], [0], [1], [0, 0, 1, 1], [], []>} : vector<8x256xbf16>, vector<256x512xbf16>, vector<8x512xf32> -> vector<8x512xf32>
    %310 = arith.addf %304, %309 : vector<8x512xf32>
    %c40_229 = arith.constant 40 : index
    %c0_230 = arith.constant 0 : index
    %311 = vector.load %arg11[%c40_229, %c0_230] : memref<104x256xf32, #tpu.memory_space<vmem>>, vector<8x256xf32>
    %312 = arith.truncf %311 : vector<8x256xf32> to vector<8x256xbf16>
    %c2_231 = arith.constant 2 : index
    %c0_232 = arith.constant 0 : index
    %c0_233 = arith.constant 0 : index
    %313 = vector.load %arg4[%c2_231, %c0_232, %c0_233] : memref<3x256x512xbf16, #tpu.memory_space<vmem>>, vector<1x256x512xbf16>
    %314 = vector.shape_cast %313 : vector<1x256x512xbf16> to vector<256x512xbf16>
    %cst_234 = arith.constant dense<0.000000e+00> : vector<8x512xf32>
    %315 = tpu.matmul %312, %314, %cst_234 {dimension_numbers = #tpu.dot_dimension_numbers<[1], [0], [0], [1], [0, 0, 1, 1], [], []>} : vector<8x256xbf16>, vector<256x512xbf16>, vector<8x512xf32> -> vector<8x512xf32>
    %316 = arith.addf %310, %315 : vector<8x512xf32>
    %317 = arith.maximumf %299, %316 : vector<8x512xf32>
    %318 = vector.extract_strided_slice %317 {offsets = [0, 0], sizes = [8, 256], strides = [1, 1]} : vector<8x512xf32> to vector<8x256xf32>
    %319 = vector.extract_strided_slice %317 {offsets = [0, 256], sizes = [8, 256], strides = [1, 1]} : vector<8x512xf32> to vector<8x256xf32>
    %320 = arith.maximumf %318, %319 : vector<8x256xf32>
    %c0_235 = arith.constant 0 : index
    %c0_236 = arith.constant 0 : index
    %321 = vector.load %arg5[%c0_235, %c0_236] : memref<1x256xf32, #tpu.memory_space<vmem>>, vector<1x256xf32>
    %322 = vector.broadcast %321 : vector<1x256xf32> to vector<8x256xf32>
    %323 = arith.addf %320, %322 : vector<8x256xf32>
    %cst_237 = arith.constant 0.000000e+00 : f32
    %324 = vector.broadcast %cst_237 : f32 to vector<8x256xf32>
    %325 = arith.maximumf %323, %324 : vector<8x256xf32>
    %326 = arith.truncf %325 : vector<8x256xf32> to vector<8x256xbf16>
    %c1_238 = arith.constant 1 : index
    %c0_239 = arith.constant 0 : index
    %c0_240 = arith.constant 0 : index
    %327 = vector.load %arg6[%c1_238, %c0_239, %c0_240] : memref<5x256x128xbf16, #tpu.memory_space<vmem>>, vector<1x256x128xbf16>
    %328 = vector.shape_cast %327 : vector<1x256x128xbf16> to vector<256x128xbf16>
    %cst_241 = arith.constant dense<0.000000e+00> : vector<8x128xf32>
    %329 = tpu.matmul %326, %328, %cst_241 {dimension_numbers = #tpu.dot_dimension_numbers<[1], [0], [0], [1], [0, 0, 1, 1], [], []>} : vector<8x256xbf16>, vector<256x128xbf16>, vector<8x128xf32> -> vector<8x128xf32>
    %330 = arith.addf %282, %329 : vector<8x128xf32>
    %c32_242 = arith.constant 32 : index
    %c0_243 = arith.constant 0 : index
    %331 = vector.load %arg11[%c32_242, %c0_243] : memref<104x256xf32, #tpu.memory_space<vmem>>, vector<8x256xf32>
    %332 = arith.truncf %331 : vector<8x256xf32> to vector<8x256xbf16>
    %c0_244 = arith.constant 0 : index
    %c0_245 = arith.constant 0 : index
    %c0_246 = arith.constant 0 : index
    %333 = vector.load %arg4[%c0_244, %c0_245, %c0_246] : memref<3x256x512xbf16, #tpu.memory_space<vmem>>, vector<1x256x512xbf16>
    %334 = vector.shape_cast %333 : vector<1x256x512xbf16> to vector<256x512xbf16>
    %cst_247 = arith.constant dense<0.000000e+00> : vector<8x512xf32>
    %335 = tpu.matmul %332, %334, %cst_247 {dimension_numbers = #tpu.dot_dimension_numbers<[1], [0], [0], [1], [0, 0, 1, 1], [], []>} : vector<8x256xbf16>, vector<256x512xbf16>, vector<8x512xf32> -> vector<8x512xf32>
    %c40_248 = arith.constant 40 : index
    %c0_249 = arith.constant 0 : index
    %336 = vector.load %arg11[%c40_248, %c0_249] : memref<104x256xf32, #tpu.memory_space<vmem>>, vector<8x256xf32>
    %337 = arith.truncf %336 : vector<8x256xf32> to vector<8x256xbf16>
    %c1_250 = arith.constant 1 : index
    %c0_251 = arith.constant 0 : index
    %c0_252 = arith.constant 0 : index
    %338 = vector.load %arg4[%c1_250, %c0_251, %c0_252] : memref<3x256x512xbf16, #tpu.memory_space<vmem>>, vector<1x256x512xbf16>
    %339 = vector.shape_cast %338 : vector<1x256x512xbf16> to vector<256x512xbf16>
    %cst_253 = arith.constant dense<0.000000e+00> : vector<8x512xf32>
    %340 = tpu.matmul %337, %339, %cst_253 {dimension_numbers = #tpu.dot_dimension_numbers<[1], [0], [0], [1], [0, 0, 1, 1], [], []>} : vector<8x256xbf16>, vector<256x512xbf16>, vector<8x512xf32> -> vector<8x512xf32>
    %341 = arith.addf %335, %340 : vector<8x512xf32>
    %c48_254 = arith.constant 48 : index
    %c0_255 = arith.constant 0 : index
    %342 = vector.load %arg11[%c48_254, %c0_255] : memref<104x256xf32, #tpu.memory_space<vmem>>, vector<8x256xf32>
    %343 = arith.truncf %342 : vector<8x256xf32> to vector<8x256xbf16>
    %c2_256 = arith.constant 2 : index
    %c0_257 = arith.constant 0 : index
    %c0_258 = arith.constant 0 : index
    %344 = vector.load %arg4[%c2_256, %c0_257, %c0_258] : memref<3x256x512xbf16, #tpu.memory_space<vmem>>, vector<1x256x512xbf16>
    %345 = vector.shape_cast %344 : vector<1x256x512xbf16> to vector<256x512xbf16>
    %cst_259 = arith.constant dense<0.000000e+00> : vector<8x512xf32>
    %346 = tpu.matmul %343, %345, %cst_259 {dimension_numbers = #tpu.dot_dimension_numbers<[1], [0], [0], [1], [0, 0, 1, 1], [], []>} : vector<8x256xbf16>, vector<256x512xbf16>, vector<8x512xf32> -> vector<8x512xf32>
    %347 = arith.addf %341, %346 : vector<8x512xf32>
    %c40_260 = arith.constant 40 : index
    %c0_261 = arith.constant 0 : index
    %348 = vector.load %arg11[%c40_260, %c0_261] : memref<104x256xf32, #tpu.memory_space<vmem>>, vector<8x256xf32>
    %349 = arith.truncf %348 : vector<8x256xf32> to vector<8x256xbf16>
    %c0_262 = arith.constant 0 : index
    %c0_263 = arith.constant 0 : index
    %c0_264 = arith.constant 0 : index
    %350 = vector.load %arg4[%c0_262, %c0_263, %c0_264] : memref<3x256x512xbf16, #tpu.memory_space<vmem>>, vector<1x256x512xbf16>
    %351 = vector.shape_cast %350 : vector<1x256x512xbf16> to vector<256x512xbf16>
    %cst_265 = arith.constant dense<0.000000e+00> : vector<8x512xf32>
    %352 = tpu.matmul %349, %351, %cst_265 {dimension_numbers = #tpu.dot_dimension_numbers<[1], [0], [0], [1], [0, 0, 1, 1], [], []>} : vector<8x256xbf16>, vector<256x512xbf16>, vector<8x512xf32> -> vector<8x512xf32>
    %c48_266 = arith.constant 48 : index
    %c0_267 = arith.constant 0 : index
    %353 = vector.load %arg11[%c48_266, %c0_267] : memref<104x256xf32, #tpu.memory_space<vmem>>, vector<8x256xf32>
    %354 = arith.truncf %353 : vector<8x256xf32> to vector<8x256xbf16>
    %c1_268 = arith.constant 1 : index
    %c0_269 = arith.constant 0 : index
    %c0_270 = arith.constant 0 : index
    %355 = vector.load %arg4[%c1_268, %c0_269, %c0_270] : memref<3x256x512xbf16, #tpu.memory_space<vmem>>, vector<1x256x512xbf16>
    %356 = vector.shape_cast %355 : vector<1x256x512xbf16> to vector<256x512xbf16>
    %cst_271 = arith.constant dense<0.000000e+00> : vector<8x512xf32>
    %357 = tpu.matmul %354, %356, %cst_271 {dimension_numbers = #tpu.dot_dimension_numbers<[1], [0], [0], [1], [0, 0, 1, 1], [], []>} : vector<8x256xbf16>, vector<256x512xbf16>, vector<8x512xf32> -> vector<8x512xf32>
    %358 = arith.addf %352, %357 : vector<8x512xf32>
    %c56_272 = arith.constant 56 : index
    %c0_273 = arith.constant 0 : index
    %359 = vector.load %arg11[%c56_272, %c0_273] : memref<104x256xf32, #tpu.memory_space<vmem>>, vector<8x256xf32>
    %360 = arith.truncf %359 : vector<8x256xf32> to vector<8x256xbf16>
    %c2_274 = arith.constant 2 : index
    %c0_275 = arith.constant 0 : index
    %c0_276 = arith.constant 0 : index
    %361 = vector.load %arg4[%c2_274, %c0_275, %c0_276] : memref<3x256x512xbf16, #tpu.memory_space<vmem>>, vector<1x256x512xbf16>
    %362 = vector.shape_cast %361 : vector<1x256x512xbf16> to vector<256x512xbf16>
    %cst_277 = arith.constant dense<0.000000e+00> : vector<8x512xf32>
    %363 = tpu.matmul %360, %362, %cst_277 {dimension_numbers = #tpu.dot_dimension_numbers<[1], [0], [0], [1], [0, 0, 1, 1], [], []>} : vector<8x256xbf16>, vector<256x512xbf16>, vector<8x512xf32> -> vector<8x512xf32>
    %364 = arith.addf %358, %363 : vector<8x512xf32>
    %365 = arith.maximumf %347, %364 : vector<8x512xf32>
    %366 = vector.extract_strided_slice %365 {offsets = [0, 0], sizes = [8, 256], strides = [1, 1]} : vector<8x512xf32> to vector<8x256xf32>
    %367 = vector.extract_strided_slice %365 {offsets = [0, 256], sizes = [8, 256], strides = [1, 1]} : vector<8x512xf32> to vector<8x256xf32>
    %368 = arith.maximumf %366, %367 : vector<8x256xf32>
    %c0_278 = arith.constant 0 : index
    %c0_279 = arith.constant 0 : index
    %369 = vector.load %arg5[%c0_278, %c0_279] : memref<1x256xf32, #tpu.memory_space<vmem>>, vector<1x256xf32>
    %370 = vector.broadcast %369 : vector<1x256xf32> to vector<8x256xf32>
    %371 = arith.addf %368, %370 : vector<8x256xf32>
    %cst_280 = arith.constant 0.000000e+00 : f32
    %372 = vector.broadcast %cst_280 : f32 to vector<8x256xf32>
    %373 = arith.maximumf %371, %372 : vector<8x256xf32>
    %374 = arith.truncf %373 : vector<8x256xf32> to vector<8x256xbf16>
    %c2_281 = arith.constant 2 : index
    %c0_282 = arith.constant 0 : index
    %c0_283 = arith.constant 0 : index
    %375 = vector.load %arg6[%c2_281, %c0_282, %c0_283] : memref<5x256x128xbf16, #tpu.memory_space<vmem>>, vector<1x256x128xbf16>
    %376 = vector.shape_cast %375 : vector<1x256x128xbf16> to vector<256x128xbf16>
    %cst_284 = arith.constant dense<0.000000e+00> : vector<8x128xf32>
    %377 = tpu.matmul %374, %376, %cst_284 {dimension_numbers = #tpu.dot_dimension_numbers<[1], [0], [0], [1], [0, 0, 1, 1], [], []>} : vector<8x256xbf16>, vector<256x128xbf16>, vector<8x128xf32> -> vector<8x128xf32>
    %378 = arith.addf %330, %377 : vector<8x128xf32>
    %c48_285 = arith.constant 48 : index
    %c0_286 = arith.constant 0 : index
    %379 = vector.load %arg11[%c48_285, %c0_286] : memref<104x256xf32, #tpu.memory_space<vmem>>, vector<8x256xf32>
    %380 = arith.truncf %379 : vector<8x256xf32> to vector<8x256xbf16>
    %c0_287 = arith.constant 0 : index
    %c0_288 = arith.constant 0 : index
    %c0_289 = arith.constant 0 : index
    %381 = vector.load %arg4[%c0_287, %c0_288, %c0_289] : memref<3x256x512xbf16, #tpu.memory_space<vmem>>, vector<1x256x512xbf16>
    %382 = vector.shape_cast %381 : vector<1x256x512xbf16> to vector<256x512xbf16>
    %cst_290 = arith.constant dense<0.000000e+00> : vector<8x512xf32>
    %383 = tpu.matmul %380, %382, %cst_290 {dimension_numbers = #tpu.dot_dimension_numbers<[1], [0], [0], [1], [0, 0, 1, 1], [], []>} : vector<8x256xbf16>, vector<256x512xbf16>, vector<8x512xf32> -> vector<8x512xf32>
    %c56_291 = arith.constant 56 : index
    %c0_292 = arith.constant 0 : index
    %384 = vector.load %arg11[%c56_291, %c0_292] : memref<104x256xf32, #tpu.memory_space<vmem>>, vector<8x256xf32>
    %385 = arith.truncf %384 : vector<8x256xf32> to vector<8x256xbf16>
    %c1_293 = arith.constant 1 : index
    %c0_294 = arith.constant 0 : index
    %c0_295 = arith.constant 0 : index
    %386 = vector.load %arg4[%c1_293, %c0_294, %c0_295] : memref<3x256x512xbf16, #tpu.memory_space<vmem>>, vector<1x256x512xbf16>
    %387 = vector.shape_cast %386 : vector<1x256x512xbf16> to vector<256x512xbf16>
    %cst_296 = arith.constant dense<0.000000e+00> : vector<8x512xf32>
    %388 = tpu.matmul %385, %387, %cst_296 {dimension_numbers = #tpu.dot_dimension_numbers<[1], [0], [0], [1], [0, 0, 1, 1], [], []>} : vector<8x256xbf16>, vector<256x512xbf16>, vector<8x512xf32> -> vector<8x512xf32>
    %389 = arith.addf %383, %388 : vector<8x512xf32>
    %c64_297 = arith.constant 64 : index
    %c0_298 = arith.constant 0 : index
    %390 = vector.load %arg11[%c64_297, %c0_298] : memref<104x256xf32, #tpu.memory_space<vmem>>, vector<8x256xf32>
    %391 = arith.truncf %390 : vector<8x256xf32> to vector<8x256xbf16>
    %c2_299 = arith.constant 2 : index
    %c0_300 = arith.constant 0 : index
    %c0_301 = arith.constant 0 : index
    %392 = vector.load %arg4[%c2_299, %c0_300, %c0_301] : memref<3x256x512xbf16, #tpu.memory_space<vmem>>, vector<1x256x512xbf16>
    %393 = vector.shape_cast %392 : vector<1x256x512xbf16> to vector<256x512xbf16>
    %cst_302 = arith.constant dense<0.000000e+00> : vector<8x512xf32>
    %394 = tpu.matmul %391, %393, %cst_302 {dimension_numbers = #tpu.dot_dimension_numbers<[1], [0], [0], [1], [0, 0, 1, 1], [], []>} : vector<8x256xbf16>, vector<256x512xbf16>, vector<8x512xf32> -> vector<8x512xf32>
    %395 = arith.addf %389, %394 : vector<8x512xf32>
    %c56_303 = arith.constant 56 : index
    %c0_304 = arith.constant 0 : index
    %396 = vector.load %arg11[%c56_303, %c0_304] : memref<104x256xf32, #tpu.memory_space<vmem>>, vector<8x256xf32>
    %397 = arith.truncf %396 : vector<8x256xf32> to vector<8x256xbf16>
    %c0_305 = arith.constant 0 : index
    %c0_306 = arith.constant 0 : index
    %c0_307 = arith.constant 0 : index
    %398 = vector.load %arg4[%c0_305, %c0_306, %c0_307] : memref<3x256x512xbf16, #tpu.memory_space<vmem>>, vector<1x256x512xbf16>
    %399 = vector.shape_cast %398 : vector<1x256x512xbf16> to vector<256x512xbf16>
    %cst_308 = arith.constant dense<0.000000e+00> : vector<8x512xf32>
    %400 = tpu.matmul %397, %399, %cst_308 {dimension_numbers = #tpu.dot_dimension_numbers<[1], [0], [0], [1], [0, 0, 1, 1], [], []>} : vector<8x256xbf16>, vector<256x512xbf16>, vector<8x512xf32> -> vector<8x512xf32>
    %c64_309 = arith.constant 64 : index
    %c0_310 = arith.constant 0 : index
    %401 = vector.load %arg11[%c64_309, %c0_310] : memref<104x256xf32, #tpu.memory_space<vmem>>, vector<8x256xf32>
    %402 = arith.truncf %401 : vector<8x256xf32> to vector<8x256xbf16>
    %c1_311 = arith.constant 1 : index
    %c0_312 = arith.constant 0 : index
    %c0_313 = arith.constant 0 : index
    %403 = vector.load %arg4[%c1_311, %c0_312, %c0_313] : memref<3x256x512xbf16, #tpu.memory_space<vmem>>, vector<1x256x512xbf16>
    %404 = vector.shape_cast %403 : vector<1x256x512xbf16> to vector<256x512xbf16>
    %cst_314 = arith.constant dense<0.000000e+00> : vector<8x512xf32>
    %405 = tpu.matmul %402, %404, %cst_314 {dimension_numbers = #tpu.dot_dimension_numbers<[1], [0], [0], [1], [0, 0, 1, 1], [], []>} : vector<8x256xbf16>, vector<256x512xbf16>, vector<8x512xf32> -> vector<8x512xf32>
    %406 = arith.addf %400, %405 : vector<8x512xf32>
    %c72_315 = arith.constant 72 : index
    %c0_316 = arith.constant 0 : index
    %407 = vector.load %arg11[%c72_315, %c0_316] : memref<104x256xf32, #tpu.memory_space<vmem>>, vector<8x256xf32>
    %408 = arith.truncf %407 : vector<8x256xf32> to vector<8x256xbf16>
    %c2_317 = arith.constant 2 : index
    %c0_318 = arith.constant 0 : index
    %c0_319 = arith.constant 0 : index
    %409 = vector.load %arg4[%c2_317, %c0_318, %c0_319] : memref<3x256x512xbf16, #tpu.memory_space<vmem>>, vector<1x256x512xbf16>
    %410 = vector.shape_cast %409 : vector<1x256x512xbf16> to vector<256x512xbf16>
    %cst_320 = arith.constant dense<0.000000e+00> : vector<8x512xf32>
    %411 = tpu.matmul %408, %410, %cst_320 {dimension_numbers = #tpu.dot_dimension_numbers<[1], [0], [0], [1], [0, 0, 1, 1], [], []>} : vector<8x256xbf16>, vector<256x512xbf16>, vector<8x512xf32> -> vector<8x512xf32>
    %412 = arith.addf %406, %411 : vector<8x512xf32>
    %413 = arith.maximumf %395, %412 : vector<8x512xf32>
    %414 = vector.extract_strided_slice %413 {offsets = [0, 0], sizes = [8, 256], strides = [1, 1]} : vector<8x512xf32> to vector<8x256xf32>
    %415 = vector.extract_strided_slice %413 {offsets = [0, 256], sizes = [8, 256], strides = [1, 1]} : vector<8x512xf32> to vector<8x256xf32>
    %416 = arith.maximumf %414, %415 : vector<8x256xf32>
    %c0_321 = arith.constant 0 : index
    %c0_322 = arith.constant 0 : index
    %417 = vector.load %arg5[%c0_321, %c0_322] : memref<1x256xf32, #tpu.memory_space<vmem>>, vector<1x256xf32>
    %418 = vector.broadcast %417 : vector<1x256xf32> to vector<8x256xf32>
    %419 = arith.addf %416, %418 : vector<8x256xf32>
    %cst_323 = arith.constant 0.000000e+00 : f32
    %420 = vector.broadcast %cst_323 : f32 to vector<8x256xf32>
    %421 = arith.maximumf %419, %420 : vector<8x256xf32>
    %422 = arith.truncf %421 : vector<8x256xf32> to vector<8x256xbf16>
    %c3 = arith.constant 3 : index
    %c0_324 = arith.constant 0 : index
    %c0_325 = arith.constant 0 : index
    %423 = vector.load %arg6[%c3, %c0_324, %c0_325] : memref<5x256x128xbf16, #tpu.memory_space<vmem>>, vector<1x256x128xbf16>
    %424 = vector.shape_cast %423 : vector<1x256x128xbf16> to vector<256x128xbf16>
    %cst_326 = arith.constant dense<0.000000e+00> : vector<8x128xf32>
    %425 = tpu.matmul %422, %424, %cst_326 {dimension_numbers = #tpu.dot_dimension_numbers<[1], [0], [0], [1], [0, 0, 1, 1], [], []>} : vector<8x256xbf16>, vector<256x128xbf16>, vector<8x128xf32> -> vector<8x128xf32>
    %426 = arith.addf %378, %425 : vector<8x128xf32>
    %c64_327 = arith.constant 64 : index
    %c0_328 = arith.constant 0 : index
    %427 = vector.load %arg11[%c64_327, %c0_328] : memref<104x256xf32, #tpu.memory_space<vmem>>, vector<8x256xf32>
    %428 = arith.truncf %427 : vector<8x256xf32> to vector<8x256xbf16>
    %c0_329 = arith.constant 0 : index
    %c0_330 = arith.constant 0 : index
    %c0_331 = arith.constant 0 : index
    %429 = vector.load %arg4[%c0_329, %c0_330, %c0_331] : memref<3x256x512xbf16, #tpu.memory_space<vmem>>, vector<1x256x512xbf16>
    %430 = vector.shape_cast %429 : vector<1x256x512xbf16> to vector<256x512xbf16>
    %cst_332 = arith.constant dense<0.000000e+00> : vector<8x512xf32>
    %431 = tpu.matmul %428, %430, %cst_332 {dimension_numbers = #tpu.dot_dimension_numbers<[1], [0], [0], [1], [0, 0, 1, 1], [], []>} : vector<8x256xbf16>, vector<256x512xbf16>, vector<8x512xf32> -> vector<8x512xf32>
    %c72_333 = arith.constant 72 : index
    %c0_334 = arith.constant 0 : index
    %432 = vector.load %arg11[%c72_333, %c0_334] : memref<104x256xf32, #tpu.memory_space<vmem>>, vector<8x256xf32>
    %433 = arith.truncf %432 : vector<8x256xf32> to vector<8x256xbf16>
    %c1_335 = arith.constant 1 : index
    %c0_336 = arith.constant 0 : index
    %c0_337 = arith.constant 0 : index
    %434 = vector.load %arg4[%c1_335, %c0_336, %c0_337] : memref<3x256x512xbf16, #tpu.memory_space<vmem>>, vector<1x256x512xbf16>
    %435 = vector.shape_cast %434 : vector<1x256x512xbf16> to vector<256x512xbf16>
    %cst_338 = arith.constant dense<0.000000e+00> : vector<8x512xf32>
    %436 = tpu.matmul %433, %435, %cst_338 {dimension_numbers = #tpu.dot_dimension_numbers<[1], [0], [0], [1], [0, 0, 1, 1], [], []>} : vector<8x256xbf16>, vector<256x512xbf16>, vector<8x512xf32> -> vector<8x512xf32>
    %437 = arith.addf %431, %436 : vector<8x512xf32>
    %c80_339 = arith.constant 80 : index
    %c0_340 = arith.constant 0 : index
    %438 = vector.load %arg11[%c80_339, %c0_340] : memref<104x256xf32, #tpu.memory_space<vmem>>, vector<8x256xf32>
    %439 = arith.truncf %438 : vector<8x256xf32> to vector<8x256xbf16>
    %c2_341 = arith.constant 2 : index
    %c0_342 = arith.constant 0 : index
    %c0_343 = arith.constant 0 : index
    %440 = vector.load %arg4[%c2_341, %c0_342, %c0_343] : memref<3x256x512xbf16, #tpu.memory_space<vmem>>, vector<1x256x512xbf16>
    %441 = vector.shape_cast %440 : vector<1x256x512xbf16> to vector<256x512xbf16>
    %cst_344 = arith.constant dense<0.000000e+00> : vector<8x512xf32>
    %442 = tpu.matmul %439, %441, %cst_344 {dimension_numbers = #tpu.dot_dimension_numbers<[1], [0], [0], [1], [0, 0, 1, 1], [], []>} : vector<8x256xbf16>, vector<256x512xbf16>, vector<8x512xf32> -> vector<8x512xf32>
    %443 = arith.addf %437, %442 : vector<8x512xf32>
    %c72_345 = arith.constant 72 : index
    %c0_346 = arith.constant 0 : index
    %444 = vector.load %arg11[%c72_345, %c0_346] : memref<104x256xf32, #tpu.memory_space<vmem>>, vector<8x256xf32>
    %445 = arith.truncf %444 : vector<8x256xf32> to vector<8x256xbf16>
    %c0_347 = arith.constant 0 : index
    %c0_348 = arith.constant 0 : index
    %c0_349 = arith.constant 0 : index
    %446 = vector.load %arg4[%c0_347, %c0_348, %c0_349] : memref<3x256x512xbf16, #tpu.memory_space<vmem>>, vector<1x256x512xbf16>
    %447 = vector.shape_cast %446 : vector<1x256x512xbf16> to vector<256x512xbf16>
    %cst_350 = arith.constant dense<0.000000e+00> : vector<8x512xf32>
    %448 = tpu.matmul %445, %447, %cst_350 {dimension_numbers = #tpu.dot_dimension_numbers<[1], [0], [0], [1], [0, 0, 1, 1], [], []>} : vector<8x256xbf16>, vector<256x512xbf16>, vector<8x512xf32> -> vector<8x512xf32>
    %c80_351 = arith.constant 80 : index
    %c0_352 = arith.constant 0 : index
    %449 = vector.load %arg11[%c80_351, %c0_352] : memref<104x256xf32, #tpu.memory_space<vmem>>, vector<8x256xf32>
    %450 = arith.truncf %449 : vector<8x256xf32> to vector<8x256xbf16>
    %c1_353 = arith.constant 1 : index
    %c0_354 = arith.constant 0 : index
    %c0_355 = arith.constant 0 : index
    %451 = vector.load %arg4[%c1_353, %c0_354, %c0_355] : memref<3x256x512xbf16, #tpu.memory_space<vmem>>, vector<1x256x512xbf16>
    %452 = vector.shape_cast %451 : vector<1x256x512xbf16> to vector<256x512xbf16>
    %cst_356 = arith.constant dense<0.000000e+00> : vector<8x512xf32>
    %453 = tpu.matmul %450, %452, %cst_356 {dimension_numbers = #tpu.dot_dimension_numbers<[1], [0], [0], [1], [0, 0, 1, 1], [], []>} : vector<8x256xbf16>, vector<256x512xbf16>, vector<8x512xf32> -> vector<8x512xf32>
    %454 = arith.addf %448, %453 : vector<8x512xf32>
    %c88_357 = arith.constant 88 : index
    %c0_358 = arith.constant 0 : index
    %455 = vector.load %arg11[%c88_357, %c0_358] : memref<104x256xf32, #tpu.memory_space<vmem>>, vector<8x256xf32>
    %456 = arith.truncf %455 : vector<8x256xf32> to vector<8x256xbf16>
    %c2_359 = arith.constant 2 : index
    %c0_360 = arith.constant 0 : index
    %c0_361 = arith.constant 0 : index
    %457 = vector.load %arg4[%c2_359, %c0_360, %c0_361] : memref<3x256x512xbf16, #tpu.memory_space<vmem>>, vector<1x256x512xbf16>
    %458 = vector.shape_cast %457 : vector<1x256x512xbf16> to vector<256x512xbf16>
    %cst_362 = arith.constant dense<0.000000e+00> : vector<8x512xf32>
    %459 = tpu.matmul %456, %458, %cst_362 {dimension_numbers = #tpu.dot_dimension_numbers<[1], [0], [0], [1], [0, 0, 1, 1], [], []>} : vector<8x256xbf16>, vector<256x512xbf16>, vector<8x512xf32> -> vector<8x512xf32>
    %460 = arith.addf %454, %459 : vector<8x512xf32>
    %461 = arith.maximumf %443, %460 : vector<8x512xf32>
    %462 = vector.extract_strided_slice %461 {offsets = [0, 0], sizes = [8, 256], strides = [1, 1]} : vector<8x512xf32> to vector<8x256xf32>
    %463 = vector.extract_strided_slice %461 {offsets = [0, 256], sizes = [8, 256], strides = [1, 1]} : vector<8x512xf32> to vector<8x256xf32>
    %464 = arith.maximumf %462, %463 : vector<8x256xf32>
    %c0_363 = arith.constant 0 : index
    %c0_364 = arith.constant 0 : index
    %465 = vector.load %arg5[%c0_363, %c0_364] : memref<1x256xf32, #tpu.memory_space<vmem>>, vector<1x256xf32>
    %466 = vector.broadcast %465 : vector<1x256xf32> to vector<8x256xf32>
    %467 = arith.addf %464, %466 : vector<8x256xf32>
    %cst_365 = arith.constant 0.000000e+00 : f32
    %468 = vector.broadcast %cst_365 : f32 to vector<8x256xf32>
    %469 = arith.maximumf %467, %468 : vector<8x256xf32>
    %470 = arith.truncf %469 : vector<8x256xf32> to vector<8x256xbf16>
    %c4 = arith.constant 4 : index
    %c0_366 = arith.constant 0 : index
    %c0_367 = arith.constant 0 : index
    %471 = vector.load %arg6[%c4, %c0_366, %c0_367] : memref<5x256x128xbf16, #tpu.memory_space<vmem>>, vector<1x256x128xbf16>
    %472 = vector.shape_cast %471 : vector<1x256x128xbf16> to vector<256x128xbf16>
    %cst_368 = arith.constant dense<0.000000e+00> : vector<8x128xf32>
    %473 = tpu.matmul %470, %472, %cst_368 {dimension_numbers = #tpu.dot_dimension_numbers<[1], [0], [0], [1], [0, 0, 1, 1], [], []>} : vector<8x256xbf16>, vector<256x128xbf16>, vector<8x128xf32> -> vector<8x128xf32>
    %474 = arith.addf %426, %473 : vector<8x128xf32>
    %c0_369 = arith.constant 0 : index
    %c0_370 = arith.constant 0 : index
    %475 = vector.load %arg7[%c0_369, %c0_370] : memref<1x128xf32, #tpu.memory_space<vmem>>, vector<1x128xf32>
    %476 = vector.broadcast %475 : vector<1x128xf32> to vector<8x128xf32>
    %477 = arith.addf %474, %476 : vector<8x128xf32>
    %cst_371 = arith.constant 0.000000e+00 : f32
    %478 = vector.broadcast %cst_371 : f32 to vector<8x128xf32>
    %479 = arith.maximumf %477, %478 : vector<8x128xf32>
    %480 = arith.truncf %479 : vector<8x128xf32> to vector<8x128xbf16>
    %c0_372 = arith.constant 0 : index
    %c0_373 = arith.constant 0 : index
    %481 = vector.load %arg8[%c0_372, %c0_373] : memref<128x10xbf16, #tpu.memory_space<vmem>>, vector<128x10xbf16>
    %cst_374 = arith.constant dense<0.000000e+00> : vector<8x10xf32>
    %482 = tpu.matmul %480, %481, %cst_374 {dimension_numbers = #tpu.dot_dimension_numbers<[1], [0], [0], [1], [0, 0, 1, 1], [], []>} : vector<8x128xbf16>, vector<128x10xbf16>, vector<8x10xf32> -> vector<8x10xf32>
    %c0_375 = arith.constant 0 : index
    %c0_376 = arith.constant 0 : index
    %483 = vector.load %arg9[%c0_375, %c0_376] : memref<1x10xf32, #tpu.memory_space<vmem>>, vector<1x10xf32>
    %484 = vector.broadcast %483 : vector<1x10xf32> to vector<8x10xf32>
    %485 = arith.addf %482, %484 : vector<8x10xf32>
    %c0_377 = arith.constant 0 : index
    %c0_378 = arith.constant 0 : index
    %486 = vector.load %arg10[%c0_377, %c0_378] : memref<8x10xf32, #tpu.memory_space<vmem>>, vector<8x10xf32>
    tpu.vector_store %arg10[%c0_377, %c0_378], %485 {strides = array<i32>} : memref<8x10xf32, #tpu.memory_space<vmem>>, vector<8x10xf32>,
    return
  }
  func.func @transform_0(%arg0: i32) -> (i32, i32) {
    %c0_i32 = arith.constant 0 : i32
    %c0_i32_0 = arith.constant 0 : i32
    return %arg0, %c0_i32 : i32, i32
  }
  func.func @transform_1(%arg0: i32) -> (i32, i32) {
    %c0_i32 = arith.constant 0 : i32
    %c0_i32_0 = arith.constant 0 : i32
    %c0_i32_1 = arith.constant 0 : i32
    return %c0_i32, %c0_i32_0 : i32, i32
  }
  func.func @transform_2(%arg0: i32) -> (i32, i32) {
    %c0_i32 = arith.constant 0 : i32
    %c0_i32_0 = arith.constant 0 : i32
    %c0_i32_1 = arith.constant 0 : i32
    return %c0_i32, %c0_i32_0 : i32, i32
  }
  func.func @transform_3(%arg0: i32) -> (i32, i32, i32) {
    %c0_i32 = arith.constant 0 : i32
    %c0_i32_0 = arith.constant 0 : i32
    %c0_i32_1 = arith.constant 0 : i32
    %c0_i32_2 = arith.constant 0 : i32
    return %c0_i32, %c0_i32_0, %c0_i32_1 : i32, i32, i32
  }
  func.func @transform_4(%arg0: i32) -> (i32, i32) {
    %c0_i32 = arith.constant 0 : i32
    %c0_i32_0 = arith.constant 0 : i32
    %c0_i32_1 = arith.constant 0 : i32
    return %c0_i32, %c0_i32_0 : i32, i32
  }
  func.func @transform_5(%arg0: i32) -> (i32, i32, i32) {
    %c0_i32 = arith.constant 0 : i32
    %c0_i32_0 = arith.constant 0 : i32
    %c0_i32_1 = arith.constant 0 : i32
    %c0_i32_2 = arith.constant 0 : i32
    return %c0_i32, %c0_i32_0, %c0_i32_1 : i32, i32, i32
  }
  func.func @transform_6(%arg0: i32) -> (i32, i32) {
    %c0_i32 = arith.constant 0 : i32
    %c0_i32_0 = arith.constant 0 : i32
    %c0_i32_1 = arith.constant 0 : i32
    return %c0_i32, %c0_i32_0 : i32, i32
  }
  func.func @transform_7(%arg0: i32) -> (i32, i32) {
    %c0_i32 = arith.constant 0 : i32
    %c0_i32_0 = arith.constant 0 : i32
    %c0_i32_1 = arith.constant 0 : i32
    return %c0_i32, %c0_i32_0 : i32, i32
  }
  func.func @transform_8(%arg0: i32) -> (i32, i32) {
    %c0_i32 = arith.constant 0 : i32
    %c0_i32_0 = arith.constant 0 : i32
    %c0_i32_1 = arith.constant 0 : i32
    return %c0_i32, %c0_i32_0 : i32, i32
  }
  func.func @transform_9(%arg0: i32) -> (i32, i32) {
    %c0_i32 = arith.constant 0 : i32
    %c0_i32_0 = arith.constant 0 : i32
    return %arg0, %c0_i32 : i32, i32
  }
}

</mosaic_0001>

<llo_original>
// kernel: cnn_forward.1
$region0: #{cnn_forward.1}
  #allocation0 [shape = 'u32[]', space=smem, size = 0x4, offset = 0x4, fixed_abs, tag = 'smem constant byte address 0x4 - core index']
  #allocation1 [shape = 'u32[72,128]{1,0:T(1,128)}', space=vmem, size = 0x9000, scoped, tag = 'internal scratch']
  #allocation2 [shape = 'f32[104,256]{1,0:T(8,128)}', space=vmem, size = 0x1a000, scoped, tag = 'scratch operand']
  %s0 = inlined_call_operand.vmem [shape: f32[8,784], index: 0, kind: input, shape index: {}]
  %s1 = inlined_call_operand.vmem [shape: bf16[84,512], index: 1, kind: input, shape index: {}]
  %s2 = inlined_call_operand.vmem [shape: f32[1,256], index: 2, kind: input, shape index: {}]
  %s3 = inlined_call_operand.hbm [shape: bf16[3,256,512], index: 3, kind: input, shape index: {}]
  %s4 = inlined_call_operand.vmem [shape: f32[1,256], index: 4, kind: input, shape index: {}]
  %s5 = inlined_call_operand.hbm [shape: bf16[5,256,128], index: 5, kind: input, shape index: {}]
  %s6 = inlined_call_operand.vmem [shape: f32[1,128], index: 6, kind: input, shape index: {}]
  %s7 = inlined_call_operand.vmem [shape: bf16[128,10], index: 7, kind: input, shape index: {}]
  %s8 = inlined_call_operand.vmem [shape: f32[1,10], index: 8, kind: input, shape index: {}]
  %s9 = inlined_call_operand.vmem [shape: f32[8,10], index: 9, kind: output, shape index: {}]
  %s10 = sld [smem:[#allocation0]]
  $region54: #{cnn_forward.1} parent=0
    _
  %s12 = ssub.s32 1, %s10
  %s13 = scalar_select 0, %s12, %s10
  $region1: #{cnn_forward.1} parent=0
    #allocation3 [shape = 'u8[786432]{0}', space=vmem, size = 0xc0000, scoped, tag = 'input window, operand 3, single buffered']
    #allocation4 [shape = 's32[1]{0}', space=sflag, size = 0x4, scoped, tag = 'scoped memory for cnn_forward.1']
    #allocation5 [shape = 'u8[327680]{0}', space=vmem, size = 0x50000, scoped, tag = 'input window, operand 5, single buffered']
    #allocation6 [shape = 's32[1]{0}', space=sflag, size = 0x4, scoped, tag = 'scoped memory for cnn_forward.1']
    %14 = vsyncpa [#allocation4], 0
    %15 = vsyncpa [#allocation6], 0
    // Predicated region
    $region2: #{cnn_forward.1} parent=1 // pred_check
      _
    $region3: #{cnn_forward.1} parent=1 // pred_check_branch
      %17 = sbr.rel (0) target = $region5
    $region4: #{cnn_forward.1} parent=1 // pred_region
      _
    $region5: #{cnn_forward.1} parent=1 // pred_fallthru
      _
    // Predicated region
    $region6: #{cnn_forward.1} parent=1 // pred_check
      _
    $region7: #{cnn_forward.1} parent=1 // pred_check_branch
      %19 = sbr.rel (0) target = $region9
    $region8: #{cnn_forward.1} parent=1 // pred_region
      _
    $region9: #{cnn_forward.1} parent=1 // pred_fallthru
      _
    // Predicated region
    $region10: #{cnn_forward.1} parent=1 // pred_check
      _
    $region11: #{cnn_forward.1} parent=1 // pred_check_branch
      %21 = sbr.rel (0) target = $region13
    $region12: #{cnn_forward.1} parent=1 // pred_region
      _
    $region13: #{cnn_forward.1} parent=1 // pred_fallthru
      _
    // Predicated region
    $region14: #{cnn_forward.1} parent=1 // pred_check
      _
    $region15: #{cnn_forward.1} parent=1 // pred_check_branch
      %23 = sbr.rel (0) target = $region17
    $region16: #{cnn_forward.1} parent=1 // pred_region
      %25 = vsyncadd [#allocation4], 0
      %s26 = sshll.u32 %s3, 4
      %s27 = int_to_ptr.hbm [resolvable:$true] %s26
      %s28 = sshll.u32 [#allocation3], 4
      %s29 = int_to_ptr.vmem [resolvable:$true] %s28
      %34 = dma.hbm_to_vmem [thread:$0]  %s27, 24576, %s29, [#allocation4], 256, 256, 16
    $region17: #{cnn_forward.1} parent=1 // pred_fallthru
      _
    // Predicated region
    $region18: #{cnn_forward.1} parent=1 // pred_check
      _
    $region19: #{cnn_forward.1} parent=1 // pred_check_branch
      %36 = sbr.rel (0) target = $region21
    $region20: #{cnn_forward.1} parent=1 // pred_region
      _
    $region21: #{cnn_forward.1} parent=1 // pred_fallthru
      _
    // Predicated region
    $region22: #{cnn_forward.1} parent=1 // pred_check
      _
    $region23: #{cnn_forward.1} parent=1 // pred_check_branch
      %38 = sbr.rel (0) target = $region25
    $region24: #{cnn_forward.1} parent=1 // pred_region
      %40 = vsyncadd [#allocation6], 0
      %s41 = sshll.u32 %s5, 4
      %s42 = int_to_ptr.hbm [resolvable:$true] %s41
      %s43 = sshll.u32 [#allocation5], 4
      %s44 = int_to_ptr.vmem [resolvable:$true] %s43
      %49 = dma.hbm_to_vmem [thread:$0]  %s42, 10240, %s44, [#allocation6], 64, 64, 4
    $region25: #{cnn_forward.1} parent=1 // pred_fallthru
      _
    // Predicated region
    $region26: #{cnn_forward.1} parent=1 // pred_check
      _
    $region27: #{cnn_forward.1} parent=1 // pred_check_branch
      %51 = sbr.rel (0) target = $region29
    $region28: #{cnn_forward.1} parent=1 // pred_region
      _
    $region29: #{cnn_forward.1} parent=1 // pred_fallthru
      _
    // Predicated region
    $region30: #{cnn_forward.1} parent=1 // pred_check
      _
    $region31: #{cnn_forward.1} parent=1 // pred_check_branch
      %53 = sbr.rel (0) target = $region33
    $region32: #{cnn_forward.1} parent=1 // pred_region
      _
    $region33: #{cnn_forward.1} parent=1 // pred_fallthru
      _
    // Predicated region
    $region34: #{cnn_forward.1} parent=1 // pred_check
      _
    $region35: #{cnn_forward.1} parent=1 // pred_check_branch
      %55 = sbr.rel (0) target = $region37
    $region36: #{cnn_forward.1} parent=1 // pred_region
      _
    $region37: #{cnn_forward.1} parent=1 // pred_fallthru
      _
    // Predicated region
    $region38: #{cnn_forward.1} parent=1 // pred_check
      _
    $region39: #{cnn_forward.1} parent=1 // pred_check_branch
      %57 = sbr.rel (0) target = $region41
    $region40: #{cnn_forward.1} parent=1 // pred_region
      %59 = dma.done [#allocation4], 24576
    $region41: #{cnn_forward.1} parent=1 // pred_fallthru
      _
    // Predicated region
    $region42: #{cnn_forward.1} parent=1 // pred_check
      _
    $region43: #{cnn_forward.1} parent=1 // pred_check_branch
      %61 = sbr.rel (0) target = $region45
    $region44: #{cnn_forward.1} parent=1 // pred_region
      %63 = dma.done [#allocation6], 10240
    $region45: #{cnn_forward.1} parent=1 // pred_fallthru
      _
    %v65 = vld [vmem:[%s0] sm:$0xff]
    %v66 = vpack.c.bf16 %v65, %v65
    %v67 = vld [vmem:[%s1] sm:$0xff]
    %v68 = vld [vmem:[%s1 + $0x8] sm:$0xff]
    %v69 = vld [vmem:[%s1 + $0x10] sm:$0xff]
    %v70 = vld [vmem:[%s1 + $0x18] sm:$0xff]
    %v71 = vld [vmem:[%s1 + $0x20] sm:$0xff]
    %v72 = vld [vmem:[%s1 + $0x28] sm:$0xff]
    %v73 = vld [vmem:[%s1 + $0x30] sm:$0xff]
    %v74 = vld [vmem:[%s1 + $0x38] sm:$0xff]
    %v75 = vld [vmem:[%s1 + $0x40] sm:$0xff]
    %v76 = vld [vmem:[%s1 + $0x48] sm:$0xff]
    %v77 = vld [vmem:[%s1 + $0x50] sm:$0xff]
    %v78 = vld [vmem:[%s1 + $0x58] sm:$0xff]
    %v79 = vld [vmem:[%s1 + $0x60] sm:$0xff]
    %v80 = vld [vmem:[%s1 + $0x68] sm:$0xff]
    %v81 = vld [vmem:[%s1 + $0x70] sm:$0xff]
    %v82 = vld [vmem:[%s1 + $0x78] sm:$0xff]
    %v83 = vld [vmem:[%s1 + $0x80] sm:$0xff]
    %v84 = vld [vmem:[%s1 + $0x88] sm:$0xff]
    %v85 = vld [vmem:[%s1 + $0x90] sm:$0xff]
    %v86 = vld [vmem:[%s1 + $0x98] sm:$0xff]
    %v87 = vld [vmem:[%s1 + $0xa0] sm:$0x33]
    %v88 = vld [vmem:[%s1 + $0xa8] sm:$0x33]
    %v111 = vunpack.c.l.b16 %v67
    %v112 = vunpack.c.h.b16 %v67
    %v113 = vunpack.c.l.b16 %v68
    %v114 = vunpack.c.h.b16 %v68
    %v115 = vunpack.c.l.b16 %v69
    %v116 = vunpack.c.h.b16 %v69
    %v117 = vunpack.c.l.b16 %v70
    %v118 = vunpack.c.h.b16 %v70
    %v119 = vunpack.c.l.b16 %v71
    %v120 = vunpack.c.h.b16 %v71
    %v121 = vunpack.c.l.b16 %v72
    %v122 = vunpack.c.h.b16 %v72
    %v123 = vunpack.c.l.b16 %v73
    %v124 = vunpack.c.h.b16 %v73
    %v125 = vunpack.c.l.b16 %v74
    %v126 = vunpack.c.h.b16 %v74
    %v127 = vunpack.c.l.b16 %v75
    %v128 = vunpack.c.h.b16 %v75
    %v129 = vunpack.c.l.b16 %v76
    %v130 = vunpack.c.h.b16 %v76
    %v131 = vunpack.c.l.b16 %v77
    %v132 = vunpack.c.h.b16 %v77
    %v133 = vunpack.c.l.b16 %v78
    %v134 = vunpack.c.h.b16 %v78
    %v135 = vunpack.c.l.b16 %v79
    %v136 = vunpack.c.h.b16 %v79
    %v137 = vunpack.c.l.b16 %v80
    %v138 = vunpack.c.h.b16 %v80
    %v139 = vunpack.c.l.b16 %v81
    %v140 = vunpack.c.h.b16 %v81
    %v141 = vunpack.c.l.b16 %v82
    %v142 = vunpack.c.h.b16 %v82
    %v143 = vunpack.c.l.b16 %v83
    %v144 = vunpack.c.h.b16 %v83
    %v145 = vunpack.c.l.b16 %v84
    %v146 = vunpack.c.h.b16 %v84
    %v147 = vunpack.c.l.b16 %v85
    %v148 = vunpack.c.h.b16 %v85
    %v149 = vunpack.c.l.b16 %v86
    %v150 = vunpack.c.h.b16 %v86
    %v151 = vunpack.c.l.b16 %v87
    %v152 = vunpack.c.h.b16 %v87
    %v153 = vunpack.c.l.b16 %v88
    %v154 = vunpack.c.h.b16 %v88
    %v155 = vpack.c.b16 %v115, %v111
    %v156 = vpack.c.b16 %v116, %v112
    %v157 = vpack.c.b16 %v117, %v113
    %v158 = vpack.c.b16 %v118, %v114
    %v159 = vpack.c.b16 %v123, %v119
    %v160 = vpack.c.b16 %v124, %v120
    %v161 = vpack.c.b16 %v125, %v121
    %v162 = vpack.c.b16 %v126, %v122
    %v163 = vpack.c.b16 %v131, %v127
    %v164 = vpack.c.b16 %v132, %v128
    %v165 = vpack.c.b16 %v133, %v129
    %v166 = vpack.c.b16 %v134, %v130
    %v167 = vpack.c.b16 %v139, %v135
    %v168 = vpack.c.b16 %v140, %v136
    %v169 = vpack.c.b16 %v141, %v137
    %v170 = vpack.c.b16 %v142, %v138
    %v171 = vpack.c.b16 %v147, %v143
    %v172 = vpack.c.b16 %v148, %v144
    %v173 = vpack.c.b16 %v149, %v145
    %v174 = vpack.c.b16 %v150, %v146
    %v175 = vpack.c.b16 %v151, %v151
    %v176 = vpack.c.b16 %v152, %v152
    %v177 = vpack.c.b16 %v153, %v153
    %v178 = vpack.c.b16 %v154, %v154
    %vm199 = vcmask 687104
    %v201 = vsel %vm199, %v66, 0
    %vm203 = vcmask 1041408
    %v205 = vsel %vm203, %v175, 0
    %v208 = vsel %vm203, %v176, 0
    %v211 = vsel %vm203, %v177, 0
    %v214 = vsel %vm203, %v178, 0
    %216 = vmatpush.bf16.msra.mxu0 0
    %217 = vmatpush.bf16.msra.mxu0 0
    %218 = vmatpush.bf16.msra.mxu0 %v205
    %219 = vmatpush.bf16.msra.mxu0 %v171
    %220 = vmatpush.bf16.msra.mxu0 %v167
    %221 = vmatpush.bf16.msra.mxu0 %v163
    %222 = vmatpush.bf16.msra.mxu0 %v159
    %223 = vmatpush.bf16.msra.mxu0 %v155
    %224 = vmatmul.bf16.gmra.mxu0 %v201
    %v225 = vpop.f32.mrf.mxu0
    %v226 = vadd.f32 0.0, %v225
    %v227 = vpop.f32.mrf.mxu0
    %228 = vdwg.mxu0
    %229 = vmatpush.bf16.msra.mxu0 0
    %230 = vmatpush.bf16.msra.mxu0 0
    %231 = vmatpush.bf16.msra.mxu0 %v208
    %232 = vmatpush.bf16.msra.mxu0 %v172
    %233 = vmatpush.bf16.msra.mxu0 %v168
    %234 = vmatpush.bf16.msra.mxu0 %v164
    %235 = vmatpush.bf16.msra.mxu0 %v160
    %236 = vmatpush.bf16.msra.mxu0 %v156
    %237 = vmatmul.bf16.gmra.mxu0 %v201
    %v238 = vpop.f32.mrf.mxu0
    %v239 = vadd.f32 0.0, %v238
    %v240 = vpop.f32.mrf.mxu0
    %241 = vdwg.mxu0
    %242 = vmatpush.bf16.msra.mxu0 0
    %243 = vmatpush.bf16.msra.mxu0 0
    %244 = vmatpush.bf16.msra.mxu0 %v211
    %245 = vmatpush.bf16.msra.mxu0 %v173
    %246 = vmatpush.bf16.msra.mxu0 %v169
    %247 = vmatpush.bf16.msra.mxu0 %v165
    %248 = vmatpush.bf16.msra.mxu0 %v161
    %249 = vmatpush.bf16.msra.mxu0 %v157
    %250 = vmatmul.bf16.gmra.mxu0 %v201
    %v251 = vpop.f32.mrf.mxu0
    %v252 = vadd.f32 0.0, %v251
    %v253 = vpop.f32.mrf.mxu0
    %254 = vdwg.mxu0
    %255 = vmatpush.bf16.msra.mxu0 0
    %256 = vmatpush.bf16.msra.mxu0 0
    %257 = vmatpush.bf16.msra.mxu0 %v214
    %258 = vmatpush.bf16.msra.mxu0 %v174
    %259 = vmatpush.bf16.msra.mxu0 %v170
    %260 = vmatpush.bf16.msra.mxu0 %v166
    %261 = vmatpush.bf16.msra.mxu0 %v162
    %262 = vmatpush.bf16.msra.mxu0 %v158
    %263 = vmatmul.bf16.gmra.mxu0 %v201
    %v264 = vpop.f32.mrf.mxu0
    %v265 = vadd.f32 0.0, %v264
    %v266 = vpop.f32.mrf.mxu0
    %267 = vdwg.mxu0
    %269 = vrot.lane.b32.xlu0 %v66, 100
    %v270 = vpop.permute.xlu0 %269
    %v272 = vsel %vm199, %v270, 0
    %274 = vmatpush.bf16.msra.mxu0 0
    %275 = vmatpush.bf16.msra.mxu0 0
    %276 = vmatpush.bf16.msra.mxu0 %v205
    %277 = vmatpush.bf16.msra.mxu0 %v171
    %278 = vmatpush.bf16.msra.mxu0 %v167
    %279 = vmatpush.bf16.msra.mxu0 %v163
    %280 = vmatpush.bf16.msra.mxu0 %v159
    %281 = vmatpush.bf16.msra.mxu0 %v155
    %282 = vmatmul.bf16.gmra.mxu0 %v272
    %v283 = vpop.f32.mrf.mxu0
    %v284 = vadd.f32 0.0, %v283
    %v285 = vpop.f32.mrf.mxu0
    %286 = vdwg.mxu0
    %287 = vmatpush.bf16.msra.mxu0 0
    %288 = vmatpush.bf16.msra.mxu0 0
    %289 = vmatpush.bf16.msra.mxu0 %v208
    %290 = vmatpush.bf16.msra.mxu0 %v172
    %291 = vmatpush.bf16.msra.mxu0 %v168
    %292 = vmatpush.bf16.msra.mxu0 %v164
    %293 = vmatpush.bf16.msra.mxu0 %v160
    %294 = vmatpush.bf16.msra.mxu0 %v156
    %295 = vmatmul.bf16.gmra.mxu0 %v272
    %v296 = vpop.f32.mrf.mxu0
    %v297 = vadd.f32 0.0, %v296
    %v298 = vpop.f32.mrf.mxu0
    %299 = vdwg.mxu0
    %300 = vmatpush.bf16.msra.mxu0 0
    %301 = vmatpush.bf16.msra.mxu0 0
    %302 = vmatpush.bf16.msra.mxu0 %v211
    %303 = vmatpush.bf16.msra.mxu0 %v173
    %304 = vmatpush.bf16.msra.mxu0 %v169
    %305 = vmatpush.bf16.msra.mxu0 %v165
    %306 = vmatpush.bf16.msra.mxu0 %v161
    %307 = vmatpush.bf16.msra.mxu0 %v157
    %308 = vmatmul.bf16.gmra.mxu0 %v272
    %v309 = vpop.f32.mrf.mxu0
    %v310 = vadd.f32 0.0, %v309
    %v311 = vpop.f32.mrf.mxu0
    %312 = vdwg.mxu0
    %313 = vmatpush.bf16.msra.mxu0 0
    %314 = vmatpush.bf16.msra.mxu0 0
    %315 = vmatpush.bf16.msra.mxu0 %v214
    %316 = vmatpush.bf16.msra.mxu0 %v174
    %317 = vmatpush.bf16.msra.mxu0 %v170
    %318 = vmatpush.bf16.msra.mxu0 %v166
    %319 = vmatpush.bf16.msra.mxu0 %v162
    %320 = vmatpush.bf16.msra.mxu0 %v158
    %321 = vmatmul.bf16.gmra.mxu0 %v272
    %v322 = vpop.f32.mrf.mxu0
    %v323 = vadd.f32 0.0, %v322
    %v324 = vpop.f32.mrf.mxu0
    %325 = vdwg.mxu0
    %v326 = vmax.f32 %v226, %v284
    %v327 = vmax.f32 %v239, %v297
    %v328 = vmax.f32 %v252, %v310
    %v329 = vmax.f32 %v265, %v323
    %v330 = vmax.f32 %v326, %v328
    %v331 = vmax.f32 %v327, %v329
    %v332 = vld [vmem:[%s2] sm:$0x3]
    %v334 = vperm.slane %v332, 0
    %v335 = vperm.slane %v332, 1
    %v338 = vadd.f32 %v330, %v334
    %v339 = vadd.f32 %v331, %v335
    %v340 = vmax.f32 %v338, 0.0
    %v341 = vmax.f32 %v339, 0.0
    %342 = vst [vmem:[#allocation2] sm:$0xff] %v340
    %343 = vst [vmem:[#allocation2 + $0x8] sm:$0xff] %v341
    %v344 = vld [vmem:[%s0] sm:$0xff]
    %v345 = vld [vmem:[%s0 + $0x8] sm:$0xff]
    %v346 = vpack.c.bf16 %v344, %v344
    %v347 = vpack.c.bf16 %v345, %v345
    %v348 = vld [vmem:[%s1] sm:$0xff]
    %v349 = vld [vmem:[%s1 + $0x8] sm:$0xff]
    %v350 = vld [vmem:[%s1 + $0x10] sm:$0xff]
    %v351 = vld [vmem:[%s1 + $0x18] sm:$0xff]
    %v352 = vld [vmem:[%s1 + $0x20] sm:$0xff]
    %v353 = vld [vmem:[%s1 + $0x28] sm:$0xff]
    %v354 = vld [vmem:[%s1 + $0x30] sm:$0xff]
    %v355 = vld [vmem:[%s1 + $0x38] sm:$0xff]
    %v356 = vld [vmem:[%s1 + $0x40] sm:$0xff]
    %v357 = vld [vmem:[%s1 + $0x48] sm:$0xff]
    %v358 = vld [vmem:[%s1 + $0x50] sm:$0xff]
    %v359 = vld [vmem:[%s1 + $0x58] sm:$0xff]
    %v360 = vld [vmem:[%s1 + $0x60] sm:$0xff]
    %v361 = vld [vmem:[%s1 + $0x68] sm:$0xff]
    %v362 = vld [vmem:[%s1 + $0x70] sm:$0xff]
    %v363 = vld [vmem:[%s1 + $0x78] sm:$0xff]
    %v364 = vld [vmem:[%s1 + $0x80] sm:$0xff]
    %v365 = vld [vmem:[%s1 + $0x88] sm:$0xff]
    %v366 = vld [vmem:[%s1 + $0x90] sm:$0xff]
    %v367 = vld [vmem:[%s1 + $0x98] sm:$0xff]
    %v368 = vld [vmem:[%s1 + $0xa0] sm:$0x33]
    %v369 = vld [vmem:[%s1 + $0xa8] sm:$0x33]
    %372 = vrot.lane.b32.xlu0 %v346, 72
    %v373 = vpop.permute.xlu0 %372
    %374 = vrot.lane.b32.xlu0 %v347, 72
    %v375 = vpop.permute.xlu0 %374
    %vm376 = vcmask 588800
    %v377 = vsel %vm376, %v373, %v375
    %v400 = vunpack.c.l.b16 %v348
    %v401 = vunpack.c.h.b16 %v348
    %v402 = vunpack.c.l.b16 %v349
    %v403 = vunpack.c.h.b16 %v349
    %v404 = vunpack.c.l.b16 %v350
    %v405 = vunpack.c.h.b16 %v350
    %v406 = vunpack.c.l.b16 %v351
    %v407 = vunpack.c.h.b16 %v351
    %v408 = vunpack.c.l.b16 %v352
    %v409 = vunpack.c.h.b16 %v352
    %v410 = vunpack.c.l.b16 %v353
    %v411 = vunpack.c.h.b16 %v353
    %v412 = vunpack.c.l.b16 %v354
    %v413 = vunpack.c.h.b16 %v354
    %v414 = vunpack.c.l.b16 %v355
    %v415 = vunpack.c.h.b16 %v355
    %v416 = vunpack.c.l.b16 %v356
    %v417 = vunpack.c.h.b16 %v356
    %v418 = vunpack.c.l.b16 %v357
    %v419 = vunpack.c.h.b16 %v357
    %v420 = vunpack.c.l.b16 %v358
    %v421 = vunpack.c.h.b16 %v358
    %v422 = vunpack.c.l.b16 %v359
    %v423 = vunpack.c.h.b16 %v359
    %v424 = vunpack.c.l.b16 %v360
    %v425 = vunpack.c.h.b16 %v360
    %v426 = vunpack.c.l.b16 %v361
    %v427 = vunpack.c.h.b16 %v361
    %v428 = vunpack.c.l.b16 %v362
    %v429 = vunpack.c.h.b16 %v362
    %v430 = vunpack.c.l.b16 %v363
    %v431 = vunpack.c.h.b16 %v363
    %v432 = vunpack.c.l.b16 %v364
    %v433 = vunpack.c.h.b16 %v364
    %v434 = vunpack.c.l.b16 %v365
    %v435 = vunpack.c.h.b16 %v365
    %v436 = vunpack.c.l.b16 %v366
    %v437 = vunpack.c.h.b16 %v366
    %v438 = vunpack.c.l.b16 %v367
    %v439 = vunpack.c.h.b16 %v367
    %v440 = vunpack.c.l.b16 %v368
    %v441 = vunpack.c.h.b16 %v368
    %v442 = vunpack.c.l.b16 %v369
    %v443 = vunpack.c.h.b16 %v369
    %v444 = vpack.c.b16 %v404, %v400
    %v445 = vpack.c.b16 %v405, %v401
    %v446 = vpack.c.b16 %v406, %v402
    %v447 = vpack.c.b16 %v407, %v403
    %v448 = vpack.c.b16 %v412, %v408
    %v449 = vpack.c.b16 %v413, %v409
    %v450 = vpack.c.b16 %v414, %v410
    %v451 = vpack.c.b16 %v415, %v411
    %v452 = vpack.c.b16 %v420, %v416
    %v453 = vpack.c.b16 %v421, %v417
    %v454 = vpack.c.b16 %v422, %v418
    %v455 = vpack.c.b16 %v423, %v419
    %v456 = vpack.c.b16 %v428, %v424
    %v457 = vpack.c.b16 %v429, %v425
    %v458 = vpack.c.b16 %v430, %v426
    %v459 = vpack.c.b16 %v431, %v427
    %v460 = vpack.c.b16 %v436, %v432
    %v461 = vpack.c.b16 %v437, %v433
    %v462 = vpack.c.b16 %v438, %v434
    %v463 = vpack.c.b16 %v439, %v435
    %v464 = vpack.c.b16 %v440, %v440
    %v465 = vpack.c.b16 %v441, %v441
    %v466 = vpack.c.b16 %v442, %v442
    %v467 = vpack.c.b16 %v443, %v443
    %v489 = vsel %vm199, %v377, 0
    %v492 = vsel %vm203, %v464, 0
    %v495 = vsel %vm203, %v465, 0
    %v498 = vsel %vm203, %v466, 0
    %v501 = vsel %vm203, %v467, 0
    %503 = vmatpush.bf16.msra.mxu0 0
    %504 = vmatpush.bf16.msra.mxu0 0
    %505 = vmatpush.bf16.msra.mxu0 %v492
    %506 = vmatpush.bf16.msra.mxu0 %v460
    %507 = vmatpush.bf16.msra.mxu0 %v456
    %508 = vmatpush.bf16.msra.mxu0 %v452
    %509 = vmatpush.bf16.msra.mxu0 %v448
    %510 = vmatpush.bf16.msra.mxu0 %v444
    %511 = vmatmul.bf16.gmra.mxu0 %v489
    %v512 = vpop.f32.mrf.mxu0
    %v513 = vadd.f32 0.0, %v512
    %v514 = vpop.f32.mrf.mxu0
    %515 = vdwg.mxu0
    %516 = vmatpush.bf16.msra.mxu0 0
    %517 = vmatpush.bf16.msra.mxu0 0
    %518 = vmatpush.bf16.msra.mxu0 %v495
    %519 = vmatpush.bf16.msra.mxu0 %v461
    %520 = vmatpush.bf16.msra.mxu0 %v457
    %521 = vmatpush.bf16.msra.mxu0 %v453
    %522 = vmatpush.bf16.msra.mxu0 %v449
    %523 = vmatpush.bf16.msra.mxu0 %v445
    %524 = vmatmul.bf16.gmra.mxu0 %v489
    %v525 = vpop.f32.mrf.mxu0
    %v526 = vadd.f32 0.0, %v525
    %v527 = vpop.f32.mrf.mxu0
    %528 = vdwg.mxu0
    %529 = vmatpush.bf16.msra.mxu0 0
    %530 = vmatpush.bf16.msra.mxu0 0
    %531 = vmatpush.bf16.msra.mxu0 %v498
    %532 = vmatpush.bf16.msra.mxu0 %v462
    %533 = vmatpush.bf16.msra.mxu0 %v458
    %534 = vmatpush.bf16.msra.mxu0 %v454
    %535 = vmatpush.bf16.msra.mxu0 %v450
    %536 = vmatpush.bf16.msra.mxu0 %v446
    %537 = vmatmul.bf16.gmra.mxu0 %v489
    %v538 = vpop.f32.mrf.mxu0
    %v539 = vadd.f32 0.0, %v538
    %v540 = vpop.f32.mrf.mxu0
    %541 = vdwg.mxu0
    %542 = vmatpush.bf16.msra.mxu0 0
    %543 = vmatpush.bf16.msra.mxu0 0
    %544 = vmatpush.bf16.msra.mxu0 %v501
    %545 = vmatpush.bf16.msra.mxu0 %v463
    %546 = vmatpush.bf16.msra.mxu0 %v459
    %547 = vmatpush.bf16.msra.mxu0 %v455
    %548 = vmatpush.bf16.msra.mxu0 %v451
    %549 = vmatpush.bf16.msra.mxu0 %v447
    %550 = vmatmul.bf16.gmra.mxu0 %v489
    %v551 = vpop.f32.mrf.mxu0
    %v552 = vadd.f32 0.0, %v551
    %v553 = vpop.f32.mrf.mxu0
    %554 = vdwg.mxu0
    %555 = vrot.lane.b32.xlu0 %v346, 44
    %v556 = vpop.permute.xlu0 %555
    %557 = vrot.lane.b32.xlu0 %v347, 44
    %v558 = vpop.permute.xlu0 %557
    %vm559 = vcmask 359424
    %v560 = vsel %vm559, %v556, %v558
    %v562 = vsel %vm199, %v560, 0
    %564 = vmatpush.bf16.msra.mxu0 0
    %565 = vmatpush.bf16.msra.mxu0 0
    %566 = vmatpush.bf16.msra.mxu0 %v492
    %567 = vmatpush.bf16.msra.mxu0 %v460
    %568 = vmatpush.bf16.msra.mxu0 %v456
    %569 = vmatpush.bf16.msra.mxu0 %v452
    %570 = vmatpush.bf16.msra.mxu0 %v448
    %571 = vmatpush.bf16.msra.mxu0 %v444
    %572 = vmatmul.bf16.gmra.mxu0 %v562
    %v573 = vpop.f32.mrf.mxu0
    %v574 = vadd.f32 0.0, %v573
    %v575 = vpop.f32.mrf.mxu0
    %576 = vdwg.mxu0
    %577 = vmatpush.bf16.msra.mxu0 0
    %578 = vmatpush.bf16.msra.mxu0 0
    %579 = vmatpush.bf16.msra.mxu0 %v495
    %580 = vmatpush.bf16.msra.mxu0 %v461
    %581 = vmatpush.bf16.msra.mxu0 %v457
    %582 = vmatpush.bf16.msra.mxu0 %v453
    %583 = vmatpush.bf16.msra.mxu0 %v449
    %584 = vmatpush.bf16.msra.mxu0 %v445
    %585 = vmatmul.bf16.gmra.mxu0 %v562
    %v586 = vpop.f32.mrf.mxu0
    %v587 = vadd.f32 0.0, %v586
    %v588 = vpop.f32.mrf.mxu0
    %589 = vdwg.mxu0
    %590 = vmatpush.bf16.msra.mxu0 0
    %591 = vmatpush.bf16.msra.mxu0 0
    %592 = vmatpush.bf16.msra.mxu0 %v498
    %593 = vmatpush.bf16.msra.mxu0 %v462
    %594 = vmatpush.bf16.msra.mxu0 %v458
    %595 = vmatpush.bf16.msra.mxu0 %v454
    %596 = vmatpush.bf16.msra.mxu0 %v450
    %597 = vmatpush.bf16.msra.mxu0 %v446
    %598 = vmatmul.bf16.gmra.mxu0 %v562
    %v599 = vpop.f32.mrf.mxu0
    %v600 = vadd.f32 0.0, %v599
    %v601 = vpop.f32.mrf.mxu0
    %602 = vdwg.mxu0
    %603 = vmatpush.bf16.msra.mxu0 0
    %604 = vmatpush.bf16.msra.mxu0 0
    %605 = vmatpush.bf16.msra.mxu0 %v501
    %606 = vmatpush.bf16.msra.mxu0 %v463
    %607 = vmatpush.bf16.msra.mxu0 %v459
    %608 = vmatpush.bf16.msra.mxu0 %v455
    %609 = vmatpush.bf16.msra.mxu0 %v451
    %610 = vmatpush.bf16.msra.mxu0 %v447
    %611 = vmatmul.bf16.gmra.mxu0 %v562
    %v612 = vpop.f32.mrf.mxu0
    %v613 = vadd.f32 0.0, %v612
    %v614 = vpop.f32.mrf.mxu0
    %615 = vdwg.mxu0
    %v616 = vmax.f32 %v513, %v574
    %v617 = vmax.f32 %v526, %v587
    %v618 = vmax.f32 %v539, %v600
    %v619 = vmax.f32 %v552, %v613
    %v620 = vmax.f32 %v616, %v618
    %v621 = vmax.f32 %v617, %v619
    %v622 = vld [vmem:[%s2] sm:$0x3]
    %v624 = vperm.slane %v622, 0
    %v625 = vperm.slane %v622, 1
    %v628 = vadd.f32 %v620, %v624
    %v629 = vadd.f32 %v621, %v625
    %v630 = vmax.f32 %v628, 0.0
    %v631 = vmax.f32 %v629, 0.0
    %632 = vst [vmem:[#allocation2 + $0x10] sm:$0xff] %v630
    %633 = vst [vmem:[#allocation2 + $0x18] sm:$0xff] %v631
    %v634 = vld [vmem:[%s0] sm:$0xff]
    %v635 = vld [vmem:[%s0 + $0x8] sm:$0xff]
    %v636 = vpack.c.bf16 %v634, %v634
    %v637 = vpack.c.bf16 %v635, %v635
    %v638 = vld [vmem:[%s1] sm:$0xff]
    %v639 = vld [vmem:[%s1 + $0x8] sm:$0xff]
    %v640 = vld [vmem:[%s1 + $0x10] sm:$0xff]
    %v641 = vld [vmem:[%s1 + $0x18] sm:$0xff]
    %v642 = vld [vmem:[%s1 + $0x20] sm:$0xff]
    %v643 = vld [vmem:[%s1 + $0x28] sm:$0xff]
    %v644 = vld [vmem:[%s1 + $0x30] sm:$0xff]
    %v645 = vld [vmem:[%s1 + $0x38] sm:$0xff]
    %v646 = vld [vmem:[%s1 + $0x40] sm:$0xff]
    %v647 = vld [vmem:[%s1 + $0x48] sm:$0xff]
    %v648 = vld [vmem:[%s1 + $0x50] sm:$0xff]
    %v649 = vld [vmem:[%s1 + $0x58] sm:$0xff]
    %v650 = vld [vmem:[%s1 + $0x60] sm:$0xff]
    %v651 = vld [vmem:[%s1 + $0x68] sm:$0xff]
    %v652 = vld [vmem:[%s1 + $0x70] sm:$0xff]
    %v653 = vld [vmem:[%s1 + $0x78] sm:$0xff]
    %v654 = vld [vmem:[%s1 + $0x80] sm:$0xff]
    %v655 = vld [vmem:[%s1 + $0x88] sm:$0xff]
    %v656 = vld [vmem:[%s1 + $0x90] sm:$0xff]
    %v657 = vld [vmem:[%s1 + $0x98] sm:$0xff]
    %v658 = vld [vmem:[%s1 + $0xa0] sm:$0x33]
    %v659 = vld [vmem:[%s1 + $0xa8] sm:$0x33]
    %662 = vrot.lane.b32.xlu0 %v636, 16
    %v663 = vpop.permute.xlu0 %662
    %664 = vrot.lane.b32.xlu0 %v637, 16
    %v665 = vpop.permute.xlu0 %664
    %vm666 = vcmask 130048
    %v667 = vsel %vm666, %v663, %v665
    %v690 = vunpack.c.l.b16 %v638
    %v691 = vunpack.c.h.b16 %v638
    %v692 = vunpack.c.l.b16 %v639
    %v693 = vunpack.c.h.b16 %v639
    %v694 = vunpack.c.l.b16 %v640
    %v695 = vunpack.c.h.b16 %v640
    %v696 = vunpack.c.l.b16 %v641
    %v697 = vunpack.c.h.b16 %v641
    %v698 = vunpack.c.l.b16 %v642
    %v699 = vunpack.c.h.b16 %v642
    %v700 = vunpack.c.l.b16 %v643
    %v701 = vunpack.c.h.b16 %v643
    %v702 = vunpack.c.l.b16 %v644
    %v703 = vunpack.c.h.b16 %v644
    %v704 = vunpack.c.l.b16 %v645
    %v705 = vunpack.c.h.b16 %v645
    %v706 = vunpack.c.l.b16 %v646
    %v707 = vunpack.c.h.b16 %v646
    %v708 = vunpack.c.l.b16 %v647
    %v709 = vunpack.c.h.b16 %v647
    %v710 = vunpack.c.l.b16 %v648
    %v711 = vunpack.c.h.b16 %v648
    %v712 = vunpack.c.l.b16 %v649
    %v713 = vunpack.c.h.b16 %v649
    %v714 = vunpack.c.l.b16 %v650
    %v715 = vunpack.c.h.b16 %v650
    %v716 = vunpack.c.l.b16 %v651
    %v717 = vunpack.c.h.b16 %v651
    %v718 = vunpack.c.l.b16 %v652
    %v719 = vunpack.c.h.b16 %v652
    %v720 = vunpack.c.l.b16 %v653
    %v721 = vunpack.c.h.b16 %v653
    %v722 = vunpack.c.l.b16 %v654
    %v723 = vunpack.c.h.b16 %v654
    %v724 = vunpack.c.l.b16 %v655
    %v725 = vunpack.c.h.b16 %v655
    %v726 = vunpack.c.l.b16 %v656
    %v727 = vunpack.c.h.b16 %v656
    %v728 = vunpack.c.l.b16 %v657
    %v729 = vunpack.c.h.b16 %v657
    %v730 = vunpack.c.l.b16 %v658
    %v731 = vunpack.c.h.b16 %v658
    %v732 = vunpack.c.l.b16 %v659
    %v733 = vunpack.c.h.b16 %v659
    %v734 = vpack.c.b16 %v694, %v690
    %v735 = vpack.c.b16 %v695, %v691
    %v736 = vpack.c.b16 %v696, %v692
    %v737 = vpack.c.b16 %v697, %v693
    %v738 = vpack.c.b16 %v702, %v698
    %v739 = vpack.c.b16 %v703, %v699
    %v740 = vpack.c.b16 %v704, %v700
    %v741 = vpack.c.b16 %v705, %v701
    %v742 = vpack.c.b16 %v710, %v706
    %v743 = vpack.c.b16 %v711, %v707
    %v744 = vpack.c.b16 %v712, %v708
    %v745 = vpack.c.b16 %v713, %v709
    %v746 = vpack.c.b16 %v718, %v714
    %v747 = vpack.c.b16 %v719, %v715
    %v748 = vpack.c.b16 %v720, %v716
    %v749 = vpack.c.b16 %v721, %v717
    %v750 = vpack.c.b16 %v726, %v722
    %v751 = vpack.c.b16 %v727, %v723
    %v752 = vpack.c.b16 %v728, %v724
    %v753 = vpack.c.b16 %v729, %v725
    %v754 = vpack.c.b16 %v730, %v730
    %v755 = vpack.c.b16 %v731, %v731
    %v756 = vpack.c.b16 %v732, %v732
    %v757 = vpack.c.b16 %v733, %v733
    %v779 = vsel %vm199, %v667, 0
    %v782 = vsel %vm203, %v754, 0
    %v785 = vsel %vm203, %v755, 0
    %v788 = vsel %vm203, %v756, 0
    %v791 = vsel %vm203, %v757, 0
    %793 = vmatpush.bf16.msra.mxu0 0
    %794 = vmatpush.bf16.msra.mxu0 0
    %795 = vmatpush.bf16.msra.mxu0 %v782
    %796 = vmatpush.bf16.msra.mxu0 %v750
    %797 = vmatpush.bf16.msra.mxu0 %v746
    %798 = vmatpush.bf16.msra.mxu0 %v742
    %799 = vmatpush.bf16.msra.mxu0 %v738
    %800 = vmatpush.bf16.msra.mxu0 %v734
    %801 = vmatmul.bf16.gmra.mxu0 %v779
    %v802 = vpop.f32.mrf.mxu0
    %v803 = vadd.f32 0.0, %v802
    %v804 = vpop.f32.mrf.mxu0
    %805 = vdwg.mxu0
    %806 = vmatpush.bf16.msra.mxu0 0
    %807 = vmatpush.bf16.msra.mxu0 0
    %808 = vmatpush.bf16.msra.mxu0 %v785
    %809 = vmatpush.bf16.msra.mxu0 %v751
    %810 = vmatpush.bf16.msra.mxu0 %v747
    %811 = vmatpush.bf16.msra.mxu0 %v743
    %812 = vmatpush.bf16.msra.mxu0 %v739
    %813 = vmatpush.bf16.msra.mxu0 %v735
    %814 = vmatmul.bf16.gmra.mxu0 %v779
    %v815 = vpop.f32.mrf.mxu0
    %v816 = vadd.f32 0.0, %v815
    %v817 = vpop.f32.mrf.mxu0
    %818 = vdwg.mxu0
    %819 = vmatpush.bf16.msra.mxu0 0
    %820 = vmatpush.bf16.msra.mxu0 0
    %821 = vmatpush.bf16.msra.mxu0 %v788
    %822 = vmatpush.bf16.msra.mxu0 %v752
    %823 = vmatpush.bf16.msra.mxu0 %v748
    %824 = vmatpush.bf16.msra.mxu0 %v744
    %825 = vmatpush.bf16.msra.mxu0 %v740
    %826 = vmatpush.bf16.msra.mxu0 %v736
    %827 = vmatmul.bf16.gmra.mxu0 %v779
    %v828 = vpop.f32.mrf.mxu0
    %v829 = vadd.f32 0.0, %v828
    %v830 = vpop.f32.mrf.mxu0
    %831 = vdwg.mxu0
    %832 = vmatpush.bf16.msra.mxu0 0
    %833 = vmatpush.bf16.msra.mxu0 0
    %834 = vmatpush.bf16.msra.mxu0 %v791
    %835 = vmatpush.bf16.msra.mxu0 %v753
    %836 = vmatpush.bf16.msra.mxu0 %v749
    %837 = vmatpush.bf16.msra.mxu0 %v745
    %838 = vmatpush.bf16.msra.mxu0 %v741
    %839 = vmatpush.bf16.msra.mxu0 %v737
    %840 = vmatmul.bf16.gmra.mxu0 %v779
    %v841 = vpop.f32.mrf.mxu0
    %v842 = vadd.f32 0.0, %v841
    %v843 = vpop.f32.mrf.mxu0
    %844 = vdwg.mxu0
    %845 = vrot.lane.b32.xlu0 %v637, 116
    %v846 = vpop.permute.xlu0 %845
    %v848 = vsel %vm199, %v846, 0
    %850 = vmatpush.bf16.msra.mxu0 0
    %851 = vmatpush.bf16.msra.mxu0 0
    %852 = vmatpush.bf16.msra.mxu0 %v782
    %853 = vmatpush.bf16.msra.mxu0 %v750
    %854 = vmatpush.bf16.msra.mxu0 %v746
    %855 = vmatpush.bf16.msra.mxu0 %v742
    %856 = vmatpush.bf16.msra.mxu0 %v738
    %857 = vmatpush.bf16.msra.mxu0 %v734
    %858 = vmatmul.bf16.gmra.mxu0 %v848
    %v859 = vpop.f32.mrf.mxu0
    %v860 = vadd.f32 0.0, %v859
    %v861 = vpop.f32.mrf.mxu0
    %862 = vdwg.mxu0
    %863 = vmatpush.bf16.msra.mxu0 0
    %864 = vmatpush.bf16.msra.mxu0 0
    %865 = vmatpush.bf16.msra.mxu0 %v785
    %866 = vmatpush.bf16.msra.mxu0 %v751
    %867 = vmatpush.bf16.msra.mxu0 %v747
    %868 = vmatpush.bf16.msra.mxu0 %v743
    %869 = vmatpush.bf16.msra.mxu0 %v739
    %870 = vmatpush.bf16.msra.mxu0 %v735
    %871 = vmatmul.bf16.gmra.mxu0 %v848
    %v872 = vpop.f32.mrf.mxu0
    %v873 = vadd.f32 0.0, %v872
    %v874 = vpop.f32.mrf.mxu0
    %875 = vdwg.mxu0
    %876 = vmatpush.bf16.msra.mxu0 0
    %877 = vmatpush.bf16.msra.mxu0 0
    %878 = vmatpush.bf16.msra.mxu0 %v788
    %879 = vmatpush.bf16.msra.mxu0 %v752
    %880 = vmatpush.bf16.msra.mxu0 %v748
    %881 = vmatpush.bf16.msra.mxu0 %v744
    %882 = vmatpush.bf16.msra.mxu0 %v740
    %883 = vmatpush.bf16.msra.mxu0 %v736
    %884 = vmatmul.bf16.gmra.mxu0 %v848
    %v885 = vpop.f32.mrf.mxu0
    %v886 = vadd.f32 0.0, %v885
    %v887 = vpop.f32.mrf.mxu0
    %888 = vdwg.mxu0
    %889 = vmatpush.bf16.msra.mxu0 0
    %890 = vmatpush.bf16.msra.mxu0 0
    %891 = vmatpush.bf16.msra.mxu0 %v791
    %892 = vmatpush.bf16.msra.mxu0 %v753
    %893 = vmatpush.bf16.msra.mxu0 %v749
    %894 = vmatpush.bf16.msra.mxu0 %v745
    %895 = vmatpush.bf16.msra.mxu0 %v741
    %896 = vmatpush.bf16.msra.mxu0 %v737
    %897 = vmatmul.bf16.gmra.mxu0 %v848
    %v898 = vpop.f32.mrf.mxu0
    %v899 = vadd.f32 0.0, %v898
    %v900 = vpop.f32.mrf.mxu0
    %901 = vdwg.mxu0
    %v902 = vmax.f32 %v803, %v860
    %v903 = vmax.f32 %v816, %v873
    %v904 = vmax.f32 %v829, %v886
    %v905 = vmax.f32 %v842, %v899
    %v906 = vmax.f32 %v902, %v904
    %v907 = vmax.f32 %v903, %v905
    %v908 = vld [vmem:[%s2] sm:$0x3]
    %v910 = vperm.slane %v908, 0
    %v911 = vperm.slane %v908, 1
    %v914 = vadd.f32 %v906, %v910
    %v915 = vadd.f32 %v907, %v911
    %v916 = vmax.f32 %v914, 0.0
    %v917 = vmax.f32 %v915, 0.0
    %918 = vst [vmem:[#allocation2 + $0x20] sm:$0xff] %v916
    %919 = vst [vmem:[#allocation2 + $0x28] sm:$0xff] %v917
    %v920 = vld [vmem:[%s0 + $0x8] sm:$0xff]
    %v921 = vpack.c.bf16 %v920, %v920
    %v922 = vld [vmem:[%s1] sm:$0xff]
    %v923 = vld [vmem:[%s1 + $0x8] sm:$0xff]
    %v924 = vld [vmem:[%s1 + $0x10] sm:$0xff]
    %v925 = vld [vmem:[%s1 + $0x18] sm:$0xff]
    %v926 = vld [vmem:[%s1 + $0x20] sm:$0xff]
    %v927 = vld [vmem:[%s1 + $0x28] sm:$0xff]
    %v928 = vld [vmem:[%s1 + $0x30] sm:$0xff]
    %v929 = vld [vmem:[%s1 + $0x38] sm:$0xff]
    %v930 = vld [vmem:[%s1 + $0x40] sm:$0xff]
    %v931 = vld [vmem:[%s1 + $0x48] sm:$0xff]
    %v932 = vld [vmem:[%s1 + $0x50] sm:$0xff]
    %v933 = vld [vmem:[%s1 + $0x58] sm:$0xff]
    %v934 = vld [vmem:[%s1 + $0x60] sm:$0xff]
    %v935 = vld [vmem:[%s1 + $0x68] sm:$0xff]
    %v936 = vld [vmem:[%s1 + $0x70] sm:$0xff]
    %v937 = vld [vmem:[%s1 + $0x78] sm:$0xff]
    %v938 = vld [vmem:[%s1 + $0x80] sm:$0xff]
    %v939 = vld [vmem:[%s1 + $0x88] sm:$0xff]
    %v940 = vld [vmem:[%s1 + $0x90] sm:$0xff]
    %v941 = vld [vmem:[%s1 + $0x98] sm:$0xff]
    %v942 = vld [vmem:[%s1 + $0xa0] sm:$0x33]
    %v943 = vld [vmem:[%s1 + $0xa8] sm:$0x33]
    %945 = vrot.lane.b32.xlu0 %v921, 88
    %v946 = vpop.permute.xlu0 %945
    %v969 = vunpack.c.l.b16 %v922
    %v970 = vunpack.c.h.b16 %v922
    %v971 = vunpack.c.l.b16 %v923
    %v972 = vunpack.c.h.b16 %v923
    %v973 = vunpack.c.l.b16 %v924
    %v974 = vunpack.c.h.b16 %v924
    %v975 = vunpack.c.l.b16 %v925
    %v976 = vunpack.c.h.b16 %v925
    %v977 = vunpack.c.l.b16 %v926
    %v978 = vunpack.c.h.b16 %v926
    %v979 = vunpack.c.l.b16 %v927
    %v980 = vunpack.c.h.b16 %v927
    %v981 = vunpack.c.l.b16 %v928
    %v982 = vunpack.c.h.b16 %v928
    %v983 = vunpack.c.l.b16 %v929
    %v984 = vunpack.c.h.b16 %v929
    %v985 = vunpack.c.l.b16 %v930
    %v986 = vunpack.c.h.b16 %v930
    %v987 = vunpack.c.l.b16 %v931
    %v988 = vunpack.c.h.b16 %v931
    %v989 = vunpack.c.l.b16 %v932
    %v990 = vunpack.c.h.b16 %v932
    %v991 = vunpack.c.l.b16 %v933
    %v992 = vunpack.c.h.b16 %v933
    %v993 = vunpack.c.l.b16 %v934
    %v994 = vunpack.c.h.b16 %v934
    %v995 = vunpack.c.l.b16 %v935
    %v996 = vunpack.c.h.b16 %v935
    %v997 = vunpack.c.l.b16 %v936
    %v998 = vunpack.c.h.b16 %v936
    %v999 = vunpack.c.l.b16 %v937
    %v1000 = vunpack.c.h.b16 %v937
    %v1001 = vunpack.c.l.b16 %v938
    %v1002 = vunpack.c.h.b16 %v938
    %v1003 = vunpack.c.l.b16 %v939
    %v1004 = vunpack.c.h.b16 %v939
    %v1005 = vunpack.c.l.b16 %v940
    %v1006 = vunpack.c.h.b16 %v940
    %v1007 = vunpack.c.l.b16 %v941
    %v1008 = vunpack.c.h.b16 %v941
    %v1009 = vunpack.c.l.b16 %v942
    %v1010 = vunpack.c.h.b16 %v942
    %v1011 = vunpack.c.l.b16 %v943
    %v1012 = vunpack.c.h.b16 %v943
    %v1013 = vpack.c.b16 %v973, %v969
    %v1014 = vpack.c.b16 %v974, %v970
    %v1015 = vpack.c.b16 %v975, %v971
    %v1016 = vpack.c.b16 %v976, %v972
    %v1017 = vpack.c.b16 %v981, %v977
    %v1018 = vpack.c.b16 %v982, %v978
    %v1019 = vpack.c.b16 %v983, %v979
    %v1020 = vpack.c.b16 %v984, %v980
    %v1021 = vpack.c.b16 %v989, %v985
    %v1022 = vpack.c.b16 %v990, %v986
    %v1023 = vpack.c.b16 %v991, %v987
    %v1024 = vpack.c.b16 %v992, %v988
    %v1025 = vpack.c.b16 %v997, %v993
    %v1026 = vpack.c.b16 %v998, %v994
    %v1027 = vpack.c.b16 %v999, %v995
    %v1028 = vpack.c.b16 %v1000, %v996
    %v1029 = vpack.c.b16 %v1005, %v1001
    %v1030 = vpack.c.b16 %v1006, %v1002
    %v1031 = vpack.c.b16 %v1007, %v1003
    %v1032 = vpack.c.b16 %v1008, %v1004
    %v1033 = vpack.c.b16 %v1009, %v1009
    %v1034 = vpack.c.b16 %v1010, %v1010
    %v1035 = vpack.c.b16 %v1011, %v1011
    %v1036 = vpack.c.b16 %v1012, %v1012
    %v1058 = vsel %vm199, %v946, 0
    %v1061 = vsel %vm203, %v1033, 0
    %v1064 = vsel %vm203, %v1034, 0
    %v1067 = vsel %vm203, %v1035, 0
    %v1070 = vsel %vm203, %v1036, 0
    %1072 = vmatpush.bf16.msra.mxu0 0
    %1073 = vmatpush.bf16.msra.mxu0 0
    %1074 = vmatpush.bf16.msra.mxu0 %v1061
    %1075 = vmatpush.bf16.msra.mxu0 %v1029
    %1076 = vmatpush.bf16.msra.mxu0 %v1025
    %1077 = vmatpush.bf16.msra.mxu0 %v1021
    %1078 = vmatpush.bf16.msra.mxu0 %v1017
    %1079 = vmatpush.bf16.msra.mxu0 %v1013
    %1080 = vmatmul.bf16.gmra.mxu0 %v1058
    %v1081 = vpop.f32.mrf.mxu0
    %v1082 = vadd.f32 0.0, %v1081
    %v1083 = vpop.f32.mrf.mxu0
    %1084 = vdwg.mxu0
    %1085 = vmatpush.bf16.msra.mxu0 0
    %1086 = vmatpush.bf16.msra.mxu0 0
    %1087 = vmatpush.bf16.msra.mxu0 %v1064
    %1088 = vmatpush.bf16.msra.mxu0 %v1030
    %1089 = vmatpush.bf16.msra.mxu0 %v1026
    %1090 = vmatpush.bf16.msra.mxu0 %v1022
    %1091 = vmatpush.bf16.msra.mxu0 %v1018
    %1092 = vmatpush.bf16.msra.mxu0 %v1014
    %1093 = vmatmul.bf16.gmra.mxu0 %v1058
    %v1094 = vpop.f32.mrf.mxu0
    %v1095 = vadd.f32 0.0, %v1094
    %v1096 = vpop.f32.mrf.mxu0
    %1097 = vdwg.mxu0
    %1098 = vmatpush.bf16.msra.mxu0 0
    %1099 = vmatpush.bf16.msra.mxu0 0
    %1100 = vmatpush.bf16.msra.mxu0 %v1067
    %1101 = vmatpush.bf16.msra.mxu0 %v1031
    %1102 = vmatpush.bf16.msra.mxu0 %v1027
    %1103 = vmatpush.bf16.msra.mxu0 %v1023
    %1104 = vmatpush.bf16.msra.mxu0 %v1019
    %1105 = vmatpush.bf16.msra.mxu0 %v1015
    %1106 = vmatmul.bf16.gmra.mxu0 %v1058
    %v1107 = vpop.f32.mrf.mxu0
    %v1108 = vadd.f32 0.0, %v1107
    %v1109 = vpop.f32.mrf.mxu0
    %1110 = vdwg.mxu0
    %1111 = vmatpush.bf16.msra.mxu0 0
    %1112 = vmatpush.bf16.msra.mxu0 0
    %1113 = vmatpush.bf16.msra.mxu0 %v1070
    %1114 = vmatpush.bf16.msra.mxu0 %v1032
    %1115 = vmatpush.bf16.msra.mxu0 %v1028
    %1116 = vmatpush.bf16.msra.mxu0 %v1024
    %1117 = vmatpush.bf16.msra.mxu0 %v1020
    %1118 = vmatpush.bf16.msra.mxu0 %v1016
    %1119 = vmatmul.bf16.gmra.mxu0 %v1058
    %v1120 = vpop.f32.mrf.mxu0
    %v1121 = vadd.f32 0.0, %v1120
    %v1122 = vpop.f32.mrf.mxu0
    %1123 = vdwg.mxu0
    %v1124 = vld [vmem:[%s0 + $0x8] sm:$0xff]
    %v1125 = vld [vmem:[%s0 + $0x10] sm:$0xff]
    %v1126 = vpack.c.bf16 %v1124, %v1124
    %v1127 = vpack.c.bf16 %v1125, %v1125
    %1130 = vrot.lane.b32.xlu0 %v1126, 60
    %v1131 = vpop.permute.xlu0 %1130
    %1132 = vrot.lane.b32.xlu0 %v1127, 60
    %v1133 = vpop.permute.xlu0 %1132
    %vm1134 = vcmask 490496
    %v1135 = vsel %vm1134, %v1131, %v1133
    %v1137 = vsel %vm199, %v1135, 0
    %1139 = vmatpush.bf16.msra.mxu0 0
    %1140 = vmatpush.bf16.msra.mxu0 0
    %1141 = vmatpush.bf16.msra.mxu0 %v1061
    %1142 = vmatpush.bf16.msra.mxu0 %v1029
    %1143 = vmatpush.bf16.msra.mxu0 %v1025
    %1144 = vmatpush.bf16.msra.mxu0 %v1021
    %1145 = vmatpush.bf16.msra.mxu0 %v1017
    %1146 = vmatpush.bf16.msra.mxu0 %v1013
    %1147 = vmatmul.bf16.gmra.mxu0 %v1137
    %v1148 = vpop.f32.mrf.mxu0
    %v1149 = vadd.f32 0.0, %v1148
    %v1150 = vpop.f32.mrf.mxu0
    %1151 = vdwg.mxu0
    %1152 = vmatpush.bf16.msra.mxu0 0
    %1153 = vmatpush.bf16.msra.mxu0 0
    %1154 = vmatpush.bf16.msra.mxu0 %v1064
    %1155 = vmatpush.bf16.msra.mxu0 %v1030
    %1156 = vmatpush.bf16.msra.mxu0 %v1026
    %1157 = vmatpush.bf16.msra.mxu0 %v1022
    %1158 = vmatpush.bf16.msra.mxu0 %v1018
    %1159 = vmatpush.bf16.msra.mxu0 %v1014
    %1160 = vmatmul.bf16.gmra.mxu0 %v1137
    %v1161 = vpop.f32.mrf.mxu0
    %v1162 = vadd.f32 0.0, %v1161
    %v1163 = vpop.f32.mrf.mxu0
    %1164 = vdwg.mxu0
    %1165 = vmatpush.bf16.msra.mxu0 0
    %1166 = vmatpush.bf16.msra.mxu0 0
    %1167 = vmatpush.bf16.msra.mxu0 %v1067
    %1168 = vmatpush.bf16.msra.mxu0 %v1031
    %1169 = vmatpush.bf16.msra.mxu0 %v1027
    %1170 = vmatpush.bf16.msra.mxu0 %v1023
    %1171 = vmatpush.bf16.msra.mxu0 %v1019
    %1172 = vmatpush.bf16.msra.mxu0 %v1015
    %1173 = vmatmul.bf16.gmra.mxu0 %v1137
    %v1174 = vpop.f32.mrf.mxu0
    %v1175 = vadd.f32 0.0, %v1174
    %v1176 = vpop.f32.mrf.mxu0
    %1177 = vdwg.mxu0
    %1178 = vmatpush.bf16.msra.mxu0 0
    %1179 = vmatpush.bf16.msra.mxu0 0
    %1180 = vmatpush.bf16.msra.mxu0 %v1070
    %1181 = vmatpush.bf16.msra.mxu0 %v1032
    %1182 = vmatpush.bf16.msra.mxu0 %v1028
    %1183 = vmatpush.bf16.msra.mxu0 %v1024
    %1184 = vmatpush.bf16.msra.mxu0 %v1020
    %1185 = vmatpush.bf16.msra.mxu0 %v1016
    %1186 = vmatmul.bf16.gmra.mxu0 %v1137
    %v1187 = vpop.f32.mrf.mxu0
    %v1188 = vadd.f32 0.0, %v1187
    %v1189 = vpop.f32.mrf.mxu0
    %1190 = vdwg.mxu0
    %v1191 = vmax.f32 %v1082, %v1149
    %v1192 = vmax.f32 %v1095, %v1162
    %v1193 = vmax.f32 %v1108, %v1175
    %v1194 = vmax.f32 %v1121, %v1188
    %v1195 = vmax.f32 %v1191, %v1193
    %v1196 = vmax.f32 %v1192, %v1194
    %v1197 = vld [vmem:[%s2] sm:$0x3]
    %v1199 = vperm.slane %v1197, 0
    %v1200 = vperm.slane %v1197, 1
    %v1203 = vadd.f32 %v1195, %v1199
    %v1204 = vadd.f32 %v1196, %v1200
    %v1205 = vmax.f32 %v1203, 0.0
    %v1206 = vmax.f32 %v1204, 0.0
    %1207 = vst [vmem:[#allocation2 + $0x30] sm:$0xff] %v1205
    %1208 = vst [vmem:[#allocation2 + $0x38] sm:$0xff] %v1206
    %v1209 = vld [vmem:[%s0 + $0x8] sm:$0xff]
    %v1210 = vld [vmem:[%s0 + $0x10] sm:$0xff]
    %v1211 = vpack.c.bf16 %v1209, %v1209
    %v1212 = vpack.c.bf16 %v1210, %v1210
    %v1213 = vld [vmem:[%s1] sm:$0xff]
    %v1214 = vld [vmem:[%s1 + $0x8] sm:$0xff]
    %v1215 = vld [vmem:[%s1 + $0x10] sm:$0xff]
    %v1216 = vld [vmem:[%s1 + $0x18] sm:$0xff]
    %v1217 = vld [vmem:[%s1 + $0x20] sm:$0xff]
    %v1218 = vld [vmem:[%s1 + $0x28] sm:$0xff]
    %v1219 = vld [vmem:[%s1 + $0x30] sm:$0xff]
    %v1220 = vld [vmem:[%s1 + $0x38] sm:$0xff]
    %v1221 = vld [vmem:[%s1 + $0x40] sm:$0xff]
    %v1222 = vld [vmem:[%s1 + $0x48] sm:$0xff]
    %v1223 = vld [vmem:[%s1 + $0x50] sm:$0xff]
    %v1224 = vld [vmem:[%s1 + $0x58] sm:$0xff]
    %v1225 = vld [vmem:[%s1 + $0x60] sm:$0xff]
    %v1226 = vld [vmem:[%s1 + $0x68] sm:$0xff]
    %v1227 = vld [vmem:[%s1 + $0x70] sm:$0xff]
    %v1228 = vld [vmem:[%s1 + $0x78] sm:$0xff]
    %v1229 = vld [vmem:[%s1 + $0x80] sm:$0xff]
    %v1230 = vld [vmem:[%s1 + $0x88] sm:$0xff]
    %v1231 = vld [vmem:[%s1 + $0x90] sm:$0xff]
    %v1232 = vld [vmem:[%s1 + $0x98] sm:$0xff]
    %v1233 = vld [vmem:[%s1 + $0xa0] sm:$0x33]
    %v1234 = vld [vmem:[%s1 + $0xa8] sm:$0x33]
    %1237 = vrot.lane.b32.xlu0 %v1211, 32
    %v1238 = vpop.permute.xlu0 %1237
    %1239 = vrot.lane.b32.xlu0 %v1212, 32
    %v1240 = vpop.permute.xlu0 %1239
    %vm1241 = vcmask 261120
    %v1242 = vsel %vm1241, %v1238, %v1240
    %v1265 = vunpack.c.l.b16 %v1213
    %v1266 = vunpack.c.h.b16 %v1213
    %v1267 = vunpack.c.l.b16 %v1214
    %v1268 = vunpack.c.h.b16 %v1214
    %v1269 = vunpack.c.l.b16 %v1215
    %v1270 = vunpack.c.h.b16 %v1215
    %v1271 = vunpack.c.l.b16 %v1216
    %v1272 = vunpack.c.h.b16 %v1216
    %v1273 = vunpack.c.l.b16 %v1217
    %v1274 = vunpack.c.h.b16 %v1217
    %v1275 = vunpack.c.l.b16 %v1218
    %v1276 = vunpack.c.h.b16 %v1218
    %v1277 = vunpack.c.l.b16 %v1219
    %v1278 = vunpack.c.h.b16 %v1219
    %v1279 = vunpack.c.l.b16 %v1220
    %v1280 = vunpack.c.h.b16 %v1220
    %v1281 = vunpack.c.l.b16 %v1221
    %v1282 = vunpack.c.h.b16 %v1221
    %v1283 = vunpack.c.l.b16 %v1222
    %v1284 = vunpack.c.h.b16 %v1222
    %v1285 = vunpack.c.l.b16 %v1223
    %v1286 = vunpack.c.h.b16 %v1223
    %v1287 = vunpack.c.l.b16 %v1224
    %v1288 = vunpack.c.h.b16 %v1224
    %v1289 = vunpack.c.l.b16 %v1225
    %v1290 = vunpack.c.h.b16 %v1225
    %v1291 = vunpack.c.l.b16 %v1226
    %v1292 = vunpack.c.h.b16 %v1226
    %v1293 = vunpack.c.l.b16 %v1227
    %v1294 = vunpack.c.h.b16 %v1227
    %v1295 = vunpack.c.l.b16 %v1228
    %v1296 = vunpack.c.h.b16 %v1228
    %v1297 = vunpack.c.l.b16 %v1229
    %v1298 = vunpack.c.h.b16 %v1229
    %v1299 = vunpack.c.l.b16 %v1230
    %v1300 = vunpack.c.h.b16 %v1230
    %v1301 = vunpack.c.l.b16 %v1231
    %v1302 = vunpack.c.h.b16 %v1231
    %v1303 = vunpack.c.l.b16 %v1232
    %v1304 = vunpack.c.h.b16 %v1232
    %v1305 = vunpack.c.l.b16 %v1233
    %v1306 = vunpack.c.h.b16 %v1233
    %v1307 = vunpack.c.l.b16 %v1234
    %v1308 = vunpack.c.h.b16 %v1234
    %v1309 = vpack.c.b16 %v1269, %v1265
    %v1310 = vpack.c.b16 %v1270, %v1266
    %v1311 = vpack.c.b16 %v1271, %v1267
    %v1312 = vpack.c.b16 %v1272, %v1268
    %v1313 = vpack.c.b16 %v1277, %v1273
    %v1314 = vpack.c.b16 %v1278, %v1274
    %v1315 = vpack.c.b16 %v1279, %v1275
    %v1316 = vpack.c.b16 %v1280, %v1276
    %v1317 = vpack.c.b16 %v1285, %v1281
    %v1318 = vpack.c.b16 %v1286, %v1282
    %v1319 = vpack.c.b16 %v1287, %v1283
    %v1320 = vpack.c.b16 %v1288, %v1284
    %v1321 = vpack.c.b16 %v1293, %v1289
    %v1322 = vpack.c.b16 %v1294, %v1290
    %v1323 = vpack.c.b16 %v1295, %v1291
    %v1324 = vpack.c.b16 %v1296, %v1292
    %v1325 = vpack.c.b16 %v1301, %v1297
    %v1326 = vpack.c.b16 %v1302, %v1298
    %v1327 = vpack.c.b16 %v1303, %v1299
    %v1328 = vpack.c.b16 %v1304, %v1300
    %v1329 = vpack.c.b16 %v1305, %v1305
    %v1330 = vpack.c.b16 %v1306, %v1306
    %v1331 = vpack.c.b16 %v1307, %v1307
    %v1332 = vpack.c.b16 %v1308, %v1308
    %v1354 = vsel %vm199, %v1242, 0
    %v1357 = vsel %vm203, %v1329, 0
    %v1360 = vsel %vm203, %v1330, 0
    %v1363 = vsel %vm203, %v1331, 0
    %v1366 = vsel %vm203, %v1332, 0
    %1368 = vmatpush.bf16.msra.mxu0 0
    %1369 = vmatpush.bf16.msra.mxu0 0
    %1370 = vmatpush.bf16.msra.mxu0 %v1357
    %1371 = vmatpush.bf16.msra.mxu0 %v1325
    %1372 = vmatpush.bf16.msra.mxu0 %v1321
    %1373 = vmatpush.bf16.msra.mxu0 %v1317
    %1374 = vmatpush.bf16.msra.mxu0 %v1313
    %1375 = vmatpush.bf16.msra.mxu0 %v1309
    %1376 = vmatmul.bf16.gmra.mxu0 %v1354
    %v1377 = vpop.f32.mrf.mxu0
    %v1378 = vadd.f32 0.0, %v1377
    %v1379 = vpop.f32.mrf.mxu0
    %1380 = vdwg.mxu0
    %1381 = vmatpush.bf16.msra.mxu0 0
    %1382 = vmatpush.bf16.msra.mxu0 0
    %1383 = vmatpush.bf16.msra.mxu0 %v1360
    %1384 = vmatpush.bf16.msra.mxu0 %v1326
    %1385 = vmatpush.bf16.msra.mxu0 %v1322
    %1386 = vmatpush.bf16.msra.mxu0 %v1318
    %1387 = vmatpush.bf16.msra.mxu0 %v1314
    %1388 = vmatpush.bf16.msra.mxu0 %v1310
    %1389 = vmatmul.bf16.gmra.mxu0 %v1354
    %v1390 = vpop.f32.mrf.mxu0
    %v1391 = vadd.f32 0.0, %v1390
    %v1392 = vpop.f32.mrf.mxu0
    %1393 = vdwg.mxu0
    %1394 = vmatpush.bf16.msra.mxu0 0
    %1395 = vmatpush.bf16.msra.mxu0 0
    %1396 = vmatpush.bf16.msra.mxu0 %v1363
    %1397 = vmatpush.bf16.msra.mxu0 %v1327
    %1398 = vmatpush.bf16.msra.mxu0 %v1323
    %1399 = vmatpush.bf16.msra.mxu0 %v1319
    %1400 = vmatpush.bf16.msra.mxu0 %v1315
    %1401 = vmatpush.bf16.msra.mxu0 %v1311
    %1402 = vmatmul.bf16.gmra.mxu0 %v1354
    %v1403 = vpop.f32.mrf.mxu0
    %v1404 = vadd.f32 0.0, %v1403
    %v1405 = vpop.f32.mrf.mxu0
    %1406 = vdwg.mxu0
    %1407 = vmatpush.bf16.msra.mxu0 0
    %1408 = vmatpush.bf16.msra.mxu0 0
    %1409 = vmatpush.bf16.msra.mxu0 %v1366
    %1410 = vmatpush.bf16.msra.mxu0 %v1328
    %1411 = vmatpush.bf16.msra.mxu0 %v1324
    %1412 = vmatpush.bf16.msra.mxu0 %v1320
    %1413 = vmatpush.bf16.msra.mxu0 %v1316
    %1414 = vmatpush.bf16.msra.mxu0 %v1312
    %1415 = vmatmul.bf16.gmra.mxu0 %v1354
    %v1416 = vpop.f32.mrf.mxu0
    %v1417 = vadd.f32 0.0, %v1416
    %v1418 = vpop.f32.mrf.mxu0
    %1419 = vdwg.mxu0
    %1420 = vrot.lane.b32.xlu0 %v1211, 4
    %v1421 = vpop.permute.xlu0 %1420
    %1422 = vrot.lane.b32.xlu0 %v1212, 4
    %v1423 = vpop.permute.xlu0 %1422
    %vm1424 = vcmask 31744
    %v1425 = vsel %vm1424, %v1421, %v1423
    %v1427 = vsel %vm199, %v1425, 0
    %1429 = vmatpush.bf16.msra.mxu0 0
    %1430 = vmatpush.bf16.msra.mxu0 0
    %1431 = vmatpush.bf16.msra.mxu0 %v1357
    %1432 = vmatpush.bf16.msra.mxu0 %v1325
    %1433 = vmatpush.bf16.msra.mxu0 %v1321
    %1434 = vmatpush.bf16.msra.mxu0 %v1317
    %1435 = vmatpush.bf16.msra.mxu0 %v1313
    %1436 = vmatpush.bf16.msra.mxu0 %v1309
    %1437 = vmatmul.bf16.gmra.mxu0 %v1427
    %v1438 = vpop.f32.mrf.mxu0
    %v1439 = vadd.f32 0.0, %v1438
    %v1440 = vpop.f32.mrf.mxu0
    %1441 = vdwg.mxu0
    %1442 = vmatpush.bf16.msra.mxu0 0
    %1443 = vmatpush.bf16.msra.mxu0 0
    %1444 = vmatpush.bf16.msra.mxu0 %v1360
    %1445 = vmatpush.bf16.msra.mxu0 %v1326
    %1446 = vmatpush.bf16.msra.mxu0 %v1322
    %1447 = vmatpush.bf16.msra.mxu0 %v1318
    %1448 = vmatpush.bf16.msra.mxu0 %v1314
    %1449 = vmatpush.bf16.msra.mxu0 %v1310
    %1450 = vmatmul.bf16.gmra.mxu0 %v1427
    %v1451 = vpop.f32.mrf.mxu0
    %v1452 = vadd.f32 0.0, %v1451
    %v1453 = vpop.f32.mrf.mxu0
    %1454 = vdwg.mxu0
    %1455 = vmatpush.bf16.msra.mxu0 0
    %1456 = vmatpush.bf16.msra.mxu0 0
    %1457 = vmatpush.bf16.msra.mxu0 %v1363
    %1458 = vmatpush.bf16.msra.mxu0 %v1327
    %1459 = vmatpush.bf16.msra.mxu0 %v1323
    %1460 = vmatpush.bf16.msra.mxu0 %v1319
    %1461 = vmatpush.bf16.msra.mxu0 %v1315
    %1462 = vmatpush.bf16.msra.mxu0 %v1311
    %1463 = vmatmul.bf16.gmra.mxu0 %v1427
    %v1464 = vpop.f32.mrf.mxu0
    %v1465 = vadd.f32 0.0, %v1464
    %v1466 = vpop.f32.mrf.mxu0
    %1467 = vdwg.mxu0
    %1468 = vmatpush.bf16.msra.mxu0 0
    %1469 = vmatpush.bf16.msra.mxu0 0
    %1470 = vmatpush.bf16.msra.mxu0 %v1366
    %1471 = vmatpush.bf16.msra.mxu0 %v1328
    %1472 = vmatpush.bf16.msra.mxu0 %v1324
    %1473 = vmatpush.bf16.msra.mxu0 %v1320
    %1474 = vmatpush.bf16.msra.mxu0 %v1316
    %1475 = vmatpush.bf16.msra.mxu0 %v1312
    %1476 = vmatmul.bf16.gmra.mxu0 %v1427
    %v1477 = vpop.f32.mrf.mxu0
    %v1478 = vadd.f32 0.0, %v1477
    %v1479 = vpop.f32.mrf.mxu0
    %1480 = vdwg.mxu0
    %v1481 = vmax.f32 %v1378, %v1439
    %v1482 = vmax.f32 %v1391, %v1452
    %v1483 = vmax.f32 %v1404, %v1465
    %v1484 = vmax.f32 %v1417, %v1478
    %v1485 = vmax.f32 %v1481, %v1483
    %v1486 = vmax.f32 %v1482, %v1484
    %v1487 = vld [vmem:[%s2] sm:$0x3]
    %v1489 = vperm.slane %v1487, 0
    %v1490 = vperm.slane %v1487, 1
    %v1493 = vadd.f32 %v1485, %v1489
    %v1494 = vadd.f32 %v1486, %v1490
    %v1495 = vmax.f32 %v1493, 0.0
    %v1496 = vmax.f32 %v1494, 0.0
    %1497 = vst [vmem:[#allocation2 + $0x40] sm:$0xff] %v1495
    %1498 = vst [vmem:[#allocation2 + $0x48] sm:$0xff] %v1496
    %v1499 = vld [vmem:[%s0 + $0x10] sm:$0xff]
    %v1500 = vpack.c.bf16 %v1499, %v1499
    %v1501 = vld [vmem:[%s1] sm:$0xff]
    %v1502 = vld [vmem:[%s1 + $0x8] sm:$0xff]
    %v1503 = vld [vmem:[%s1 + $0x10] sm:$0xff]
    %v1504 = vld [vmem:[%s1 + $0x18] sm:$0xff]
    %v1505 = vld [vmem:[%s1 + $0x20] sm:$0xff]
    %v1506 = vld [vmem:[%s1 + $0x28] sm:$0xff]
    %v1507 = vld [vmem:[%s1 + $0x30] sm:$0xff]
    %v1508 = vld [vmem:[%s1 + $0x38] sm:$0xff]
    %v1509 = vld [vmem:[%s1 + $0x40] sm:$0xff]
    %v1510 = vld [vmem:[%s1 + $0x48] sm:$0xff]
    %v1511 = vld [vmem:[%s1 + $0x50] sm:$0xff]
    %v1512 = vld [vmem:[%s1 + $0x58] sm:$0xff]
    %v1513 = vld [vmem:[%s1 + $0x60] sm:$0xff]
    %v1514 = vld [vmem:[%s1 + $0x68] sm:$0xff]
    %v1515 = vld [vmem:[%s1 + $0x70] sm:$0xff]
    %v1516 = vld [vmem:[%s1 + $0x78] sm:$0xff]
    %v1517 = vld [vmem:[%s1 + $0x80] sm:$0xff]
    %v1518 = vld [vmem:[%s1 + $0x88] sm:$0xff]
    %v1519 = vld [vmem:[%s1 + $0x90] sm:$0xff]
    %v1520 = vld [vmem:[%s1 + $0x98] sm:$0xff]
    %v1521 = vld [vmem:[%s1 + $0xa0] sm:$0x33]
    %v1522 = vld [vmem:[%s1 + $0xa8] sm:$0x33]
    %1524 = vrot.lane.b32.xlu0 %v1500, 104
    %v1525 = vpop.permute.xlu0 %1524
    %v1548 = vunpack.c.l.b16 %v1501
    %v1549 = vunpack.c.h.b16 %v1501
    %v1550 = vunpack.c.l.b16 %v1502
    %v1551 = vunpack.c.h.b16 %v1502
    %v1552 = vunpack.c.l.b16 %v1503
    %v1553 = vunpack.c.h.b16 %v1503
    %v1554 = vunpack.c.l.b16 %v1504
    %v1555 = vunpack.c.h.b16 %v1504
    %v1556 = vunpack.c.l.b16 %v1505
    %v1557 = vunpack.c.h.b16 %v1505
    %v1558 = vunpack.c.l.b16 %v1506
    %v1559 = vunpack.c.h.b16 %v1506
    %v1560 = vunpack.c.l.b16 %v1507
    %v1561 = vunpack.c.h.b16 %v1507
    %v1562 = vunpack.c.l.b16 %v1508
    %v1563 = vunpack.c.h.b16 %v1508
    %v1564 = vunpack.c.l.b16 %v1509
    %v1565 = vunpack.c.h.b16 %v1509
    %v1566 = vunpack.c.l.b16 %v1510
    %v1567 = vunpack.c.h.b16 %v1510
    %v1568 = vunpack.c.l.b16 %v1511
    %v1569 = vunpack.c.h.b16 %v1511
    %v1570 = vunpack.c.l.b16 %v1512
    %v1571 = vunpack.c.h.b16 %v1512
    %v1572 = vunpack.c.l.b16 %v1513
    %v1573 = vunpack.c.h.b16 %v1513
    %v1574 = vunpack.c.l.b16 %v1514
    %v1575 = vunpack.c.h.b16 %v1514
    %v1576 = vunpack.c.l.b16 %v1515
    %v1577 = vunpack.c.h.b16 %v1515
    %v1578 = vunpack.c.l.b16 %v1516
    %v1579 = vunpack.c.h.b16 %v1516
    %v1580 = vunpack.c.l.b16 %v1517
    %v1581 = vunpack.c.h.b16 %v1517
    %v1582 = vunpack.c.l.b16 %v1518
    %v1583 = vunpack.c.h.b16 %v1518
    %v1584 = vunpack.c.l.b16 %v1519
    %v1585 = vunpack.c.h.b16 %v1519
    %v1586 = vunpack.c.l.b16 %v1520
    %v1587 = vunpack.c.h.b16 %v1520
    %v1588 = vunpack.c.l.b16 %v1521
    %v1589 = vunpack.c.h.b16 %v1521
    %v1590 = vunpack.c.l.b16 %v1522
    %v1591 = vunpack.c.h.b16 %v1522
    %v1592 = vpack.c.b16 %v1552, %v1548
    %v1593 = vpack.c.b16 %v1553, %v1549
    %v1594 = vpack.c.b16 %v1554, %v1550
    %v1595 = vpack.c.b16 %v1555, %v1551
    %v1596 = vpack.c.b16 %v1560, %v1556
    %v1597 = vpack.c.b16 %v1561, %v1557
    %v1598 = vpack.c.b16 %v1562, %v1558
    %v1599 = vpack.c.b16 %v1563, %v1559
    %v1600 = vpack.c.b16 %v1568, %v1564
    %v1601 = vpack.c.b16 %v1569, %v1565
    %v1602 = vpack.c.b16 %v1570, %v1566
    %v1603 = vpack.c.b16 %v1571, %v1567
    %v1604 = vpack.c.b16 %v1576, %v1572
    %v1605 = vpack.c.b16 %v1577, %v1573
    %v1606 = vpack.c.b16 %v1578, %v1574
    %v1607 = vpack.c.b16 %v1579, %v1575
    %v1608 = vpack.c.b16 %v1584, %v1580
    %v1609 = vpack.c.b16 %v1585, %v1581
    %v1610 = vpack.c.b16 %v1586, %v1582
    %v1611 = vpack.c.b16 %v1587, %v1583
    %v1612 = vpack.c.b16 %v1588, %v1588
    %v1613 = vpack.c.b16 %v1589, %v1589
    %v1614 = vpack.c.b16 %v1590, %v1590
    %v1615 = vpack.c.b16 %v1591, %v1591
    %v1637 = vsel %vm199, %v1525, 0
    %v1640 = vsel %vm203, %v1612, 0
    %v1643 = vsel %vm203, %v1613, 0
    %v1646 = vsel %vm203, %v1614, 0
    %v1649 = vsel %vm203, %v1615, 0
    %1651 = vmatpush.bf16.msra.mxu0 0
    %1652 = vmatpush.bf16.msra.mxu0 0
    %1653 = vmatpush.bf16.msra.mxu0 %v1640
    %1654 = vmatpush.bf16.msra.mxu0 %v1608
    %1655 = vmatpush.bf16.msra.mxu0 %v1604
    %1656 = vmatpush.bf16.msra.mxu0 %v1600
    %1657 = vmatpush.bf16.msra.mxu0 %v1596
    %1658 = vmatpush.bf16.msra.mxu0 %v1592
    %1659 = vmatmul.bf16.gmra.mxu0 %v1637
    %v1660 = vpop.f32.mrf.mxu0
    %v1661 = vadd.f32 0.0, %v1660
    %v1662 = vpop.f32.mrf.mxu0
    %1663 = vdwg.mxu0
    %1664 = vmatpush.bf16.msra.mxu0 0
    %1665 = vmatpush.bf16.msra.mxu0 0
    %1666 = vmatpush.bf16.msra.mxu0 %v1643
    %1667 = vmatpush.bf16.msra.mxu0 %v1609
    %1668 = vmatpush.bf16.msra.mxu0 %v1605
    %1669 = vmatpush.bf16.msra.mxu0 %v1601
    %1670 = vmatpush.bf16.msra.mxu0 %v1597
    %1671 = vmatpush.bf16.msra.mxu0 %v1593
    %1672 = vmatmul.bf16.gmra.mxu0 %v1637
    %v1673 = vpop.f32.mrf.mxu0
    %v1674 = vadd.f32 0.0, %v1673
    %v1675 = vpop.f32.mrf.mxu0
    %1676 = vdwg.mxu0
    %1677 = vmatpush.bf16.msra.mxu0 0
    %1678 = vmatpush.bf16.msra.mxu0 0
    %1679 = vmatpush.bf16.msra.mxu0 %v1646
    %1680 = vmatpush.bf16.msra.mxu0 %v1610
    %1681 = vmatpush.bf16.msra.mxu0 %v1606
    %1682 = vmatpush.bf16.msra.mxu0 %v1602
    %1683 = vmatpush.bf16.msra.mxu0 %v1598
    %1684 = vmatpush.bf16.msra.mxu0 %v1594
    %1685 = vmatmul.bf16.gmra.mxu0 %v1637
    %v1686 = vpop.f32.mrf.mxu0
    %v1687 = vadd.f32 0.0, %v1686
    %v1688 = vpop.f32.mrf.mxu0
    %1689 = vdwg.mxu0
    %1690 = vmatpush.bf16.msra.mxu0 0
    %1691 = vmatpush.bf16.msra.mxu0 0
    %1692 = vmatpush.bf16.msra.mxu0 %v1649
    %1693 = vmatpush.bf16.msra.mxu0 %v1611
    %1694 = vmatpush.bf16.msra.mxu0 %v1607
    %1695 = vmatpush.bf16.msra.mxu0 %v1603
    %1696 = vmatpush.bf16.msra.mxu0 %v1599
    %1697 = vmatpush.bf16.msra.mxu0 %v1595
    %1698 = vmatmul.bf16.gmra.mxu0 %v1637
    %v1699 = vpop.f32.mrf.mxu0
    %v1700 = vadd.f32 0.0, %v1699
    %v1701 = vpop.f32.mrf.mxu0
    %1702 = vdwg.mxu0
    %v1703 = vld [vmem:[%s0 + $0x10] sm:$0xff]
    %v1704 = vld [vmem:[%s0 + $0x18] sm:$0xff]
    %v1705 = vpack.c.bf16 %v1703, %v1703
    %v1706 = vpack.c.bf16 %v1704, %v1704
    %1709 = vrot.lane.b32.xlu0 %v1705, 76
    %v1710 = vpop.permute.xlu0 %1709
    %1711 = vrot.lane.b32.xlu0 %v1706, 76
    %v1712 = vpop.permute.xlu0 %1711
    %vm1713 = vcmask 621568
    %v1714 = vsel %vm1713, %v1710, %v1712
    %v1716 = vsel %vm199, %v1714, 0
    %1718 = vmatpush.bf16.msra.mxu0 0
    %1719 = vmatpush.bf16.msra.mxu0 0
    %1720 = vmatpush.bf16.msra.mxu0 %v1640
    %1721 = vmatpush.bf16.msra.mxu0 %v1608
    %1722 = vmatpush.bf16.msra.mxu0 %v1604
    %1723 = vmatpush.bf16.msra.mxu0 %v1600
    %1724 = vmatpush.bf16.msra.mxu0 %v1596
    %1725 = vmatpush.bf16.msra.mxu0 %v1592
    %1726 = vmatmul.bf16.gmra.mxu0 %v1716
    %v1727 = vpop.f32.mrf.mxu0
    %v1728 = vadd.f32 0.0, %v1727
    %v1729 = vpop.f32.mrf.mxu0
    %1730 = vdwg.mxu0
    %1731 = vmatpush.bf16.msra.mxu0 0
    %1732 = vmatpush.bf16.msra.mxu0 0
    %1733 = vmatpush.bf16.msra.mxu0 %v1643
    %1734 = vmatpush.bf16.msra.mxu0 %v1609
    %1735 = vmatpush.bf16.msra.mxu0 %v1605
    %1736 = vmatpush.bf16.msra.mxu0 %v1601
    %1737 = vmatpush.bf16.msra.mxu0 %v1597
    %1738 = vmatpush.bf16.msra.mxu0 %v1593
    %1739 = vmatmul.bf16.gmra.mxu0 %v1716
    %v1740 = vpop.f32.mrf.mxu0
    %v1741 = vadd.f32 0.0, %v1740
    %v1742 = vpop.f32.mrf.mxu0
    %1743 = vdwg.mxu0
    %1744 = vmatpush.bf16.msra.mxu0 0
    %1745 = vmatpush.bf16.msra.mxu0 0
    %1746 = vmatpush.bf16.msra.mxu0 %v1646
    %1747 = vmatpush.bf16.msra.mxu0 %v1610
    %1748 = vmatpush.bf16.msra.mxu0 %v1606
    %1749 = vmatpush.bf16.msra.mxu0 %v1602
    %1750 = vmatpush.bf16.msra.mxu0 %v1598
    %1751 = vmatpush.bf16.msra.mxu0 %v1594
    %1752 = vmatmul.bf16.gmra.mxu0 %v1716
    %v1753 = vpop.f32.mrf.mxu0
    %v1754 = vadd.f32 0.0, %v1753
    %v1755 = vpop.f32.mrf.mxu0
    %1756 = vdwg.mxu0
    %1757 = vmatpush.bf16.msra.mxu0 0
    %1758 = vmatpush.bf16.msra.mxu0 0
    %1759 = vmatpush.bf16.msra.mxu0 %v1649
    %1760 = vmatpush.bf16.msra.mxu0 %v1611
    %1761 = vmatpush.bf16.msra.mxu0 %v1607
    %1762 = vmatpush.bf16.msra.mxu0 %v1603
    %1763 = vmatpush.bf16.msra.mxu0 %v1599
    %1764 = vmatpush.bf16.msra.mxu0 %v1595
    %1765 = vmatmul.bf16.gmra.mxu0 %v1716
    %v1766 = vpop.f32.mrf.mxu0
    %v1767 = vadd.f32 0.0, %v1766
    %v1768 = vpop.f32.mrf.mxu0
    %1769 = vdwg.mxu0
    %v1770 = vmax.f32 %v1661, %v1728
    %v1771 = vmax.f32 %v1674, %v1741
    %v1772 = vmax.f32 %v1687, %v1754
    %v1773 = vmax.f32 %v1700, %v1767
    %v1774 = vmax.f32 %v1770, %v1772
    %v1775 = vmax.f32 %v1771, %v1773
    %v1776 = vld [vmem:[%s2] sm:$0x3]
    %v1778 = vperm.slane %v1776, 0
    %v1779 = vperm.slane %v1776, 1
    %v1782 = vadd.f32 %v1774, %v1778
    %v1783 = vadd.f32 %v1775, %v1779
    %v1784 = vmax.f32 %v1782, 0.0
    %v1785 = vmax.f32 %v1783, 0.0
    %1786 = vst [vmem:[#allocation2 + $0x50] sm:$0xff] %v1784
    %1787 = vst [vmem:[#allocation2 + $0x58] sm:$0xff] %v1785
    %v1788 = vld [vmem:[%s0 + $0x10] sm:$0xff]
    %v1789 = vld [vmem:[%s0 + $0x18] sm:$0xff]
    %v1790 = vpack.c.bf16 %v1788, %v1788
    %v1791 = vpack.c.bf16 %v1789, %v1789
    %v1792 = vld [vmem:[%s1] sm:$0xff]
    %v1793 = vld [vmem:[%s1 + $0x8] sm:$0xff]
    %v1794 = vld [vmem:[%s1 + $0x10] sm:$0xff]
    %v1795 = vld [vmem:[%s1 + $0x18] sm:$0xff]
    %v1796 = vld [vmem:[%s1 + $0x20] sm:$0xff]
    %v1797 = vld [vmem:[%s1 + $0x28] sm:$0xff]
    %v1798 = vld [vmem:[%s1 + $0x30] sm:$0xff]
    %v1799 = vld [vmem:[%s1 + $0x38] sm:$0xff]
    %v1800 = vld [vmem:[%s1 + $0x40] sm:$0xff]
    %v1801 = vld [vmem:[%s1 + $0x48] sm:$0xff]
    %v1802 = vld [vmem:[%s1 + $0x50] sm:$0xff]
    %v1803 = vld [vmem:[%s1 + $0x58] sm:$0xff]
    %v1804 = vld [vmem:[%s1 + $0x60] sm:$0xff]
    %v1805 = vld [vmem:[%s1 + $0x68] sm:$0xff]
    %v1806 = vld [vmem:[%s1 + $0x70] sm:$0xff]
    %v1807 = vld [vmem:[%s1 + $0x78] sm:$0xff]
    %v1808 = vld [vmem:[%s1 + $0x80] sm:$0xff]
    %v1809 = vld [vmem:[%s1 + $0x88] sm:$0xff]
    %v1810 = vld [vmem:[%s1 + $0x90] sm:$0xff]
    %v1811 = vld [vmem:[%s1 + $0x98] sm:$0xff]
    %v1812 = vld [vmem:[%s1 + $0xa0] sm:$0x33]
    %v1813 = vld [vmem:[%s1 + $0xa8] sm:$0x33]
    %1816 = vrot.lane.b32.xlu0 %v1790, 48
    %v1817 = vpop.permute.xlu0 %1816
    %1818 = vrot.lane.b32.xlu0 %v1791, 48
    %v1819 = vpop.permute.xlu0 %1818
    %vm1820 = vcmask 392192
    %v1821 = vsel %vm1820, %v1817, %v1819
    %v1844 = vunpack.c.l.b16 %v1792
    %v1845 = vunpack.c.h.b16 %v1792
    %v1846 = vunpack.c.l.b16 %v1793
    %v1847 = vunpack.c.h.b16 %v1793
    %v1848 = vunpack.c.l.b16 %v1794
    %v1849 = vunpack.c.h.b16 %v1794
    %v1850 = vunpack.c.l.b16 %v1795
    %v1851 = vunpack.c.h.b16 %v1795
    %v1852 = vunpack.c.l.b16 %v1796
    %v1853 = vunpack.c.h.b16 %v1796
    %v1854 = vunpack.c.l.b16 %v1797
    %v1855 = vunpack.c.h.b16 %v1797
    %v1856 = vunpack.c.l.b16 %v1798
    %v1857 = vunpack.c.h.b16 %v1798
    %v1858 = vunpack.c.l.b16 %v1799
    %v1859 = vunpack.c.h.b16 %v1799
    %v1860 = vunpack.c.l.b16 %v1800
    %v1861 = vunpack.c.h.b16 %v1800
    %v1862 = vunpack.c.l.b16 %v1801
    %v1863 = vunpack.c.h.b16 %v1801
    %v1864 = vunpack.c.l.b16 %v1802
    %v1865 = vunpack.c.h.b16 %v1802
    %v1866 = vunpack.c.l.b16 %v1803
    %v1867 = vunpack.c.h.b16 %v1803
    %v1868 = vunpack.c.l.b16 %v1804
    %v1869 = vunpack.c.h.b16 %v1804
    %v1870 = vunpack.c.l.b16 %v1805
    %v1871 = vunpack.c.h.b16 %v1805
    %v1872 = vunpack.c.l.b16 %v1806
    %v1873 = vunpack.c.h.b16 %v1806
    %v1874 = vunpack.c.l.b16 %v1807
    %v1875 = vunpack.c.h.b16 %v1807
    %v1876 = vunpack.c.l.b16 %v1808
    %v1877 = vunpack.c.h.b16 %v1808
    %v1878 = vunpack.c.l.b16 %v1809
    %v1879 = vunpack.c.h.b16 %v1809
    %v1880 = vunpack.c.l.b16 %v1810
    %v1881 = vunpack.c.h.b16 %v1810
    %v1882 = vunpack.c.l.b16 %v1811
    %v1883 = vunpack.c.h.b16 %v1811
    %v1884 = vunpack.c.l.b16 %v1812
    %v1885 = vunpack.c.h.b16 %v1812
    %v1886 = vunpack.c.l.b16 %v1813
    %v1887 = vunpack.c.h.b16 %v1813
    %v1888 = vpack.c.b16 %v1848, %v1844
    %v1889 = vpack.c.b16 %v1849, %v1845
    %v1890 = vpack.c.b16 %v1850, %v1846
    %v1891 = vpack.c.b16 %v1851, %v1847
    %v1892 = vpack.c.b16 %v1856, %v1852
    %v1893 = vpack.c.b16 %v1857, %v1853
    %v1894 = vpack.c.b16 %v1858, %v1854
    %v1895 = vpack.c.b16 %v1859, %v1855
    %v1896 = vpack.c.b16 %v1864, %v1860
    %v1897 = vpack.c.b16 %v1865, %v1861
    %v1898 = vpack.c.b16 %v1866, %v1862
    %v1899 = vpack.c.b16 %v1867, %v1863
    %v1900 = vpack.c.b16 %v1872, %v1868
    %v1901 = vpack.c.b16 %v1873, %v1869
    %v1902 = vpack.c.b16 %v1874, %v1870
    %v1903 = vpack.c.b16 %v1875, %v1871
    %v1904 = vpack.c.b16 %v1880, %v1876
    %v1905 = vpack.c.b16 %v1881, %v1877
    %v1906 = vpack.c.b16 %v1882, %v1878
    %v1907 = vpack.c.b16 %v1883, %v1879
    %v1908 = vpack.c.b16 %v1884, %v1884
    %v1909 = vpack.c.b16 %v1885, %v1885
    %v1910 = vpack.c.b16 %v1886, %v1886
    %v1911 = vpack.c.b16 %v1887, %v1887
    %v1933 = vsel %vm199, %v1821, 0
    %v1936 = vsel %vm203, %v1908, 0
    %v1939 = vsel %vm203, %v1909, 0
    %v1942 = vsel %vm203, %v1910, 0
    %v1945 = vsel %vm203, %v1911, 0
    %1947 = vmatpush.bf16.msra.mxu0 0
    %1948 = vmatpush.bf16.msra.mxu0 0
    %1949 = vmatpush.bf16.msra.mxu0 %v1936
    %1950 = vmatpush.bf16.msra.mxu0 %v1904
    %1951 = vmatpush.bf16.msra.mxu0 %v1900
    %1952 = vmatpush.bf16.msra.mxu0 %v1896
    %1953 = vmatpush.bf16.msra.mxu0 %v1892
    %1954 = vmatpush.bf16.msra.mxu0 %v1888
    %1955 = vmatmul.bf16.gmra.mxu0 %v1933
    %v1956 = vpop.f32.mrf.mxu0
    %v1957 = vadd.f32 0.0, %v1956
    %v1958 = vpop.f32.mrf.mxu0
    %1959 = vdwg.mxu0
    %1960 = vmatpush.bf16.msra.mxu0 0
    %1961 = vmatpush.bf16.msra.mxu0 0
    %1962 = vmatpush.bf16.msra.mxu0 %v1939
    %1963 = vmatpush.bf16.msra.mxu0 %v1905
    %1964 = vmatpush.bf16.msra.mxu0 %v1901
    %1965 = vmatpush.bf16.msra.mxu0 %v1897
    %1966 = vmatpush.bf16.msra.mxu0 %v1893
    %1967 = vmatpush.bf16.msra.mxu0 %v1889
    %1968 = vmatmul.bf16.gmra.mxu0 %v1933
    %v1969 = vpop.f32.mrf.mxu0
    %v1970 = vadd.f32 0.0, %v1969
    %v1971 = vpop.f32.mrf.mxu0
    %1972 = vdwg.mxu0
    %1973 = vmatpush.bf16.msra.mxu0 0
    %1974 = vmatpush.bf16.msra.mxu0 0
    %1975 = vmatpush.bf16.msra.mxu0 %v1942
    %1976 = vmatpush.bf16.msra.mxu0 %v1906
    %1977 = vmatpush.bf16.msra.mxu0 %v1902
    %1978 = vmatpush.bf16.msra.mxu0 %v1898
    %1979 = vmatpush.bf16.msra.mxu0 %v1894
    %1980 = vmatpush.bf16.msra.mxu0 %v1890
    %1981 = vmatmul.bf16.gmra.mxu0 %v1933
    %v1982 = vpop.f32.mrf.mxu0
    %v1983 = vadd.f32 0.0, %v1982
    %v1984 = vpop.f32.mrf.mxu0
    %1985 = vdwg.mxu0
    %1986 = vmatpush.bf16.msra.mxu0 0
    %1987 = vmatpush.bf16.msra.mxu0 0
    %1988 = vmatpush.bf16.msra.mxu0 %v1945
    %1989 = vmatpush.bf16.msra.mxu0 %v1907
    %1990 = vmatpush.bf16.msra.mxu0 %v1903
    %1991 = vmatpush.bf16.msra.mxu0 %v1899
    %1992 = vmatpush.bf16.msra.mxu0 %v1895
    %1993 = vmatpush.bf16.msra.mxu0 %v1891
    %1994 = vmatmul.bf16.gmra.mxu0 %v1933
    %v1995 = vpop.f32.mrf.mxu0
    %v1996 = vadd.f32 0.0, %v1995
    %v1997 = vpop.f32.mrf.mxu0
    %1998 = vdwg.mxu0
    %1999 = vrot.lane.b32.xlu0 %v1790, 20
    %v2000 = vpop.permute.xlu0 %1999
    %2001 = vrot.lane.b32.xlu0 %v1791, 20
    %v2002 = vpop.permute.xlu0 %2001
    %vm2003 = vcmask 162816
    %v2004 = vsel %vm2003, %v2000, %v2002
    %v2006 = vsel %vm199, %v2004, 0
    %2008 = vmatpush.bf16.msra.mxu0 0
    %2009 = vmatpush.bf16.msra.mxu0 0
    %2010 = vmatpush.bf16.msra.mxu0 %v1936
    %2011 = vmatpush.bf16.msra.mxu0 %v1904
    %2012 = vmatpush.bf16.msra.mxu0 %v1900
    %2013 = vmatpush.bf16.msra.mxu0 %v1896
    %2014 = vmatpush.bf16.msra.mxu0 %v1892
    %2015 = vmatpush.bf16.msra.mxu0 %v1888
    %2016 = vmatmul.bf16.gmra.mxu0 %v2006
    %v2017 = vpop.f32.mrf.mxu0
    %v2018 = vadd.f32 0.0, %v2017
    %v2019 = vpop.f32.mrf.mxu0
    %2020 = vdwg.mxu0
    %2021 = vmatpush.bf16.msra.mxu0 0
    %2022 = vmatpush.bf16.msra.mxu0 0
    %2023 = vmatpush.bf16.msra.mxu0 %v1939
    %2024 = vmatpush.bf16.msra.mxu0 %v1905
    %2025 = vmatpush.bf16.msra.mxu0 %v1901
    %2026 = vmatpush.bf16.msra.mxu0 %v1897
    %2027 = vmatpush.bf16.msra.mxu0 %v1893
    %2028 = vmatpush.bf16.msra.mxu0 %v1889
    %2029 = vmatmul.bf16.gmra.mxu0 %v2006
    %v2030 = vpop.f32.mrf.mxu0
    %v2031 = vadd.f32 0.0, %v2030
    %v2032 = vpop.f32.mrf.mxu0
    %2033 = vdwg.mxu0
    %2034 = vmatpush.bf16.msra.mxu0 0
    %2035 = vmatpush.bf16.msra.mxu0 0
    %2036 = vmatpush.bf16.msra.mxu0 %v1942
    %2037 = vmatpush.bf16.msra.mxu0 %v1906
    %2038 = vmatpush.bf16.msra.mxu0 %v1902
    %2039 = vmatpush.bf16.msra.mxu0 %v1898
    %2040 = vmatpush.bf16.msra.mxu0 %v1894
    %2041 = vmatpush.bf16.msra.mxu0 %v1890
    %2042 = vmatmul.bf16.gmra.mxu0 %v2006
    %v2043 = vpop.f32.mrf.mxu0
    %v2044 = vadd.f32 0.0, %v2043
    %v2045 = vpop.f32.mrf.mxu0
    %2046 = vdwg.mxu0
    %2047 = vmatpush.bf16.msra.mxu0 0
    %2048 = vmatpush.bf16.msra.mxu0 0
    %2049 = vmatpush.bf16.msra.mxu0 %v1945
    %2050 = vmatpush.bf16.msra.mxu0 %v1907
    %2051 = vmatpush.bf16.msra.mxu0 %v1903
    %2052 = vmatpush.bf16.msra.mxu0 %v1899
    %2053 = vmatpush.bf16.msra.mxu0 %v1895
    %2054 = vmatpush.bf16.msra.mxu0 %v1891
    %2055 = vmatmul.bf16.gmra.mxu0 %v2006
    %v2056 = vpop.f32.mrf.mxu0
    %v2057 = vadd.f32 0.0, %v2056
    %v2058 = vpop.f32.mrf.mxu0
    %2059 = vdwg.mxu0
    %v2060 = vmax.f32 %v1957, %v2018
    %v2061 = vmax.f32 %v1970, %v2031
    %v2062 = vmax.f32 %v1983, %v2044
    %v2063 = vmax.f32 %v1996, %v2057
    %v2064 = vmax.f32 %v2060, %v2062
    %v2065 = vmax.f32 %v2061, %v2063
    %v2066 = vld [vmem:[%s2] sm:$0x3]
    %v2068 = vperm.slane %v2066, 0
    %v2069 = vperm.slane %v2066, 1
    %v2072 = vadd.f32 %v2064, %v2068
    %v2073 = vadd.f32 %v2065, %v2069
    %v2074 = vmax.f32 %v2072, 0.0
    %v2075 = vmax.f32 %v2073, 0.0
    %2076 = vst [vmem:[#allocation2 + $0x60] sm:$0xff] %v2074
    %2077 = vst [vmem:[#allocation2 + $0x68] sm:$0xff] %v2075
    %v2078 = vld [vmem:[%s0 + $0x18] sm:$0xff]
    %v2079 = vpack.c.bf16 %v2078, %v2078
    %v2080 = vld [vmem:[%s1] sm:$0xff]
    %v2081 = vld [vmem:[%s1 + $0x8] sm:$0xff]
    %v2082 = vld [vmem:[%s1 + $0x10] sm:$0xff]
    %v2083 = vld [vmem:[%s1 + $0x18] sm:$0xff]
    %v2084 = vld [vmem:[%s1 + $0x20] sm:$0xff]
    %v2085 = vld [vmem:[%s1 + $0x28] sm:$0xff]
    %v2086 = vld [vmem:[%s1 + $0x30] sm:$0xff]
    %v2087 = vld [vmem:[%s1 + $0x38] sm:$0xff]
    %v2088 = vld [vmem:[%s1 + $0x40] sm:$0xff]
    %v2089 = vld [vmem:[%s1 + $0x48] sm:$0xff]
    %v2090 = vld [vmem:[%s1 + $0x50] sm:$0xff]
    %v2091 = vld [vmem:[%s1 + $0x58] sm:$0xff]
    %v2092 = vld [vmem:[%s1 + $0x60] sm:$0xff]
    %v2093 = vld [vmem:[%s1 + $0x68] sm:$0xff]
    %v2094 = vld [vmem:[%s1 + $0x70] sm:$0xff]
    %v2095 = vld [vmem:[%s1 + $0x78] sm:$0xff]
    %v2096 = vld [vmem:[%s1 + $0x80] sm:$0xff]
    %v2097 = vld [vmem:[%s1 + $0x88] sm:$0xff]
    %v2098 = vld [vmem:[%s1 + $0x90] sm:$0xff]
    %v2099 = vld [vmem:[%s1 + $0x98] sm:$0xff]
    %v2100 = vld [vmem:[%s1 + $0xa0] sm:$0x33]
    %v2101 = vld [vmem:[%s1 + $0xa8] sm:$0x33]
    %2103 = vrot.lane.b32.xlu0 %v2079, 120
    %v2104 = vpop.permute.xlu0 %2103
    %v2127 = vunpack.c.l.b16 %v2080
    %v2128 = vunpack.c.h.b16 %v2080
    %v2129 = vunpack.c.l.b16 %v2081
    %v2130 = vunpack.c.h.b16 %v2081
    %v2131 = vunpack.c.l.b16 %v2082
    %v2132 = vunpack.c.h.b16 %v2082
    %v2133 = vunpack.c.l.b16 %v2083
    %v2134 = vunpack.c.h.b16 %v2083
    %v2135 = vunpack.c.l.b16 %v2084
    %v2136 = vunpack.c.h.b16 %v2084
    %v2137 = vunpack.c.l.b16 %v2085
    %v2138 = vunpack.c.h.b16 %v2085
    %v2139 = vunpack.c.l.b16 %v2086
    %v2140 = vunpack.c.h.b16 %v2086
    %v2141 = vunpack.c.l.b16 %v2087
    %v2142 = vunpack.c.h.b16 %v2087
    %v2143 = vunpack.c.l.b16 %v2088
    %v2144 = vunpack.c.h.b16 %v2088
    %v2145 = vunpack.c.l.b16 %v2089
    %v2146 = vunpack.c.h.b16 %v2089
    %v2147 = vunpack.c.l.b16 %v2090
    %v2148 = vunpack.c.h.b16 %v2090
    %v2149 = vunpack.c.l.b16 %v2091
    %v2150 = vunpack.c.h.b16 %v2091
    %v2151 = vunpack.c.l.b16 %v2092
    %v2152 = vunpack.c.h.b16 %v2092
    %v2153 = vunpack.c.l.b16 %v2093
    %v2154 = vunpack.c.h.b16 %v2093
    %v2155 = vunpack.c.l.b16 %v2094
    %v2156 = vunpack.c.h.b16 %v2094
    %v2157 = vunpack.c.l.b16 %v2095
    %v2158 = vunpack.c.h.b16 %v2095
    %v2159 = vunpack.c.l.b16 %v2096
    %v2160 = vunpack.c.h.b16 %v2096
    %v2161 = vunpack.c.l.b16 %v2097
    %v2162 = vunpack.c.h.b16 %v2097
    %v2163 = vunpack.c.l.b16 %v2098
    %v2164 = vunpack.c.h.b16 %v2098
    %v2165 = vunpack.c.l.b16 %v2099
    %v2166 = vunpack.c.h.b16 %v2099
    %v2167 = vunpack.c.l.b16 %v2100
    %v2168 = vunpack.c.h.b16 %v2100
    %v2169 = vunpack.c.l.b16 %v2101
    %v2170 = vunpack.c.h.b16 %v2101
    %v2171 = vpack.c.b16 %v2131, %v2127
    %v2172 = vpack.c.b16 %v2132, %v2128
    %v2173 = vpack.c.b16 %v2133, %v2129
    %v2174 = vpack.c.b16 %v2134, %v2130
    %v2175 = vpack.c.b16 %v2139, %v2135
    %v2176 = vpack.c.b16 %v2140, %v2136
    %v2177 = vpack.c.b16 %v2141, %v2137
    %v2178 = vpack.c.b16 %v2142, %v2138
    %v2179 = vpack.c.b16 %v2147, %v2143
    %v2180 = vpack.c.b16 %v2148, %v2144
    %v2181 = vpack.c.b16 %v2149, %v2145
    %v2182 = vpack.c.b16 %v2150, %v2146
    %v2183 = vpack.c.b16 %v2155, %v2151
    %v2184 = vpack.c.b16 %v2156, %v2152
    %v2185 = vpack.c.b16 %v2157, %v2153
    %v2186 = vpack.c.b16 %v2158, %v2154
    %v2187 = vpack.c.b16 %v2163, %v2159
    %v2188 = vpack.c.b16 %v2164, %v2160
    %v2189 = vpack.c.b16 %v2165, %v2161
    %v2190 = vpack.c.b16 %v2166, %v2162
    %v2191 = vpack.c.b16 %v2167, %v2167
    %v2192 = vpack.c.b16 %v2168, %v2168
    %v2193 = vpack.c.b16 %v2169, %v2169
    %v2194 = vpack.c.b16 %v2170, %v2170
    %v2216 = vsel %vm199, %v2104, 0
    %v2219 = vsel %vm203, %v2191, 0
    %v2222 = vsel %vm203, %v2192, 0
    %v2225 = vsel %vm203, %v2193, 0
    %v2228 = vsel %vm203, %v2194, 0
    %2230 = vmatpush.bf16.msra.mxu0 0
    %2231 = vmatpush.bf16.msra.mxu0 0
    %2232 = vmatpush.bf16.msra.mxu0 %v2219
    %2233 = vmatpush.bf16.msra.mxu0 %v2187
    %2234 = vmatpush.bf16.msra.mxu0 %v2183
    %2235 = vmatpush.bf16.msra.mxu0 %v2179
    %2236 = vmatpush.bf16.msra.mxu0 %v2175
    %2237 = vmatpush.bf16.msra.mxu0 %v2171
    %2238 = vmatmul.bf16.gmra.mxu0 %v2216
    %v2239 = vpop.f32.mrf.mxu0
    %v2240 = vadd.f32 0.0, %v2239
    %v2241 = vpop.f32.mrf.mxu0
    %2242 = vdwg.mxu0
    %2243 = vmatpush.bf16.msra.mxu0 0
    %2244 = vmatpush.bf16.msra.mxu0 0
    %2245 = vmatpush.bf16.msra.mxu0 %v2222
    %2246 = vmatpush.bf16.msra.mxu0 %v2188
    %2247 = vmatpush.bf16.msra.mxu0 %v2184
    %2248 = vmatpush.bf16.msra.mxu0 %v2180
    %2249 = vmatpush.bf16.msra.mxu0 %v2176
    %2250 = vmatpush.bf16.msra.mxu0 %v2172
    %2251 = vmatmul.bf16.gmra.mxu0 %v2216
    %v2252 = vpop.f32.mrf.mxu0
    %v2253 = vadd.f32 0.0, %v2252
    %v2254 = vpop.f32.mrf.mxu0
    %2255 = vdwg.mxu0
    %2256 = vmatpush.bf16.msra.mxu0 0
    %2257 = vmatpush.bf16.msra.mxu0 0
    %2258 = vmatpush.bf16.msra.mxu0 %v2225
    %2259 = vmatpush.bf16.msra.mxu0 %v2189
    %2260 = vmatpush.bf16.msra.mxu0 %v2185
    %2261 = vmatpush.bf16.msra.mxu0 %v2181
    %2262 = vmatpush.bf16.msra.mxu0 %v2177
    %2263 = vmatpush.bf16.msra.mxu0 %v2173
    %2264 = vmatmul.bf16.gmra.mxu0 %v2216
    %v2265 = vpop.f32.mrf.mxu0
    %v2266 = vadd.f32 0.0, %v2265
    %v2267 = vpop.f32.mrf.mxu0
    %2268 = vdwg.mxu0
    %2269 = vmatpush.bf16.msra.mxu0 0
    %2270 = vmatpush.bf16.msra.mxu0 0
    %2271 = vmatpush.bf16.msra.mxu0 %v2228
    %2272 = vmatpush.bf16.msra.mxu0 %v2190
    %2273 = vmatpush.bf16.msra.mxu0 %v2186
    %2274 = vmatpush.bf16.msra.mxu0 %v2182
    %2275 = vmatpush.bf16.msra.mxu0 %v2178
    %2276 = vmatpush.bf16.msra.mxu0 %v2174
    %2277 = vmatmul.bf16.gmra.mxu0 %v2216
    %v2278 = vpop.f32.mrf.mxu0
    %v2279 = vadd.f32 0.0, %v2278
    %v2280 = vpop.f32.mrf.mxu0
    %2281 = vdwg.mxu0
    %2282 = vrot.lane.b32.xlu0 %v2079, 92
    %v2283 = vpop.permute.xlu0 %2282
    %v2285 = vsel %vm199, %v2283, 0
    %2287 = vmatpush.bf16.msra.mxu0 0
    %2288 = vmatpush.bf16.msra.mxu0 0
    %2289 = vmatpush.bf16.msra.mxu0 %v2219
    %2290 = vmatpush.bf16.msra.mxu0 %v2187
    %2291 = vmatpush.bf16.msra.mxu0 %v2183
    %2292 = vmatpush.bf16.msra.mxu0 %v2179
    %2293 = vmatpush.bf16.msra.mxu0 %v2175
    %2294 = vmatpush.bf16.msra.mxu0 %v2171
    %2295 = vmatmul.bf16.gmra.mxu0 %v2285
    %v2296 = vpop.f32.mrf.mxu0
    %v2297 = vadd.f32 0.0, %v2296
    %v2298 = vpop.f32.mrf.mxu0
    %2299 = vdwg.mxu0
    %2300 = vmatpush.bf16.msra.mxu0 0
    %2301 = vmatpush.bf16.msra.mxu0 0
    %2302 = vmatpush.bf16.msra.mxu0 %v2222
    %2303 = vmatpush.bf16.msra.mxu0 %v2188
    %2304 = vmatpush.bf16.msra.mxu0 %v2184
    %2305 = vmatpush.bf16.msra.mxu0 %v2180
    %2306 = vmatpush.bf16.msra.mxu0 %v2176
    %2307 = vmatpush.bf16.msra.mxu0 %v2172
    %2308 = vmatmul.bf16.gmra.mxu0 %v2285
    %v2309 = vpop.f32.mrf.mxu0
    %v2310 = vadd.f32 0.0, %v2309
    %v2311 = vpop.f32.mrf.mxu0
    %2312 = vdwg.mxu0
    %2313 = vmatpush.bf16.msra.mxu0 0
    %2314 = vmatpush.bf16.msra.mxu0 0
    %2315 = vmatpush.bf16.msra.mxu0 %v2225
    %2316 = vmatpush.bf16.msra.mxu0 %v2189
    %2317 = vmatpush.bf16.msra.mxu0 %v2185
    %2318 = vmatpush.bf16.msra.mxu0 %v2181
    %2319 = vmatpush.bf16.msra.mxu0 %v2177
    %2320 = vmatpush.bf16.msra.mxu0 %v2173
    %2321 = vmatmul.bf16.gmra.mxu0 %v2285
    %v2322 = vpop.f32.mrf.mxu0
    %v2323 = vadd.f32 0.0, %v2322
    %v2324 = vpop.f32.mrf.mxu0
    %2325 = vdwg.mxu0
    %2326 = vmatpush.bf16.msra.mxu0 0
    %2327 = vmatpush.bf16.msra.mxu0 0
    %2328 = vmatpush.bf16.msra.mxu0 %v2228
    %2329 = vmatpush.bf16.msra.mxu0 %v2190
    %2330 = vmatpush.bf16.msra.mxu0 %v2186
    %2331 = vmatpush.bf16.msra.mxu0 %v2182
    %2332 = vmatpush.bf16.msra.mxu0 %v2178
    %2333 = vmatpush.bf16.msra.mxu0 %v2174
    %2334 = vmatmul.bf16.gmra.mxu0 %v2285
    %v2335 = vpop.f32.mrf.mxu0
    %v2336 = vadd.f32 0.0, %v2335
    %v2337 = vpop.f32.mrf.mxu0
    %2338 = vdwg.mxu0
    %v2339 = vmax.f32 %v2240, %v2297
    %v2340 = vmax.f32 %v2253, %v2310
    %v2341 = vmax.f32 %v2266, %v2323
    %v2342 = vmax.f32 %v2279, %v2336
    %v2343 = vmax.f32 %v2339, %v2341
    %v2344 = vmax.f32 %v2340, %v2342
    %v2345 = vld [vmem:[%s2] sm:$0x3]
    %v2347 = vperm.slane %v2345, 0
    %v2348 = vperm.slane %v2345, 1
    %v2351 = vadd.f32 %v2343, %v2347
    %v2352 = vadd.f32 %v2344, %v2348
    %v2353 = vmax.f32 %v2351, 0.0
    %v2354 = vmax.f32 %v2352, 0.0
    %2355 = vst [vmem:[#allocation2 + $0x70] sm:$0xff] %v2353
    %2356 = vst [vmem:[#allocation2 + $0x78] sm:$0xff] %v2354
    %v2357 = vld [vmem:[%s0 + $0x18] sm:$0xff]
    %v2358 = vld [vmem:[%s0 + $0x20] sm:$0xff]
    %v2359 = vpack.c.bf16 %v2357, %v2357
    %v2360 = vpack.c.bf16 %v2358, %v2358
    %v2361 = vld [vmem:[%s1] sm:$0xff]
    %v2362 = vld [vmem:[%s1 + $0x8] sm:$0xff]
    %v2363 = vld [vmem:[%s1 + $0x10] sm:$0xff]
    %v2364 = vld [vmem:[%s1 + $0x18] sm:$0xff]
    %v2365 = vld [vmem:[%s1 + $0x20] sm:$0xff]
    %v2366 = vld [vmem:[%s1 + $0x28] sm:$0xff]
    %v2367 = vld [vmem:[%s1 + $0x30] sm:$0xff]
    %v2368 = vld [vmem:[%s1 + $0x38] sm:$0xff]
    %v2369 = vld [vmem:[%s1 + $0x40] sm:$0xff]
    %v2370 = vld [vmem:[%s1 + $0x48] sm:$0xff]
    %v2371 = vld [vmem:[%s1 + $0x50] sm:$0xff]
    %v2372 = vld [vmem:[%s1 + $0x58] sm:$0xff]
    %v2373 = vld [vmem:[%s1 + $0x60] sm:$0xff]
    %v2374 = vld [vmem:[%s1 + $0x68] sm:$0xff]
    %v2375 = vld [vmem:[%s1 + $0x70] sm:$0xff]
    %v2376 = vld [vmem:[%s1 + $0x78] sm:$0xff]
    %v2377 = vld [vmem:[%s1 + $0x80] sm:$0xff]
    %v2378 = vld [vmem:[%s1 + $0x88] sm:$0xff]
    %v2379 = vld [vmem:[%s1 + $0x90] sm:$0xff]
    %v2380 = vld [vmem:[%s1 + $0x98] sm:$0xff]
    %v2381 = vld [vmem:[%s1 + $0xa0] sm:$0x33]
    %v2382 = vld [vmem:[%s1 + $0xa8] sm:$0x33]
    %2385 = vrot.lane.b32.xlu0 %v2359, 64
    %v2386 = vpop.permute.xlu0 %2385
    %2387 = vrot.lane.b32.xlu0 %v2360, 64
    %v2388 = vpop.permute.xlu0 %2387
    %vm2389 = vcmask 523264
    %v2390 = vsel %vm2389, %v2386, %v2388
    %v2413 = vunpack.c.l.b16 %v2361
    %v2414 = vunpack.c.h.b16 %v2361
    %v2415 = vunpack.c.l.b16 %v2362
    %v2416 = vunpack.c.h.b16 %v2362
    %v2417 = vunpack.c.l.b16 %v2363
    %v2418 = vunpack.c.h.b16 %v2363
    %v2419 = vunpack.c.l.b16 %v2364
    %v2420 = vunpack.c.h.b16 %v2364
    %v2421 = vunpack.c.l.b16 %v2365
    %v2422 = vunpack.c.h.b16 %v2365
    %v2423 = vunpack.c.l.b16 %v2366
    %v2424 = vunpack.c.h.b16 %v2366
    %v2425 = vunpack.c.l.b16 %v2367
    %v2426 = vunpack.c.h.b16 %v2367
    %v2427 = vunpack.c.l.b16 %v2368
    %v2428 = vunpack.c.h.b16 %v2368
    %v2429 = vunpack.c.l.b16 %v2369
    %v2430 = vunpack.c.h.b16 %v2369
    %v2431 = vunpack.c.l.b16 %v2370
    %v2432 = vunpack.c.h.b16 %v2370
    %v2433 = vunpack.c.l.b16 %v2371
    %v2434 = vunpack.c.h.b16 %v2371
    %v2435 = vunpack.c.l.b16 %v2372
    %v2436 = vunpack.c.h.b16 %v2372
    %v2437 = vunpack.c.l.b16 %v2373
    %v2438 = vunpack.c.h.b16 %v2373
    %v2439 = vunpack.c.l.b16 %v2374
    %v2440 = vunpack.c.h.b16 %v2374
    %v2441 = vunpack.c.l.b16 %v2375
    %v2442 = vunpack.c.h.b16 %v2375
    %v2443 = vunpack.c.l.b16 %v2376
    %v2444 = vunpack.c.h.b16 %v2376
    %v2445 = vunpack.c.l.b16 %v2377
    %v2446 = vunpack.c.h.b16 %v2377
    %v2447 = vunpack.c.l.b16 %v2378
    %v2448 = vunpack.c.h.b16 %v2378
    %v2449 = vunpack.c.l.b16 %v2379
    %v2450 = vunpack.c.h.b16 %v2379
    %v2451 = vunpack.c.l.b16 %v2380
    %v2452 = vunpack.c.h.b16 %v2380
    %v2453 = vunpack.c.l.b16 %v2381
    %v2454 = vunpack.c.h.b16 %v2381
    %v2455 = vunpack.c.l.b16 %v2382
    %v2456 = vunpack.c.h.b16 %v2382
    %v2457 = vpack.c.b16 %v2417, %v2413
    %v2458 = vpack.c.b16 %v2418, %v2414
    %v2459 = vpack.c.b16 %v2419, %v2415
    %v2460 = vpack.c.b16 %v2420, %v2416
    %v2461 = vpack.c.b16 %v2425, %v2421
    %v2462 = vpack.c.b16 %v2426, %v2422
    %v2463 = vpack.c.b16 %v2427, %v2423
    %v2464 = vpack.c.b16 %v2428, %v2424
    %v2465 = vpack.c.b16 %v2433, %v2429
    %v2466 = vpack.c.b16 %v2434, %v2430
    %v2467 = vpack.c.b16 %v2435, %v2431
    %v2468 = vpack.c.b16 %v2436, %v2432
    %v2469 = vpack.c.b16 %v2441, %v2437
    %v2470 = vpack.c.b16 %v2442, %v2438
    %v2471 = vpack.c.b16 %v2443, %v2439
    %v2472 = vpack.c.b16 %v2444, %v2440
    %v2473 = vpack.c.b16 %v2449, %v2445
    %v2474 = vpack.c.b16 %v2450, %v2446
    %v2475 = vpack.c.b16 %v2451, %v2447
    %v2476 = vpack.c.b16 %v2452, %v2448
    %v2477 = vpack.c.b16 %v2453, %v2453
    %v2478 = vpack.c.b16 %v2454, %v2454
    %v2479 = vpack.c.b16 %v2455, %v2455
    %v2480 = vpack.c.b16 %v2456, %v2456
    %v2502 = vsel %vm199, %v2390, 0
    %v2505 = vsel %vm203, %v2477, 0
    %v2508 = vsel %vm203, %v2478, 0
    %v2511 = vsel %vm203, %v2479, 0
    %v2514 = vsel %vm203, %v2480, 0
    %2516 = vmatpush.bf16.msra.mxu0 0
    %2517 = vmatpush.bf16.msra.mxu0 0
    %2518 = vmatpush.bf16.msra.mxu0 %v2505
    %2519 = vmatpush.bf16.msra.mxu0 %v2473
    %2520 = vmatpush.bf16.msra.mxu0 %v2469
    %2521 = vmatpush.bf16.msra.mxu0 %v2465
    %2522 = vmatpush.bf16.msra.mxu0 %v2461
    %2523 = vmatpush.bf16.msra.mxu0 %v2457
    %2524 = vmatmul.bf16.gmra.mxu0 %v2502
    %v2525 = vpop.f32.mrf.mxu0
    %v2526 = vadd.f32 0.0, %v2525
    %v2527 = vpop.f32.mrf.mxu0
    %2528 = vdwg.mxu0
    %2529 = vmatpush.bf16.msra.mxu0 0
    %2530 = vmatpush.bf16.msra.mxu0 0
    %2531 = vmatpush.bf16.msra.mxu0 %v2508
    %2532 = vmatpush.bf16.msra.mxu0 %v2474
    %2533 = vmatpush.bf16.msra.mxu0 %v2470
    %2534 = vmatpush.bf16.msra.mxu0 %v2466
    %2535 = vmatpush.bf16.msra.mxu0 %v2462
    %2536 = vmatpush.bf16.msra.mxu0 %v2458
    %2537 = vmatmul.bf16.gmra.mxu0 %v2502
    %v2538 = vpop.f32.mrf.mxu0
    %v2539 = vadd.f32 0.0, %v2538
    %v2540 = vpop.f32.mrf.mxu0
    %2541 = vdwg.mxu0
    %2542 = vmatpush.bf16.msra.mxu0 0
    %2543 = vmatpush.bf16.msra.mxu0 0
    %2544 = vmatpush.bf16.msra.mxu0 %v2511
    %2545 = vmatpush.bf16.msra.mxu0 %v2475
    %2546 = vmatpush.bf16.msra.mxu0 %v2471
    %2547 = vmatpush.bf16.msra.mxu0 %v2467
    %2548 = vmatpush.bf16.msra.mxu0 %v2463
    %2549 = vmatpush.bf16.msra.mxu0 %v2459
    %2550 = vmatmul.bf16.gmra.mxu0 %v2502
    %v2551 = vpop.f32.mrf.mxu0
    %v2552 = vadd.f32 0.0, %v2551
    %v2553 = vpop.f32.mrf.mxu0
    %2554 = vdwg.mxu0
    %2555 = vmatpush.bf16.msra.mxu0 0
    %2556 = vmatpush.bf16.msra.mxu0 0
    %2557 = vmatpush.bf16.msra.mxu0 %v2514
    %2558 = vmatpush.bf16.msra.mxu0 %v2476
    %2559 = vmatpush.bf16.msra.mxu0 %v2472
    %2560 = vmatpush.bf16.msra.mxu0 %v2468
    %2561 = vmatpush.bf16.msra.mxu0 %v2464
    %2562 = vmatpush.bf16.msra.mxu0 %v2460
    %2563 = vmatmul.bf16.gmra.mxu0 %v2502
    %v2564 = vpop.f32.mrf.mxu0
    %v2565 = vadd.f32 0.0, %v2564
    %v2566 = vpop.f32.mrf.mxu0
    %2567 = vdwg.mxu0
    %2568 = vrot.lane.b32.xlu0 %v2359, 36
    %v2569 = vpop.permute.xlu0 %2568
    %2570 = vrot.lane.b32.xlu0 %v2360, 36
    %v2571 = vpop.permute.xlu0 %2570
    %vm2572 = vcmask 293888
    %v2573 = vsel %vm2572, %v2569, %v2571
    %v2575 = vsel %vm199, %v2573, 0
    %2577 = vmatpush.bf16.msra.mxu0 0
    %2578 = vmatpush.bf16.msra.mxu0 0
    %2579 = vmatpush.bf16.msra.mxu0 %v2505
    %2580 = vmatpush.bf16.msra.mxu0 %v2473
    %2581 = vmatpush.bf16.msra.mxu0 %v2469
    %2582 = vmatpush.bf16.msra.mxu0 %v2465
    %2583 = vmatpush.bf16.msra.mxu0 %v2461
    %2584 = vmatpush.bf16.msra.mxu0 %v2457
    %2585 = vmatmul.bf16.gmra.mxu0 %v2575
    %v2586 = vpop.f32.mrf.mxu0
    %v2587 = vadd.f32 0.0, %v2586
    %v2588 = vpop.f32.mrf.mxu0
    %2589 = vdwg.mxu0
    %2590 = vmatpush.bf16.msra.mxu0 0
    %2591 = vmatpush.bf16.msra.mxu0 0
    %2592 = vmatpush.bf16.msra.mxu0 %v2508
    %2593 = vmatpush.bf16.msra.mxu0 %v2474
    %2594 = vmatpush.bf16.msra.mxu0 %v2470
    %2595 = vmatpush.bf16.msra.mxu0 %v2466
    %2596 = vmatpush.bf16.msra.mxu0 %v2462
    %2597 = vmatpush.bf16.msra.mxu0 %v2458
    %2598 = vmatmul.bf16.gmra.mxu0 %v2575
    %v2599 = vpop.f32.mrf.mxu0
    %v2600 = vadd.f32 0.0, %v2599
    %v2601 = vpop.f32.mrf.mxu0
    %2602 = vdwg.mxu0
    %2603 = vmatpush.bf16.msra.mxu0 0
    %2604 = vmatpush.bf16.msra.mxu0 0
    %2605 = vmatpush.bf16.msra.mxu0 %v2511
    %2606 = vmatpush.bf16.msra.mxu0 %v2475
    %2607 = vmatpush.bf16.msra.mxu0 %v2471
    %2608 = vmatpush.bf16.msra.mxu0 %v2467
    %2609 = vmatpush.bf16.msra.mxu0 %v2463
    %2610 = vmatpush.bf16.msra.mxu0 %v2459
    %2611 = vmatmul.bf16.gmra.mxu0 %v2575
    %v2612 = vpop.f32.mrf.mxu0
    %v2613 = vadd.f32 0.0, %v2612
    %v2614 = vpop.f32.mrf.mxu0
    %2615 = vdwg.mxu0
    %2616 = vmatpush.bf16.msra.mxu0 0
    %2617 = vmatpush.bf16.msra.mxu0 0
    %2618 = vmatpush.bf16.msra.mxu0 %v2514
    %2619 = vmatpush.bf16.msra.mxu0 %v2476
    %2620 = vmatpush.bf16.msra.mxu0 %v2472
    %2621 = vmatpush.bf16.msra.mxu0 %v2468
    %2622 = vmatpush.bf16.msra.mxu0 %v2464
    %2623 = vmatpush.bf16.msra.mxu0 %v2460
    %2624 = vmatmul.bf16.gmra.mxu0 %v2575
    %v2625 = vpop.f32.mrf.mxu0
    %v2626 = vadd.f32 0.0, %v2625
    %v2627 = vpop.f32.mrf.mxu0
    %2628 = vdwg.mxu0
    %v2629 = vmax.f32 %v2526, %v2587
    %v2630 = vmax.f32 %v2539, %v2600
    %v2631 = vmax.f32 %v2552, %v2613
    %v2632 = vmax.f32 %v2565, %v2626
    %v2633 = vmax.f32 %v2629, %v2631
    %v2634 = vmax.f32 %v2630, %v2632
    %v2635 = vld [vmem:[%s2] sm:$0x3]
    %v2637 = vperm.slane %v2635, 0
    %v2638 = vperm.slane %v2635, 1
    %v2641 = vadd.f32 %v2633, %v2637
    %v2642 = vadd.f32 %v2634, %v2638
    %v2643 = vmax.f32 %v2641, 0.0
    %v2644 = vmax.f32 %v2642, 0.0
    %2645 = vst [vmem:[#allocation2 + $0x80] sm:$0xff] %v2643
    %2646 = vst [vmem:[#allocation2 + $0x88] sm:$0xff] %v2644
    %v2647 = vld [vmem:[%s0 + $0x18] sm:$0xff]
    %v2648 = vld [vmem:[%s0 + $0x20] sm:$0xff]
    %v2649 = vpack.c.bf16 %v2647, %v2647
    %v2650 = vpack.c.bf16 %v2648, %v2648
    %v2651 = vld [vmem:[%s1] sm:$0xff]
    %v2652 = vld [vmem:[%s1 + $0x8] sm:$0xff]
    %v2653 = vld [vmem:[%s1 + $0x10] sm:$0xff]
    %v2654 = vld [vmem:[%s1 + $0x18] sm:$0xff]
    %v2655 = vld [vmem:[%s1 + $0x20] sm:$0xff]
    %v2656 = vld [vmem:[%s1 + $0x28] sm:$0xff]
    %v2657 = vld [vmem:[%s1 + $0x30] sm:$0xff]
    %v2658 = vld [vmem:[%s1 + $0x38] sm:$0xff]
    %v2659 = vld [vmem:[%s1 + $0x40] sm:$0xff]
    %v2660 = vld [vmem:[%s1 + $0x48] sm:$0xff]
    %v2661 = vld [vmem:[%s1 + $0x50] sm:$0xff]
    %v2662 = vld [vmem:[%s1 + $0x58] sm:$0xff]
    %v2663 = vld [vmem:[%s1 + $0x60] sm:$0xff]
    %v2664 = vld [vmem:[%s1 + $0x68] sm:$0xff]
    %v2665 = vld [vmem:[%s1 + $0x70] sm:$0xff]
    %v2666 = vld [vmem:[%s1 + $0x78] sm:$0xff]
    %v2667 = vld [vmem:[%s1 + $0x80] sm:$0xff]
    %v2668 = vld [vmem:[%s1 + $0x88] sm:$0xff]
    %v2669 = vld [vmem:[%s1 + $0x90] sm:$0xff]
    %v2670 = vld [vmem:[%s1 + $0x98] sm:$0xff]
    %v2671 = vld [vmem:[%s1 + $0xa0] sm:$0x33]
    %v2672 = vld [vmem:[%s1 + $0xa8] sm:$0x33]
    %2675 = vrot.lane.b32.xlu0 %v2649, 8
    %v2676 = vpop.permute.xlu0 %2675
    %2677 = vrot.lane.b32.xlu0 %v2650, 8
    %v2678 = vpop.permute.xlu0 %2677
    %vm2679 = vcmask 64512
    %v2680 = vsel %vm2679, %v2676, %v2678
    %v2703 = vunpack.c.l.b16 %v2651
    %v2704 = vunpack.c.h.b16 %v2651
    %v2705 = vunpack.c.l.b16 %v2652
    %v2706 = vunpack.c.h.b16 %v2652
    %v2707 = vunpack.c.l.b16 %v2653
    %v2708 = vunpack.c.h.b16 %v2653
    %v2709 = vunpack.c.l.b16 %v2654
    %v2710 = vunpack.c.h.b16 %v2654
    %v2711 = vunpack.c.l.b16 %v2655
    %v2712 = vunpack.c.h.b16 %v2655
    %v2713 = vunpack.c.l.b16 %v2656
    %v2714 = vunpack.c.h.b16 %v2656
    %v2715 = vunpack.c.l.b16 %v2657
    %v2716 = vunpack.c.h.b16 %v2657
    %v2717 = vunpack.c.l.b16 %v2658
    %v2718 = vunpack.c.h.b16 %v2658
    %v2719 = vunpack.c.l.b16 %v2659
    %v2720 = vunpack.c.h.b16 %v2659
    %v2721 = vunpack.c.l.b16 %v2660
    %v2722 = vunpack.c.h.b16 %v2660
    %v2723 = vunpack.c.l.b16 %v2661
    %v2724 = vunpack.c.h.b16 %v2661
    %v2725 = vunpack.c.l.b16 %v2662
    %v2726 = vunpack.c.h.b16 %v2662
    %v2727 = vunpack.c.l.b16 %v2663
    %v2728 = vunpack.c.h.b16 %v2663
    %v2729 = vunpack.c.l.b16 %v2664
    %v2730 = vunpack.c.h.b16 %v2664
    %v2731 = vunpack.c.l.b16 %v2665
    %v2732 = vunpack.c.h.b16 %v2665
    %v2733 = vunpack.c.l.b16 %v2666
    %v2734 = vunpack.c.h.b16 %v2666
    %v2735 = vunpack.c.l.b16 %v2667
    %v2736 = vunpack.c.h.b16 %v2667
    %v2737 = vunpack.c.l.b16 %v2668
    %v2738 = vunpack.c.h.b16 %v2668
    %v2739 = vunpack.c.l.b16 %v2669
    %v2740 = vunpack.c.h.b16 %v2669
    %v2741 = vunpack.c.l.b16 %v2670
    %v2742 = vunpack.c.h.b16 %v2670
    %v2743 = vunpack.c.l.b16 %v2671
    %v2744 = vunpack.c.h.b16 %v2671
    %v2745 = vunpack.c.l.b16 %v2672
    %v2746 = vunpack.c.h.b16 %v2672
    %v2747 = vpack.c.b16 %v2707, %v2703
    %v2748 = vpack.c.b16 %v2708, %v2704
    %v2749 = vpack.c.b16 %v2709, %v2705
    %v2750 = vpack.c.b16 %v2710, %v2706
    %v2751 = vpack.c.b16 %v2715, %v2711
    %v2752 = vpack.c.b16 %v2716, %v2712
    %v2753 = vpack.c.b16 %v2717, %v2713
    %v2754 = vpack.c.b16 %v2718, %v2714
    %v2755 = vpack.c.b16 %v2723, %v2719
    %v2756 = vpack.c.b16 %v2724, %v2720
    %v2757 = vpack.c.b16 %v2725, %v2721
    %v2758 = vpack.c.b16 %v2726, %v2722
    %v2759 = vpack.c.b16 %v2731, %v2727
    %v2760 = vpack.c.b16 %v2732, %v2728
    %v2761 = vpack.c.b16 %v2733, %v2729
    %v2762 = vpack.c.b16 %v2734, %v2730
    %v2763 = vpack.c.b16 %v2739, %v2735
    %v2764 = vpack.c.b16 %v2740, %v2736
    %v2765 = vpack.c.b16 %v2741, %v2737
    %v2766 = vpack.c.b16 %v2742, %v2738
    %v2767 = vpack.c.b16 %v2743, %v2743
    %v2768 = vpack.c.b16 %v2744, %v2744
    %v2769 = vpack.c.b16 %v2745, %v2745
    %v2770 = vpack.c.b16 %v2746, %v2746
    %v2792 = vsel %vm199, %v2680, 0
    %v2795 = vsel %vm203, %v2767, 0
    %v2798 = vsel %vm203, %v2768, 0
    %v2801 = vsel %vm203, %v2769, 0
    %v2804 = vsel %vm203, %v2770, 0
    %2806 = vmatpush.bf16.msra.mxu0 0
    %2807 = vmatpush.bf16.msra.mxu0 0
    %2808 = vmatpush.bf16.msra.mxu0 %v2795
    %2809 = vmatpush.bf16.msra.mxu0 %v2763
    %2810 = vmatpush.bf16.msra.mxu0 %v2759
    %2811 = vmatpush.bf16.msra.mxu0 %v2755
    %2812 = vmatpush.bf16.msra.mxu0 %v2751
    %2813 = vmatpush.bf16.msra.mxu0 %v2747
    %2814 = vmatmul.bf16.gmra.mxu0 %v2792
    %v2815 = vpop.f32.mrf.mxu0
    %v2816 = vadd.f32 0.0, %v2815
    %v2817 = vpop.f32.mrf.mxu0
    %2818 = vdwg.mxu0
    %2819 = vmatpush.bf16.msra.mxu0 0
    %2820 = vmatpush.bf16.msra.mxu0 0
    %2821 = vmatpush.bf16.msra.mxu0 %v2798
    %2822 = vmatpush.bf16.msra.mxu0 %v2764
    %2823 = vmatpush.bf16.msra.mxu0 %v2760
    %2824 = vmatpush.bf16.msra.mxu0 %v2756
    %2825 = vmatpush.bf16.msra.mxu0 %v2752
    %2826 = vmatpush.bf16.msra.mxu0 %v2748
    %2827 = vmatmul.bf16.gmra.mxu0 %v2792
    %v2828 = vpop.f32.mrf.mxu0
    %v2829 = vadd.f32 0.0, %v2828
    %v2830 = vpop.f32.mrf.mxu0
    %2831 = vdwg.mxu0
    %2832 = vmatpush.bf16.msra.mxu0 0
    %2833 = vmatpush.bf16.msra.mxu0 0
    %2834 = vmatpush.bf16.msra.mxu0 %v2801
    %2835 = vmatpush.bf16.msra.mxu0 %v2765
    %2836 = vmatpush.bf16.msra.mxu0 %v2761
    %2837 = vmatpush.bf16.msra.mxu0 %v2757
    %2838 = vmatpush.bf16.msra.mxu0 %v2753
    %2839 = vmatpush.bf16.msra.mxu0 %v2749
    %2840 = vmatmul.bf16.gmra.mxu0 %v2792
    %v2841 = vpop.f32.mrf.mxu0
    %v2842 = vadd.f32 0.0, %v2841
    %v2843 = vpop.f32.mrf.mxu0
    %2844 = vdwg.mxu0
    %2845 = vmatpush.bf16.msra.mxu0 0
    %2846 = vmatpush.bf16.msra.mxu0 0
    %2847 = vmatpush.bf16.msra.mxu0 %v2804
    %2848 = vmatpush.bf16.msra.mxu0 %v2766
    %2849 = vmatpush.bf16.msra.mxu0 %v2762
    %2850 = vmatpush.bf16.msra.mxu0 %v2758
    %2851 = vmatpush.bf16.msra.mxu0 %v2754
    %2852 = vmatpush.bf16.msra.mxu0 %v2750
    %2853 = vmatmul.bf16.gmra.mxu0 %v2792
    %v2854 = vpop.f32.mrf.mxu0
    %v2855 = vadd.f32 0.0, %v2854
    %v2856 = vpop.f32.mrf.mxu0
    %2857 = vdwg.mxu0
    %2858 = vrot.lane.b32.xlu0 %v2650, 108
    %v2859 = vpop.permute.xlu0 %2858
    %v2861 = vsel %vm199, %v2859, 0
    %2863 = vmatpush.bf16.msra.mxu0 0
    %2864 = vmatpush.bf16.msra.mxu0 0
    %2865 = vmatpush.bf16.msra.mxu0 %v2795
    %2866 = vmatpush.bf16.msra.mxu0 %v2763
    %2867 = vmatpush.bf16.msra.mxu0 %v2759
    %2868 = vmatpush.bf16.msra.mxu0 %v2755
    %2869 = vmatpush.bf16.msra.mxu0 %v2751
    %2870 = vmatpush.bf16.msra.mxu0 %v2747
    %2871 = vmatmul.bf16.gmra.mxu0 %v2861
    %v2872 = vpop.f32.mrf.mxu0
    %v2873 = vadd.f32 0.0, %v2872
    %v2874 = vpop.f32.mrf.mxu0
    %2875 = vdwg.mxu0
    %2876 = vmatpush.bf16.msra.mxu0 0
    %2877 = vmatpush.bf16.msra.mxu0 0
    %2878 = vmatpush.bf16.msra.mxu0 %v2798
    %2879 = vmatpush.bf16.msra.mxu0 %v2764
    %2880 = vmatpush.bf16.msra.mxu0 %v2760
    %2881 = vmatpush.bf16.msra.mxu0 %v2756
    %2882 = vmatpush.bf16.msra.mxu0 %v2752
    %2883 = vmatpush.bf16.msra.mxu0 %v2748
    %2884 = vmatmul.bf16.gmra.mxu0 %v2861
    %v2885 = vpop.f32.mrf.mxu0
    %v2886 = vadd.f32 0.0, %v2885
    %v2887 = vpop.f32.mrf.mxu0
    %2888 = vdwg.mxu0
    %2889 = vmatpush.bf16.msra.mxu0 0
    %2890 = vmatpush.bf16.msra.mxu0 0
    %2891 = vmatpush.bf16.msra.mxu0 %v2801
    %2892 = vmatpush.bf16.msra.mxu0 %v2765
    %2893 = vmatpush.bf16.msra.mxu0 %v2761
    %2894 = vmatpush.bf16.msra.mxu0 %v2757
    %2895 = vmatpush.bf16.msra.mxu0 %v2753
    %2896 = vmatpush.bf16.msra.mxu0 %v2749
    %2897 = vmatmul.bf16.gmra.mxu0 %v2861
    %v2898 = vpop.f32.mrf.mxu0
    %v2899 = vadd.f32 0.0, %v2898
    %v2900 = vpop.f32.mrf.mxu0
    %2901 = vdwg.mxu0
    %2902 = vmatpush.bf16.msra.mxu0 0
    %2903 = vmatpush.bf16.msra.mxu0 0
    %2904 = vmatpush.bf16.msra.mxu0 %v2804
    %2905 = vmatpush.bf16.msra.mxu0 %v2766
    %2906 = vmatpush.bf16.msra.mxu0 %v2762
    %2907 = vmatpush.bf16.msra.mxu0 %v2758
    %2908 = vmatpush.bf16.msra.mxu0 %v2754
    %2909 = vmatpush.bf16.msra.mxu0 %v2750
    %2910 = vmatmul.bf16.gmra.mxu0 %v2861
    %v2911 = vpop.f32.mrf.mxu0
    %v2912 = vadd.f32 0.0, %v2911
    %v2913 = vpop.f32.mrf.mxu0
    %2914 = vdwg.mxu0
    %v2915 = vmax.f32 %v2816, %v2873
    %v2916 = vmax.f32 %v2829, %v2886
    %v2917 = vmax.f32 %v2842, %v2899
    %v2918 = vmax.f32 %v2855, %v2912
    %v2919 = vmax.f32 %v2915, %v2917
    %v2920 = vmax.f32 %v2916, %v2918
    %v2921 = vld [vmem:[%s2] sm:$0x3]
    %v2923 = vperm.slane %v2921, 0
    %v2924 = vperm.slane %v2921, 1
    %v2927 = vadd.f32 %v2919, %v2923
    %v2928 = vadd.f32 %v2920, %v2924
    %v2929 = vmax.f32 %v2927, 0.0
    %v2930 = vmax.f32 %v2928, 0.0
    %2931 = vst [vmem:[#allocation2 + $0x90] sm:$0xff] %v2929
    %2932 = vst [vmem:[#allocation2 + $0x98] sm:$0xff] %v2930
    %v2933 = vld [vmem:[%s0 + $0x20] sm:$0xff]
    %v2934 = vld [vmem:[%s0 + $0x28] sm:$0xff]
    %v2935 = vpack.c.bf16 %v2933, %v2933
    %v2936 = vpack.c.bf16 %v2934, %v2934
    %v2937 = vld [vmem:[%s1] sm:$0xff]
    %v2938 = vld [vmem:[%s1 + $0x8] sm:$0xff]
    %v2939 = vld [vmem:[%s1 + $0x10] sm:$0xff]
    %v2940 = vld [vmem:[%s1 + $0x18] sm:$0xff]
    %v2941 = vld [vmem:[%s1 + $0x20] sm:$0xff]
    %v2942 = vld [vmem:[%s1 + $0x28] sm:$0xff]
    %v2943 = vld [vmem:[%s1 + $0x30] sm:$0xff]
    %v2944 = vld [vmem:[%s1 + $0x38] sm:$0xff]
    %v2945 = vld [vmem:[%s1 + $0x40] sm:$0xff]
    %v2946 = vld [vmem:[%s1 + $0x48] sm:$0xff]
    %v2947 = vld [vmem:[%s1 + $0x50] sm:$0xff]
    %v2948 = vld [vmem:[%s1 + $0x58] sm:$0xff]
    %v2949 = vld [vmem:[%s1 + $0x60] sm:$0xff]
    %v2950 = vld [vmem:[%s1 + $0x68] sm:$0xff]
    %v2951 = vld [vmem:[%s1 + $0x70] sm:$0xff]
    %v2952 = vld [vmem:[%s1 + $0x78] sm:$0xff]
    %v2953 = vld [vmem:[%s1 + $0x80] sm:$0xff]
    %v2954 = vld [vmem:[%s1 + $0x88] sm:$0xff]
    %v2955 = vld [vmem:[%s1 + $0x90] sm:$0xff]
    %v2956 = vld [vmem:[%s1 + $0x98] sm:$0xff]
    %v2957 = vld [vmem:[%s1 + $0xa0] sm:$0x33]
    %v2958 = vld [vmem:[%s1 + $0xa8] sm:$0x33]
    %2961 = vrot.lane.b32.xlu0 %v2935, 80
    %v2962 = vpop.permute.xlu0 %2961
    %2963 = vrot.lane.b32.xlu0 %v2936, 80
    %v2964 = vpop.permute.xlu0 %2963
    %vm2965 = vcmask 654336
    %v2966 = vsel %vm2965, %v2962, %v2964
    %v2989 = vunpack.c.l.b16 %v2937
    %v2990 = vunpack.c.h.b16 %v2937
    %v2991 = vunpack.c.l.b16 %v2938
    %v2992 = vunpack.c.h.b16 %v2938
    %v2993 = vunpack.c.l.b16 %v2939
    %v2994 = vunpack.c.h.b16 %v2939
    %v2995 = vunpack.c.l.b16 %v2940
    %v2996 = vunpack.c.h.b16 %v2940
    %v2997 = vunpack.c.l.b16 %v2941
    %v2998 = vunpack.c.h.b16 %v2941
    %v2999 = vunpack.c.l.b16 %v2942
    %v3000 = vunpack.c.h.b16 %v2942
    %v3001 = vunpack.c.l.b16 %v2943
    %v3002 = vunpack.c.h.b16 %v2943
    %v3003 = vunpack.c.l.b16 %v2944
    %v3004 = vunpack.c.h.b16 %v2944
    %v3005 = vunpack.c.l.b16 %v2945
    %v3006 = vunpack.c.h.b16 %v2945
    %v3007 = vunpack.c.l.b16 %v2946
    %v3008 = vunpack.c.h.b16 %v2946
    %v3009 = vunpack.c.l.b16 %v2947
    %v3010 = vunpack.c.h.b16 %v2947
    %v3011 = vunpack.c.l.b16 %v2948
    %v3012 = vunpack.c.h.b16 %v2948
    %v3013 = vunpack.c.l.b16 %v2949
    %v3014 = vunpack.c.h.b16 %v2949
    %v3015 = vunpack.c.l.b16 %v2950
    %v3016 = vunpack.c.h.b16 %v2950
    %v3017 = vunpack.c.l.b16 %v2951
    %v3018 = vunpack.c.h.b16 %v2951
    %v3019 = vunpack.c.l.b16 %v2952
    %v3020 = vunpack.c.h.b16 %v2952
    %v3021 = vunpack.c.l.b16 %v2953
    %v3022 = vunpack.c.h.b16 %v2953
    %v3023 = vunpack.c.l.b16 %v2954
    %v3024 = vunpack.c.h.b16 %v2954
    %v3025 = vunpack.c.l.b16 %v2955
    %v3026 = vunpack.c.h.b16 %v2955
    %v3027 = vunpack.c.l.b16 %v2956
    %v3028 = vunpack.c.h.b16 %v2956
    %v3029 = vunpack.c.l.b16 %v2957
    %v3030 = vunpack.c.h.b16 %v2957
    %v3031 = vunpack.c.l.b16 %v2958
    %v3032 = vunpack.c.h.b16 %v2958
    %v3033 = vpack.c.b16 %v2993, %v2989
    %v3034 = vpack.c.b16 %v2994, %v2990
    %v3035 = vpack.c.b16 %v2995, %v2991
    %v3036 = vpack.c.b16 %v2996, %v2992
    %v3037 = vpack.c.b16 %v3001, %v2997
    %v3038 = vpack.c.b16 %v3002, %v2998
    %v3039 = vpack.c.b16 %v3003, %v2999
    %v3040 = vpack.c.b16 %v3004, %v3000
    %v3041 = vpack.c.b16 %v3009, %v3005
    %v3042 = vpack.c.b16 %v3010, %v3006
    %v3043 = vpack.c.b16 %v3011, %v3007
    %v3044 = vpack.c.b16 %v3012, %v3008
    %v3045 = vpack.c.b16 %v3017, %v3013
    %v3046 = vpack.c.b16 %v3018, %v3014
    %v3047 = vpack.c.b16 %v3019, %v3015
    %v3048 = vpack.c.b16 %v3020, %v3016
    %v3049 = vpack.c.b16 %v3025, %v3021
    %v3050 = vpack.c.b16 %v3026, %v3022
    %v3051 = vpack.c.b16 %v3027, %v3023
    %v3052 = vpack.c.b16 %v3028, %v3024
    %v3053 = vpack.c.b16 %v3029, %v3029
    %v3054 = vpack.c.b16 %v3030, %v3030
    %v3055 = vpack.c.b16 %v3031, %v3031
    %v3056 = vpack.c.b16 %v3032, %v3032
    %v3078 = vsel %vm199, %v2966, 0
    %v3081 = vsel %vm203, %v3053, 0
    %v3084 = vsel %vm203, %v3054, 0
    %v3087 = vsel %vm203, %v3055, 0
    %v3090 = vsel %vm203, %v3056, 0
    %3092 = vmatpush.bf16.msra.mxu0 0
    %3093 = vmatpush.bf16.msra.mxu0 0
    %3094 = vmatpush.bf16.msra.mxu0 %v3081
    %3095 = vmatpush.bf16.msra.mxu0 %v3049
    %3096 = vmatpush.bf16.msra.mxu0 %v3045
    %3097 = vmatpush.bf16.msra.mxu0 %v3041
    %3098 = vmatpush.bf16.msra.mxu0 %v3037
    %3099 = vmatpush.bf16.msra.mxu0 %v3033
    %3100 = vmatmul.bf16.gmra.mxu0 %v3078
    %v3101 = vpop.f32.mrf.mxu0
    %v3102 = vadd.f32 0.0, %v3101
    %v3103 = vpop.f32.mrf.mxu0
    %3104 = vdwg.mxu0
    %3105 = vmatpush.bf16.msra.mxu0 0
    %3106 = vmatpush.bf16.msra.mxu0 0
    %3107 = vmatpush.bf16.msra.mxu0 %v3084
    %3108 = vmatpush.bf16.msra.mxu0 %v3050
    %3109 = vmatpush.bf16.msra.mxu0 %v3046
    %3110 = vmatpush.bf16.msra.mxu0 %v3042
    %3111 = vmatpush.bf16.msra.mxu0 %v3038
    %3112 = vmatpush.bf16.msra.mxu0 %v3034
    %3113 = vmatmul.bf16.gmra.mxu0 %v3078
    %v3114 = vpop.f32.mrf.mxu0
    %v3115 = vadd.f32 0.0, %v3114
    %v3116 = vpop.f32.mrf.mxu0
    %3117 = vdwg.mxu0
    %3118 = vmatpush.bf16.msra.mxu0 0
    %3119 = vmatpush.bf16.msra.mxu0 0
    %3120 = vmatpush.bf16.msra.mxu0 %v3087
    %3121 = vmatpush.bf16.msra.mxu0 %v3051
    %3122 = vmatpush.bf16.msra.mxu0 %v3047
    %3123 = vmatpush.bf16.msra.mxu0 %v3043
    %3124 = vmatpush.bf16.msra.mxu0 %v3039
    %3125 = vmatpush.bf16.msra.mxu0 %v3035
    %3126 = vmatmul.bf16.gmra.mxu0 %v3078
    %v3127 = vpop.f32.mrf.mxu0
    %v3128 = vadd.f32 0.0, %v3127
    %v3129 = vpop.f32.mrf.mxu0
    %3130 = vdwg.mxu0
    %3131 = vmatpush.bf16.msra.mxu0 0
    %3132 = vmatpush.bf16.msra.mxu0 0
    %3133 = vmatpush.bf16.msra.mxu0 %v3090
    %3134 = vmatpush.bf16.msra.mxu0 %v3052
    %3135 = vmatpush.bf16.msra.mxu0 %v3048
    %3136 = vmatpush.bf16.msra.mxu0 %v3044
    %3137 = vmatpush.bf16.msra.mxu0 %v3040
    %3138 = vmatpush.bf16.msra.mxu0 %v3036
    %3139 = vmatmul.bf16.gmra.mxu0 %v3078
    %v3140 = vpop.f32.mrf.mxu0
    %v3141 = vadd.f32 0.0, %v3140
    %v3142 = vpop.f32.mrf.mxu0
    %3143 = vdwg.mxu0
    %3144 = vrot.lane.b32.xlu0 %v2935, 52
    %v3145 = vpop.permute.xlu0 %3144
    %3146 = vrot.lane.b32.xlu0 %v2936, 52
    %v3147 = vpop.permute.xlu0 %3146
    %vm3148 = vcmask 424960
    %v3149 = vsel %vm3148, %v3145, %v3147
    %v3151 = vsel %vm199, %v3149, 0
    %3153 = vmatpush.bf16.msra.mxu0 0
    %3154 = vmatpush.bf16.msra.mxu0 0
    %3155 = vmatpush.bf16.msra.mxu0 %v3081
    %3156 = vmatpush.bf16.msra.mxu0 %v3049
    %3157 = vmatpush.bf16.msra.mxu0 %v3045
    %3158 = vmatpush.bf16.msra.mxu0 %v3041
    %3159 = vmatpush.bf16.msra.mxu0 %v3037
    %3160 = vmatpush.bf16.msra.mxu0 %v3033
    %3161 = vmatmul.bf16.gmra.mxu0 %v3151
    %v3162 = vpop.f32.mrf.mxu0
    %v3163 = vadd.f32 0.0, %v3162
    %v3164 = vpop.f32.mrf.mxu0
    %3165 = vdwg.mxu0
    %3166 = vmatpush.bf16.msra.mxu0 0
    %3167 = vmatpush.bf16.msra.mxu0 0
    %3168 = vmatpush.bf16.msra.mxu0 %v3084
    %3169 = vmatpush.bf16.msra.mxu0 %v3050
    %3170 = vmatpush.bf16.msra.mxu0 %v3046
    %3171 = vmatpush.bf16.msra.mxu0 %v3042
    %3172 = vmatpush.bf16.msra.mxu0 %v3038
    %3173 = vmatpush.bf16.msra.mxu0 %v3034
    %3174 = vmatmul.bf16.gmra.mxu0 %v3151
    %v3175 = vpop.f32.mrf.mxu0
    %v3176 = vadd.f32 0.0, %v3175
    %v3177 = vpop.f32.mrf.mxu0
    %3178 = vdwg.mxu0
    %3179 = vmatpush.bf16.msra.mxu0 0
    %3180 = vmatpush.bf16.msra.mxu0 0
    %3181 = vmatpush.bf16.msra.mxu0 %v3087
    %3182 = vmatpush.bf16.msra.mxu0 %v3051
    %3183 = vmatpush.bf16.msra.mxu0 %v3047
    %3184 = vmatpush.bf16.msra.mxu0 %v3043
    %3185 = vmatpush.bf16.msra.mxu0 %v3039
    %3186 = vmatpush.bf16.msra.mxu0 %v3035
    %3187 = vmatmul.bf16.gmra.mxu0 %v3151
    %v3188 = vpop.f32.mrf.mxu0
    %v3189 = vadd.f32 0.0, %v3188
    %v3190 = vpop.f32.mrf.mxu0
    %3191 = vdwg.mxu0
    %3192 = vmatpush.bf16.msra.mxu0 0
    %3193 = vmatpush.bf16.msra.mxu0 0
    %3194 = vmatpush.bf16.msra.mxu0 %v3090
    %3195 = vmatpush.bf16.msra.mxu0 %v3052
    %3196 = vmatpush.bf16.msra.mxu0 %v3048
    %3197 = vmatpush.bf16.msra.mxu0 %v3044
    %3198 = vmatpush.bf16.msra.mxu0 %v3040
    %3199 = vmatpush.bf16.msra.mxu0 %v3036
    %3200 = vmatmul.bf16.gmra.mxu0 %v3151
    %v3201 = vpop.f32.mrf.mxu0
    %v3202 = vadd.f32 0.0, %v3201
    %v3203 = vpop.f32.mrf.mxu0
    %3204 = vdwg.mxu0
    %v3205 = vmax.f32 %v3102, %v3163
    %v3206 = vmax.f32 %v3115, %v3176
    %v3207 = vmax.f32 %v3128, %v3189
    %v3208 = vmax.f32 %v3141, %v3202
    %v3209 = vmax.f32 %v3205, %v3207
    %v3210 = vmax.f32 %v3206, %v3208
    %v3211 = vld [vmem:[%s2] sm:$0x3]
    %v3213 = vperm.slane %v3211, 0
    %v3214 = vperm.slane %v3211, 1
    %v3217 = vadd.f32 %v3209, %v3213
    %v3218 = vadd.f32 %v3210, %v3214
    %v3219 = vmax.f32 %v3217, 0.0
    %v3220 = vmax.f32 %v3218, 0.0
    %3221 = vst [vmem:[#allocation2 + $0xa0] sm:$0xff] %v3219
    %3222 = vst [vmem:[#allocation2 + $0xa8] sm:$0xff] %v3220
    %v3223 = vld [vmem:[%s0 + $0x20] sm:$0xff]
    %v3224 = vld [vmem:[%s0 + $0x28] sm:$0xff]
    %v3225 = vpack.c.bf16 %v3223, %v3223
    %v3226 = vpack.c.bf16 %v3224, %v3224
    %v3227 = vld [vmem:[%s1] sm:$0xff]
    %v3228 = vld [vmem:[%s1 + $0x8] sm:$0xff]
    %v3229 = vld [vmem:[%s1 + $0x10] sm:$0xff]
    %v3230 = vld [vmem:[%s1 + $0x18] sm:$0xff]
    %v3231 = vld [vmem:[%s1 + $0x20] sm:$0xff]
    %v3232 = vld [vmem:[%s1 + $0x28] sm:$0xff]
    %v3233 = vld [vmem:[%s1 + $0x30] sm:$0xff]
    %v3234 = vld [vmem:[%s1 + $0x38] sm:$0xff]
    %v3235 = vld [vmem:[%s1 + $0x40] sm:$0xff]
    %v3236 = vld [vmem:[%s1 + $0x48] sm:$0xff]
    %v3237 = vld [vmem:[%s1 + $0x50] sm:$0xff]
    %v3238 = vld [vmem:[%s1 + $0x58] sm:$0xff]
    %v3239 = vld [vmem:[%s1 + $0x60] sm:$0xff]
    %v3240 = vld [vmem:[%s1 + $0x68] sm:$0xff]
    %v3241 = vld [vmem:[%s1 + $0x70] sm:$0xff]
    %v3242 = vld [vmem:[%s1 + $0x78] sm:$0xff]
    %v3243 = vld [vmem:[%s1 + $0x80] sm:$0xff]
    %v3244 = vld [vmem:[%s1 + $0x88] sm:$0xff]
    %v3245 = vld [vmem:[%s1 + $0x90] sm:$0xff]
    %v3246 = vld [vmem:[%s1 + $0x98] sm:$0xff]
    %v3247 = vld [vmem:[%s1 + $0xa0] sm:$0x33]
    %v3248 = vld [vmem:[%s1 + $0xa8] sm:$0x33]
    %3251 = vrot.lane.b32.xlu0 %v3225, 24
    %v3252 = vpop.permute.xlu0 %3251
    %3253 = vrot.lane.b32.xlu0 %v3226, 24
    %v3254 = vpop.permute.xlu0 %3253
    %vm3255 = vcmask 195584
    %v3256 = vsel %vm3255, %v3252, %v3254
    %v3279 = vunpack.c.l.b16 %v3227
    %v3280 = vunpack.c.h.b16 %v3227
    %v3281 = vunpack.c.l.b16 %v3228
    %v3282 = vunpack.c.h.b16 %v3228
    %v3283 = vunpack.c.l.b16 %v3229
    %v3284 = vunpack.c.h.b16 %v3229
    %v3285 = vunpack.c.l.b16 %v3230
    %v3286 = vunpack.c.h.b16 %v3230
    %v3287 = vunpack.c.l.b16 %v3231
    %v3288 = vunpack.c.h.b16 %v3231
    %v3289 = vunpack.c.l.b16 %v3232
    %v3290 = vunpack.c.h.b16 %v3232
    %v3291 = vunpack.c.l.b16 %v3233
    %v3292 = vunpack.c.h.b16 %v3233
    %v3293 = vunpack.c.l.b16 %v3234
    %v3294 = vunpack.c.h.b16 %v3234
    %v3295 = vunpack.c.l.b16 %v3235
    %v3296 = vunpack.c.h.b16 %v3235
    %v3297 = vunpack.c.l.b16 %v3236
    %v3298 = vunpack.c.h.b16 %v3236
    %v3299 = vunpack.c.l.b16 %v3237
    %v3300 = vunpack.c.h.b16 %v3237
    %v3301 = vunpack.c.l.b16 %v3238
    %v3302 = vunpack.c.h.b16 %v3238
    %v3303 = vunpack.c.l.b16 %v3239
    %v3304 = vunpack.c.h.b16 %v3239
    %v3305 = vunpack.c.l.b16 %v3240
    %v3306 = vunpack.c.h.b16 %v3240
    %v3307 = vunpack.c.l.b16 %v3241
    %v3308 = vunpack.c.h.b16 %v3241
    %v3309 = vunpack.c.l.b16 %v3242
    %v3310 = vunpack.c.h.b16 %v3242
    %v3311 = vunpack.c.l.b16 %v3243
    %v3312 = vunpack.c.h.b16 %v3243
    %v3313 = vunpack.c.l.b16 %v3244
    %v3314 = vunpack.c.h.b16 %v3244
    %v3315 = vunpack.c.l.b16 %v3245
    %v3316 = vunpack.c.h.b16 %v3245
    %v3317 = vunpack.c.l.b16 %v3246
    %v3318 = vunpack.c.h.b16 %v3246
    %v3319 = vunpack.c.l.b16 %v3247
    %v3320 = vunpack.c.h.b16 %v3247
    %v3321 = vunpack.c.l.b16 %v3248
    %v3322 = vunpack.c.h.b16 %v3248
    %v3323 = vpack.c.b16 %v3283, %v3279
    %v3324 = vpack.c.b16 %v3284, %v3280
    %v3325 = vpack.c.b16 %v3285, %v3281
    %v3326 = vpack.c.b16 %v3286, %v3282
    %v3327 = vpack.c.b16 %v3291, %v3287
    %v3328 = vpack.c.b16 %v3292, %v3288
    %v3329 = vpack.c.b16 %v3293, %v3289
    %v3330 = vpack.c.b16 %v3294, %v3290
    %v3331 = vpack.c.b16 %v3299, %v3295
    %v3332 = vpack.c.b16 %v3300, %v3296
    %v3333 = vpack.c.b16 %v3301, %v3297
    %v3334 = vpack.c.b16 %v3302, %v3298
    %v3335 = vpack.c.b16 %v3307, %v3303
    %v3336 = vpack.c.b16 %v3308, %v3304
    %v3337 = vpack.c.b16 %v3309, %v3305
    %v3338 = vpack.c.b16 %v3310, %v3306
    %v3339 = vpack.c.b16 %v3315, %v3311
    %v3340 = vpack.c.b16 %v3316, %v3312
    %v3341 = vpack.c.b16 %v3317, %v3313
    %v3342 = vpack.c.b16 %v3318, %v3314
    %v3343 = vpack.c.b16 %v3319, %v3319
    %v3344 = vpack.c.b16 %v3320, %v3320
    %v3345 = vpack.c.b16 %v3321, %v3321
    %v3346 = vpack.c.b16 %v3322, %v3322
    %v3368 = vsel %vm199, %v3256, 0
    %v3371 = vsel %vm203, %v3343, 0
    %v3374 = vsel %vm203, %v3344, 0
    %v3377 = vsel %vm203, %v3345, 0
    %v3380 = vsel %vm203, %v3346, 0
    %3382 = vmatpush.bf16.msra.mxu0 0
    %3383 = vmatpush.bf16.msra.mxu0 0
    %3384 = vmatpush.bf16.msra.mxu0 %v3371
    %3385 = vmatpush.bf16.msra.mxu0 %v3339
    %3386 = vmatpush.bf16.msra.mxu0 %v3335
    %3387 = vmatpush.bf16.msra.mxu0 %v3331
    %3388 = vmatpush.bf16.msra.mxu0 %v3327
    %3389 = vmatpush.bf16.msra.mxu0 %v3323
    %3390 = vmatmul.bf16.gmra.mxu0 %v3368
    %v3391 = vpop.f32.mrf.mxu0
    %v3392 = vadd.f32 0.0, %v3391
    %v3393 = vpop.f32.mrf.mxu0
    %3394 = vdwg.mxu0
    %3395 = vmatpush.bf16.msra.mxu0 0
    %3396 = vmatpush.bf16.msra.mxu0 0
    %3397 = vmatpush.bf16.msra.mxu0 %v3374
    %3398 = vmatpush.bf16.msra.mxu0 %v3340
    %3399 = vmatpush.bf16.msra.mxu0 %v3336
    %3400 = vmatpush.bf16.msra.mxu0 %v3332
    %3401 = vmatpush.bf16.msra.mxu0 %v3328
    %3402 = vmatpush.bf16.msra.mxu0 %v3324
    %3403 = vmatmul.bf16.gmra.mxu0 %v3368
    %v3404 = vpop.f32.mrf.mxu0
    %v3405 = vadd.f32 0.0, %v3404
    %v3406 = vpop.f32.mrf.mxu0
    %3407 = vdwg.mxu0
    %3408 = vmatpush.bf16.msra.mxu0 0
    %3409 = vmatpush.bf16.msra.mxu0 0
    %3410 = vmatpush.bf16.msra.mxu0 %v3377
    %3411 = vmatpush.bf16.msra.mxu0 %v3341
    %3412 = vmatpush.bf16.msra.mxu0 %v3337
    %3413 = vmatpush.bf16.msra.mxu0 %v3333
    %3414 = vmatpush.bf16.msra.mxu0 %v3329
    %3415 = vmatpush.bf16.msra.mxu0 %v3325
    %3416 = vmatmul.bf16.gmra.mxu0 %v3368
    %v3417 = vpop.f32.mrf.mxu0
    %v3418 = vadd.f32 0.0, %v3417
    %v3419 = vpop.f32.mrf.mxu0
    %3420 = vdwg.mxu0
    %3421 = vmatpush.bf16.msra.mxu0 0
    %3422 = vmatpush.bf16.msra.mxu0 0
    %3423 = vmatpush.bf16.msra.mxu0 %v3380
    %3424 = vmatpush.bf16.msra.mxu0 %v3342
    %3425 = vmatpush.bf16.msra.mxu0 %v3338
    %3426 = vmatpush.bf16.msra.mxu0 %v3334
    %3427 = vmatpush.bf16.msra.mxu0 %v3330
    %3428 = vmatpush.bf16.msra.mxu0 %v3326
    %3429 = vmatmul.bf16.gmra.mxu0 %v3368
    %v3430 = vpop.f32.mrf.mxu0
    %v3431 = vadd.f32 0.0, %v3430
    %v3432 = vpop.f32.mrf.mxu0
    %3433 = vdwg.mxu0
    %3434 = vrot.lane.b32.xlu0 %v3226, 124
    %v3435 = vpop.permute.xlu0 %3434
    %v3437 = vsel %vm199, %v3435, 0
    %3439 = vmatpush.bf16.msra.mxu0 0
    %3440 = vmatpush.bf16.msra.mxu0 0
    %3441 = vmatpush.bf16.msra.mxu0 %v3371
    %3442 = vmatpush.bf16.msra.mxu0 %v3339
    %3443 = vmatpush.bf16.msra.mxu0 %v3335
    %3444 = vmatpush.bf16.msra.mxu0 %v3331
    %3445 = vmatpush.bf16.msra.mxu0 %v3327
    %3446 = vmatpush.bf16.msra.mxu0 %v3323
    %3447 = vmatmul.bf16.gmra.mxu0 %v3437
    %v3448 = vpop.f32.mrf.mxu0
    %v3449 = vadd.f32 0.0, %v3448
    %v3450 = vpop.f32.mrf.mxu0
    %3451 = vdwg.mxu0
    %3452 = vmatpush.bf16.msra.mxu0 0
    %3453 = vmatpush.bf16.msra.mxu0 0
    %3454 = vmatpush.bf16.msra.mxu0 %v3374
    %3455 = vmatpush.bf16.msra.mxu0 %v3340
    %3456 = vmatpush.bf16.msra.mxu0 %v3336
    %3457 = vmatpush.bf16.msra.mxu0 %v3332
    %3458 = vmatpush.bf16.msra.mxu0 %v3328
    %3459 = vmatpush.bf16.msra.mxu0 %v3324
    %3460 = vmatmul.bf16.gmra.mxu0 %v3437
    %v3461 = vpop.f32.mrf.mxu0
    %v3462 = vadd.f32 0.0, %v3461
    %v3463 = vpop.f32.mrf.mxu0
    %3464 = vdwg.mxu0
    %3465 = vmatpush.bf16.msra.mxu0 0
    %3466 = vmatpush.bf16.msra.mxu0 0
    %3467 = vmatpush.bf16.msra.mxu0 %v3377
    %3468 = vmatpush.bf16.msra.mxu0 %v3341
    %3469 = vmatpush.bf16.msra.mxu0 %v3337
    %3470 = vmatpush.bf16.msra.mxu0 %v3333
    %3471 = vmatpush.bf16.msra.mxu0 %v3329
    %3472 = vmatpush.bf16.msra.mxu0 %v3325
    %3473 = vmatmul.bf16.gmra.mxu0 %v3437
    %v3474 = vpop.f32.mrf.mxu0
    %v3475 = vadd.f32 0.0, %v3474
    %v3476 = vpop.f32.mrf.mxu0
    %3477 = vdwg.mxu0
    %3478 = vmatpush.bf16.msra.mxu0 0
    %3479 = vmatpush.bf16.msra.mxu0 0
    %3480 = vmatpush.bf16.msra.mxu0 %v3380
    %3481 = vmatpush.bf16.msra.mxu0 %v3342
    %3482 = vmatpush.bf16.msra.mxu0 %v3338
    %3483 = vmatpush.bf16.msra.mxu0 %v3334
    %3484 = vmatpush.bf16.msra.mxu0 %v3330
    %3485 = vmatpush.bf16.msra.mxu0 %v3326
    %3486 = vmatmul.bf16.gmra.mxu0 %v3437
    %v3487 = vpop.f32.mrf.mxu0
    %v3488 = vadd.f32 0.0, %v3487
    %v3489 = vpop.f32.mrf.mxu0
    %3490 = vdwg.mxu0
    %v3491 = vmax.f32 %v3392, %v3449
    %v3492 = vmax.f32 %v3405, %v3462
    %v3493 = vmax.f32 %v3418, %v3475
    %v3494 = vmax.f32 %v3431, %v3488
    %v3495 = vmax.f32 %v3491, %v3493
    %v3496 = vmax.f32 %v3492, %v3494
    %v3497 = vld [vmem:[%s2] sm:$0x3]
    %v3499 = vperm.slane %v3497, 0
    %v3500 = vperm.slane %v3497, 1
    %v3503 = vadd.f32 %v3495, %v3499
    %v3504 = vadd.f32 %v3496, %v3500
    %v3505 = vmax.f32 %v3503, 0.0
    %v3506 = vmax.f32 %v3504, 0.0
    %3507 = vst [vmem:[#allocation2 + $0xb0] sm:$0xff] %v3505
    %3508 = vst [vmem:[#allocation2 + $0xb8] sm:$0xff] %v3506
    %v3509 = vld [vmem:[%s0 + $0x28] sm:$0xff]
    %v3510 = vpack.c.bf16 %v3509, %v3509
    %v3511 = vld [vmem:[%s1] sm:$0xff]
    %v3512 = vld [vmem:[%s1 + $0x8] sm:$0xff]
    %v3513 = vld [vmem:[%s1 + $0x10] sm:$0xff]
    %v3514 = vld [vmem:[%s1 + $0x18] sm:$0xff]
    %v3515 = vld [vmem:[%s1 + $0x20] sm:$0xff]
    %v3516 = vld [vmem:[%s1 + $0x28] sm:$0xff]
    %v3517 = vld [vmem:[%s1 + $0x30] sm:$0xff]
    %v3518 = vld [vmem:[%s1 + $0x38] sm:$0xff]
    %v3519 = vld [vmem:[%s1 + $0x40] sm:$0xff]
    %v3520 = vld [vmem:[%s1 + $0x48] sm:$0xff]
    %v3521 = vld [vmem:[%s1 + $0x50] sm:$0xff]
    %v3522 = vld [vmem:[%s1 + $0x58] sm:$0xff]
    %v3523 = vld [vmem:[%s1 + $0x60] sm:$0xff]
    %v3524 = vld [vmem:[%s1 + $0x68] sm:$0xff]
    %v3525 = vld [vmem:[%s1 + $0x70] sm:$0xff]
    %v3526 = vld [vmem:[%s1 + $0x78] sm:$0xff]
    %v3527 = vld [vmem:[%s1 + $0x80] sm:$0xff]
    %v3528 = vld [vmem:[%s1 + $0x88] sm:$0xff]
    %v3529 = vld [vmem:[%s1 + $0x90] sm:$0xff]
    %v3530 = vld [vmem:[%s1 + $0x98] sm:$0xff]
    %v3531 = vld [vmem:[%s1 + $0xa0] sm:$0x33]
    %v3532 = vld [vmem:[%s1 + $0xa8] sm:$0x33]
    %3534 = vrot.lane.b32.xlu0 %v3510, 96
    %v3535 = vpop.permute.xlu0 %3534
    %v3558 = vunpack.c.l.b16 %v3511
    %v3559 = vunpack.c.h.b16 %v3511
    %v3560 = vunpack.c.l.b16 %v3512
    %v3561 = vunpack.c.h.b16 %v3512
    %v3562 = vunpack.c.l.b16 %v3513
    %v3563 = vunpack.c.h.b16 %v3513
    %v3564 = vunpack.c.l.b16 %v3514
    %v3565 = vunpack.c.h.b16 %v3514
    %v3566 = vunpack.c.l.b16 %v3515
    %v3567 = vunpack.c.h.b16 %v3515
    %v3568 = vunpack.c.l.b16 %v3516
    %v3569 = vunpack.c.h.b16 %v3516
    %v3570 = vunpack.c.l.b16 %v3517
    %v3571 = vunpack.c.h.b16 %v3517
    %v3572 = vunpack.c.l.b16 %v3518
    %v3573 = vunpack.c.h.b16 %v3518
    %v3574 = vunpack.c.l.b16 %v3519
    %v3575 = vunpack.c.h.b16 %v3519
    %v3576 = vunpack.c.l.b16 %v3520
    %v3577 = vunpack.c.h.b16 %v3520
    %v3578 = vunpack.c.l.b16 %v3521
    %v3579 = vunpack.c.h.b16 %v3521
    %v3580 = vunpack.c.l.b16 %v3522
    %v3581 = vunpack.c.h.b16 %v3522
    %v3582 = vunpack.c.l.b16 %v3523
    %v3583 = vunpack.c.h.b16 %v3523
    %v3584 = vunpack.c.l.b16 %v3524
    %v3585 = vunpack.c.h.b16 %v3524
    %v3586 = vunpack.c.l.b16 %v3525
    %v3587 = vunpack.c.h.b16 %v3525
    %v3588 = vunpack.c.l.b16 %v3526
    %v3589 = vunpack.c.h.b16 %v3526
    %v3590 = vunpack.c.l.b16 %v3527
    %v3591 = vunpack.c.h.b16 %v3527
    %v3592 = vunpack.c.l.b16 %v3528
    %v3593 = vunpack.c.h.b16 %v3528
    %v3594 = vunpack.c.l.b16 %v3529
    %v3595 = vunpack.c.h.b16 %v3529
    %v3596 = vunpack.c.l.b16 %v3530
    %v3597 = vunpack.c.h.b16 %v3530
    %v3598 = vunpack.c.l.b16 %v3531
    %v3599 = vunpack.c.h.b16 %v3531
    %v3600 = vunpack.c.l.b16 %v3532
    %v3601 = vunpack.c.h.b16 %v3532
    %v3602 = vpack.c.b16 %v3562, %v3558
    %v3603 = vpack.c.b16 %v3563, %v3559
    %v3604 = vpack.c.b16 %v3564, %v3560
    %v3605 = vpack.c.b16 %v3565, %v3561
    %v3606 = vpack.c.b16 %v3570, %v3566
    %v3607 = vpack.c.b16 %v3571, %v3567
    %v3608 = vpack.c.b16 %v3572, %v3568
    %v3609 = vpack.c.b16 %v3573, %v3569
    %v3610 = vpack.c.b16 %v3578, %v3574
    %v3611 = vpack.c.b16 %v3579, %v3575
    %v3612 = vpack.c.b16 %v3580, %v3576
    %v3613 = vpack.c.b16 %v3581, %v3577
    %v3614 = vpack.c.b16 %v3586, %v3582
    %v3615 = vpack.c.b16 %v3587, %v3583
    %v3616 = vpack.c.b16 %v3588, %v3584
    %v3617 = vpack.c.b16 %v3589, %v3585
    %v3618 = vpack.c.b16 %v3594, %v3590
    %v3619 = vpack.c.b16 %v3595, %v3591
    %v3620 = vpack.c.b16 %v3596, %v3592
    %v3621 = vpack.c.b16 %v3597, %v3593
    %v3622 = vpack.c.b16 %v3598, %v3598
    %v3623 = vpack.c.b16 %v3599, %v3599
    %v3624 = vpack.c.b16 %v3600, %v3600
    %v3625 = vpack.c.b16 %v3601, %v3601
    %v3647 = vsel %vm199, %v3535, 0
    %v3650 = vsel %vm203, %v3622, 0
    %v3653 = vsel %vm203, %v3623, 0
    %v3656 = vsel %vm203, %v3624, 0
    %v3659 = vsel %vm203, %v3625, 0
    %3661 = vmatpush.bf16.msra.mxu0 0
    %3662 = vmatpush.bf16.msra.mxu0 0
    %3663 = vmatpush.bf16.msra.mxu0 %v3650
    %3664 = vmatpush.bf16.msra.mxu0 %v3618
    %3665 = vmatpush.bf16.msra.mxu0 %v3614
    %3666 = vmatpush.bf16.msra.mxu0 %v3610
    %3667 = vmatpush.bf16.msra.mxu0 %v3606
    %3668 = vmatpush.bf16.msra.mxu0 %v3602
    %3669 = vmatmul.bf16.gmra.mxu0 %v3647
    %v3670 = vpop.f32.mrf.mxu0
    %v3671 = vadd.f32 0.0, %v3670
    %v3672 = vpop.f32.mrf.mxu0
    %3673 = vdwg.mxu0
    %3674 = vmatpush.bf16.msra.mxu0 0
    %3675 = vmatpush.bf16.msra.mxu0 0
    %3676 = vmatpush.bf16.msra.mxu0 %v3653
    %3677 = vmatpush.bf16.msra.mxu0 %v3619
    %3678 = vmatpush.bf16.msra.mxu0 %v3615
    %3679 = vmatpush.bf16.msra.mxu0 %v3611
    %3680 = vmatpush.bf16.msra.mxu0 %v3607
    %3681 = vmatpush.bf16.msra.mxu0 %v3603
    %3682 = vmatmul.bf16.gmra.mxu0 %v3647
    %v3683 = vpop.f32.mrf.mxu0
    %v3684 = vadd.f32 0.0, %v3683
    %v3685 = vpop.f32.mrf.mxu0
    %3686 = vdwg.mxu0
    %3687 = vmatpush.bf16.msra.mxu0 0
    %3688 = vmatpush.bf16.msra.mxu0 0
    %3689 = vmatpush.bf16.msra.mxu0 %v3656
    %3690 = vmatpush.bf16.msra.mxu0 %v3620
    %3691 = vmatpush.bf16.msra.mxu0 %v3616
    %3692 = vmatpush.bf16.msra.mxu0 %v3612
    %3693 = vmatpush.bf16.msra.mxu0 %v3608
    %3694 = vmatpush.bf16.msra.mxu0 %v3604
    %3695 = vmatmul.bf16.gmra.mxu0 %v3647
    %v3696 = vpop.f32.mrf.mxu0
    %v3697 = vadd.f32 0.0, %v3696
    %v3698 = vpop.f32.mrf.mxu0
    %3699 = vdwg.mxu0
    %3700 = vmatpush.bf16.msra.mxu0 0
    %3701 = vmatpush.bf16.msra.mxu0 0
    %3702 = vmatpush.bf16.msra.mxu0 %v3659
    %3703 = vmatpush.bf16.msra.mxu0 %v3621
    %3704 = vmatpush.bf16.msra.mxu0 %v3617
    %3705 = vmatpush.bf16.msra.mxu0 %v3613
    %3706 = vmatpush.bf16.msra.mxu0 %v3609
    %3707 = vmatpush.bf16.msra.mxu0 %v3605
    %3708 = vmatmul.bf16.gmra.mxu0 %v3647
    %v3709 = vpop.f32.mrf.mxu0
    %v3710 = vadd.f32 0.0, %v3709
    %v3711 = vpop.f32.mrf.mxu0
    %3712 = vdwg.mxu0
    %v3713 = vld [vmem:[%s0 + $0x28] sm:$0xff]
    %v3714 = vld [vmem:[%s0 + $0x30] sm:$0xff]
    %v3715 = vpack.c.bf16 %v3713, %v3713
    %v3716 = vpack.c.bf16 %v3714, %v3714
    %3719 = vrot.lane.b32.xlu0 %v3715, 68
    %v3720 = vpop.permute.xlu0 %3719
    %3721 = vrot.lane.b32.xlu0 %v3716, 68
    %v3722 = vpop.permute.xlu0 %3721
    %vm3723 = vcmask 556032
    %v3724 = vsel %vm3723, %v3720, %v3722
    %v3726 = vsel %vm199, %v3724, 0
    %3728 = vmatpush.bf16.msra.mxu0 0
    %3729 = vmatpush.bf16.msra.mxu0 0
    %3730 = vmatpush.bf16.msra.mxu0 %v3650
    %3731 = vmatpush.bf16.msra.mxu0 %v3618
    %3732 = vmatpush.bf16.msra.mxu0 %v3614
    %3733 = vmatpush.bf16.msra.mxu0 %v3610
    %3734 = vmatpush.bf16.msra.mxu0 %v3606
    %3735 = vmatpush.bf16.msra.mxu0 %v3602
    %3736 = vmatmul.bf16.gmra.mxu0 %v3726
    %v3737 = vpop.f32.mrf.mxu0
    %v3738 = vadd.f32 0.0, %v3737
    %v3739 = vpop.f32.mrf.mxu0
    %3740 = vdwg.mxu0
    %3741 = vmatpush.bf16.msra.mxu0 0
    %3742 = vmatpush.bf16.msra.mxu0 0
    %3743 = vmatpush.bf16.msra.mxu0 %v3653
    %3744 = vmatpush.bf16.msra.mxu0 %v3619
    %3745 = vmatpush.bf16.msra.mxu0 %v3615
    %3746 = vmatpush.bf16.msra.mxu0 %v3611
    %3747 = vmatpush.bf16.msra.mxu0 %v3607
    %3748 = vmatpush.bf16.msra.mxu0 %v3603
    %3749 = vmatmul.bf16.gmra.mxu0 %v3726
    %v3750 = vpop.f32.mrf.mxu0
    %v3751 = vadd.f32 0.0, %v3750
    %v3752 = vpop.f32.mrf.mxu0
    %3753 = vdwg.mxu0
    %3754 = vmatpush.bf16.msra.mxu0 0
    %3755 = vmatpush.bf16.msra.mxu0 0
    %3756 = vmatpush.bf16.msra.mxu0 %v3656
    %3757 = vmatpush.bf16.msra.mxu0 %v3620
    %3758 = vmatpush.bf16.msra.mxu0 %v3616
    %3759 = vmatpush.bf16.msra.mxu0 %v3612
    %3760 = vmatpush.bf16.msra.mxu0 %v3608
    %3761 = vmatpush.bf16.msra.mxu0 %v3604
    %3762 = vmatmul.bf16.gmra.mxu0 %v3726
    %v3763 = vpop.f32.mrf.mxu0
    %v3764 = vadd.f32 0.0, %v3763
    %v3765 = vpop.f32.mrf.mxu0
    %3766 = vdwg.mxu0
    %3767 = vmatpush.bf16.msra.mxu0 0
    %3768 = vmatpush.bf16.msra.mxu0 0
    %3769 = vmatpush.bf16.msra.mxu0 %v3659
    %3770 = vmatpush.bf16.msra.mxu0 %v3621
    %3771 = vmatpush.bf16.msra.mxu0 %v3617
    %3772 = vmatpush.bf16.msra.mxu0 %v3613
    %3773 = vmatpush.bf16.msra.mxu0 %v3609
    %3774 = vmatpush.bf16.msra.mxu0 %v3605
    %3775 = vmatmul.bf16.gmra.mxu0 %v3726
    %v3776 = vpop.f32.mrf.mxu0
    %v3777 = vadd.f32 0.0, %v3776
    %v3778 = vpop.f32.mrf.mxu0
    %3779 = vdwg.mxu0
    %v3780 = vmax.f32 %v3671, %v3738
    %v3781 = vmax.f32 %v3684, %v3751
    %v3782 = vmax.f32 %v3697, %v3764
    %v3783 = vmax.f32 %v3710, %v3777
    %v3784 = vmax.f32 %v3780, %v3782
    %v3785 = vmax.f32 %v3781, %v3783
    %v3786 = vld [vmem:[%s2] sm:$0x3]
    %v3788 = vperm.slane %v3786, 0
    %v3789 = vperm.slane %v3786, 1
    %v3792 = vadd.f32 %v3784, %v3788
    %v3793 = vadd.f32 %v3785, %v3789
    %v3794 = vmax.f32 %v3792, 0.0
    %v3795 = vmax.f32 %v3793, 0.0
    %3796 = vst [vmem:[#allocation2 + $0xc0] sm:$0xff] %v3794
    %3797 = vst [vmem:[#allocation2 + $0xc8] sm:$0xff] %v3795
    %v3798 = vld [vmem:[#allocation2] sm:$0xff]
    %v3799 = vld [vmem:[#allocation2 + $0x8] sm:$0xff]
    %v3800 = vpack.c.bf16 %v3798, %v3798
    %v3801 = vpack.c.bf16 %v3799, %v3799
    %v3802 = vld [vmem:[#allocation3] sm:$0xff]
    %v3803 = vld [vmem:[#allocation3 + $0x8] sm:$0xff]
    %v3804 = vld [vmem:[#allocation3 + $0x10] sm:$0xff]
    %v3805 = vld [vmem:[#allocation3 + $0x18] sm:$0xff]
    %v3806 = vld [vmem:[#allocation3 + $0x20] sm:$0xff]
    %v3807 = vld [vmem:[#allocation3 + $0x28] sm:$0xff]
    %v3808 = vld [vmem:[#allocation3 + $0x30] sm:$0xff]
    %v3809 = vld [vmem:[#allocation3 + $0x38] sm:$0xff]
    %v3810 = vld [vmem:[#allocation3 + $0x40] sm:$0xff]
    %v3811 = vld [vmem:[#allocation3 + $0x48] sm:$0xff]
    %v3812 = vld [vmem:[#allocation3 + $0x50] sm:$0xff]
    %v3813 = vld [vmem:[#allocation3 + $0x58] sm:$0xff]
    %v3814 = vld [vmem:[#allocation3 + $0x60] sm:$0xff]
    %v3815 = vld [vmem:[#allocation3 + $0x68] sm:$0xff]
    %v3816 = vld [vmem:[#allocation3 + $0x70] sm:$0xff]
    %v3817 = vld [vmem:[#allocation3 + $0x78] sm:$0xff]
    %v3818 = vld [vmem:[#allocation3 + $0x80] sm:$0xff]
    %v3819 = vld [vmem:[#allocation3 + $0x88] sm:$0xff]
    %v3820 = vld [vmem:[#allocation3 + $0x90] sm:$0xff]
    %v3821 = vld [vmem:[#allocation3 + $0x98] sm:$0xff]
    %v3822 = vld [vmem:[#allocation3 + $0xa0] sm:$0xff]
    %v3823 = vld [vmem:[#allocation3 + $0xa8] sm:$0xff]
    %v3824 = vld [vmem:[#allocation3 + $0xb0] sm:$0xff]
    %v3825 = vld [vmem:[#allocation3 + $0xb8] sm:$0xff]
    %v3826 = vld [vmem:[#allocation3 + $0xc0] sm:$0xff]
    %v3827 = vld [vmem:[#allocation3 + $0xc8] sm:$0xff]
    %v3828 = vld [vmem:[#allocation3 + $0xd0] sm:$0xff]
    %v3829 = vld [vmem:[#allocation3 + $0xd8] sm:$0xff]
    %v3830 = vld [vmem:[#allocation3 + $0xe0] sm:$0xff]
    %v3831 = vld [vmem:[#allocation3 + $0xe8] sm:$0xff]
    %v3832 = vld [vmem:[#allocation3 + $0xf0] sm:$0xff]
    %v3833 = vld [vmem:[#allocation3 + $0xf8] sm:$0xff]
    %v3834 = vld [vmem:[#allocation3 + $0x100] sm:$0xff]
    %v3835 = vld [vmem:[#allocation3 + $0x108] sm:$0xff]
    %v3836 = vld [vmem:[#allocation3 + $0x110] sm:$0xff]
    %v3837 = vld [vmem:[#allocation3 + $0x118] sm:$0xff]
    %v3838 = vld [vmem:[#allocation3 + $0x120] sm:$0xff]
    %v3839 = vld [vmem:[#allocation3 + $0x128] sm:$0xff]
    %v3840 = vld [vmem:[#allocation3 + $0x130] sm:$0xff]
    %v3841 = vld [vmem:[#allocation3 + $0x138] sm:$0xff]
    %v3842 = vld [vmem:[#allocation3 + $0x140] sm:$0xff]
    %v3843 = vld [vmem:[#allocation3 + $0x148] sm:$0xff]
    %v3844 = vld [vmem:[#allocation3 + $0x150] sm:$0xff]
    %v3845 = vld [vmem:[#allocation3 + $0x158] sm:$0xff]
    %v3846 = vld [vmem:[#allocation3 + $0x160] sm:$0xff]
    %v3847 = vld [vmem:[#allocation3 + $0x168] sm:$0xff]
    %v3848 = vld [vmem:[#allocation3 + $0x170] sm:$0xff]
    %v3849 = vld [vmem:[#allocation3 + $0x178] sm:$0xff]
    %v3850 = vld [vmem:[#allocation3 + $0x180] sm:$0xff]
    %v3851 = vld [vmem:[#allocation3 + $0x188] sm:$0xff]
    %v3852 = vld [vmem:[#allocation3 + $0x190] sm:$0xff]
    %v3853 = vld [vmem:[#allocation3 + $0x198] sm:$0xff]
    %v3854 = vld [vmem:[#allocation3 + $0x1a0] sm:$0xff]
    %v3855 = vld [vmem:[#allocation3 + $0x1a8] sm:$0xff]
    %v3856 = vld [vmem:[#allocation3 + $0x1b0] sm:$0xff]
    %v3857 = vld [vmem:[#allocation3 + $0x1b8] sm:$0xff]
    %v3858 = vld [vmem:[#allocation3 + $0x1c0] sm:$0xff]
    %v3859 = vld [vmem:[#allocation3 + $0x1c8] sm:$0xff]
    %v3860 = vld [vmem:[#allocation3 + $0x1d0] sm:$0xff]
    %v3861 = vld [vmem:[#allocation3 + $0x1d8] sm:$0xff]
    %v3862 = vld [vmem:[#allocation3 + $0x1e0] sm:$0xff]
    %v3863 = vld [vmem:[#allocation3 + $0x1e8] sm:$0xff]
    %v3864 = vld [vmem:[#allocation3 + $0x1f0] sm:$0xff]
    %v3865 = vld [vmem:[#allocation3 + $0x1f8] sm:$0xff]
    %v3866 = vld [vmem:[#allocation2 + $0x10] sm:$0xff]
    %v3867 = vld [vmem:[#allocation2 + $0x18] sm:$0xff]
    %v3868 = vpack.c.bf16 %v3866, %v3866
    %v3869 = vpack.c.bf16 %v3867, %v3867
    %s3870 = scalar_lea.vmem [#allocation3], 512
    %v3871 = vld [vmem:[%s3870] sm:$0xff]
    %v3872 = vld [vmem:[%s3870 + $0x8] sm:$0xff]
    %v3873 = vld [vmem:[%s3870 + $0x10] sm:$0xff]
    %v3874 = vld [vmem:[%s3870 + $0x18] sm:$0xff]
    %v3875 = vld [vmem:[%s3870 + $0x20] sm:$0xff]
    %v3876 = vld [vmem:[%s3870 + $0x28] sm:$0xff]
    %v3877 = vld [vmem:[%s3870 + $0x30] sm:$0xff]
    %v3878 = vld [vmem:[%s3870 + $0x38] sm:$0xff]
    %v3879 = vld [vmem:[%s3870 + $0x40] sm:$0xff]
    %v3880 = vld [vmem:[%s3870 + $0x48] sm:$0xff]
    %v3881 = vld [vmem:[%s3870 + $0x50] sm:$0xff]
    %v3882 = vld [vmem:[%s3870 + $0x58] sm:$0xff]
    %v3883 = vld [vmem:[%s3870 + $0x60] sm:$0xff]
    %v3884 = vld [vmem:[%s3870 + $0x68] sm:$0xff]
    %v3885 = vld [vmem:[%s3870 + $0x70] sm:$0xff]
    %v3886 = vld [vmem:[%s3870 + $0x78] sm:$0xff]
    %v3887 = vld [vmem:[%s3870 + $0x80] sm:$0xff]
    %v3888 = vld [vmem:[%s3870 + $0x88] sm:$0xff]
    %v3889 = vld [vmem:[%s3870 + $0x90] sm:$0xff]
    %v3890 = vld [vmem:[%s3870 + $0x98] sm:$0xff]
    %v3891 = vld [vmem:[%s3870 + $0xa0] sm:$0xff]
    %v3892 = vld [vmem:[%s3870 + $0xa8] sm:$0xff]
    %v3893 = vld [vmem:[%s3870 + $0xb0] sm:$0xff]
    %v3894 = vld [vmem:[%s3870 + $0xb8] sm:$0xff]
    %v3895 = vld [vmem:[%s3870 + $0xc0] sm:$0xff]
    %v3896 = vld [vmem:[%s3870 + $0xc8] sm:$0xff]
    %v3897 = vld [vmem:[%s3870 + $0xd0] sm:$0xff]
    %v3898 = vld [vmem:[%s3870 + $0xd8] sm:$0xff]
    %v3899 = vld [vmem:[%s3870 + $0xe0] sm:$0xff]
    %v3900 = vld [vmem:[%s3870 + $0xe8] sm:$0xff]
    %v3901 = vld [vmem:[%s3870 + $0xf0] sm:$0xff]
    %v3902 = vld [vmem:[%s3870 + $0xf8] sm:$0xff]
    %v3903 = vld [vmem:[%s3870 + $0x100] sm:$0xff]
    %v3904 = vld [vmem:[%s3870 + $0x108] sm:$0xff]
    %v3905 = vld [vmem:[%s3870 + $0x110] sm:$0xff]
    %v3906 = vld [vmem:[%s3870 + $0x118] sm:$0xff]
    %v3907 = vld [vmem:[%s3870 + $0x120] sm:$0xff]
    %v3908 = vld [vmem:[%s3870 + $0x128] sm:$0xff]
    %v3909 = vld [vmem:[%s3870 + $0x130] sm:$0xff]
    %v3910 = vld [vmem:[%s3870 + $0x138] sm:$0xff]
    %v3911 = vld [vmem:[%s3870 + $0x140] sm:$0xff]
    %v3912 = vld [vmem:[%s3870 + $0x148] sm:$0xff]
    %v3913 = vld [vmem:[%s3870 + $0x150] sm:$0xff]
    %v3914 = vld [vmem:[%s3870 + $0x158] sm:$0xff]
    %v3915 = vld [vmem:[%s3870 + $0x160] sm:$0xff]
    %v3916 = vld [vmem:[%s3870 + $0x168] sm:$0xff]
    %v3917 = vld [vmem:[%s3870 + $0x170] sm:$0xff]
    %v3918 = vld [vmem:[%s3870 + $0x178] sm:$0xff]
    %v3919 = vld [vmem:[%s3870 + $0x180] sm:$0xff]
    %v3920 = vld [vmem:[%s3870 + $0x188] sm:$0xff]
    %v3921 = vld [vmem:[%s3870 + $0x190] sm:$0xff]
    %v3922 = vld [vmem:[%s3870 + $0x198] sm:$0xff]
    %v3923 = vld [vmem:[%s3870 + $0x1a0] sm:$0xff]
    %v3924 = vld [vmem:[%s3870 + $0x1a8] sm:$0xff]
    %v3925 = vld [vmem:[%s3870 + $0x1b0] sm:$0xff]
    %v3926 = vld [vmem:[%s3870 + $0x1b8] sm:$0xff]
    %v3927 = vld [vmem:[%s3870 + $0x1c0] sm:$0xff]
    %v3928 = vld [vmem:[%s3870 + $0x1c8] sm:$0xff]
    %v3929 = vld [vmem:[%s3870 + $0x1d0] sm:$0xff]
    %v3930 = vld [vmem:[%s3870 + $0x1d8] sm:$0xff]
    %v3931 = vld [vmem:[%s3870 + $0x1e0] sm:$0xff]
    %v3932 = vld [vmem:[%s3870 + $0x1e8] sm:$0xff]
    %v3933 = vld [vmem:[%s3870 + $0x1f0] sm:$0xff]
    %v3934 = vld [vmem:[%s3870 + $0x1f8] sm:$0xff]
    %v3999 = vunpack.c.l.b16 %v3871
    %v4000 = vunpack.c.h.b16 %v3871
    %v4001 = vunpack.c.l.b16 %v3872
    %v4002 = vunpack.c.h.b16 %v3872
    %v4003 = vunpack.c.l.b16 %v3873
    %v4004 = vunpack.c.h.b16 %v3873
    %v4005 = vunpack.c.l.b16 %v3874
    %v4006 = vunpack.c.h.b16 %v3874
    %v4007 = vunpack.c.l.b16 %v3875
    %v4008 = vunpack.c.h.b16 %v3875
    %v4009 = vunpack.c.l.b16 %v3876
    %v4010 = vunpack.c.h.b16 %v3876
    %v4011 = vunpack.c.l.b16 %v3877
    %v4012 = vunpack.c.h.b16 %v3877
    %v4013 = vunpack.c.l.b16 %v3878
    %v4014 = vunpack.c.h.b16 %v3878
    %v4015 = vunpack.c.l.b16 %v3879
    %v4016 = vunpack.c.h.b16 %v3879
    %v4017 = vunpack.c.l.b16 %v3880
    %v4018 = vunpack.c.h.b16 %v3880
    %v4019 = vunpack.c.l.b16 %v3881
    %v4020 = vunpack.c.h.b16 %v3881
    %v4021 = vunpack.c.l.b16 %v3882
    %v4022 = vunpack.c.h.b16 %v3882
    %v4023 = vunpack.c.l.b16 %v3883
    %v4024 = vunpack.c.h.b16 %v3883
    %v4025 = vunpack.c.l.b16 %v3884
    %v4026 = vunpack.c.h.b16 %v3884
    %v4027 = vunpack.c.l.b16 %v3885
    %v4028 = vunpack.c.h.b16 %v3885
    %v4029 = vunpack.c.l.b16 %v3886
    %v4030 = vunpack.c.h.b16 %v3886
    %v4031 = vunpack.c.l.b16 %v3887
    %v4032 = vunpack.c.h.b16 %v3887
    %v4033 = vunpack.c.l.b16 %v3888
    %v4034 = vunpack.c.h.b16 %v3888
    %v4035 = vunpack.c.l.b16 %v3889
    %v4036 = vunpack.c.h.b16 %v3889
    %v4037 = vunpack.c.l.b16 %v3890
    %v4038 = vunpack.c.h.b16 %v3890
    %v4039 = vunpack.c.l.b16 %v3891
    %v4040 = vunpack.c.h.b16 %v3891
    %v4041 = vunpack.c.l.b16 %v3892
    %v4042 = vunpack.c.h.b16 %v3892
    %v4043 = vunpack.c.l.b16 %v3893
    %v4044 = vunpack.c.h.b16 %v3893
    %v4045 = vunpack.c.l.b16 %v3894
    %v4046 = vunpack.c.h.b16 %v3894
    %v4047 = vunpack.c.l.b16 %v3895
    %v4048 = vunpack.c.h.b16 %v3895
    %v4049 = vunpack.c.l.b16 %v3896
    %v4050 = vunpack.c.h.b16 %v3896
    %v4051 = vunpack.c.l.b16 %v3897
    %v4052 = vunpack.c.h.b16 %v3897
    %v4053 = vunpack.c.l.b16 %v3898
    %v4054 = vunpack.c.h.b16 %v3898
    %v4055 = vunpack.c.l.b16 %v3899
    %v4056 = vunpack.c.h.b16 %v3899
    %v4057 = vunpack.c.l.b16 %v3900
    %v4058 = vunpack.c.h.b16 %v3900
    %v4059 = vunpack.c.l.b16 %v3901
    %v4060 = vunpack.c.h.b16 %v3901
    %v4061 = vunpack.c.l.b16 %v3902
    %v4062 = vunpack.c.h.b16 %v3902
    %v4063 = vunpack.c.l.b16 %v3903
    %v4064 = vunpack.c.h.b16 %v3903
    %v4065 = vunpack.c.l.b16 %v3904
    %v4066 = vunpack.c.h.b16 %v3904
    %v4067 = vunpack.c.l.b16 %v3905
    %v4068 = vunpack.c.h.b16 %v3905
    %v4069 = vunpack.c.l.b16 %v3906
    %v4070 = vunpack.c.h.b16 %v3906
    %v4071 = vunpack.c.l.b16 %v3907
    %v4072 = vunpack.c.h.b16 %v3907
    %v4073 = vunpack.c.l.b16 %v3908
    %v4074 = vunpack.c.h.b16 %v3908
    %v4075 = vunpack.c.l.b16 %v3909
    %v4076 = vunpack.c.h.b16 %v3909
    %v4077 = vunpack.c.l.b16 %v3910
    %v4078 = vunpack.c.h.b16 %v3910
    %v4079 = vunpack.c.l.b16 %v3911
    %v4080 = vunpack.c.h.b16 %v3911
    %v4081 = vunpack.c.l.b16 %v3912
    %v4082 = vunpack.c.h.b16 %v3912
    %v4083 = vunpack.c.l.b16 %v3913
    %v4084 = vunpack.c.h.b16 %v3913
    %v4085 = vunpack.c.l.b16 %v3914
    %v4086 = vunpack.c.h.b16 %v3914
    %v4087 = vunpack.c.l.b16 %v3915
    %v4088 = vunpack.c.h.b16 %v3915
    %v4089 = vunpack.c.l.b16 %v3916
    %v4090 = vunpack.c.h.b16 %v3916
    %v4091 = vunpack.c.l.b16 %v3917
    %v4092 = vunpack.c.h.b16 %v3917
    %v4093 = vunpack.c.l.b16 %v3918
    %v4094 = vunpack.c.h.b16 %v3918
    %v4095 = vunpack.c.l.b16 %v3919
    %v4096 = vunpack.c.h.b16 %v3919
    %v4097 = vunpack.c.l.b16 %v3920
    %v4098 = vunpack.c.h.b16 %v3920
    %v4099 = vunpack.c.l.b16 %v3921
    %v4100 = vunpack.c.h.b16 %v3921
    %v4101 = vunpack.c.l.b16 %v3922
    %v4102 = vunpack.c.h.b16 %v3922
    %v4103 = vunpack.c.l.b16 %v3923
    %v4104 = vunpack.c.h.b16 %v3923
    %v4105 = vunpack.c.l.b16 %v3924
    %v4106 = vunpack.c.h.b16 %v3924
    %v4107 = vunpack.c.l.b16 %v3925
    %v4108 = vunpack.c.h.b16 %v3925
    %v4109 = vunpack.c.l.b16 %v3926
    %v4110 = vunpack.c.h.b16 %v3926
    %v4111 = vunpack.c.l.b16 %v3927
    %v4112 = vunpack.c.h.b16 %v3927
    %v4113 = vunpack.c.l.b16 %v3928
    %v4114 = vunpack.c.h.b16 %v3928
    %v4115 = vunpack.c.l.b16 %v3929
    %v4116 = vunpack.c.h.b16 %v3929
    %v4117 = vunpack.c.l.b16 %v3930
    %v4118 = vunpack.c.h.b16 %v3930
    %v4119 = vunpack.c.l.b16 %v3931
    %v4120 = vunpack.c.h.b16 %v3931
    %v4121 = vunpack.c.l.b16 %v3932
    %v4122 = vunpack.c.h.b16 %v3932
    %v4123 = vunpack.c.l.b16 %v3933
    %v4124 = vunpack.c.h.b16 %v3933
    %v4125 = vunpack.c.l.b16 %v3934
    %v4126 = vunpack.c.h.b16 %v3934
    %v4127 = vpack.c.b16 %v4003, %v3999
    %v4128 = vpack.c.b16 %v4004, %v4000
    %v4129 = vpack.c.b16 %v4005, %v4001
    %v4130 = vpack.c.b16 %v4006, %v4002
    %v4131 = vpack.c.b16 %v4011, %v4007
    %v4132 = vpack.c.b16 %v4012, %v4008
    %v4133 = vpack.c.b16 %v4013, %v4009
    %v4134 = vpack.c.b16 %v4014, %v4010
    %v4135 = vpack.c.b16 %v4019, %v4015
    %v4136 = vpack.c.b16 %v4020, %v4016
    %v4137 = vpack.c.b16 %v4021, %v4017
    %v4138 = vpack.c.b16 %v4022, %v4018
    %v4139 = vpack.c.b16 %v4027, %v4023
    %v4140 = vpack.c.b16 %v4028, %v4024
    %v4141 = vpack.c.b16 %v4029, %v4025
    %v4142 = vpack.c.b16 %v4030, %v4026
    %v4143 = vpack.c.b16 %v4035, %v4031
    %v4144 = vpack.c.b16 %v4036, %v4032
    %v4145 = vpack.c.b16 %v4037, %v4033
    %v4146 = vpack.c.b16 %v4038, %v4034
    %v4147 = vpack.c.b16 %v4043, %v4039
    %v4148 = vpack.c.b16 %v4044, %v4040
    %v4149 = vpack.c.b16 %v4045, %v4041
    %v4150 = vpack.c.b16 %v4046, %v4042
    %v4151 = vpack.c.b16 %v4051, %v4047
    %v4152 = vpack.c.b16 %v4052, %v4048
    %v4153 = vpack.c.b16 %v4053, %v4049
    %v4154 = vpack.c.b16 %v4054, %v4050
    %v4155 = vpack.c.b16 %v4059, %v4055
    %v4156 = vpack.c.b16 %v4060, %v4056
    %v4157 = vpack.c.b16 %v4061, %v4057
    %v4158 = vpack.c.b16 %v4062, %v4058
    %v4159 = vpack.c.b16 %v4067, %v4063
    %v4160 = vpack.c.b16 %v4068, %v4064
    %v4161 = vpack.c.b16 %v4069, %v4065
    %v4162 = vpack.c.b16 %v4070, %v4066
    %v4163 = vpack.c.b16 %v4075, %v4071
    %v4164 = vpack.c.b16 %v4076, %v4072
    %v4165 = vpack.c.b16 %v4077, %v4073
    %v4166 = vpack.c.b16 %v4078, %v4074
    %v4167 = vpack.c.b16 %v4083, %v4079
    %v4168 = vpack.c.b16 %v4084, %v4080
    %v4169 = vpack.c.b16 %v4085, %v4081
    %v4170 = vpack.c.b16 %v4086, %v4082
    %v4171 = vpack.c.b16 %v4091, %v4087
    %v4172 = vpack.c.b16 %v4092, %v4088
    %v4173 = vpack.c.b16 %v4093, %v4089
    %v4174 = vpack.c.b16 %v4094, %v4090
    %v4175 = vpack.c.b16 %v4099, %v4095
    %v4176 = vpack.c.b16 %v4100, %v4096
    %v4177 = vpack.c.b16 %v4101, %v4097
    %v4178 = vpack.c.b16 %v4102, %v4098
    %v4179 = vpack.c.b16 %v4107, %v4103
    %v4180 = vpack.c.b16 %v4108, %v4104
    %v4181 = vpack.c.b16 %v4109, %v4105
    %v4182 = vpack.c.b16 %v4110, %v4106
    %v4183 = vpack.c.b16 %v4115, %v4111
    %v4184 = vpack.c.b16 %v4116, %v4112
    %v4185 = vpack.c.b16 %v4117, %v4113
    %v4186 = vpack.c.b16 %v4118, %v4114
    %v4187 = vpack.c.b16 %v4123, %v4119
    %v4188 = vpack.c.b16 %v4124, %v4120
    %v4189 = vpack.c.b16 %v4125, %v4121
    %v4190 = vpack.c.b16 %v4126, %v4122
    %4255 = vmatpush.bf16.msra.mxu0 %v4155
    %4256 = vmatpush.bf16.msra.mxu0 %v4151
    %4257 = vmatpush.bf16.msra.mxu0 %v4147
    %4258 = vmatpush.bf16.msra.mxu0 %v4143
    %4259 = vmatpush.bf16.msra.mxu0 %v4139
    %4260 = vmatpush.bf16.msra.mxu0 %v4135
    %4261 = vmatpush.bf16.msra.mxu0 %v4131
    %4262 = vmatpush.bf16.msra.mxu0 %v4127
    %4263 = vmatmul.bf16.gmra.mxu0 %v3868
    %v4264 = vpop.f32.mrf.mxu0
    %v4265 = vadd.f32 0.0, %v4264
    %v4266 = vpop.f32.mrf.mxu0
    %4267 = vdwg.mxu0
    %4268 = vmatpush.bf16.msra.mxu0 %v4187
    %4269 = vmatpush.bf16.msra.mxu0 %v4183
    %4270 = vmatpush.bf16.msra.mxu0 %v4179
    %4271 = vmatpush.bf16.msra.mxu0 %v4175
    %4272 = vmatpush.bf16.msra.mxu0 %v4171
    %4273 = vmatpush.bf16.msra.mxu0 %v4167
    %4274 = vmatpush.bf16.msra.mxu0 %v4163
    %4275 = vmatpush.bf16.msra.mxu0 %v4159
    %4276 = vmatmul.bf16.gmra.mxu0 %v3869
    %v4277 = vpop.f32.mrf.mxu0
    %v4278 = vadd.f32 %v4265, %v4277
    %v4279 = vpop.f32.mrf.mxu0
    %4280 = vdwg.mxu0
    %4281 = vmatpush.bf16.msra.mxu0 %v4156
    %4282 = vmatpush.bf16.msra.mxu0 %v4152
    %4283 = vmatpush.bf16.msra.mxu0 %v4148
    %4284 = vmatpush.bf16.msra.mxu0 %v4144
    %4285 = vmatpush.bf16.msra.mxu0 %v4140
    %4286 = vmatpush.bf16.msra.mxu0 %v4136
    %4287 = vmatpush.bf16.msra.mxu0 %v4132
    %4288 = vmatpush.bf16.msra.mxu0 %v4128
    %4289 = vmatmul.bf16.gmra.mxu0 %v3868
    %v4290 = vpop.f32.mrf.mxu0
    %v4291 = vadd.f32 0.0, %v4290
    %v4292 = vpop.f32.mrf.mxu0
    %4293 = vdwg.mxu0
    %4294 = vmatpush.bf16.msra.mxu0 %v4188
    %4295 = vmatpush.bf16.msra.mxu0 %v4184
    %4296 = vmatpush.bf16.msra.mxu0 %v4180
    %4297 = vmatpush.bf16.msra.mxu0 %v4176
    %4298 = vmatpush.bf16.msra.mxu0 %v4172
    %4299 = vmatpush.bf16.msra.mxu0 %v4168
    %4300 = vmatpush.bf16.msra.mxu0 %v4164
    %4301 = vmatpush.bf16.msra.mxu0 %v4160
    %4302 = vmatmul.bf16.gmra.mxu0 %v3869
    %v4303 = vpop.f32.mrf.mxu0
    %v4304 = vadd.f32 %v4291, %v4303
    %v4305 = vpop.f32.mrf.mxu0
    %4306 = vdwg.mxu0
    %4307 = vmatpush.bf16.msra.mxu0 %v4157
    %4308 = vmatpush.bf16.msra.mxu0 %v4153
    %4309 = vmatpush.bf16.msra.mxu0 %v4149
    %4310 = vmatpush.bf16.msra.mxu0 %v4145
    %4311 = vmatpush.bf16.msra.mxu0 %v4141
    %4312 = vmatpush.bf16.msra.mxu0 %v4137
    %4313 = vmatpush.bf16.msra.mxu0 %v4133
    %4314 = vmatpush.bf16.msra.mxu0 %v4129
    %4315 = vmatmul.bf16.gmra.mxu0 %v3868
    %v4316 = vpop.f32.mrf.mxu0
    %v4317 = vadd.f32 0.0, %v4316
    %v4318 = vpop.f32.mrf.mxu0
    %4319 = vdwg.mxu0
    %4320 = vmatpush.bf16.msra.mxu0 %v4189
    %4321 = vmatpush.bf16.msra.mxu0 %v4185
    %4322 = vmatpush.bf16.msra.mxu0 %v4181
    %4323 = vmatpush.bf16.msra.mxu0 %v4177
    %4324 = vmatpush.bf16.msra.mxu0 %v4173
    %4325 = vmatpush.bf16.msra.mxu0 %v4169
    %4326 = vmatpush.bf16.msra.mxu0 %v4165
    %4327 = vmatpush.bf16.msra.mxu0 %v4161
    %4328 = vmatmul.bf16.gmra.mxu0 %v3869
    %v4329 = vpop.f32.mrf.mxu0
    %v4330 = vadd.f32 %v4317, %v4329
    %v4331 = vpop.f32.mrf.mxu0
    %4332 = vdwg.mxu0
    %4333 = vmatpush.bf16.msra.mxu0 %v4158
    %4334 = vmatpush.bf16.msra.mxu0 %v4154
    %4335 = vmatpush.bf16.msra.mxu0 %v4150
    %4336 = vmatpush.bf16.msra.mxu0 %v4146
    %4337 = vmatpush.bf16.msra.mxu0 %v4142
    %4338 = vmatpush.bf16.msra.mxu0 %v4138
    %4339 = vmatpush.bf16.msra.mxu0 %v4134
    %4340 = vmatpush.bf16.msra.mxu0 %v4130
    %4341 = vmatmul.bf16.gmra.mxu0 %v3868
    %v4342 = vpop.f32.mrf.mxu0
    %v4343 = vadd.f32 0.0, %v4342
    %v4344 = vpop.f32.mrf.mxu0
    %4345 = vdwg.mxu0
    %4346 = vmatpush.bf16.msra.mxu0 %v4190
    %4347 = vmatpush.bf16.msra.mxu0 %v4186
    %4348 = vmatpush.bf16.msra.mxu0 %v4182
    %4349 = vmatpush.bf16.msra.mxu0 %v4178
    %4350 = vmatpush.bf16.msra.mxu0 %v4174
    %4351 = vmatpush.bf16.msra.mxu0 %v4170
    %4352 = vmatpush.bf16.msra.mxu0 %v4166
    %4353 = vmatpush.bf16.msra.mxu0 %v4162
    %4354 = vmatmul.bf16.gmra.mxu0 %v3869
    %v4355 = vpop.f32.mrf.mxu0
    %v4356 = vadd.f32 %v4343, %v4355
    %v4357 = vpop.f32.mrf.mxu0
    %4358 = vdwg.mxu0
    %v4423 = vunpack.c.l.b16 %v3802
    %v4424 = vunpack.c.h.b16 %v3802
    %v4425 = vunpack.c.l.b16 %v3803
    %v4426 = vunpack.c.h.b16 %v3803
    %v4427 = vunpack.c.l.b16 %v3804
    %v4428 = vunpack.c.h.b16 %v3804
    %v4429 = vunpack.c.l.b16 %v3805
    %v4430 = vunpack.c.h.b16 %v3805
    %v4431 = vunpack.c.l.b16 %v3806
    %v4432 = vunpack.c.h.b16 %v3806
    %v4433 = vunpack.c.l.b16 %v3807
    %v4434 = vunpack.c.h.b16 %v3807
    %v4435 = vunpack.c.l.b16 %v3808
    %v4436 = vunpack.c.h.b16 %v3808
    %v4437 = vunpack.c.l.b16 %v3809
    %v4438 = vunpack.c.h.b16 %v3809
    %v4439 = vunpack.c.l.b16 %v3810
    %v4440 = vunpack.c.h.b16 %v3810
    %v4441 = vunpack.c.l.b16 %v3811
    %v4442 = vunpack.c.h.b16 %v3811
    %v4443 = vunpack.c.l.b16 %v3812
    %v4444 = vunpack.c.h.b16 %v3812
    %v4445 = vunpack.c.l.b16 %v3813
    %v4446 = vunpack.c.h.b16 %v3813
    %v4447 = vunpack.c.l.b16 %v3814
    %v4448 = vunpack.c.h.b16 %v3814
    %v4449 = vunpack.c.l.b16 %v3815
    %v4450 = vunpack.c.h.b16 %v3815
    %v4451 = vunpack.c.l.b16 %v3816
    %v4452 = vunpack.c.h.b16 %v3816
    %v4453 = vunpack.c.l.b16 %v3817
    %v4454 = vunpack.c.h.b16 %v3817
    %v4455 = vunpack.c.l.b16 %v3818
    %v4456 = vunpack.c.h.b16 %v3818
    %v4457 = vunpack.c.l.b16 %v3819
    %v4458 = vunpack.c.h.b16 %v3819
    %v4459 = vunpack.c.l.b16 %v3820
    %v4460 = vunpack.c.h.b16 %v3820
    %v4461 = vunpack.c.l.b16 %v3821
    %v4462 = vunpack.c.h.b16 %v3821
    %v4463 = vunpack.c.l.b16 %v3822
    %v4464 = vunpack.c.h.b16 %v3822
    %v4465 = vunpack.c.l.b16 %v3823
    %v4466 = vunpack.c.h.b16 %v3823
    %v4467 = vunpack.c.l.b16 %v3824
    %v4468 = vunpack.c.h.b16 %v3824
    %v4469 = vunpack.c.l.b16 %v3825
    %v4470 = vunpack.c.h.b16 %v3825
    %v4471 = vunpack.c.l.b16 %v3826
    %v4472 = vunpack.c.h.b16 %v3826
    %v4473 = vunpack.c.l.b16 %v3827
    %v4474 = vunpack.c.h.b16 %v3827
    %v4475 = vunpack.c.l.b16 %v3828
    %v4476 = vunpack.c.h.b16 %v3828
    %v4477 = vunpack.c.l.b16 %v3829
    %v4478 = vunpack.c.h.b16 %v3829
    %v4479 = vunpack.c.l.b16 %v3830
    %v4480 = vunpack.c.h.b16 %v3830
    %v4481 = vunpack.c.l.b16 %v3831
    %v4482 = vunpack.c.h.b16 %v3831
    %v4483 = vunpack.c.l.b16 %v3832
    %v4484 = vunpack.c.h.b16 %v3832
    %v4485 = vunpack.c.l.b16 %v3833
    %v4486 = vunpack.c.h.b16 %v3833
    %v4487 = vunpack.c.l.b16 %v3834
    %v4488 = vunpack.c.h.b16 %v3834
    %v4489 = vunpack.c.l.b16 %v3835
    %v4490 = vunpack.c.h.b16 %v3835
    %v4491 = vunpack.c.l.b16 %v3836
    %v4492 = vunpack.c.h.b16 %v3836
    %v4493 = vunpack.c.l.b16 %v3837
    %v4494 = vunpack.c.h.b16 %v3837
    %v4495 = vunpack.c.l.b16 %v3838
    %v4496 = vunpack.c.h.b16 %v3838
    %v4497 = vunpack.c.l.b16 %v3839
    %v4498 = vunpack.c.h.b16 %v3839
    %v4499 = vunpack.c.l.b16 %v3840
    %v4500 = vunpack.c.h.b16 %v3840
    %v4501 = vunpack.c.l.b16 %v3841
    %v4502 = vunpack.c.h.b16 %v3841
    %v4503 = vunpack.c.l.b16 %v3842
    %v4504 = vunpack.c.h.b16 %v3842
    %v4505 = vunpack.c.l.b16 %v3843
    %v4506 = vunpack.c.h.b16 %v3843
    %v4507 = vunpack.c.l.b16 %v3844
    %v4508 = vunpack.c.h.b16 %v3844
    %v4509 = vunpack.c.l.b16 %v3845
    %v4510 = vunpack.c.h.b16 %v3845
    %v4511 = vunpack.c.l.b16 %v3846
    %v4512 = vunpack.c.h.b16 %v3846
    %v4513 = vunpack.c.l.b16 %v3847
    %v4514 = vunpack.c.h.b16 %v3847
    %v4515 = vunpack.c.l.b16 %v3848
    %v4516 = vunpack.c.h.b16 %v3848
    %v4517 = vunpack.c.l.b16 %v3849
    %v4518 = vunpack.c.h.b16 %v3849
    %v4519 = vunpack.c.l.b16 %v3850
    %v4520 = vunpack.c.h.b16 %v3850
    %v4521 = vunpack.c.l.b16 %v3851
    %v4522 = vunpack.c.h.b16 %v3851
    %v4523 = vunpack.c.l.b16 %v3852
    %v4524 = vunpack.c.h.b16 %v3852
    %v4525 = vunpack.c.l.b16 %v3853
    %v4526 = vunpack.c.h.b16 %v3853
    %v4527 = vunpack.c.l.b16 %v3854
    %v4528 = vunpack.c.h.b16 %v3854
    %v4529 = vunpack.c.l.b16 %v3855
    %v4530 = vunpack.c.h.b16 %v3855
    %v4531 = vunpack.c.l.b16 %v3856
    %v4532 = vunpack.c.h.b16 %v3856
    %v4533 = vunpack.c.l.b16 %v3857
    %v4534 = vunpack.c.h.b16 %v3857
    %v4535 = vunpack.c.l.b16 %v3858
    %v4536 = vunpack.c.h.b16 %v3858
    %v4537 = vunpack.c.l.b16 %v3859
    %v4538 = vunpack.c.h.b16 %v3859
    %v4539 = vunpack.c.l.b16 %v3860
    %v4540 = vunpack.c.h.b16 %v3860
    %v4541 = vunpack.c.l.b16 %v3861
    %v4542 = vunpack.c.h.b16 %v3861
    %v4543 = vunpack.c.l.b16 %v3862
    %v4544 = vunpack.c.h.b16 %v3862
    %v4545 = vunpack.c.l.b16 %v3863
    %v4546 = vunpack.c.h.b16 %v3863
    %v4547 = vunpack.c.l.b16 %v3864
    %v4548 = vunpack.c.h.b16 %v3864
    %v4549 = vunpack.c.l.b16 %v3865
    %v4550 = vunpack.c.h.b16 %v3865
    %v4551 = vpack.c.b16 %v4427, %v4423
    %v4552 = vpack.c.b16 %v4428, %v4424
    %v4553 = vpack.c.b16 %v4429, %v4425
    %v4554 = vpack.c.b16 %v4430, %v4426
    %v4555 = vpack.c.b16 %v4435, %v4431
    %v4556 = vpack.c.b16 %v4436, %v4432
    %v4557 = vpack.c.b16 %v4437, %v4433
    %v4558 = vpack.c.b16 %v4438, %v4434
    %v4559 = vpack.c.b16 %v4443, %v4439
    %v4560 = vpack.c.b16 %v4444, %v4440
    %v4561 = vpack.c.b16 %v4445, %v4441
    %v4562 = vpack.c.b16 %v4446, %v4442
    %v4563 = vpack.c.b16 %v4451, %v4447
    %v4564 = vpack.c.b16 %v4452, %v4448
    %v4565 = vpack.c.b16 %v4453, %v4449
    %v4566 = vpack.c.b16 %v4454, %v4450
    %v4567 = vpack.c.b16 %v4459, %v4455
    %v4568 = vpack.c.b16 %v4460, %v4456
    %v4569 = vpack.c.b16 %v4461, %v4457
    %v4570 = vpack.c.b16 %v4462, %v4458
    %v4571 = vpack.c.b16 %v4467, %v4463
    %v4572 = vpack.c.b16 %v4468, %v4464
    %v4573 = vpack.c.b16 %v4469, %v4465
    %v4574 = vpack.c.b16 %v4470, %v4466
    %v4575 = vpack.c.b16 %v4475, %v4471
    %v4576 = vpack.c.b16 %v4476, %v4472
    %v4577 = vpack.c.b16 %v4477, %v4473
    %v4578 = vpack.c.b16 %v4478, %v4474
    %v4579 = vpack.c.b16 %v4483, %v4479
    %v4580 = vpack.c.b16 %v4484, %v4480
    %v4581 = vpack.c.b16 %v4485, %v4481
    %v4582 = vpack.c.b16 %v4486, %v4482
    %v4583 = vpack.c.b16 %v4491, %v4487
    %v4584 = vpack.c.b16 %v4492, %v4488
    %v4585 = vpack.c.b16 %v4493, %v4489
    %v4586 = vpack.c.b16 %v4494, %v4490
    %v4587 = vpack.c.b16 %v4499, %v4495
    %v4588 = vpack.c.b16 %v4500, %v4496
    %v4589 = vpack.c.b16 %v4501, %v4497
    %v4590 = vpack.c.b16 %v4502, %v4498
    %v4591 = vpack.c.b16 %v4507, %v4503
    %v4592 = vpack.c.b16 %v4508, %v4504
    %v4593 = vpack.c.b16 %v4509, %v4505
    %v4594 = vpack.c.b16 %v4510, %v4506
    %v4595 = vpack.c.b16 %v4515, %v4511
    %v4596 = vpack.c.b16 %v4516, %v4512
    %v4597 = vpack.c.b16 %v4517, %v4513
    %v4598 = vpack.c.b16 %v4518, %v4514
    %v4599 = vpack.c.b16 %v4523, %v4519
    %v4600 = vpack.c.b16 %v4524, %v4520
    %v4601 = vpack.c.b16 %v4525, %v4521
    %v4602 = vpack.c.b16 %v4526, %v4522
    %v4603 = vpack.c.b16 %v4531, %v4527
    %v4604 = vpack.c.b16 %v4532, %v4528
    %v4605 = vpack.c.b16 %v4533, %v4529
    %v4606 = vpack.c.b16 %v4534, %v4530
    %v4607 = vpack.c.b16 %v4539, %v4535
    %v4608 = vpack.c.b16 %v4540, %v4536
    %v4609 = vpack.c.b16 %v4541, %v4537
    %v4610 = vpack.c.b16 %v4542, %v4538
    %v4611 = vpack.c.b16 %v4547, %v4543
    %v4612 = vpack.c.b16 %v4548, %v4544
    %v4613 = vpack.c.b16 %v4549, %v4545
    %v4614 = vpack.c.b16 %v4550, %v4546
    %4679 = vmatpush.bf16.msra.mxu0 %v4579
    %4680 = vmatpush.bf16.msra.mxu0 %v4575
    %4681 = vmatpush.bf16.msra.mxu0 %v4571
    %4682 = vmatpush.bf16.msra.mxu0 %v4567
    %4683 = vmatpush.bf16.msra.mxu0 %v4563
    %4684 = vmatpush.bf16.msra.mxu0 %v4559
    %4685 = vmatpush.bf16.msra.mxu0 %v4555
    %4686 = vmatpush.bf16.msra.mxu0 %v4551
    %4687 = vmatmul.bf16.gmra.mxu0 %v3800
    %v4688 = vpop.f32.mrf.mxu0
    %v4689 = vadd.f32 %v4278, %v4688
    %v4690 = vpop.f32.mrf.mxu0
    %4691 = vdwg.mxu0
    %4692 = vmatpush.bf16.msra.mxu0 %v4611
    %4693 = vmatpush.bf16.msra.mxu0 %v4607
    %4694 = vmatpush.bf16.msra.mxu0 %v4603
    %4695 = vmatpush.bf16.msra.mxu0 %v4599
    %4696 = vmatpush.bf16.msra.mxu0 %v4595
    %4697 = vmatpush.bf16.msra.mxu0 %v4591
    %4698 = vmatpush.bf16.msra.mxu0 %v4587
    %4699 = vmatpush.bf16.msra.mxu0 %v4583
    %4700 = vmatmul.bf16.gmra.mxu0 %v3801
    %v4701 = vpop.f32.mrf.mxu0
    %v4702 = vadd.f32 %v4689, %v4701
    %v4703 = vpop.f32.mrf.mxu0
    %4704 = vdwg.mxu0
    %4705 = vmatpush.bf16.msra.mxu0 %v4580
    %4706 = vmatpush.bf16.msra.mxu0 %v4576
    %4707 = vmatpush.bf16.msra.mxu0 %v4572
    %4708 = vmatpush.bf16.msra.mxu0 %v4568
    %4709 = vmatpush.bf16.msra.mxu0 %v4564
    %4710 = vmatpush.bf16.msra.mxu0 %v4560
    %4711 = vmatpush.bf16.msra.mxu0 %v4556
    %4712 = vmatpush.bf16.msra.mxu0 %v4552
    %4713 = vmatmul.bf16.gmra.mxu0 %v3800
    %v4714 = vpop.f32.mrf.mxu0
    %v4715 = vadd.f32 %v4304, %v4714
    %v4716 = vpop.f32.mrf.mxu0
    %4717 = vdwg.mxu0
    %4718 = vmatpush.bf16.msra.mxu0 %v4612
    %4719 = vmatpush.bf16.msra.mxu0 %v4608
    %4720 = vmatpush.bf16.msra.mxu0 %v4604
    %4721 = vmatpush.bf16.msra.mxu0 %v4600
    %4722 = vmatpush.bf16.msra.mxu0 %v4596
    %4723 = vmatpush.bf16.msra.mxu0 %v4592
    %4724 = vmatpush.bf16.msra.mxu0 %v4588
    %4725 = vmatpush.bf16.msra.mxu0 %v4584
    %4726 = vmatmul.bf16.gmra.mxu0 %v3801
    %v4727 = vpop.f32.mrf.mxu0
    %v4728 = vadd.f32 %v4715, %v4727
    %v4729 = vpop.f32.mrf.mxu0
    %4730 = vdwg.mxu0
    %4731 = vmatpush.bf16.msra.mxu0 %v4581
    %4732 = vmatpush.bf16.msra.mxu0 %v4577
    %4733 = vmatpush.bf16.msra.mxu0 %v4573
    %4734 = vmatpush.bf16.msra.mxu0 %v4569
    %4735 = vmatpush.bf16.msra.mxu0 %v4565
    %4736 = vmatpush.bf16.msra.mxu0 %v4561
    %4737 = vmatpush.bf16.msra.mxu0 %v4557
    %4738 = vmatpush.bf16.msra.mxu0 %v4553
    %4739 = vmatmul.bf16.gmra.mxu0 %v3800
    %v4740 = vpop.f32.mrf.mxu0
    %v4741 = vadd.f32 %v4330, %v4740
    %v4742 = vpop.f32.mrf.mxu0
    %4743 = vdwg.mxu0
    %4744 = vmatpush.bf16.msra.mxu0 %v4613
    %4745 = vmatpush.bf16.msra.mxu0 %v4609
    %4746 = vmatpush.bf16.msra.mxu0 %v4605
    %4747 = vmatpush.bf16.msra.mxu0 %v4601
    %4748 = vmatpush.bf16.msra.mxu0 %v4597
    %4749 = vmatpush.bf16.msra.mxu0 %v4593
    %4750 = vmatpush.bf16.msra.mxu0 %v4589
    %4751 = vmatpush.bf16.msra.mxu0 %v4585
    %4752 = vmatmul.bf16.gmra.mxu0 %v3801
    %v4753 = vpop.f32.mrf.mxu0
    %v4754 = vadd.f32 %v4741, %v4753
    %v4755 = vpop.f32.mrf.mxu0
    %4756 = vdwg.mxu0
    %4757 = vmatpush.bf16.msra.mxu0 %v4582
    %4758 = vmatpush.bf16.msra.mxu0 %v4578
    %4759 = vmatpush.bf16.msra.mxu0 %v4574
    %4760 = vmatpush.bf16.msra.mxu0 %v4570
    %4761 = vmatpush.bf16.msra.mxu0 %v4566
    %4762 = vmatpush.bf16.msra.mxu0 %v4562
    %4763 = vmatpush.bf16.msra.mxu0 %v4558
    %4764 = vmatpush.bf16.msra.mxu0 %v4554
    %4765 = vmatmul.bf16.gmra.mxu0 %v3800
    %v4766 = vpop.f32.mrf.mxu0
    %v4767 = vadd.f32 %v4356, %v4766
    %v4768 = vpop.f32.mrf.mxu0
    %4769 = vdwg.mxu0
    %4770 = vmatpush.bf16.msra.mxu0 %v4614
    %4771 = vmatpush.bf16.msra.mxu0 %v4610
    %4772 = vmatpush.bf16.msra.mxu0 %v4606
    %4773 = vmatpush.bf16.msra.mxu0 %v4602
    %4774 = vmatpush.bf16.msra.mxu0 %v4598
    %4775 = vmatpush.bf16.msra.mxu0 %v4594
    %4776 = vmatpush.bf16.msra.mxu0 %v4590
    %4777 = vmatpush.bf16.msra.mxu0 %v4586
    %4778 = vmatmul.bf16.gmra.mxu0 %v3801
    %v4779 = vpop.f32.mrf.mxu0
    %v4780 = vadd.f32 %v4767, %v4779
    %v4781 = vpop.f32.mrf.mxu0
    %4782 = vdwg.mxu0
    %v4783 = vld [vmem:[#allocation2 + $0x20] sm:$0xff]
    %v4784 = vld [vmem:[#allocation2 + $0x28] sm:$0xff]
    %v4785 = vpack.c.bf16 %v4783, %v4783
    %v4786 = vpack.c.bf16 %v4784, %v4784
    %s4787 = scalar_lea.vmem [#allocation3], 1024
    %v4788 = vld [vmem:[%s4787] sm:$0xff]
    %v4789 = vld [vmem:[%s4787 + $0x8] sm:$0xff]
    %v4790 = vld [vmem:[%s4787 + $0x10] sm:$0xff]
    %v4791 = vld [vmem:[%s4787 + $0x18] sm:$0xff]
    %v4792 = vld [vmem:[%s4787 + $0x20] sm:$0xff]
    %v4793 = vld [vmem:[%s4787 + $0x28] sm:$0xff]
    %v4794 = vld [vmem:[%s4787 + $0x30] sm:$0xff]
    %v4795 = vld [vmem:[%s4787 + $0x38] sm:$0xff]
    %v4796 = vld [vmem:[%s4787 + $0x40] sm:$0xff]
    %v4797 = vld [vmem:[%s4787 + $0x48] sm:$0xff]
    %v4798 = vld [vmem:[%s4787 + $0x50] sm:$0xff]
    %v4799 = vld [vmem:[%s4787 + $0x58] sm:$0xff]
    %v4800 = vld [vmem:[%s4787 + $0x60] sm:$0xff]
    %v4801 = vld [vmem:[%s4787 + $0x68] sm:$0xff]
    %v4802 = vld [vmem:[%s4787 + $0x70] sm:$0xff]
    %v4803 = vld [vmem:[%s4787 + $0x78] sm:$0xff]
    %v4804 = vld [vmem:[%s4787 + $0x80] sm:$0xff]
    %v4805 = vld [vmem:[%s4787 + $0x88] sm:$0xff]
    %v4806 = vld [vmem:[%s4787 + $0x90] sm:$0xff]
    %v4807 = vld [vmem:[%s4787 + $0x98] sm:$0xff]
    %v4808 = vld [vmem:[%s4787 + $0xa0] sm:$0xff]
    %v4809 = vld [vmem:[%s4787 + $0xa8] sm:$0xff]
    %v4810 = vld [vmem:[%s4787 + $0xb0] sm:$0xff]
    %v4811 = vld [vmem:[%s4787 + $0xb8] sm:$0xff]
    %v4812 = vld [vmem:[%s4787 + $0xc0] sm:$0xff]
    %v4813 = vld [vmem:[%s4787 + $0xc8] sm:$0xff]
    %v4814 = vld [vmem:[%s4787 + $0xd0] sm:$0xff]
    %v4815 = vld [vmem:[%s4787 + $0xd8] sm:$0xff]
    %v4816 = vld [vmem:[%s4787 + $0xe0] sm:$0xff]
    %v4817 = vld [vmem:[%s4787 + $0xe8] sm:$0xff]
    %v4818 = vld [vmem:[%s4787 + $0xf0] sm:$0xff]
    %v4819 = vld [vmem:[%s4787 + $0xf8] sm:$0xff]
    %v4820 = vld [vmem:[%s4787 + $0x100] sm:$0xff]
    %v4821 = vld [vmem:[%s4787 + $0x108] sm:$0xff]
    %v4822 = vld [vmem:[%s4787 + $0x110] sm:$0xff]
    %v4823 = vld [vmem:[%s4787 + $0x118] sm:$0xff]
    %v4824 = vld [vmem:[%s4787 + $0x120] sm:$0xff]
    %v4825 = vld [vmem:[%s4787 + $0x128] sm:$0xff]
    %v4826 = vld [vmem:[%s4787 + $0x130] sm:$0xff]
    %v4827 = vld [vmem:[%s4787 + $0x138] sm:$0xff]
    %v4828 = vld [vmem:[%s4787 + $0x140] sm:$0xff]
    %v4829 = vld [vmem:[%s4787 + $0x148] sm:$0xff]
    %v4830 = vld [vmem:[%s4787 + $0x150] sm:$0xff]
    %v4831 = vld [vmem:[%s4787 + $0x158] sm:$0xff]
    %v4832 = vld [vmem:[%s4787 + $0x160] sm:$0xff]
    %v4833 = vld [vmem:[%s4787 + $0x168] sm:$0xff]
    %v4834 = vld [vmem:[%s4787 + $0x170] sm:$0xff]
    %v4835 = vld [vmem:[%s4787 + $0x178] sm:$0xff]
    %v4836 = vld [vmem:[%s4787 + $0x180] sm:$0xff]
    %v4837 = vld [vmem:[%s4787 + $0x188] sm:$0xff]
    %v4838 = vld [vmem:[%s4787 + $0x190] sm:$0xff]
    %v4839 = vld [vmem:[%s4787 + $0x198] sm:$0xff]
    %v4840 = vld [vmem:[%s4787 + $0x1a0] sm:$0xff]
    %v4841 = vld [vmem:[%s4787 + $0x1a8] sm:$0xff]
    %v4842 = vld [vmem:[%s4787 + $0x1b0] sm:$0xff]
    %v4843 = vld [vmem:[%s4787 + $0x1b8] sm:$0xff]
    %v4844 = vld [vmem:[%s4787 + $0x1c0] sm:$0xff]
    %v4845 = vld [vmem:[%s4787 + $0x1c8] sm:$0xff]
    %v4846 = vld [vmem:[%s4787 + $0x1d0] sm:$0xff]
    %v4847 = vld [vmem:[%s4787 + $0x1d8] sm:$0xff]
    %v4848 = vld [vmem:[%s4787 + $0x1e0] sm:$0xff]
    %v4849 = vld [vmem:[%s4787 + $0x1e8] sm:$0xff]
    %v4850 = vld [vmem:[%s4787 + $0x1f0] sm:$0xff]
    %v4851 = vld [vmem:[%s4787 + $0x1f8] sm:$0xff]
    %v4916 = vunpack.c.l.b16 %v4788
    %v4917 = vunpack.c.h.b16 %v4788
    %v4918 = vunpack.c.l.b16 %v4789
    %v4919 = vunpack.c.h.b16 %v4789
    %v4920 = vunpack.c.l.b16 %v4790
    %v4921 = vunpack.c.h.b16 %v4790
    %v4922 = vunpack.c.l.b16 %v4791
    %v4923 = vunpack.c.h.b16 %v4791
    %v4924 = vunpack.c.l.b16 %v4792
    %v4925 = vunpack.c.h.b16 %v4792
    %v4926 = vunpack.c.l.b16 %v4793
    %v4927 = vunpack.c.h.b16 %v4793
    %v4928 = vunpack.c.l.b16 %v4794
    %v4929 = vunpack.c.h.b16 %v4794
    %v4930 = vunpack.c.l.b16 %v4795
    %v4931 = vunpack.c.h.b16 %v4795
    %v4932 = vunpack.c.l.b16 %v4796
    %v4933 = vunpack.c.h.b16 %v4796
    %v4934 = vunpack.c.l.b16 %v4797
    %v4935 = vunpack.c.h.b16 %v4797
    %v4936 = vunpack.c.l.b16 %v4798
    %v4937 = vunpack.c.h.b16 %v4798
    %v4938 = vunpack.c.l.b16 %v4799
    %v4939 = vunpack.c.h.b16 %v4799
    %v4940 = vunpack.c.l.b16 %v4800
    %v4941 = vunpack.c.h.b16 %v4800
    %v4942 = vunpack.c.l.b16 %v4801
    %v4943 = vunpack.c.h.b16 %v4801
    %v4944 = vunpack.c.l.b16 %v4802
    %v4945 = vunpack.c.h.b16 %v4802
    %v4946 = vunpack.c.l.b16 %v4803
    %v4947 = vunpack.c.h.b16 %v4803
    %v4948 = vunpack.c.l.b16 %v4804
    %v4949 = vunpack.c.h.b16 %v4804
    %v4950 = vunpack.c.l.b16 %v4805
    %v4951 = vunpack.c.h.b16 %v4805
    %v4952 = vunpack.c.l.b16 %v4806
    %v4953 = vunpack.c.h.b16 %v4806
    %v4954 = vunpack.c.l.b16 %v4807
    %v4955 = vunpack.c.h.b16 %v4807
    %v4956 = vunpack.c.l.b16 %v4808
    %v4957 = vunpack.c.h.b16 %v4808
    %v4958 = vunpack.c.l.b16 %v4809
    %v4959 = vunpack.c.h.b16 %v4809
    %v4960 = vunpack.c.l.b16 %v4810
    %v4961 = vunpack.c.h.b16 %v4810
    %v4962 = vunpack.c.l.b16 %v4811
    %v4963 = vunpack.c.h.b16 %v4811
    %v4964 = vunpack.c.l.b16 %v4812
    %v4965 = vunpack.c.h.b16 %v4812
    %v4966 = vunpack.c.l.b16 %v4813
    %v4967 = vunpack.c.h.b16 %v4813
    %v4968 = vunpack.c.l.b16 %v4814
    %v4969 = vunpack.c.h.b16 %v4814
    %v4970 = vunpack.c.l.b16 %v4815
    %v4971 = vunpack.c.h.b16 %v4815
    %v4972 = vunpack.c.l.b16 %v4816
    %v4973 = vunpack.c.h.b16 %v4816
    %v4974 = vunpack.c.l.b16 %v4817
    %v4975 = vunpack.c.h.b16 %v4817
    %v4976 = vunpack.c.l.b16 %v4818
    %v4977 = vunpack.c.h.b16 %v4818
    %v4978 = vunpack.c.l.b16 %v4819
    %v4979 = vunpack.c.h.b16 %v4819
    %v4980 = vunpack.c.l.b16 %v4820
    %v4981 = vunpack.c.h.b16 %v4820
    %v4982 = vunpack.c.l.b16 %v4821
    %v4983 = vunpack.c.h.b16 %v4821
    %v4984 = vunpack.c.l.b16 %v4822
    %v4985 = vunpack.c.h.b16 %v4822
    %v4986 = vunpack.c.l.b16 %v4823
    %v4987 = vunpack.c.h.b16 %v4823
    %v4988 = vunpack.c.l.b16 %v4824
    %v4989 = vunpack.c.h.b16 %v4824
    %v4990 = vunpack.c.l.b16 %v4825
    %v4991 = vunpack.c.h.b16 %v4825
    %v4992 = vunpack.c.l.b16 %v4826
    %v4993 = vunpack.c.h.b16 %v4826
    %v4994 = vunpack.c.l.b16 %v4827
    %v4995 = vunpack.c.h.b16 %v4827
    %v4996 = vunpack.c.l.b16 %v4828
    %v4997 = vunpack.c.h.b16 %v4828
    %v4998 = vunpack.c.l.b16 %v4829
    %v4999 = vunpack.c.h.b16 %v4829
    %v5000 = vunpack.c.l.b16 %v4830
    %v5001 = vunpack.c.h.b16 %v4830
    %v5002 = vunpack.c.l.b16 %v4831
    %v5003 = vunpack.c.h.b16 %v4831
    %v5004 = vunpack.c.l.b16 %v4832
    %v5005 = vunpack.c.h.b16 %v4832
    %v5006 = vunpack.c.l.b16 %v4833
    %v5007 = vunpack.c.h.b16 %v4833
    %v5008 = vunpack.c.l.b16 %v4834
    %v5009 = vunpack.c.h.b16 %v4834
    %v5010 = vunpack.c.l.b16 %v4835
    %v5011 = vunpack.c.h.b16 %v4835
    %v5012 = vunpack.c.l.b16 %v4836
    %v5013 = vunpack.c.h.b16 %v4836
    %v5014 = vunpack.c.l.b16 %v4837
    %v5015 = vunpack.c.h.b16 %v4837
    %v5016 = vunpack.c.l.b16 %v4838
    %v5017 = vunpack.c.h.b16 %v4838
    %v5018 = vunpack.c.l.b16 %v4839
    %v5019 = vunpack.c.h.b16 %v4839
    %v5020 = vunpack.c.l.b16 %v4840
    %v5021 = vunpack.c.h.b16 %v4840
    %v5022 = vunpack.c.l.b16 %v4841
    %v5023 = vunpack.c.h.b16 %v4841
    %v5024 = vunpack.c.l.b16 %v4842
    %v5025 = vunpack.c.h.b16 %v4842
    %v5026 = vunpack.c.l.b16 %v4843
    %v5027 = vunpack.c.h.b16 %v4843
    %v5028 = vunpack.c.l.b16 %v4844
    %v5029 = vunpack.c.h.b16 %v4844
    %v5030 = vunpack.c.l.b16 %v4845
    %v5031 = vunpack.c.h.b16 %v4845
    %v5032 = vunpack.c.l.b16 %v4846
    %v5033 = vunpack.c.h.b16 %v4846
    %v5034 = vunpack.c.l.b16 %v4847
    %v5035 = vunpack.c.h.b16 %v4847
    %v5036 = vunpack.c.l.b16 %v4848
    %v5037 = vunpack.c.h.b16 %v4848
    %v5038 = vunpack.c.l.b16 %v4849
    %v5039 = vunpack.c.h.b16 %v4849
    %v5040 = vunpack.c.l.b16 %v4850
    %v5041 = vunpack.c.h.b16 %v4850
    %v5042 = vunpack.c.l.b16 %v4851
    %v5043 = vunpack.c.h.b16 %v4851
    %v5044 = vpack.c.b16 %v4920, %v4916
    %v5045 = vpack.c.b16 %v4921, %v4917
    %v5046 = vpack.c.b16 %v4922, %v4918
    %v5047 = vpack.c.b16 %v4923, %v4919
    %v5048 = vpack.c.b16 %v4928, %v4924
    %v5049 = vpack.c.b16 %v4929, %v4925
    %v5050 = vpack.c.b16 %v4930, %v4926
    %v5051 = vpack.c.b16 %v4931, %v4927
    %v5052 = vpack.c.b16 %v4936, %v4932
    %v5053 = vpack.c.b16 %v4937, %v4933
    %v5054 = vpack.c.b16 %v4938, %v4934
    %v5055 = vpack.c.b16 %v4939, %v4935
    %v5056 = vpack.c.b16 %v4944, %v4940
    %v5057 = vpack.c.b16 %v4945, %v4941
    %v5058 = vpack.c.b16 %v4946, %v4942
    %v5059 = vpack.c.b16 %v4947, %v4943
    %v5060 = vpack.c.b16 %v4952, %v4948
    %v5061 = vpack.c.b16 %v4953, %v4949
    %v5062 = vpack.c.b16 %v4954, %v4950
    %v5063 = vpack.c.b16 %v4955, %v4951
    %v5064 = vpack.c.b16 %v4960, %v4956
    %v5065 = vpack.c.b16 %v4961, %v4957
    %v5066 = vpack.c.b16 %v4962, %v4958
    %v5067 = vpack.c.b16 %v4963, %v4959
    %v5068 = vpack.c.b16 %v4968, %v4964
    %v5069 = vpack.c.b16 %v4969, %v4965
    %v5070 = vpack.c.b16 %v4970, %v4966
    %v5071 = vpack.c.b16 %v4971, %v4967
    %v5072 = vpack.c.b16 %v4976, %v4972
    %v5073 = vpack.c.b16 %v4977, %v4973
    %v5074 = vpack.c.b16 %v4978, %v4974
    %v5075 = vpack.c.b16 %v4979, %v4975
    %v5076 = vpack.c.b16 %v4984, %v4980
    %v5077 = vpack.c.b16 %v4985, %v4981
    %v5078 = vpack.c.b16 %v4986, %v4982
    %v5079 = vpack.c.b16 %v4987, %v4983
    %v5080 = vpack.c.b16 %v4992, %v4988
    %v5081 = vpack.c.b16 %v4993, %v4989
    %v5082 = vpack.c.b16 %v4994, %v4990
    %v5083 = vpack.c.b16 %v4995, %v4991
    %v5084 = vpack.c.b16 %v5000, %v4996
    %v5085 = vpack.c.b16 %v5001, %v4997
    %v5086 = vpack.c.b16 %v5002, %v4998
    %v5087 = vpack.c.b16 %v5003, %v4999
    %v5088 = vpack.c.b16 %v5008, %v5004
    %v5089 = vpack.c.b16 %v5009, %v5005
    %v5090 = vpack.c.b16 %v5010, %v5006
    %v5091 = vpack.c.b16 %v5011, %v5007
    %v5092 = vpack.c.b16 %v5016, %v5012
    %v5093 = vpack.c.b16 %v5017, %v5013
    %v5094 = vpack.c.b16 %v5018, %v5014
    %v5095 = vpack.c.b16 %v5019, %v5015
    %v5096 = vpack.c.b16 %v5024, %v5020
    %v5097 = vpack.c.b16 %v5025, %v5021
    %v5098 = vpack.c.b16 %v5026, %v5022
    %v5099 = vpack.c.b16 %v5027, %v5023
    %v5100 = vpack.c.b16 %v5032, %v5028
    %v5101 = vpack.c.b16 %v5033, %v5029
    %v5102 = vpack.c.b16 %v5034, %v5030
    %v5103 = vpack.c.b16 %v5035, %v5031
    %v5104 = vpack.c.b16 %v5040, %v5036
    %v5105 = vpack.c.b16 %v5041, %v5037
    %v5106 = vpack.c.b16 %v5042, %v5038
    %v5107 = vpack.c.b16 %v5043, %v5039
    %5172 = vmatpush.bf16.msra.mxu0 %v5072
    %5173 = vmatpush.bf16.msra.mxu0 %v5068
    %5174 = vmatpush.bf16.msra.mxu0 %v5064
    %5175 = vmatpush.bf16.msra.mxu0 %v5060
    %5176 = vmatpush.bf16.msra.mxu0 %v5056
    %5177 = vmatpush.bf16.msra.mxu0 %v5052
    %5178 = vmatpush.bf16.msra.mxu0 %v5048
    %5179 = vmatpush.bf16.msra.mxu0 %v5044
    %5180 = vmatmul.bf16.gmra.mxu0 %v4785
    %v5181 = vpop.f32.mrf.mxu0
    %v5182 = vadd.f32 0.0, %v5181
    %v5183 = vpop.f32.mrf.mxu0
    %5184 = vdwg.mxu0
    %5185 = vmatpush.bf16.msra.mxu0 %v5104
    %5186 = vmatpush.bf16.msra.mxu0 %v5100
    %5187 = vmatpush.bf16.msra.mxu0 %v5096
    %5188 = vmatpush.bf16.msra.mxu0 %v5092
    %5189 = vmatpush.bf16.msra.mxu0 %v5088
    %5190 = vmatpush.bf16.msra.mxu0 %v5084
    %5191 = vmatpush.bf16.msra.mxu0 %v5080
    %5192 = vmatpush.bf16.msra.mxu0 %v5076
    %5193 = vmatmul.bf16.gmra.mxu0 %v4786
    %v5194 = vpop.f32.mrf.mxu0
    %v5195 = vadd.f32 %v5182, %v5194
    %v5196 = vpop.f32.mrf.mxu0
    %5197 = vdwg.mxu0
    %5198 = vmatpush.bf16.msra.mxu0 %v5073
    %5199 = vmatpush.bf16.msra.mxu0 %v5069
    %5200 = vmatpush.bf16.msra.mxu0 %v5065
    %5201 = vmatpush.bf16.msra.mxu0 %v5061
    %5202 = vmatpush.bf16.msra.mxu0 %v5057
    %5203 = vmatpush.bf16.msra.mxu0 %v5053
    %5204 = vmatpush.bf16.msra.mxu0 %v5049
    %5205 = vmatpush.bf16.msra.mxu0 %v5045
    %5206 = vmatmul.bf16.gmra.mxu0 %v4785
    %v5207 = vpop.f32.mrf.mxu0
    %v5208 = vadd.f32 0.0, %v5207
    %v5209 = vpop.f32.mrf.mxu0
    %5210 = vdwg.mxu0
    %5211 = vmatpush.bf16.msra.mxu0 %v5105
    %5212 = vmatpush.bf16.msra.mxu0 %v5101
    %5213 = vmatpush.bf16.msra.mxu0 %v5097
    %5214 = vmatpush.bf16.msra.mxu0 %v5093
    %5215 = vmatpush.bf16.msra.mxu0 %v5089
    %5216 = vmatpush.bf16.msra.mxu0 %v5085
    %5217 = vmatpush.bf16.msra.mxu0 %v5081
    %5218 = vmatpush.bf16.msra.mxu0 %v5077
    %5219 = vmatmul.bf16.gmra.mxu0 %v4786
    %v5220 = vpop.f32.mrf.mxu0
    %v5221 = vadd.f32 %v5208, %v5220
    %v5222 = vpop.f32.mrf.mxu0
    %5223 = vdwg.mxu0
    %5224 = vmatpush.bf16.msra.mxu0 %v5074
    %5225 = vmatpush.bf16.msra.mxu0 %v5070
    %5226 = vmatpush.bf16.msra.mxu0 %v5066
    %5227 = vmatpush.bf16.msra.mxu0 %v5062
    %5228 = vmatpush.bf16.msra.mxu0 %v5058
    %5229 = vmatpush.bf16.msra.mxu0 %v5054
    %5230 = vmatpush.bf16.msra.mxu0 %v5050
    %5231 = vmatpush.bf16.msra.mxu0 %v5046
    %5232 = vmatmul.bf16.gmra.mxu0 %v4785
    %v5233 = vpop.f32.mrf.mxu0
    %v5234 = vadd.f32 0.0, %v5233
    %v5235 = vpop.f32.mrf.mxu0
    %5236 = vdwg.mxu0
    %5237 = vmatpush.bf16.msra.mxu0 %v5106
    %5238 = vmatpush.bf16.msra.mxu0 %v5102
    %5239 = vmatpush.bf16.msra.mxu0 %v5098
    %5240 = vmatpush.bf16.msra.mxu0 %v5094
    %5241 = vmatpush.bf16.msra.mxu0 %v5090
    %5242 = vmatpush.bf16.msra.mxu0 %v5086
    %5243 = vmatpush.bf16.msra.mxu0 %v5082
    %5244 = vmatpush.bf16.msra.mxu0 %v5078
    %5245 = vmatmul.bf16.gmra.mxu0 %v4786
    %v5246 = vpop.f32.mrf.mxu0
    %v5247 = vadd.f32 %v5234, %v5246
    %v5248 = vpop.f32.mrf.mxu0
    %5249 = vdwg.mxu0
    %5250 = vmatpush.bf16.msra.mxu0 %v5075
    %5251 = vmatpush.bf16.msra.mxu0 %v5071
    %5252 = vmatpush.bf16.msra.mxu0 %v5067
    %5253 = vmatpush.bf16.msra.mxu0 %v5063
    %5254 = vmatpush.bf16.msra.mxu0 %v5059
    %5255 = vmatpush.bf16.msra.mxu0 %v5055
    %5256 = vmatpush.bf16.msra.mxu0 %v5051
    %5257 = vmatpush.bf16.msra.mxu0 %v5047
    %5258 = vmatmul.bf16.gmra.mxu0 %v4785
    %v5259 = vpop.f32.mrf.mxu0
    %v5260 = vadd.f32 0.0, %v5259
    %v5261 = vpop.f32.mrf.mxu0
    %5262 = vdwg.mxu0
    %5263 = vmatpush.bf16.msra.mxu0 %v5107
    %5264 = vmatpush.bf16.msra.mxu0 %v5103
    %5265 = vmatpush.bf16.msra.mxu0 %v5099
    %5266 = vmatpush.bf16.msra.mxu0 %v5095
    %5267 = vmatpush.bf16.msra.mxu0 %v5091
    %5268 = vmatpush.bf16.msra.mxu0 %v5087
    %5269 = vmatpush.bf16.msra.mxu0 %v5083
    %5270 = vmatpush.bf16.msra.mxu0 %v5079
    %5271 = vmatmul.bf16.gmra.mxu0 %v4786
    %v5272 = vpop.f32.mrf.mxu0
    %v5273 = vadd.f32 %v5260, %v5272
    %v5274 = vpop.f32.mrf.mxu0
    %5275 = vdwg.mxu0
    %v5276 = vadd.f32 %v4702, %v5195
    %v5277 = vadd.f32 %v4728, %v5221
    %v5278 = vadd.f32 %v4754, %v5247
    %v5279 = vadd.f32 %v4780, %v5273
    %5280 = vmatpush.bf16.msra.mxu0 %v4155
    %5281 = vmatpush.bf16.msra.mxu0 %v4151
    %5282 = vmatpush.bf16.msra.mxu0 %v4147
    %5283 = vmatpush.bf16.msra.mxu0 %v4143
    %5284 = vmatpush.bf16.msra.mxu0 %v4139
    %5285 = vmatpush.bf16.msra.mxu0 %v4135
    %5286 = vmatpush.bf16.msra.mxu0 %v4131
    %5287 = vmatpush.bf16.msra.mxu0 %v4127
    %5288 = vmatmul.bf16.gmra.mxu0 %v4785
    %v5289 = vpop.f32.mrf.mxu0
    %v5290 = vadd.f32 0.0, %v5289
    %v5291 = vpop.f32.mrf.mxu0
    %5292 = vdwg.mxu0
    %5293 = vmatpush.bf16.msra.mxu0 %v4187
    %5294 = vmatpush.bf16.msra.mxu0 %v4183
    %5295 = vmatpush.bf16.msra.mxu0 %v4179
    %5296 = vmatpush.bf16.msra.mxu0 %v4175
    %5297 = vmatpush.bf16.msra.mxu0 %v4171
    %5298 = vmatpush.bf16.msra.mxu0 %v4167
    %5299 = vmatpush.bf16.msra.mxu0 %v4163
    %5300 = vmatpush.bf16.msra.mxu0 %v4159
    %5301 = vmatmul.bf16.gmra.mxu0 %v4786
    %v5302 = vpop.f32.mrf.mxu0
    %v5303 = vadd.f32 %v5290, %v5302
    %v5304 = vpop.f32.mrf.mxu0
    %5305 = vdwg.mxu0
    %5306 = vmatpush.bf16.msra.mxu0 %v4156
    %5307 = vmatpush.bf16.msra.mxu0 %v4152
    %5308 = vmatpush.bf16.msra.mxu0 %v4148
    %5309 = vmatpush.bf16.msra.mxu0 %v4144
    %5310 = vmatpush.bf16.msra.mxu0 %v4140
    %5311 = vmatpush.bf16.msra.mxu0 %v4136
    %5312 = vmatpush.bf16.msra.mxu0 %v4132
    %5313 = vmatpush.bf16.msra.mxu0 %v4128
    %5314 = vmatmul.bf16.gmra.mxu0 %v4785
    %v5315 = vpop.f32.mrf.mxu0
    %v5316 = vadd.f32 0.0, %v5315
    %v5317 = vpop.f32.mrf.mxu0
    %5318 = vdwg.mxu0
    %5319 = vmatpush.bf16.msra.mxu0 %v4188
    %5320 = vmatpush.bf16.msra.mxu0 %v4184
    %5321 = vmatpush.bf16.msra.mxu0 %v4180
    %5322 = vmatpush.bf16.msra.mxu0 %v4176
    %5323 = vmatpush.bf16.msra.mxu0 %v4172
    %5324 = vmatpush.bf16.msra.mxu0 %v4168
    %5325 = vmatpush.bf16.msra.mxu0 %v4164
    %5326 = vmatpush.bf16.msra.mxu0 %v4160
    %5327 = vmatmul.bf16.gmra.mxu0 %v4786
    %v5328 = vpop.f32.mrf.mxu0
    %v5329 = vadd.f32 %v5316, %v5328
    %v5330 = vpop.f32.mrf.mxu0
    %5331 = vdwg.mxu0
    %5332 = vmatpush.bf16.msra.mxu0 %v4157
    %5333 = vmatpush.bf16.msra.mxu0 %v4153
    %5334 = vmatpush.bf16.msra.mxu0 %v4149
    %5335 = vmatpush.bf16.msra.mxu0 %v4145
    %5336 = vmatpush.bf16.msra.mxu0 %v4141
    %5337 = vmatpush.bf16.msra.mxu0 %v4137
    %5338 = vmatpush.bf16.msra.mxu0 %v4133
    %5339 = vmatpush.bf16.msra.mxu0 %v4129
    %5340 = vmatmul.bf16.gmra.mxu0 %v4785
    %v5341 = vpop.f32.mrf.mxu0
    %v5342 = vadd.f32 0.0, %v5341
    %v5343 = vpop.f32.mrf.mxu0
    %5344 = vdwg.mxu0
    %5345 = vmatpush.bf16.msra.mxu0 %v4189
    %5346 = vmatpush.bf16.msra.mxu0 %v4185
    %5347 = vmatpush.bf16.msra.mxu0 %v4181
    %5348 = vmatpush.bf16.msra.mxu0 %v4177
    %5349 = vmatpush.bf16.msra.mxu0 %v4173
    %5350 = vmatpush.bf16.msra.mxu0 %v4169
    %5351 = vmatpush.bf16.msra.mxu0 %v4165
    %5352 = vmatpush.bf16.msra.mxu0 %v4161
    %5353 = vmatmul.bf16.gmra.mxu0 %v4786
    %v5354 = vpop.f32.mrf.mxu0
    %v5355 = vadd.f32 %v5342, %v5354
    %v5356 = vpop.f32.mrf.mxu0
    %5357 = vdwg.mxu0
    %5358 = vmatpush.bf16.msra.mxu0 %v4158
    %5359 = vmatpush.bf16.msra.mxu0 %v4154
    %5360 = vmatpush.bf16.msra.mxu0 %v4150
    %5361 = vmatpush.bf16.msra.mxu0 %v4146
    %5362 = vmatpush.bf16.msra.mxu0 %v4142
    %5363 = vmatpush.bf16.msra.mxu0 %v4138
    %5364 = vmatpush.bf16.msra.mxu0 %v4134
    %5365 = vmatpush.bf16.msra.mxu0 %v4130
    %5366 = vmatmul.bf16.gmra.mxu0 %v4785
    %v5367 = vpop.f32.mrf.mxu0
    %v5368 = vadd.f32 0.0, %v5367
    %v5369 = vpop.f32.mrf.mxu0
    %5370 = vdwg.mxu0
    %5371 = vmatpush.bf16.msra.mxu0 %v4190
    %5372 = vmatpush.bf16.msra.mxu0 %v4186
    %5373 = vmatpush.bf16.msra.mxu0 %v4182
    %5374 = vmatpush.bf16.msra.mxu0 %v4178
    %5375 = vmatpush.bf16.msra.mxu0 %v4174
    %5376 = vmatpush.bf16.msra.mxu0 %v4170
    %5377 = vmatpush.bf16.msra.mxu0 %v4166
    %5378 = vmatpush.bf16.msra.mxu0 %v4162
    %5379 = vmatmul.bf16.gmra.mxu0 %v4786
    %v5380 = vpop.f32.mrf.mxu0
    %v5381 = vadd.f32 %v5368, %v5380
    %v5382 = vpop.f32.mrf.mxu0
    %5383 = vdwg.mxu0
    %5384 = vmatpush.bf16.msra.mxu0 %v4579
    %5385 = vmatpush.bf16.msra.mxu0 %v4575
    %5386 = vmatpush.bf16.msra.mxu0 %v4571
    %5387 = vmatpush.bf16.msra.mxu0 %v4567
    %5388 = vmatpush.bf16.msra.mxu0 %v4563
    %5389 = vmatpush.bf16.msra.mxu0 %v4559
    %5390 = vmatpush.bf16.msra.mxu0 %v4555
    %5391 = vmatpush.bf16.msra.mxu0 %v4551
    %5392 = vmatmul.bf16.gmra.mxu0 %v3868
    %v5393 = vpop.f32.mrf.mxu0
    %v5394 = vadd.f32 %v5303, %v5393
    %v5395 = vpop.f32.mrf.mxu0
    %5396 = vdwg.mxu0
    %5397 = vmatpush.bf16.msra.mxu0 %v4611
    %5398 = vmatpush.bf16.msra.mxu0 %v4607
    %5399 = vmatpush.bf16.msra.mxu0 %v4603
    %5400 = vmatpush.bf16.msra.mxu0 %v4599
    %5401 = vmatpush.bf16.msra.mxu0 %v4595
    %5402 = vmatpush.bf16.msra.mxu0 %v4591
    %5403 = vmatpush.bf16.msra.mxu0 %v4587
    %5404 = vmatpush.bf16.msra.mxu0 %v4583
    %5405 = vmatmul.bf16.gmra.mxu0 %v3869
    %v5406 = vpop.f32.mrf.mxu0
    %v5407 = vadd.f32 %v5394, %v5406
    %v5408 = vpop.f32.mrf.mxu0
    %5409 = vdwg.mxu0
    %5410 = vmatpush.bf16.msra.mxu0 %v4580
    %5411 = vmatpush.bf16.msra.mxu0 %v4576
    %5412 = vmatpush.bf16.msra.mxu0 %v4572
    %5413 = vmatpush.bf16.msra.mxu0 %v4568
    %5414 = vmatpush.bf16.msra.mxu0 %v4564
    %5415 = vmatpush.bf16.msra.mxu0 %v4560
    %5416 = vmatpush.bf16.msra.mxu0 %v4556
    %5417 = vmatpush.bf16.msra.mxu0 %v4552
    %5418 = vmatmul.bf16.gmra.mxu0 %v3868
    %v5419 = vpop.f32.mrf.mxu0
    %v5420 = vadd.f32 %v5329, %v5419
    %v5421 = vpop.f32.mrf.mxu0
    %5422 = vdwg.mxu0
    %5423 = vmatpush.bf16.msra.mxu0 %v4612
    %5424 = vmatpush.bf16.msra.mxu0 %v4608
    %5425 = vmatpush.bf16.msra.mxu0 %v4604
    %5426 = vmatpush.bf16.msra.mxu0 %v4600
    %5427 = vmatpush.bf16.msra.mxu0 %v4596
    %5428 = vmatpush.bf16.msra.mxu0 %v4592
    %5429 = vmatpush.bf16.msra.mxu0 %v4588
    %5430 = vmatpush.bf16.msra.mxu0 %v4584
    %5431 = vmatmul.bf16.gmra.mxu0 %v3869
    %v5432 = vpop.f32.mrf.mxu0
    %v5433 = vadd.f32 %v5420, %v5432
    %v5434 = vpop.f32.mrf.mxu0
    %5435 = vdwg.mxu0
    %5436 = vmatpush.bf16.msra.mxu0 %v4581
    %5437 = vmatpush.bf16.msra.mxu0 %v4577
    %5438 = vmatpush.bf16.msra.mxu0 %v4573
    %5439 = vmatpush.bf16.msra.mxu0 %v4569
    %5440 = vmatpush.bf16.msra.mxu0 %v4565
    %5441 = vmatpush.bf16.msra.mxu0 %v4561
    %5442 = vmatpush.bf16.msra.mxu0 %v4557
    %5443 = vmatpush.bf16.msra.mxu0 %v4553
    %5444 = vmatmul.bf16.gmra.mxu0 %v3868
    %v5445 = vpop.f32.mrf.mxu0
    %v5446 = vadd.f32 %v5355, %v5445
    %v5447 = vpop.f32.mrf.mxu0
    %5448 = vdwg.mxu0
    %5449 = vmatpush.bf16.msra.mxu0 %v4613
    %5450 = vmatpush.bf16.msra.mxu0 %v4609
    %5451 = vmatpush.bf16.msra.mxu0 %v4605
    %5452 = vmatpush.bf16.msra.mxu0 %v4601
    %5453 = vmatpush.bf16.msra.mxu0 %v4597
    %5454 = vmatpush.bf16.msra.mxu0 %v4593
    %5455 = vmatpush.bf16.msra.mxu0 %v4589
    %5456 = vmatpush.bf16.msra.mxu0 %v4585
    %5457 = vmatmul.bf16.gmra.mxu0 %v3869
    %v5458 = vpop.f32.mrf.mxu0
    %v5459 = vadd.f32 %v5446, %v5458
    %v5460 = vpop.f32.mrf.mxu0
    %5461 = vdwg.mxu0
    %5462 = vmatpush.bf16.msra.mxu0 %v4582
    %5463 = vmatpush.bf16.msra.mxu0 %v4578
    %5464 = vmatpush.bf16.msra.mxu0 %v4574
    %5465 = vmatpush.bf16.msra.mxu0 %v4570
    %5466 = vmatpush.bf16.msra.mxu0 %v4566
    %5467 = vmatpush.bf16.msra.mxu0 %v4562
    %5468 = vmatpush.bf16.msra.mxu0 %v4558
    %5469 = vmatpush.bf16.msra.mxu0 %v4554
    %5470 = vmatmul.bf16.gmra.mxu0 %v3868
    %v5471 = vpop.f32.mrf.mxu0
    %v5472 = vadd.f32 %v5381, %v5471
    %v5473 = vpop.f32.mrf.mxu0
    %5474 = vdwg.mxu0
    %5475 = vmatpush.bf16.msra.mxu0 %v4614
    %5476 = vmatpush.bf16.msra.mxu0 %v4610
    %5477 = vmatpush.bf16.msra.mxu0 %v4606
    %5478 = vmatpush.bf16.msra.mxu0 %v4602
    %5479 = vmatpush.bf16.msra.mxu0 %v4598
    %5480 = vmatpush.bf16.msra.mxu0 %v4594
    %5481 = vmatpush.bf16.msra.mxu0 %v4590
    %5482 = vmatpush.bf16.msra.mxu0 %v4586
    %5483 = vmatmul.bf16.gmra.mxu0 %v3869
    %v5484 = vpop.f32.mrf.mxu0
    %v5485 = vadd.f32 %v5472, %v5484
    %v5486 = vpop.f32.mrf.mxu0
    %5487 = vdwg.mxu0
    %v5488 = vld [vmem:[#allocation2 + $0x30] sm:$0xff]
    %v5489 = vld [vmem:[#allocation2 + $0x38] sm:$0xff]
    %v5490 = vpack.c.bf16 %v5488, %v5488
    %v5491 = vpack.c.bf16 %v5489, %v5489
    %5492 = vmatpush.bf16.msra.mxu0 %v5072
    %5493 = vmatpush.bf16.msra.mxu0 %v5068
    %5494 = vmatpush.bf16.msra.mxu0 %v5064
    %5495 = vmatpush.bf16.msra.mxu0 %v5060
    %5496 = vmatpush.bf16.msra.mxu0 %v5056
    %5497 = vmatpush.bf16.msra.mxu0 %v5052
    %5498 = vmatpush.bf16.msra.mxu0 %v5048
    %5499 = vmatpush.bf16.msra.mxu0 %v5044
    %5500 = vmatmul.bf16.gmra.mxu0 %v5490
    %v5501 = vpop.f32.mrf.mxu0
    %v5502 = vadd.f32 0.0, %v5501
    %v5503 = vpop.f32.mrf.mxu0
    %5504 = vdwg.mxu0
    %5505 = vmatpush.bf16.msra.mxu0 %v5104
    %5506 = vmatpush.bf16.msra.mxu0 %v5100
    %5507 = vmatpush.bf16.msra.mxu0 %v5096
    %5508 = vmatpush.bf16.msra.mxu0 %v5092
    %5509 = vmatpush.bf16.msra.mxu0 %v5088
    %5510 = vmatpush.bf16.msra.mxu0 %v5084
    %5511 = vmatpush.bf16.msra.mxu0 %v5080
    %5512 = vmatpush.bf16.msra.mxu0 %v5076
    %5513 = vmatmul.bf16.gmra.mxu0 %v5491
    %v5514 = vpop.f32.mrf.mxu0
    %v5515 = vadd.f32 %v5502, %v5514
    %v5516 = vpop.f32.mrf.mxu0
    %5517 = vdwg.mxu0
    %5518 = vmatpush.bf16.msra.mxu0 %v5073
    %5519 = vmatpush.bf16.msra.mxu0 %v5069
    %5520 = vmatpush.bf16.msra.mxu0 %v5065
    %5521 = vmatpush.bf16.msra.mxu0 %v5061
    %5522 = vmatpush.bf16.msra.mxu0 %v5057
    %5523 = vmatpush.bf16.msra.mxu0 %v5053
    %5524 = vmatpush.bf16.msra.mxu0 %v5049
    %5525 = vmatpush.bf16.msra.mxu0 %v5045
    %5526 = vmatmul.bf16.gmra.mxu0 %v5490
    %v5527 = vpop.f32.mrf.mxu0
    %v5528 = vadd.f32 0.0, %v5527
    %v5529 = vpop.f32.mrf.mxu0
    %5530 = vdwg.mxu0
    %5531 = vmatpush.bf16.msra.mxu0 %v5105
    %5532 = vmatpush.bf16.msra.mxu0 %v5101
    %5533 = vmatpush.bf16.msra.mxu0 %v5097
    %5534 = vmatpush.bf16.msra.mxu0 %v5093
    %5535 = vmatpush.bf16.msra.mxu0 %v5089
    %5536 = vmatpush.bf16.msra.mxu0 %v5085
    %5537 = vmatpush.bf16.msra.mxu0 %v5081
    %5538 = vmatpush.bf16.msra.mxu0 %v5077
    %5539 = vmatmul.bf16.gmra.mxu0 %v5491
    %v5540 = vpop.f32.mrf.mxu0
    %v5541 = vadd.f32 %v5528, %v5540
    %v5542 = vpop.f32.mrf.mxu0
    %5543 = vdwg.mxu0
    %5544 = vmatpush.bf16.msra.mxu0 %v5074
    %5545 = vmatpush.bf16.msra.mxu0 %v5070
    %5546 = vmatpush.bf16.msra.mxu0 %v5066
    %5547 = vmatpush.bf16.msra.mxu0 %v5062
    %5548 = vmatpush.bf16.msra.mxu0 %v5058
    %5549 = vmatpush.bf16.msra.mxu0 %v5054
    %5550 = vmatpush.bf16.msra.mxu0 %v5050
    %5551 = vmatpush.bf16.msra.mxu0 %v5046
    %5552 = vmatmul.bf16.gmra.mxu0 %v5490
    %v5553 = vpop.f32.mrf.mxu0
    %v5554 = vadd.f32 0.0, %v5553
    %v5555 = vpop.f32.mrf.mxu0
    %5556 = vdwg.mxu0
    %5557 = vmatpush.bf16.msra.mxu0 %v5106
    %5558 = vmatpush.bf16.msra.mxu0 %v5102
    %5559 = vmatpush.bf16.msra.mxu0 %v5098
    %5560 = vmatpush.bf16.msra.mxu0 %v5094
    %5561 = vmatpush.bf16.msra.mxu0 %v5090
    %5562 = vmatpush.bf16.msra.mxu0 %v5086
    %5563 = vmatpush.bf16.msra.mxu0 %v5082
    %5564 = vmatpush.bf16.msra.mxu0 %v5078
    %5565 = vmatmul.bf16.gmra.mxu0 %v5491
    %v5566 = vpop.f32.mrf.mxu0
    %v5567 = vadd.f32 %v5554, %v5566
    %v5568 = vpop.f32.mrf.mxu0
    %5569 = vdwg.mxu0
    %5570 = vmatpush.bf16.msra.mxu0 %v5075
    %5571 = vmatpush.bf16.msra.mxu0 %v5071
    %5572 = vmatpush.bf16.msra.mxu0 %v5067
    %5573 = vmatpush.bf16.msra.mxu0 %v5063
    %5574 = vmatpush.bf16.msra.mxu0 %v5059
    %5575 = vmatpush.bf16.msra.mxu0 %v5055
    %5576 = vmatpush.bf16.msra.mxu0 %v5051
    %5577 = vmatpush.bf16.msra.mxu0 %v5047
    %5578 = vmatmul.bf16.gmra.mxu0 %v5490
    %v5579 = vpop.f32.mrf.mxu0
    %v5580 = vadd.f32 0.0, %v5579
    %v5581 = vpop.f32.mrf.mxu0
    %5582 = vdwg.mxu0
    %5583 = vmatpush.bf16.msra.mxu0 %v5107
    %5584 = vmatpush.bf16.msra.mxu0 %v5103
    %5585 = vmatpush.bf16.msra.mxu0 %v5099
    %5586 = vmatpush.bf16.msra.mxu0 %v5095
    %5587 = vmatpush.bf16.msra.mxu0 %v5091
    %5588 = vmatpush.bf16.msra.mxu0 %v5087
    %5589 = vmatpush.bf16.msra.mxu0 %v5083
    %5590 = vmatpush.bf16.msra.mxu0 %v5079
    %5591 = vmatmul.bf16.gmra.mxu0 %v5491
    %v5592 = vpop.f32.mrf.mxu0
    %v5593 = vadd.f32 %v5580, %v5592
    %v5594 = vpop.f32.mrf.mxu0
    %5595 = vdwg.mxu0
    %v5596 = vadd.f32 %v5407, %v5515
    %v5597 = vadd.f32 %v5433, %v5541
    %v5598 = vadd.f32 %v5459, %v5567
    %v5599 = vadd.f32 %v5485, %v5593
    %v5600 = vmax.f32 %v5276, %v5596
    %v5601 = vmax.f32 %v5277, %v5597
    %v5602 = vmax.f32 %v5278, %v5598
    %v5603 = vmax.f32 %v5279, %v5599
    %v5604 = vmax.f32 %v5600, %v5602
    %v5605 = vmax.f32 %v5601, %v5603
    %v5606 = vld [vmem:[%s4] sm:$0x3]
    %v5608 = vperm.slane %v5606, 0
    %v5609 = vperm.slane %v5606, 1
    %v5612 = vadd.f32 %v5604, %v5608
    %v5613 = vadd.f32 %v5605, %v5609
    %v5614 = vmax.f32 %v5612, 0.0
    %v5615 = vmax.f32 %v5613, 0.0
    %v5616 = vpack.c.bf16 %v5614, %v5614
    %v5617 = vpack.c.bf16 %v5615, %v5615
    %v5618 = vld [vmem:[#allocation5] sm:$0xf]
    %v5619 = vld [vmem:[#allocation5 + $0x4] sm:$0xf]
    %v5620 = vld [vmem:[#allocation5 + $0x8] sm:$0xf]
    %v5621 = vld [vmem:[#allocation5 + $0xc] sm:$0xf]
    %v5622 = vld [vmem:[#allocation5 + $0x10] sm:$0xf]
    %v5623 = vld [vmem:[#allocation5 + $0x14] sm:$0xf]
    %v5624 = vld [vmem:[#allocation5 + $0x18] sm:$0xf]
    %v5625 = vld [vmem:[#allocation5 + $0x1c] sm:$0xf]
    %v5626 = vld [vmem:[#allocation5 + $0x20] sm:$0xf]
    %v5627 = vld [vmem:[#allocation5 + $0x24] sm:$0xf]
    %v5628 = vld [vmem:[#allocation5 + $0x28] sm:$0xf]
    %v5629 = vld [vmem:[#allocation5 + $0x2c] sm:$0xf]
    %v5630 = vld [vmem:[#allocation5 + $0x30] sm:$0xf]
    %v5631 = vld [vmem:[#allocation5 + $0x34] sm:$0xf]
    %v5632 = vld [vmem:[#allocation5 + $0x38] sm:$0xf]
    %v5633 = vld [vmem:[#allocation5 + $0x3c] sm:$0xf]
    %v5634 = vld [vmem:[#allocation5 + $0x40] sm:$0xf]
    %v5635 = vld [vmem:[#allocation5 + $0x44] sm:$0xf]
    %v5636 = vld [vmem:[#allocation5 + $0x48] sm:$0xf]
    %v5637 = vld [vmem:[#allocation5 + $0x4c] sm:$0xf]
    %v5638 = vld [vmem:[#allocation5 + $0x50] sm:$0xf]
    %v5639 = vld [vmem:[#allocation5 + $0x54] sm:$0xf]
    %v5640 = vld [vmem:[#allocation5 + $0x58] sm:$0xf]
    %v5641 = vld [vmem:[#allocation5 + $0x5c] sm:$0xf]
    %v5642 = vld [vmem:[#allocation5 + $0x60] sm:$0xf]
    %v5643 = vld [vmem:[#allocation5 + $0x64] sm:$0xf]
    %v5644 = vld [vmem:[#allocation5 + $0x68] sm:$0xf]
    %v5645 = vld [vmem:[#allocation5 + $0x6c] sm:$0xf]
    %v5646 = vld [vmem:[#allocation5 + $0x70] sm:$0xf]
    %v5647 = vld [vmem:[#allocation5 + $0x74] sm:$0xf]
    %v5648 = vld [vmem:[#allocation5 + $0x78] sm:$0xf]
    %v5649 = vld [vmem:[#allocation5 + $0x7c] sm:$0xf]
    %5650 = vmatpush.bf16.msra.mxu0 %v4155
    %5651 = vmatpush.bf16.msra.mxu0 %v4151
    %5652 = vmatpush.bf16.msra.mxu0 %v4147
    %5653 = vmatpush.bf16.msra.mxu0 %v4143
    %5654 = vmatpush.bf16.msra.mxu0 %v4139
    %5655 = vmatpush.bf16.msra.mxu0 %v4135
    %5656 = vmatpush.bf16.msra.mxu0 %v4131
    %5657 = vmatpush.bf16.msra.mxu0 %v4127
    %5658 = vmatmul.bf16.gmra.mxu0 %v5490
    %v5659 = vpop.f32.mrf.mxu0
    %v5660 = vadd.f32 0.0, %v5659
    %v5661 = vpop.f32.mrf.mxu0
    %5662 = vdwg.mxu0
    %5663 = vmatpush.bf16.msra.mxu0 %v4187
    %5664 = vmatpush.bf16.msra.mxu0 %v4183
    %5665 = vmatpush.bf16.msra.mxu0 %v4179
    %5666 = vmatpush.bf16.msra.mxu0 %v4175
    %5667 = vmatpush.bf16.msra.mxu0 %v4171
    %5668 = vmatpush.bf16.msra.mxu0 %v4167
    %5669 = vmatpush.bf16.msra.mxu0 %v4163
    %5670 = vmatpush.bf16.msra.mxu0 %v4159
    %5671 = vmatmul.bf16.gmra.mxu0 %v5491
    %v5672 = vpop.f32.mrf.mxu0
    %v5673 = vadd.f32 %v5660, %v5672
    %v5674 = vpop.f32.mrf.mxu0
    %5675 = vdwg.mxu0
    %5676 = vmatpush.bf16.msra.mxu0 %v4156
    %5677 = vmatpush.bf16.msra.mxu0 %v4152
    %5678 = vmatpush.bf16.msra.mxu0 %v4148
    %5679 = vmatpush.bf16.msra.mxu0 %v4144
    %5680 = vmatpush.bf16.msra.mxu0 %v4140
    %5681 = vmatpush.bf16.msra.mxu0 %v4136
    %5682 = vmatpush.bf16.msra.mxu0 %v4132
    %5683 = vmatpush.bf16.msra.mxu0 %v4128
    %5684 = vmatmul.bf16.gmra.mxu0 %v5490
    %v5685 = vpop.f32.mrf.mxu0
    %v5686 = vadd.f32 0.0, %v5685
    %v5687 = vpop.f32.mrf.mxu0
    %5688 = vdwg.mxu0
    %5689 = vmatpush.bf16.msra.mxu0 %v4188
    %5690 = vmatpush.bf16.msra.mxu0 %v4184
    %5691 = vmatpush.bf16.msra.mxu0 %v4180
    %5692 = vmatpush.bf16.msra.mxu0 %v4176
    %5693 = vmatpush.bf16.msra.mxu0 %v4172
    %5694 = vmatpush.bf16.msra.mxu0 %v4168
    %5695 = vmatpush.bf16.msra.mxu0 %v4164
    %5696 = vmatpush.bf16.msra.mxu0 %v4160
    %5697 = vmatmul.bf16.gmra.mxu0 %v5491
    %v5698 = vpop.f32.mrf.mxu0
    %v5699 = vadd.f32 %v5686, %v5698
    %v5700 = vpop.f32.mrf.mxu0
    %5701 = vdwg.mxu0
    %5702 = vmatpush.bf16.msra.mxu0 %v4157
    %5703 = vmatpush.bf16.msra.mxu0 %v4153
    %5704 = vmatpush.bf16.msra.mxu0 %v4149
    %5705 = vmatpush.bf16.msra.mxu0 %v4145
    %5706 = vmatpush.bf16.msra.mxu0 %v4141
    %5707 = vmatpush.bf16.msra.mxu0 %v4137
    %5708 = vmatpush.bf16.msra.mxu0 %v4133
    %5709 = vmatpush.bf16.msra.mxu0 %v4129
    %5710 = vmatmul.bf16.gmra.mxu0 %v5490
    %v5711 = vpop.f32.mrf.mxu0
    %v5712 = vadd.f32 0.0, %v5711
    %v5713 = vpop.f32.mrf.mxu0
    %5714 = vdwg.mxu0
    %5715 = vmatpush.bf16.msra.mxu0 %v4189
    %5716 = vmatpush.bf16.msra.mxu0 %v4185
    %5717 = vmatpush.bf16.msra.mxu0 %v4181
    %5718 = vmatpush.bf16.msra.mxu0 %v4177
    %5719 = vmatpush.bf16.msra.mxu0 %v4173
    %5720 = vmatpush.bf16.msra.mxu0 %v4169
    %5721 = vmatpush.bf16.msra.mxu0 %v4165
    %5722 = vmatpush.bf16.msra.mxu0 %v4161
    %5723 = vmatmul.bf16.gmra.mxu0 %v5491
    %v5724 = vpop.f32.mrf.mxu0
    %v5725 = vadd.f32 %v5712, %v5724
    %v5726 = vpop.f32.mrf.mxu0
    %5727 = vdwg.mxu0
    %5728 = vmatpush.bf16.msra.mxu0 %v4158
    %5729 = vmatpush.bf16.msra.mxu0 %v4154
    %5730 = vmatpush.bf16.msra.mxu0 %v4150
    %5731 = vmatpush.bf16.msra.mxu0 %v4146
    %5732 = vmatpush.bf16.msra.mxu0 %v4142
    %5733 = vmatpush.bf16.msra.mxu0 %v4138
    %5734 = vmatpush.bf16.msra.mxu0 %v4134
    %5735 = vmatpush.bf16.msra.mxu0 %v4130
    %5736 = vmatmul.bf16.gmra.mxu0 %v5490
    %v5737 = vpop.f32.mrf.mxu0
    %v5738 = vadd.f32 0.0, %v5737
    %v5739 = vpop.f32.mrf.mxu0
    %5740 = vdwg.mxu0
    %5741 = vmatpush.bf16.msra.mxu0 %v4190
    %5742 = vmatpush.bf16.msra.mxu0 %v4186
    %5743 = vmatpush.bf16.msra.mxu0 %v4182
    %5744 = vmatpush.bf16.msra.mxu0 %v4178
    %5745 = vmatpush.bf16.msra.mxu0 %v4174
    %5746 = vmatpush.bf16.msra.mxu0 %v4170
    %5747 = vmatpush.bf16.msra.mxu0 %v4166
    %5748 = vmatpush.bf16.msra.mxu0 %v4162
    %5749 = vmatmul.bf16.gmra.mxu0 %v5491
    %v5750 = vpop.f32.mrf.mxu0
    %v5751 = vadd.f32 %v5738, %v5750
    %v5752 = vpop.f32.mrf.mxu0
    %5753 = vdwg.mxu0
    %5754 = vmatpush.bf16.msra.mxu0 %v4579
    %5755 = vmatpush.bf16.msra.mxu0 %v4575
    %5756 = vmatpush.bf16.msra.mxu0 %v4571
    %5757 = vmatpush.bf16.msra.mxu0 %v4567
    %5758 = vmatpush.bf16.msra.mxu0 %v4563
    %5759 = vmatpush.bf16.msra.mxu0 %v4559
    %5760 = vmatpush.bf16.msra.mxu0 %v4555
    %5761 = vmatpush.bf16.msra.mxu0 %v4551
    %5762 = vmatmul.bf16.gmra.mxu0 %v4785
    %v5763 = vpop.f32.mrf.mxu0
    %v5764 = vadd.f32 %v5673, %v5763
    %v5765 = vpop.f32.mrf.mxu0
    %5766 = vdwg.mxu0
    %5767 = vmatpush.bf16.msra.mxu0 %v4611
    %5768 = vmatpush.bf16.msra.mxu0 %v4607
    %5769 = vmatpush.bf16.msra.mxu0 %v4603
    %5770 = vmatpush.bf16.msra.mxu0 %v4599
    %5771 = vmatpush.bf16.msra.mxu0 %v4595
    %5772 = vmatpush.bf16.msra.mxu0 %v4591
    %5773 = vmatpush.bf16.msra.mxu0 %v4587
    %5774 = vmatpush.bf16.msra.mxu0 %v4583
    %5775 = vmatmul.bf16.gmra.mxu0 %v4786
    %v5776 = vpop.f32.mrf.mxu0
    %v5777 = vadd.f32 %v5764, %v5776
    %v5778 = vpop.f32.mrf.mxu0
    %5779 = vdwg.mxu0
    %5780 = vmatpush.bf16.msra.mxu0 %v4580
    %5781 = vmatpush.bf16.msra.mxu0 %v4576
    %5782 = vmatpush.bf16.msra.mxu0 %v4572
    %5783 = vmatpush.bf16.msra.mxu0 %v4568
    %5784 = vmatpush.bf16.msra.mxu0 %v4564
    %5785 = vmatpush.bf16.msra.mxu0 %v4560
    %5786 = vmatpush.bf16.msra.mxu0 %v4556
    %5787 = vmatpush.bf16.msra.mxu0 %v4552
    %5788 = vmatmul.bf16.gmra.mxu0 %v4785
    %v5789 = vpop.f32.mrf.mxu0
    %v5790 = vadd.f32 %v5699, %v5789
    %v5791 = vpop.f32.mrf.mxu0
    %5792 = vdwg.mxu0
    %5793 = vmatpush.bf16.msra.mxu0 %v4612
    %5794 = vmatpush.bf16.msra.mxu0 %v4608
    %5795 = vmatpush.bf16.msra.mxu0 %v4604
    %5796 = vmatpush.bf16.msra.mxu0 %v4600
    %5797 = vmatpush.bf16.msra.mxu0 %v4596
    %5798 = vmatpush.bf16.msra.mxu0 %v4592
    %5799 = vmatpush.bf16.msra.mxu0 %v4588
    %5800 = vmatpush.bf16.msra.mxu0 %v4584
    %5801 = vmatmul.bf16.gmra.mxu0 %v4786
    %v5802 = vpop.f32.mrf.mxu0
    %v5803 = vadd.f32 %v5790, %v5802
    %v5804 = vpop.f32.mrf.mxu0
    %5805 = vdwg.mxu0
    %5806 = vmatpush.bf16.msra.mxu0 %v4581
    %5807 = vmatpush.bf16.msra.mxu0 %v4577
    %5808 = vmatpush.bf16.msra.mxu0 %v4573
    %5809 = vmatpush.bf16.msra.mxu0 %v4569
    %5810 = vmatpush.bf16.msra.mxu0 %v4565
    %5811 = vmatpush.bf16.msra.mxu0 %v4561
    %5812 = vmatpush.bf16.msra.mxu0 %v4557
    %5813 = vmatpush.bf16.msra.mxu0 %v4553
    %5814 = vmatmul.bf16.gmra.mxu0 %v4785
    %v5815 = vpop.f32.mrf.mxu0
    %v5816 = vadd.f32 %v5725, %v5815
    %v5817 = vpop.f32.mrf.mxu0
    %5818 = vdwg.mxu0
    %5819 = vmatpush.bf16.msra.mxu0 %v4613
    %5820 = vmatpush.bf16.msra.mxu0 %v4609
    %5821 = vmatpush.bf16.msra.mxu0 %v4605
    %5822 = vmatpush.bf16.msra.mxu0 %v4601
    %5823 = vmatpush.bf16.msra.mxu0 %v4597
    %5824 = vmatpush.bf16.msra.mxu0 %v4593
    %5825 = vmatpush.bf16.msra.mxu0 %v4589
    %5826 = vmatpush.bf16.msra.mxu0 %v4585
    %5827 = vmatmul.bf16.gmra.mxu0 %v4786
    %v5828 = vpop.f32.mrf.mxu0
    %v5829 = vadd.f32 %v5816, %v5828
    %v5830 = vpop.f32.mrf.mxu0
    %5831 = vdwg.mxu0
    %5832 = vmatpush.bf16.msra.mxu0 %v4582
    %5833 = vmatpush.bf16.msra.mxu0 %v4578
    %5834 = vmatpush.bf16.msra.mxu0 %v4574
    %5835 = vmatpush.bf16.msra.mxu0 %v4570
    %5836 = vmatpush.bf16.msra.mxu0 %v4566
    %5837 = vmatpush.bf16.msra.mxu0 %v4562
    %5838 = vmatpush.bf16.msra.mxu0 %v4558
    %5839 = vmatpush.bf16.msra.mxu0 %v4554
    %5840 = vmatmul.bf16.gmra.mxu0 %v4785
    %v5841 = vpop.f32.mrf.mxu0
    %v5842 = vadd.f32 %v5751, %v5841
    %v5843 = vpop.f32.mrf.mxu0
    %5844 = vdwg.mxu0
    %5845 = vmatpush.bf16.msra.mxu0 %v4614
    %5846 = vmatpush.bf16.msra.mxu0 %v4610
    %5847 = vmatpush.bf16.msra.mxu0 %v4606
    %5848 = vmatpush.bf16.msra.mxu0 %v4602
    %5849 = vmatpush.bf16.msra.mxu0 %v4598
    %5850 = vmatpush.bf16.msra.mxu0 %v4594
    %5851 = vmatpush.bf16.msra.mxu0 %v4590
    %5852 = vmatpush.bf16.msra.mxu0 %v4586
    %5853 = vmatmul.bf16.gmra.mxu0 %v4786
    %v5854 = vpop.f32.mrf.mxu0
    %v5855 = vadd.f32 %v5842, %v5854
    %v5856 = vpop.f32.mrf.mxu0
    %5857 = vdwg.mxu0
    %v5858 = vld [vmem:[#allocation2 + $0x40] sm:$0xff]
    %v5859 = vld [vmem:[#allocation2 + $0x48] sm:$0xff]
    %v5860 = vpack.c.bf16 %v5858, %v5858
    %v5861 = vpack.c.bf16 %v5859, %v5859
    %5862 = vmatpush.bf16.msra.mxu0 %v5072
    %5863 = vmatpush.bf16.msra.mxu0 %v5068
    %5864 = vmatpush.bf16.msra.mxu0 %v5064
    %5865 = vmatpush.bf16.msra.mxu0 %v5060
    %5866 = vmatpush.bf16.msra.mxu0 %v5056
    %5867 = vmatpush.bf16.msra.mxu0 %v5052
    %5868 = vmatpush.bf16.msra.mxu0 %v5048
    %5869 = vmatpush.bf16.msra.mxu0 %v5044
    %5870 = vmatmul.bf16.gmra.mxu0 %v5860
    %v5871 = vpop.f32.mrf.mxu0
    %v5872 = vadd.f32 0.0, %v5871
    %v5873 = vpop.f32.mrf.mxu0
    %5874 = vdwg.mxu0
    %5875 = vmatpush.bf16.msra.mxu0 %v5104
    %5876 = vmatpush.bf16.msra.mxu0 %v5100
    %5877 = vmatpush.bf16.msra.mxu0 %v5096
    %5878 = vmatpush.bf16.msra.mxu0 %v5092
    %5879 = vmatpush.bf16.msra.mxu0 %v5088
    %5880 = vmatpush.bf16.msra.mxu0 %v5084
    %5881 = vmatpush.bf16.msra.mxu0 %v5080
    %5882 = vmatpush.bf16.msra.mxu0 %v5076
    %5883 = vmatmul.bf16.gmra.mxu0 %v5861
    %v5884 = vpop.f32.mrf.mxu0
    %v5885 = vadd.f32 %v5872, %v5884
    %v5886 = vpop.f32.mrf.mxu0
    %5887 = vdwg.mxu0
    %5888 = vmatpush.bf16.msra.mxu0 %v5073
    %5889 = vmatpush.bf16.msra.mxu0 %v5069
    %5890 = vmatpush.bf16.msra.mxu0 %v5065
    %5891 = vmatpush.bf16.msra.mxu0 %v5061
    %5892 = vmatpush.bf16.msra.mxu0 %v5057
    %5893 = vmatpush.bf16.msra.mxu0 %v5053
    %5894 = vmatpush.bf16.msra.mxu0 %v5049
    %5895 = vmatpush.bf16.msra.mxu0 %v5045
    %5896 = vmatmul.bf16.gmra.mxu0 %v5860
    %v5897 = vpop.f32.mrf.mxu0
    %v5898 = vadd.f32 0.0, %v5897
    %v5899 = vpop.f32.mrf.mxu0
    %5900 = vdwg.mxu0
    %5901 = vmatpush.bf16.msra.mxu0 %v5105
    %5902 = vmatpush.bf16.msra.mxu0 %v5101
    %5903 = vmatpush.bf16.msra.mxu0 %v5097
    %5904 = vmatpush.bf16.msra.mxu0 %v5093
    %5905 = vmatpush.bf16.msra.mxu0 %v5089
    %5906 = vmatpush.bf16.msra.mxu0 %v5085
    %5907 = vmatpush.bf16.msra.mxu0 %v5081
    %5908 = vmatpush.bf16.msra.mxu0 %v5077
    %5909 = vmatmul.bf16.gmra.mxu0 %v5861
    %v5910 = vpop.f32.mrf.mxu0
    %v5911 = vadd.f32 %v5898, %v5910
    %v5912 = vpop.f32.mrf.mxu0
    %5913 = vdwg.mxu0
    %5914 = vmatpush.bf16.msra.mxu0 %v5074
    %5915 = vmatpush.bf16.msra.mxu0 %v5070
    %5916 = vmatpush.bf16.msra.mxu0 %v5066
    %5917 = vmatpush.bf16.msra.mxu0 %v5062
    %5918 = vmatpush.bf16.msra.mxu0 %v5058
    %5919 = vmatpush.bf16.msra.mxu0 %v5054
    %5920 = vmatpush.bf16.msra.mxu0 %v5050
    %5921 = vmatpush.bf16.msra.mxu0 %v5046
    %5922 = vmatmul.bf16.gmra.mxu0 %v5860
    %v5923 = vpop.f32.mrf.mxu0
    %v5924 = vadd.f32 0.0, %v5923
    %v5925 = vpop.f32.mrf.mxu0
    %5926 = vdwg.mxu0
    %5927 = vmatpush.bf16.msra.mxu0 %v5106
    %5928 = vmatpush.bf16.msra.mxu0 %v5102
    %5929 = vmatpush.bf16.msra.mxu0 %v5098
    %5930 = vmatpush.bf16.msra.mxu0 %v5094
    %5931 = vmatpush.bf16.msra.mxu0 %v5090
    %5932 = vmatpush.bf16.msra.mxu0 %v5086
    %5933 = vmatpush.bf16.msra.mxu0 %v5082
    %5934 = vmatpush.bf16.msra.mxu0 %v5078
    %5935 = vmatmul.bf16.gmra.mxu0 %v5861
    %v5936 = vpop.f32.mrf.mxu0
    %v5937 = vadd.f32 %v5924, %v5936
    %v5938 = vpop.f32.mrf.mxu0
    %5939 = vdwg.mxu0
    %5940 = vmatpush.bf16.msra.mxu0 %v5075
    %5941 = vmatpush.bf16.msra.mxu0 %v5071
    %5942 = vmatpush.bf16.msra.mxu0 %v5067
    %5943 = vmatpush.bf16.msra.mxu0 %v5063
    %5944 = vmatpush.bf16.msra.mxu0 %v5059
    %5945 = vmatpush.bf16.msra.mxu0 %v5055
    %5946 = vmatpush.bf16.msra.mxu0 %v5051
    %5947 = vmatpush.bf16.msra.mxu0 %v5047
    %5948 = vmatmul.bf16.gmra.mxu0 %v5860
    %v5949 = vpop.f32.mrf.mxu0
    %v5950 = vadd.f32 0.0, %v5949
    %v5951 = vpop.f32.mrf.mxu0
    %5952 = vdwg.mxu0
    %5953 = vmatpush.bf16.msra.mxu0 %v5107
    %5954 = vmatpush.bf16.msra.mxu0 %v5103
    %5955 = vmatpush.bf16.msra.mxu0 %v5099
    %5956 = vmatpush.bf16.msra.mxu0 %v5095
    %5957 = vmatpush.bf16.msra.mxu0 %v5091
    %5958 = vmatpush.bf16.msra.mxu0 %v5087
    %5959 = vmatpush.bf16.msra.mxu0 %v5083
    %5960 = vmatpush.bf16.msra.mxu0 %v5079
    %5961 = vmatmul.bf16.gmra.mxu0 %v5861
    %v5962 = vpop.f32.mrf.mxu0
    %v5963 = vadd.f32 %v5950, %v5962
    %v5964 = vpop.f32.mrf.mxu0
    %5965 = vdwg.mxu0
    %v5966 = vadd.f32 %v5777, %v5885
    %v5967 = vadd.f32 %v5803, %v5911
    %v5968 = vadd.f32 %v5829, %v5937
    %v5969 = vadd.f32 %v5855, %v5963
    %5970 = vmatpush.bf16.msra.mxu0 %v4155
    %5971 = vmatpush.bf16.msra.mxu0 %v4151
    %5972 = vmatpush.bf16.msra.mxu0 %v4147
    %5973 = vmatpush.bf16.msra.mxu0 %v4143
    %5974 = vmatpush.bf16.msra.mxu0 %v4139
    %5975 = vmatpush.bf16.msra.mxu0 %v4135
    %5976 = vmatpush.bf16.msra.mxu0 %v4131
    %5977 = vmatpush.bf16.msra.mxu0 %v4127
    %5978 = vmatmul.bf16.gmra.mxu0 %v5860
    %v5979 = vpop.f32.mrf.mxu0
    %v5980 = vadd.f32 0.0, %v5979
    %v5981 = vpop.f32.mrf.mxu0
    %5982 = vdwg.mxu0
    %5983 = vmatpush.bf16.msra.mxu0 %v4187
    %5984 = vmatpush.bf16.msra.mxu0 %v4183
    %5985 = vmatpush.bf16.msra.mxu0 %v4179
    %5986 = vmatpush.bf16.msra.mxu0 %v4175
    %5987 = vmatpush.bf16.msra.mxu0 %v4171
    %5988 = vmatpush.bf16.msra.mxu0 %v4167
    %5989 = vmatpush.bf16.msra.mxu0 %v4163
    %5990 = vmatpush.bf16.msra.mxu0 %v4159
    %5991 = vmatmul.bf16.gmra.mxu0 %v5861
    %v5992 = vpop.f32.mrf.mxu0
    %v5993 = vadd.f32 %v5980, %v5992
    %v5994 = vpop.f32.mrf.mxu0
    %5995 = vdwg.mxu0
    %5996 = vmatpush.bf16.msra.mxu0 %v4156
    %5997 = vmatpush.bf16.msra.mxu0 %v4152
    %5998 = vmatpush.bf16.msra.mxu0 %v4148
    %5999 = vmatpush.bf16.msra.mxu0 %v4144
    %6000 = vmatpush.bf16.msra.mxu0 %v4140
    %6001 = vmatpush.bf16.msra.mxu0 %v4136
    %6002 = vmatpush.bf16.msra.mxu0 %v4132
    %6003 = vmatpush.bf16.msra.mxu0 %v4128
    %6004 = vmatmul.bf16.gmra.mxu0 %v5860
    %v6005 = vpop.f32.mrf.mxu0
    %v6006 = vadd.f32 0.0, %v6005
    %v6007 = vpop.f32.mrf.mxu0
    %6008 = vdwg.mxu0
    %6009 = vmatpush.bf16.msra.mxu0 %v4188
    %6010 = vmatpush.bf16.msra.mxu0 %v4184
    %6011 = vmatpush.bf16.msra.mxu0 %v4180
    %6012 = vmatpush.bf16.msra.mxu0 %v4176
    %6013 = vmatpush.bf16.msra.mxu0 %v4172
    %6014 = vmatpush.bf16.msra.mxu0 %v4168
    %6015 = vmatpush.bf16.msra.mxu0 %v4164
    %6016 = vmatpush.bf16.msra.mxu0 %v4160
    %6017 = vmatmul.bf16.gmra.mxu0 %v5861
    %v6018 = vpop.f32.mrf.mxu0
    %v6019 = vadd.f32 %v6006, %v6018
    %v6020 = vpop.f32.mrf.mxu0
    %6021 = vdwg.mxu0
    %6022 = vmatpush.bf16.msra.mxu0 %v4157
    %6023 = vmatpush.bf16.msra.mxu0 %v4153
    %6024 = vmatpush.bf16.msra.mxu0 %v4149
    %6025 = vmatpush.bf16.msra.mxu0 %v4145
    %6026 = vmatpush.bf16.msra.mxu0 %v4141
    %6027 = vmatpush.bf16.msra.mxu0 %v4137
    %6028 = vmatpush.bf16.msra.mxu0 %v4133
    %6029 = vmatpush.bf16.msra.mxu0 %v4129
    %6030 = vmatmul.bf16.gmra.mxu0 %v5860
    %v6031 = vpop.f32.mrf.mxu0
    %v6032 = vadd.f32 0.0, %v6031
    %v6033 = vpop.f32.mrf.mxu0
    %6034 = vdwg.mxu0
    %6035 = vmatpush.bf16.msra.mxu0 %v4189
    %6036 = vmatpush.bf16.msra.mxu0 %v4185
    %6037 = vmatpush.bf16.msra.mxu0 %v4181
    %6038 = vmatpush.bf16.msra.mxu0 %v4177
    %6039 = vmatpush.bf16.msra.mxu0 %v4173
    %6040 = vmatpush.bf16.msra.mxu0 %v4169
    %6041 = vmatpush.bf16.msra.mxu0 %v4165
    %6042 = vmatpush.bf16.msra.mxu0 %v4161
    %6043 = vmatmul.bf16.gmra.mxu0 %v5861
    %v6044 = vpop.f32.mrf.mxu0
    %v6045 = vadd.f32 %v6032, %v6044
    %v6046 = vpop.f32.mrf.mxu0
    %6047 = vdwg.mxu0
    %6048 = vmatpush.bf16.msra.mxu0 %v4158
    %6049 = vmatpush.bf16.msra.mxu0 %v4154
    %6050 = vmatpush.bf16.msra.mxu0 %v4150
    %6051 = vmatpush.bf16.msra.mxu0 %v4146
    %6052 = vmatpush.bf16.msra.mxu0 %v4142
    %6053 = vmatpush.bf16.msra.mxu0 %v4138
    %6054 = vmatpush.bf16.msra.mxu0 %v4134
    %6055 = vmatpush.bf16.msra.mxu0 %v4130
    %6056 = vmatmul.bf16.gmra.mxu0 %v5860
    %v6057 = vpop.f32.mrf.mxu0
    %v6058 = vadd.f32 0.0, %v6057
    %v6059 = vpop.f32.mrf.mxu0
    %6060 = vdwg.mxu0
    %6061 = vmatpush.bf16.msra.mxu0 %v4190
    %6062 = vmatpush.bf16.msra.mxu0 %v4186
    %6063 = vmatpush.bf16.msra.mxu0 %v4182
    %6064 = vmatpush.bf16.msra.mxu0 %v4178
    %6065 = vmatpush.bf16.msra.mxu0 %v4174
    %6066 = vmatpush.bf16.msra.mxu0 %v4170
    %6067 = vmatpush.bf16.msra.mxu0 %v4166
    %6068 = vmatpush.bf16.msra.mxu0 %v4162
    %6069 = vmatmul.bf16.gmra.mxu0 %v5861
    %v6070 = vpop.f32.mrf.mxu0
    %v6071 = vadd.f32 %v6058, %v6070
    %v6072 = vpop.f32.mrf.mxu0
    %6073 = vdwg.mxu0
    %6074 = vmatpush.bf16.msra.mxu0 %v4579
    %6075 = vmatpush.bf16.msra.mxu0 %v4575
    %6076 = vmatpush.bf16.msra.mxu0 %v4571
    %6077 = vmatpush.bf16.msra.mxu0 %v4567
    %6078 = vmatpush.bf16.msra.mxu0 %v4563
    %6079 = vmatpush.bf16.msra.mxu0 %v4559
    %6080 = vmatpush.bf16.msra.mxu0 %v4555
    %6081 = vmatpush.bf16.msra.mxu0 %v4551
    %6082 = vmatmul.bf16.gmra.mxu0 %v5490
    %v6083 = vpop.f32.mrf.mxu0
    %v6084 = vadd.f32 %v5993, %v6083
    %v6085 = vpop.f32.mrf.mxu0
    %6086 = vdwg.mxu0
    %6087 = vmatpush.bf16.msra.mxu0 %v4611
    %6088 = vmatpush.bf16.msra.mxu0 %v4607
    %6089 = vmatpush.bf16.msra.mxu0 %v4603
    %6090 = vmatpush.bf16.msra.mxu0 %v4599
    %6091 = vmatpush.bf16.msra.mxu0 %v4595
    %6092 = vmatpush.bf16.msra.mxu0 %v4591
    %6093 = vmatpush.bf16.msra.mxu0 %v4587
    %6094 = vmatpush.bf16.msra.mxu0 %v4583
    %6095 = vmatmul.bf16.gmra.mxu0 %v5491
    %v6096 = vpop.f32.mrf.mxu0
    %v6097 = vadd.f32 %v6084, %v6096
    %v6098 = vpop.f32.mrf.mxu0
    %6099 = vdwg.mxu0
    %6100 = vmatpush.bf16.msra.mxu0 %v4580
    %6101 = vmatpush.bf16.msra.mxu0 %v4576
    %6102 = vmatpush.bf16.msra.mxu0 %v4572
    %6103 = vmatpush.bf16.msra.mxu0 %v4568
    %6104 = vmatpush.bf16.msra.mxu0 %v4564
    %6105 = vmatpush.bf16.msra.mxu0 %v4560
    %6106 = vmatpush.bf16.msra.mxu0 %v4556
    %6107 = vmatpush.bf16.msra.mxu0 %v4552
    %6108 = vmatmul.bf16.gmra.mxu0 %v5490
    %v6109 = vpop.f32.mrf.mxu0
    %v6110 = vadd.f32 %v6019, %v6109
    %v6111 = vpop.f32.mrf.mxu0
    %6112 = vdwg.mxu0
    %6113 = vmatpush.bf16.msra.mxu0 %v4612
    %6114 = vmatpush.bf16.msra.mxu0 %v4608
    %6115 = vmatpush.bf16.msra.mxu0 %v4604
    %6116 = vmatpush.bf16.msra.mxu0 %v4600
    %6117 = vmatpush.bf16.msra.mxu0 %v4596
    %6118 = vmatpush.bf16.msra.mxu0 %v4592
    %6119 = vmatpush.bf16.msra.mxu0 %v4588
    %6120 = vmatpush.bf16.msra.mxu0 %v4584
    %6121 = vmatmul.bf16.gmra.mxu0 %v5491
    %v6122 = vpop.f32.mrf.mxu0
    %v6123 = vadd.f32 %v6110, %v6122
    %v6124 = vpop.f32.mrf.mxu0
    %6125 = vdwg.mxu0
    %6126 = vmatpush.bf16.msra.mxu0 %v4581
    %6127 = vmatpush.bf16.msra.mxu0 %v4577
    %6128 = vmatpush.bf16.msra.mxu0 %v4573
    %6129 = vmatpush.bf16.msra.mxu0 %v4569
    %6130 = vmatpush.bf16.msra.mxu0 %v4565
    %6131 = vmatpush.bf16.msra.mxu0 %v4561
    %6132 = vmatpush.bf16.msra.mxu0 %v4557
    %6133 = vmatpush.bf16.msra.mxu0 %v4553
    %6134 = vmatmul.bf16.gmra.mxu0 %v5490
    %v6135 = vpop.f32.mrf.mxu0
    %v6136 = vadd.f32 %v6045, %v6135
    %v6137 = vpop.f32.mrf.mxu0
    %6138 = vdwg.mxu0
    %6139 = vmatpush.bf16.msra.mxu0 %v4613
    %6140 = vmatpush.bf16.msra.mxu0 %v4609
    %6141 = vmatpush.bf16.msra.mxu0 %v4605
    %6142 = vmatpush.bf16.msra.mxu0 %v4601
    %6143 = vmatpush.bf16.msra.mxu0 %v4597
    %6144 = vmatpush.bf16.msra.mxu0 %v4593
    %6145 = vmatpush.bf16.msra.mxu0 %v4589
    %6146 = vmatpush.bf16.msra.mxu0 %v4585
    %6147 = vmatmul.bf16.gmra.mxu0 %v5491
    %v6148 = vpop.f32.mrf.mxu0
    %v6149 = vadd.f32 %v6136, %v6148
    %v6150 = vpop.f32.mrf.mxu0
    %6151 = vdwg.mxu0
    %6152 = vmatpush.bf16.msra.mxu0 %v4582
    %6153 = vmatpush.bf16.msra.mxu0 %v4578
    %6154 = vmatpush.bf16.msra.mxu0 %v4574
    %6155 = vmatpush.bf16.msra.mxu0 %v4570
    %6156 = vmatpush.bf16.msra.mxu0 %v4566
    %6157 = vmatpush.bf16.msra.mxu0 %v4562
    %6158 = vmatpush.bf16.msra.mxu0 %v4558
    %6159 = vmatpush.bf16.msra.mxu0 %v4554
    %6160 = vmatmul.bf16.gmra.mxu0 %v5490
    %v6161 = vpop.f32.mrf.mxu0
    %v6162 = vadd.f32 %v6071, %v6161
    %v6163 = vpop.f32.mrf.mxu0
    %6164 = vdwg.mxu0
    %6165 = vmatpush.bf16.msra.mxu0 %v4614
    %6166 = vmatpush.bf16.msra.mxu0 %v4610
    %6167 = vmatpush.bf16.msra.mxu0 %v4606
    %6168 = vmatpush.bf16.msra.mxu0 %v4602
    %6169 = vmatpush.bf16.msra.mxu0 %v4598
    %6170 = vmatpush.bf16.msra.mxu0 %v4594
    %6171 = vmatpush.bf16.msra.mxu0 %v4590
    %6172 = vmatpush.bf16.msra.mxu0 %v4586
    %6173 = vmatmul.bf16.gmra.mxu0 %v5491
    %v6174 = vpop.f32.mrf.mxu0
    %v6175 = vadd.f32 %v6162, %v6174
    %v6176 = vpop.f32.mrf.mxu0
    %6177 = vdwg.mxu0
    %v6178 = vld [vmem:[#allocation2 + $0x50] sm:$0xff]
    %v6179 = vld [vmem:[#allocation2 + $0x58] sm:$0xff]
    %v6180 = vpack.c.bf16 %v6178, %v6178
    %v6181 = vpack.c.bf16 %v6179, %v6179
    %6182 = vmatpush.bf16.msra.mxu0 %v5072
    %6183 = vmatpush.bf16.msra.mxu0 %v5068
    %6184 = vmatpush.bf16.msra.mxu0 %v5064
    %6185 = vmatpush.bf16.msra.mxu0 %v5060
    %6186 = vmatpush.bf16.msra.mxu0 %v5056
    %6187 = vmatpush.bf16.msra.mxu0 %v5052
    %6188 = vmatpush.bf16.msra.mxu0 %v5048
    %6189 = vmatpush.bf16.msra.mxu0 %v5044
    %6190 = vmatmul.bf16.gmra.mxu0 %v6180
    %v6191 = vpop.f32.mrf.mxu0
    %v6192 = vadd.f32 0.0, %v6191
    %v6193 = vpop.f32.mrf.mxu0
    %6194 = vdwg.mxu0
    %6195 = vmatpush.bf16.msra.mxu0 %v5104
    %6196 = vmatpush.bf16.msra.mxu0 %v5100
    %6197 = vmatpush.bf16.msra.mxu0 %v5096
    %6198 = vmatpush.bf16.msra.mxu0 %v5092
    %6199 = vmatpush.bf16.msra.mxu0 %v5088
    %6200 = vmatpush.bf16.msra.mxu0 %v5084
    %6201 = vmatpush.bf16.msra.mxu0 %v5080
    %6202 = vmatpush.bf16.msra.mxu0 %v5076
    %6203 = vmatmul.bf16.gmra.mxu0 %v6181
    %v6204 = vpop.f32.mrf.mxu0
    %v6205 = vadd.f32 %v6192, %v6204
    %v6206 = vpop.f32.mrf.mxu0
    %6207 = vdwg.mxu0
    %6208 = vmatpush.bf16.msra.mxu0 %v5073
    %6209 = vmatpush.bf16.msra.mxu0 %v5069
    %6210 = vmatpush.bf16.msra.mxu0 %v5065
    %6211 = vmatpush.bf16.msra.mxu0 %v5061
    %6212 = vmatpush.bf16.msra.mxu0 %v5057
    %6213 = vmatpush.bf16.msra.mxu0 %v5053
    %6214 = vmatpush.bf16.msra.mxu0 %v5049
    %6215 = vmatpush.bf16.msra.mxu0 %v5045
    %6216 = vmatmul.bf16.gmra.mxu0 %v6180
    %v6217 = vpop.f32.mrf.mxu0
    %v6218 = vadd.f32 0.0, %v6217
    %v6219 = vpop.f32.mrf.mxu0
    %6220 = vdwg.mxu0
    %6221 = vmatpush.bf16.msra.mxu0 %v5105
    %6222 = vmatpush.bf16.msra.mxu0 %v5101
    %6223 = vmatpush.bf16.msra.mxu0 %v5097
    %6224 = vmatpush.bf16.msra.mxu0 %v5093
    %6225 = vmatpush.bf16.msra.mxu0 %v5089
    %6226 = vmatpush.bf16.msra.mxu0 %v5085
    %6227 = vmatpush.bf16.msra.mxu0 %v5081
    %6228 = vmatpush.bf16.msra.mxu0 %v5077
    %6229 = vmatmul.bf16.gmra.mxu0 %v6181
    %v6230 = vpop.f32.mrf.mxu0
    %v6231 = vadd.f32 %v6218, %v6230
    %v6232 = vpop.f32.mrf.mxu0
    %6233 = vdwg.mxu0
    %6234 = vmatpush.bf16.msra.mxu0 %v5074
    %6235 = vmatpush.bf16.msra.mxu0 %v5070
    %6236 = vmatpush.bf16.msra.mxu0 %v5066
    %6237 = vmatpush.bf16.msra.mxu0 %v5062
    %6238 = vmatpush.bf16.msra.mxu0 %v5058
    %6239 = vmatpush.bf16.msra.mxu0 %v5054
    %6240 = vmatpush.bf16.msra.mxu0 %v5050
    %6241 = vmatpush.bf16.msra.mxu0 %v5046
    %6242 = vmatmul.bf16.gmra.mxu0 %v6180
    %v6243 = vpop.f32.mrf.mxu0
    %v6244 = vadd.f32 0.0, %v6243
    %v6245 = vpop.f32.mrf.mxu0
    %6246 = vdwg.mxu0
    %6247 = vmatpush.bf16.msra.mxu0 %v5106
    %6248 = vmatpush.bf16.msra.mxu0 %v5102
    %6249 = vmatpush.bf16.msra.mxu0 %v5098
    %6250 = vmatpush.bf16.msra.mxu0 %v5094
    %6251 = vmatpush.bf16.msra.mxu0 %v5090
    %6252 = vmatpush.bf16.msra.mxu0 %v5086
    %6253 = vmatpush.bf16.msra.mxu0 %v5082
    %6254 = vmatpush.bf16.msra.mxu0 %v5078
    %6255 = vmatmul.bf16.gmra.mxu0 %v6181
    %v6256 = vpop.f32.mrf.mxu0
    %v6257 = vadd.f32 %v6244, %v6256
    %v6258 = vpop.f32.mrf.mxu0
    %6259 = vdwg.mxu0
    %6260 = vmatpush.bf16.msra.mxu0 %v5075
    %6261 = vmatpush.bf16.msra.mxu0 %v5071
    %6262 = vmatpush.bf16.msra.mxu0 %v5067
    %6263 = vmatpush.bf16.msra.mxu0 %v5063
    %6264 = vmatpush.bf16.msra.mxu0 %v5059
    %6265 = vmatpush.bf16.msra.mxu0 %v5055
    %6266 = vmatpush.bf16.msra.mxu0 %v5051
    %6267 = vmatpush.bf16.msra.mxu0 %v5047
    %6268 = vmatmul.bf16.gmra.mxu0 %v6180
    %v6269 = vpop.f32.mrf.mxu0
    %v6270 = vadd.f32 0.0, %v6269
    %v6271 = vpop.f32.mrf.mxu0
    %6272 = vdwg.mxu0
    %6273 = vmatpush.bf16.msra.mxu0 %v5107
    %6274 = vmatpush.bf16.msra.mxu0 %v5103
    %6275 = vmatpush.bf16.msra.mxu0 %v5099
    %6276 = vmatpush.bf16.msra.mxu0 %v5095
    %6277 = vmatpush.bf16.msra.mxu0 %v5091
    %6278 = vmatpush.bf16.msra.mxu0 %v5087
    %6279 = vmatpush.bf16.msra.mxu0 %v5083
    %6280 = vmatpush.bf16.msra.mxu0 %v5079
    %6281 = vmatmul.bf16.gmra.mxu0 %v6181
    %v6282 = vpop.f32.mrf.mxu0
    %v6283 = vadd.f32 %v6270, %v6282
    %v6284 = vpop.f32.mrf.mxu0
    %6285 = vdwg.mxu0
    %v6286 = vadd.f32 %v6097, %v6205
    %v6287 = vadd.f32 %v6123, %v6231
    %v6288 = vadd.f32 %v6149, %v6257
    %v6289 = vadd.f32 %v6175, %v6283
    %v6290 = vmax.f32 %v5966, %v6286
    %v6291 = vmax.f32 %v5967, %v6287
    %v6292 = vmax.f32 %v5968, %v6288
    %v6293 = vmax.f32 %v5969, %v6289
    %v6294 = vmax.f32 %v6290, %v6292
    %v6295 = vmax.f32 %v6291, %v6293
    %v6296 = vadd.f32 %v6294, %v5608
    %v6297 = vadd.f32 %v6295, %v5609
    %v6298 = vmax.f32 %v6296, 0.0
    %v6299 = vmax.f32 %v6297, 0.0
    %v6300 = vpack.c.bf16 %v6298, %v6298
    %v6301 = vpack.c.bf16 %v6299, %v6299
    %s6302 = scalar_lea.vmem [#allocation5], 128
    %v6303 = vld [vmem:[%s6302] sm:$0xf]
    %v6304 = vld [vmem:[%s6302 + $0x4] sm:$0xf]
    %v6305 = vld [vmem:[%s6302 + $0x8] sm:$0xf]
    %v6306 = vld [vmem:[%s6302 + $0xc] sm:$0xf]
    %v6307 = vld [vmem:[%s6302 + $0x10] sm:$0xf]
    %v6308 = vld [vmem:[%s6302 + $0x14] sm:$0xf]
    %v6309 = vld [vmem:[%s6302 + $0x18] sm:$0xf]
    %v6310 = vld [vmem:[%s6302 + $0x1c] sm:$0xf]
    %v6311 = vld [vmem:[%s6302 + $0x20] sm:$0xf]
    %v6312 = vld [vmem:[%s6302 + $0x24] sm:$0xf]
    %v6313 = vld [vmem:[%s6302 + $0x28] sm:$0xf]
    %v6314 = vld [vmem:[%s6302 + $0x2c] sm:$0xf]
    %v6315 = vld [vmem:[%s6302 + $0x30] sm:$0xf]
    %v6316 = vld [vmem:[%s6302 + $0x34] sm:$0xf]
    %v6317 = vld [vmem:[%s6302 + $0x38] sm:$0xf]
    %v6318 = vld [vmem:[%s6302 + $0x3c] sm:$0xf]
    %v6319 = vld [vmem:[%s6302 + $0x40] sm:$0xf]
    %v6320 = vld [vmem:[%s6302 + $0x44] sm:$0xf]
    %v6321 = vld [vmem:[%s6302 + $0x48] sm:$0xf]
    %v6322 = vld [vmem:[%s6302 + $0x4c] sm:$0xf]
    %v6323 = vld [vmem:[%s6302 + $0x50] sm:$0xf]
    %v6324 = vld [vmem:[%s6302 + $0x54] sm:$0xf]
    %v6325 = vld [vmem:[%s6302 + $0x58] sm:$0xf]
    %v6326 = vld [vmem:[%s6302 + $0x5c] sm:$0xf]
    %v6327 = vld [vmem:[%s6302 + $0x60] sm:$0xf]
    %v6328 = vld [vmem:[%s6302 + $0x64] sm:$0xf]
    %v6329 = vld [vmem:[%s6302 + $0x68] sm:$0xf]
    %v6330 = vld [vmem:[%s6302 + $0x6c] sm:$0xf]
    %v6331 = vld [vmem:[%s6302 + $0x70] sm:$0xf]
    %v6332 = vld [vmem:[%s6302 + $0x74] sm:$0xf]
    %v6333 = vld [vmem:[%s6302 + $0x78] sm:$0xf]
    %v6334 = vld [vmem:[%s6302 + $0x7c] sm:$0xf]
    %v6367 = vunpack.c.l.b16 %v6303
    %v6368 = vunpack.c.l.b16 %v6304
    %v6369 = vunpack.c.l.b16 %v6305
    %v6370 = vunpack.c.l.b16 %v6306
    %v6371 = vunpack.c.l.b16 %v6307
    %v6372 = vunpack.c.l.b16 %v6308
    %v6373 = vunpack.c.l.b16 %v6309
    %v6374 = vunpack.c.l.b16 %v6310
    %v6375 = vunpack.c.l.b16 %v6311
    %v6376 = vunpack.c.l.b16 %v6312
    %v6377 = vunpack.c.l.b16 %v6313
    %v6378 = vunpack.c.l.b16 %v6314
    %v6379 = vunpack.c.l.b16 %v6315
    %v6380 = vunpack.c.l.b16 %v6316
    %v6381 = vunpack.c.l.b16 %v6317
    %v6382 = vunpack.c.l.b16 %v6318
    %v6383 = vunpack.c.l.b16 %v6319
    %v6384 = vunpack.c.l.b16 %v6320
    %v6385 = vunpack.c.l.b16 %v6321
    %v6386 = vunpack.c.l.b16 %v6322
    %v6387 = vunpack.c.l.b16 %v6323
    %v6388 = vunpack.c.l.b16 %v6324
    %v6389 = vunpack.c.l.b16 %v6325
    %v6390 = vunpack.c.l.b16 %v6326
    %v6391 = vunpack.c.l.b16 %v6327
    %v6392 = vunpack.c.l.b16 %v6328
    %v6393 = vunpack.c.l.b16 %v6329
    %v6394 = vunpack.c.l.b16 %v6330
    %v6395 = vunpack.c.l.b16 %v6331
    %v6396 = vunpack.c.l.b16 %v6332
    %v6397 = vunpack.c.l.b16 %v6333
    %v6398 = vunpack.c.l.b16 %v6334
    %v6399 = vpack.c.b16 %v6368, %v6367
    %v6400 = vpack.c.b16 %v6370, %v6369
    %v6401 = vpack.c.b16 %v6372, %v6371
    %v6402 = vpack.c.b16 %v6374, %v6373
    %v6403 = vpack.c.b16 %v6376, %v6375
    %v6404 = vpack.c.b16 %v6378, %v6377
    %v6405 = vpack.c.b16 %v6380, %v6379
    %v6406 = vpack.c.b16 %v6382, %v6381
    %v6407 = vpack.c.b16 %v6384, %v6383
    %v6408 = vpack.c.b16 %v6386, %v6385
    %v6409 = vpack.c.b16 %v6388, %v6387
    %v6410 = vpack.c.b16 %v6390, %v6389
    %v6411 = vpack.c.b16 %v6392, %v6391
    %v6412 = vpack.c.b16 %v6394, %v6393
    %v6413 = vpack.c.b16 %v6396, %v6395
    %v6414 = vpack.c.b16 %v6398, %v6397
    %6431 = vmatpush.bf16.msra.mxu0 %v6406
    %6432 = vmatpush.bf16.msra.mxu0 %v6405
    %6433 = vmatpush.bf16.msra.mxu0 %v6404
    %6434 = vmatpush.bf16.msra.mxu0 %v6403
    %6435 = vmatpush.bf16.msra.mxu0 %v6402
    %6436 = vmatpush.bf16.msra.mxu0 %v6401
    %6437 = vmatpush.bf16.msra.mxu0 %v6400
    %6438 = vmatpush.bf16.msra.mxu0 %v6399
    %6439 = vmatmul.bf16.gmra.mxu0 %v6300
    %v6440 = vpop.f32.mrf.mxu0
    %v6441 = vadd.f32 0.0, %v6440
    %v6442 = vpop.f32.mrf.mxu0
    %6443 = vdwg.mxu0
    %6444 = vmatpush.bf16.msra.mxu0 %v6414
    %6445 = vmatpush.bf16.msra.mxu0 %v6413
    %6446 = vmatpush.bf16.msra.mxu0 %v6412
    %6447 = vmatpush.bf16.msra.mxu0 %v6411
    %6448 = vmatpush.bf16.msra.mxu0 %v6410
    %6449 = vmatpush.bf16.msra.mxu0 %v6409
    %6450 = vmatpush.bf16.msra.mxu0 %v6408
    %6451 = vmatpush.bf16.msra.mxu0 %v6407
    %6452 = vmatmul.bf16.gmra.mxu0 %v6301
    %v6453 = vpop.f32.mrf.mxu0
    %v6454 = vadd.f32 %v6441, %v6453
    %v6455 = vpop.f32.mrf.mxu0
    %6456 = vdwg.mxu0
    %v6489 = vunpack.c.l.b16 %v5618
    %v6490 = vunpack.c.l.b16 %v5619
    %v6491 = vunpack.c.l.b16 %v5620
    %v6492 = vunpack.c.l.b16 %v5621
    %v6493 = vunpack.c.l.b16 %v5622
    %v6494 = vunpack.c.l.b16 %v5623
    %v6495 = vunpack.c.l.b16 %v5624
    %v6496 = vunpack.c.l.b16 %v5625
    %v6497 = vunpack.c.l.b16 %v5626
    %v6498 = vunpack.c.l.b16 %v5627
    %v6499 = vunpack.c.l.b16 %v5628
    %v6500 = vunpack.c.l.b16 %v5629
    %v6501 = vunpack.c.l.b16 %v5630
    %v6502 = vunpack.c.l.b16 %v5631
    %v6503 = vunpack.c.l.b16 %v5632
    %v6504 = vunpack.c.l.b16 %v5633
    %v6505 = vunpack.c.l.b16 %v5634
    %v6506 = vunpack.c.l.b16 %v5635
    %v6507 = vunpack.c.l.b16 %v5636
    %v6508 = vunpack.c.l.b16 %v5637
    %v6509 = vunpack.c.l.b16 %v5638
    %v6510 = vunpack.c.l.b16 %v5639
    %v6511 = vunpack.c.l.b16 %v5640
    %v6512 = vunpack.c.l.b16 %v5641
    %v6513 = vunpack.c.l.b16 %v5642
    %v6514 = vunpack.c.l.b16 %v5643
    %v6515 = vunpack.c.l.b16 %v5644
    %v6516 = vunpack.c.l.b16 %v5645
    %v6517 = vunpack.c.l.b16 %v5646
    %v6518 = vunpack.c.l.b16 %v5647
    %v6519 = vunpack.c.l.b16 %v5648
    %v6520 = vunpack.c.l.b16 %v5649
    %v6521 = vpack.c.b16 %v6490, %v6489
    %v6522 = vpack.c.b16 %v6492, %v6491
    %v6523 = vpack.c.b16 %v6494, %v6493
    %v6524 = vpack.c.b16 %v6496, %v6495
    %v6525 = vpack.c.b16 %v6498, %v6497
    %v6526 = vpack.c.b16 %v6500, %v6499
    %v6527 = vpack.c.b16 %v6502, %v6501
    %v6528 = vpack.c.b16 %v6504, %v6503
    %v6529 = vpack.c.b16 %v6506, %v6505
    %v6530 = vpack.c.b16 %v6508, %v6507
    %v6531 = vpack.c.b16 %v6510, %v6509
    %v6532 = vpack.c.b16 %v6512, %v6511
    %v6533 = vpack.c.b16 %v6514, %v6513
    %v6534 = vpack.c.b16 %v6516, %v6515
    %v6535 = vpack.c.b16 %v6518, %v6517
    %v6536 = vpack.c.b16 %v6520, %v6519
    %6553 = vmatpush.bf16.msra.mxu0 %v6528
    %6554 = vmatpush.bf16.msra.mxu0 %v6527
    %6555 = vmatpush.bf16.msra.mxu0 %v6526
    %6556 = vmatpush.bf16.msra.mxu0 %v6525
    %6557 = vmatpush.bf16.msra.mxu0 %v6524
    %6558 = vmatpush.bf16.msra.mxu0 %v6523
    %6559 = vmatpush.bf16.msra.mxu0 %v6522
    %6560 = vmatpush.bf16.msra.mxu0 %v6521
    %6561 = vmatmul.bf16.gmra.mxu0 %v5616
    %v6562 = vpop.f32.mrf.mxu0
    %v6563 = vadd.f32 %v6454, %v6562
    %v6564 = vpop.f32.mrf.mxu0
    %6565 = vdwg.mxu0
    %6566 = vmatpush.bf16.msra.mxu0 %v6536
    %6567 = vmatpush.bf16.msra.mxu0 %v6535
    %6568 = vmatpush.bf16.msra.mxu0 %v6534
    %6569 = vmatpush.bf16.msra.mxu0 %v6533
    %6570 = vmatpush.bf16.msra.mxu0 %v6532
    %6571 = vmatpush.bf16.msra.mxu0 %v6531
    %6572 = vmatpush.bf16.msra.mxu0 %v6530
    %6573 = vmatpush.bf16.msra.mxu0 %v6529
    %6574 = vmatmul.bf16.gmra.mxu0 %v5617
    %v6575 = vpop.f32.mrf.mxu0
    %v6576 = vadd.f32 %v6563, %v6575
    %v6577 = vpop.f32.mrf.mxu0
    %6578 = vdwg.mxu0
    %6579 = vmatpush.bf16.msra.mxu0 %v4155
    %6580 = vmatpush.bf16.msra.mxu0 %v4151
    %6581 = vmatpush.bf16.msra.mxu0 %v4147
    %6582 = vmatpush.bf16.msra.mxu0 %v4143
    %6583 = vmatpush.bf16.msra.mxu0 %v4139
    %6584 = vmatpush.bf16.msra.mxu0 %v4135
    %6585 = vmatpush.bf16.msra.mxu0 %v4131
    %6586 = vmatpush.bf16.msra.mxu0 %v4127
    %6587 = vmatmul.bf16.gmra.mxu0 %v6180
    %v6588 = vpop.f32.mrf.mxu0
    %v6589 = vadd.f32 0.0, %v6588
    %v6590 = vpop.f32.mrf.mxu0
    %6591 = vdwg.mxu0
    %6592 = vmatpush.bf16.msra.mxu0 %v4187
    %6593 = vmatpush.bf16.msra.mxu0 %v4183
    %6594 = vmatpush.bf16.msra.mxu0 %v4179
    %6595 = vmatpush.bf16.msra.mxu0 %v4175
    %6596 = vmatpush.bf16.msra.mxu0 %v4171
    %6597 = vmatpush.bf16.msra.mxu0 %v4167
    %6598 = vmatpush.bf16.msra.mxu0 %v4163
    %6599 = vmatpush.bf16.msra.mxu0 %v4159
    %6600 = vmatmul.bf16.gmra.mxu0 %v6181
    %v6601 = vpop.f32.mrf.mxu0
    %v6602 = vadd.f32 %v6589, %v6601
    %v6603 = vpop.f32.mrf.mxu0
    %6604 = vdwg.mxu0
    %6605 = vmatpush.bf16.msra.mxu0 %v4156
    %6606 = vmatpush.bf16.msra.mxu0 %v4152
    %6607 = vmatpush.bf16.msra.mxu0 %v4148
    %6608 = vmatpush.bf16.msra.mxu0 %v4144
    %6609 = vmatpush.bf16.msra.mxu0 %v4140
    %6610 = vmatpush.bf16.msra.mxu0 %v4136
    %6611 = vmatpush.bf16.msra.mxu0 %v4132
    %6612 = vmatpush.bf16.msra.mxu0 %v4128
    %6613 = vmatmul.bf16.gmra.mxu0 %v6180
    %v6614 = vpop.f32.mrf.mxu0
    %v6615 = vadd.f32 0.0, %v6614
    %v6616 = vpop.f32.mrf.mxu0
    %6617 = vdwg.mxu0
    %6618 = vmatpush.bf16.msra.mxu0 %v4188
    %6619 = vmatpush.bf16.msra.mxu0 %v4184
    %6620 = vmatpush.bf16.msra.mxu0 %v4180
    %6621 = vmatpush.bf16.msra.mxu0 %v4176
    %6622 = vmatpush.bf16.msra.mxu0 %v4172
    %6623 = vmatpush.bf16.msra.mxu0 %v4168
    %6624 = vmatpush.bf16.msra.mxu0 %v4164
    %6625 = vmatpush.bf16.msra.mxu0 %v4160
    %6626 = vmatmul.bf16.gmra.mxu0 %v6181
    %v6627 = vpop.f32.mrf.mxu0
    %v6628 = vadd.f32 %v6615, %v6627
    %v6629 = vpop.f32.mrf.mxu0
    %6630 = vdwg.mxu0
    %6631 = vmatpush.bf16.msra.mxu0 %v4157
    %6632 = vmatpush.bf16.msra.mxu0 %v4153
    %6633 = vmatpush.bf16.msra.mxu0 %v4149
    %6634 = vmatpush.bf16.msra.mxu0 %v4145
    %6635 = vmatpush.bf16.msra.mxu0 %v4141
    %6636 = vmatpush.bf16.msra.mxu0 %v4137
    %6637 = vmatpush.bf16.msra.mxu0 %v4133
    %6638 = vmatpush.bf16.msra.mxu0 %v4129
    %6639 = vmatmul.bf16.gmra.mxu0 %v6180
    %v6640 = vpop.f32.mrf.mxu0
    %v6641 = vadd.f32 0.0, %v6640
    %v6642 = vpop.f32.mrf.mxu0
    %6643 = vdwg.mxu0
    %6644 = vmatpush.bf16.msra.mxu0 %v4189
    %6645 = vmatpush.bf16.msra.mxu0 %v4185
    %6646 = vmatpush.bf16.msra.mxu0 %v4181
    %6647 = vmatpush.bf16.msra.mxu0 %v4177
    %6648 = vmatpush.bf16.msra.mxu0 %v4173
    %6649 = vmatpush.bf16.msra.mxu0 %v4169
    %6650 = vmatpush.bf16.msra.mxu0 %v4165
    %6651 = vmatpush.bf16.msra.mxu0 %v4161
    %6652 = vmatmul.bf16.gmra.mxu0 %v6181
    %v6653 = vpop.f32.mrf.mxu0
    %v6654 = vadd.f32 %v6641, %v6653
    %v6655 = vpop.f32.mrf.mxu0
    %6656 = vdwg.mxu0
    %6657 = vmatpush.bf16.msra.mxu0 %v4158
    %6658 = vmatpush.bf16.msra.mxu0 %v4154
    %6659 = vmatpush.bf16.msra.mxu0 %v4150
    %6660 = vmatpush.bf16.msra.mxu0 %v4146
    %6661 = vmatpush.bf16.msra.mxu0 %v4142
    %6662 = vmatpush.bf16.msra.mxu0 %v4138
    %6663 = vmatpush.bf16.msra.mxu0 %v4134
    %6664 = vmatpush.bf16.msra.mxu0 %v4130
    %6665 = vmatmul.bf16.gmra.mxu0 %v6180
    %v6666 = vpop.f32.mrf.mxu0
    %v6667 = vadd.f32 0.0, %v6666
    %v6668 = vpop.f32.mrf.mxu0
    %6669 = vdwg.mxu0
    %6670 = vmatpush.bf16.msra.mxu0 %v4190
    %6671 = vmatpush.bf16.msra.mxu0 %v4186
    %6672 = vmatpush.bf16.msra.mxu0 %v4182
    %6673 = vmatpush.bf16.msra.mxu0 %v4178
    %6674 = vmatpush.bf16.msra.mxu0 %v4174
    %6675 = vmatpush.bf16.msra.mxu0 %v4170
    %6676 = vmatpush.bf16.msra.mxu0 %v4166
    %6677 = vmatpush.bf16.msra.mxu0 %v4162
    %6678 = vmatmul.bf16.gmra.mxu0 %v6181
    %v6679 = vpop.f32.mrf.mxu0
    %v6680 = vadd.f32 %v6667, %v6679
    %v6681 = vpop.f32.mrf.mxu0
    %6682 = vdwg.mxu0
    %6683 = vmatpush.bf16.msra.mxu0 %v4579
    %6684 = vmatpush.bf16.msra.mxu0 %v4575
    %6685 = vmatpush.bf16.msra.mxu0 %v4571
    %6686 = vmatpush.bf16.msra.mxu0 %v4567
    %6687 = vmatpush.bf16.msra.mxu0 %v4563
    %6688 = vmatpush.bf16.msra.mxu0 %v4559
    %6689 = vmatpush.bf16.msra.mxu0 %v4555
    %6690 = vmatpush.bf16.msra.mxu0 %v4551
    %6691 = vmatmul.bf16.gmra.mxu0 %v5860
    %v6692 = vpop.f32.mrf.mxu0
    %v6693 = vadd.f32 %v6602, %v6692
    %v6694 = vpop.f32.mrf.mxu0
    %6695 = vdwg.mxu0
    %6696 = vmatpush.bf16.msra.mxu0 %v4611
    %6697 = vmatpush.bf16.msra.mxu0 %v4607
    %6698 = vmatpush.bf16.msra.mxu0 %v4603
    %6699 = vmatpush.bf16.msra.mxu0 %v4599
    %6700 = vmatpush.bf16.msra.mxu0 %v4595
    %6701 = vmatpush.bf16.msra.mxu0 %v4591
    %6702 = vmatpush.bf16.msra.mxu0 %v4587
    %6703 = vmatpush.bf16.msra.mxu0 %v4583
    %6704 = vmatmul.bf16.gmra.mxu0 %v5861
    %v6705 = vpop.f32.mrf.mxu0
    %v6706 = vadd.f32 %v6693, %v6705
    %v6707 = vpop.f32.mrf.mxu0
    %6708 = vdwg.mxu0
    %6709 = vmatpush.bf16.msra.mxu0 %v4580
    %6710 = vmatpush.bf16.msra.mxu0 %v4576
    %6711 = vmatpush.bf16.msra.mxu0 %v4572
    %6712 = vmatpush.bf16.msra.mxu0 %v4568
    %6713 = vmatpush.bf16.msra.mxu0 %v4564
    %6714 = vmatpush.bf16.msra.mxu0 %v4560
    %6715 = vmatpush.bf16.msra.mxu0 %v4556
    %6716 = vmatpush.bf16.msra.mxu0 %v4552
    %6717 = vmatmul.bf16.gmra.mxu0 %v5860
    %v6718 = vpop.f32.mrf.mxu0
    %v6719 = vadd.f32 %v6628, %v6718
    %v6720 = vpop.f32.mrf.mxu0
    %6721 = vdwg.mxu0
    %6722 = vmatpush.bf16.msra.mxu0 %v4612
    %6723 = vmatpush.bf16.msra.mxu0 %v4608
    %6724 = vmatpush.bf16.msra.mxu0 %v4604
    %6725 = vmatpush.bf16.msra.mxu0 %v4600
    %6726 = vmatpush.bf16.msra.mxu0 %v4596
    %6727 = vmatpush.bf16.msra.mxu0 %v4592
    %6728 = vmatpush.bf16.msra.mxu0 %v4588
    %6729 = vmatpush.bf16.msra.mxu0 %v4584
    %6730 = vmatmul.bf16.gmra.mxu0 %v5861
    %v6731 = vpop.f32.mrf.mxu0
    %v6732 = vadd.f32 %v6719, %v6731
    %v6733 = vpop.f32.mrf.mxu0
    %6734 = vdwg.mxu0
    %6735 = vmatpush.bf16.msra.mxu0 %v4581
    %6736 = vmatpush.bf16.msra.mxu0 %v4577
    %6737 = vmatpush.bf16.msra.mxu0 %v4573
    %6738 = vmatpush.bf16.msra.mxu0 %v4569
    %6739 = vmatpush.bf16.msra.mxu0 %v4565
    %6740 = vmatpush.bf16.msra.mxu0 %v4561
    %6741 = vmatpush.bf16.msra.mxu0 %v4557
    %6742 = vmatpush.bf16.msra.mxu0 %v4553
    %6743 = vmatmul.bf16.gmra.mxu0 %v5860
    %v6744 = vpop.f32.mrf.mxu0
    %v6745 = vadd.f32 %v6654, %v6744
    %v6746 = vpop.f32.mrf.mxu0
    %6747 = vdwg.mxu0
    %6748 = vmatpush.bf16.msra.mxu0 %v4613
    %6749 = vmatpush.bf16.msra.mxu0 %v4609
    %6750 = vmatpush.bf16.msra.mxu0 %v4605
    %6751 = vmatpush.bf16.msra.mxu0 %v4601
    %6752 = vmatpush.bf16.msra.mxu0 %v4597
    %6753 = vmatpush.bf16.msra.mxu0 %v4593
    %6754 = vmatpush.bf16.msra.mxu0 %v4589
    %6755 = vmatpush.bf16.msra.mxu0 %v4585
    %6756 = vmatmul.bf16.gmra.mxu0 %v5861
    %v6757 = vpop.f32.mrf.mxu0
    %v6758 = vadd.f32 %v6745, %v6757
    %v6759 = vpop.f32.mrf.mxu0
    %6760 = vdwg.mxu0
    %6761 = vmatpush.bf16.msra.mxu0 %v4582
    %6762 = vmatpush.bf16.msra.mxu0 %v4578
    %6763 = vmatpush.bf16.msra.mxu0 %v4574
    %6764 = vmatpush.bf16.msra.mxu0 %v4570
    %6765 = vmatpush.bf16.msra.mxu0 %v4566
    %6766 = vmatpush.bf16.msra.mxu0 %v4562
    %6767 = vmatpush.bf16.msra.mxu0 %v4558
    %6768 = vmatpush.bf16.msra.mxu0 %v4554
    %6769 = vmatmul.bf16.gmra.mxu0 %v5860
    %v6770 = vpop.f32.mrf.mxu0
    %v6771 = vadd.f32 %v6680, %v6770
    %v6772 = vpop.f32.mrf.mxu0
    %6773 = vdwg.mxu0
    %6774 = vmatpush.bf16.msra.mxu0 %v4614
    %6775 = vmatpush.bf16.msra.mxu0 %v4610
    %6776 = vmatpush.bf16.msra.mxu0 %v4606
    %6777 = vmatpush.bf16.msra.mxu0 %v4602
    %6778 = vmatpush.bf16.msra.mxu0 %v4598
    %6779 = vmatpush.bf16.msra.mxu0 %v4594
    %6780 = vmatpush.bf16.msra.mxu0 %v4590
    %6781 = vmatpush.bf16.msra.mxu0 %v4586
    %6782 = vmatmul.bf16.gmra.mxu0 %v5861
    %v6783 = vpop.f32.mrf.mxu0
    %v6784 = vadd.f32 %v6771, %v6783
    %v6785 = vpop.f32.mrf.mxu0
    %6786 = vdwg.mxu0
    %v6787 = vld [vmem:[#allocation2 + $0x60] sm:$0xff]
    %v6788 = vld [vmem:[#allocation2 + $0x68] sm:$0xff]
    %v6789 = vpack.c.bf16 %v6787, %v6787
    %v6790 = vpack.c.bf16 %v6788, %v6788
    %6791 = vmatpush.bf16.msra.mxu0 %v5072
    %6792 = vmatpush.bf16.msra.mxu0 %v5068
    %6793 = vmatpush.bf16.msra.mxu0 %v5064
    %6794 = vmatpush.bf16.msra.mxu0 %v5060
    %6795 = vmatpush.bf16.msra.mxu0 %v5056
    %6796 = vmatpush.bf16.msra.mxu0 %v5052
    %6797 = vmatpush.bf16.msra.mxu0 %v5048
    %6798 = vmatpush.bf16.msra.mxu0 %v5044
    %6799 = vmatmul.bf16.gmra.mxu0 %v6789
    %v6800 = vpop.f32.mrf.mxu0
    %v6801 = vadd.f32 0.0, %v6800
    %v6802 = vpop.f32.mrf.mxu0
    %6803 = vdwg.mxu0
    %6804 = vmatpush.bf16.msra.mxu0 %v5104
    %6805 = vmatpush.bf16.msra.mxu0 %v5100
    %6806 = vmatpush.bf16.msra.mxu0 %v5096
    %6807 = vmatpush.bf16.msra.mxu0 %v5092
    %6808 = vmatpush.bf16.msra.mxu0 %v5088
    %6809 = vmatpush.bf16.msra.mxu0 %v5084
    %6810 = vmatpush.bf16.msra.mxu0 %v5080
    %6811 = vmatpush.bf16.msra.mxu0 %v5076
    %6812 = vmatmul.bf16.gmra.mxu0 %v6790
    %v6813 = vpop.f32.mrf.mxu0
    %v6814 = vadd.f32 %v6801, %v6813
    %v6815 = vpop.f32.mrf.mxu0
    %6816 = vdwg.mxu0
    %6817 = vmatpush.bf16.msra.mxu0 %v5073
    %6818 = vmatpush.bf16.msra.mxu0 %v5069
    %6819 = vmatpush.bf16.msra.mxu0 %v5065
    %6820 = vmatpush.bf16.msra.mxu0 %v5061
    %6821 = vmatpush.bf16.msra.mxu0 %v5057
    %6822 = vmatpush.bf16.msra.mxu0 %v5053
    %6823 = vmatpush.bf16.msra.mxu0 %v5049
    %6824 = vmatpush.bf16.msra.mxu0 %v5045
    %6825 = vmatmul.bf16.gmra.mxu0 %v6789
    %v6826 = vpop.f32.mrf.mxu0
    %v6827 = vadd.f32 0.0, %v6826
    %v6828 = vpop.f32.mrf.mxu0
    %6829 = vdwg.mxu0
    %6830 = vmatpush.bf16.msra.mxu0 %v5105
    %6831 = vmatpush.bf16.msra.mxu0 %v5101
    %6832 = vmatpush.bf16.msra.mxu0 %v5097
    %6833 = vmatpush.bf16.msra.mxu0 %v5093
    %6834 = vmatpush.bf16.msra.mxu0 %v5089
    %6835 = vmatpush.bf16.msra.mxu0 %v5085
    %6836 = vmatpush.bf16.msra.mxu0 %v5081
    %6837 = vmatpush.bf16.msra.mxu0 %v5077
    %6838 = vmatmul.bf16.gmra.mxu0 %v6790
    %v6839 = vpop.f32.mrf.mxu0
    %v6840 = vadd.f32 %v6827, %v6839
    %v6841 = vpop.f32.mrf.mxu0
    %6842 = vdwg.mxu0
    %6843 = vmatpush.bf16.msra.mxu0 %v5074
    %6844 = vmatpush.bf16.msra.mxu0 %v5070
    %6845 = vmatpush.bf16.msra.mxu0 %v5066
    %6846 = vmatpush.bf16.msra.mxu0 %v5062
    %6847 = vmatpush.bf16.msra.mxu0 %v5058
    %6848 = vmatpush.bf16.msra.mxu0 %v5054
    %6849 = vmatpush.bf16.msra.mxu0 %v5050
    %6850 = vmatpush.bf16.msra.mxu0 %v5046
    %6851 = vmatmul.bf16.gmra.mxu0 %v6789
    %v6852 = vpop.f32.mrf.mxu0
    %v6853 = vadd.f32 0.0, %v6852
    %v6854 = vpop.f32.mrf.mxu0
    %6855 = vdwg.mxu0
    %6856 = vmatpush.bf16.msra.mxu0 %v5106
    %6857 = vmatpush.bf16.msra.mxu0 %v5102
    %6858 = vmatpush.bf16.msra.mxu0 %v5098
    %6859 = vmatpush.bf16.msra.mxu0 %v5094
    %6860 = vmatpush.bf16.msra.mxu0 %v5090
    %6861 = vmatpush.bf16.msra.mxu0 %v5086
    %6862 = vmatpush.bf16.msra.mxu0 %v5082
    %6863 = vmatpush.bf16.msra.mxu0 %v5078
    %6864 = vmatmul.bf16.gmra.mxu0 %v6790
    %v6865 = vpop.f32.mrf.mxu0
    %v6866 = vadd.f32 %v6853, %v6865
    %v6867 = vpop.f32.mrf.mxu0
    %6868 = vdwg.mxu0
    %6869 = vmatpush.bf16.msra.mxu0 %v5075
    %6870 = vmatpush.bf16.msra.mxu0 %v5071
    %6871 = vmatpush.bf16.msra.mxu0 %v5067
    %6872 = vmatpush.bf16.msra.mxu0 %v5063
    %6873 = vmatpush.bf16.msra.mxu0 %v5059
    %6874 = vmatpush.bf16.msra.mxu0 %v5055
    %6875 = vmatpush.bf16.msra.mxu0 %v5051
    %6876 = vmatpush.bf16.msra.mxu0 %v5047
    %6877 = vmatmul.bf16.gmra.mxu0 %v6789
    %v6878 = vpop.f32.mrf.mxu0
    %v6879 = vadd.f32 0.0, %v6878
    %v6880 = vpop.f32.mrf.mxu0
    %6881 = vdwg.mxu0
    %6882 = vmatpush.bf16.msra.mxu0 %v5107
    %6883 = vmatpush.bf16.msra.mxu0 %v5103
    %6884 = vmatpush.bf16.msra.mxu0 %v5099
    %6885 = vmatpush.bf16.msra.mxu0 %v5095
    %6886 = vmatpush.bf16.msra.mxu0 %v5091
    %6887 = vmatpush.bf16.msra.mxu0 %v5087
    %6888 = vmatpush.bf16.msra.mxu0 %v5083
    %6889 = vmatpush.bf16.msra.mxu0 %v5079
    %6890 = vmatmul.bf16.gmra.mxu0 %v6790
    %v6891 = vpop.f32.mrf.mxu0
    %v6892 = vadd.f32 %v6879, %v6891
    %v6893 = vpop.f32.mrf.mxu0
    %6894 = vdwg.mxu0
    %v6895 = vadd.f32 %v6706, %v6814
    %v6896 = vadd.f32 %v6732, %v6840
    %v6897 = vadd.f32 %v6758, %v6866
    %v6898 = vadd.f32 %v6784, %v6892
    %6899 = vmatpush.bf16.msra.mxu0 %v4155
    %6900 = vmatpush.bf16.msra.mxu0 %v4151
    %6901 = vmatpush.bf16.msra.mxu0 %v4147
    %6902 = vmatpush.bf16.msra.mxu0 %v4143
    %6903 = vmatpush.bf16.msra.mxu0 %v4139
    %6904 = vmatpush.bf16.msra.mxu0 %v4135
    %6905 = vmatpush.bf16.msra.mxu0 %v4131
    %6906 = vmatpush.bf16.msra.mxu0 %v4127
    %6907 = vmatmul.bf16.gmra.mxu0 %v6789
    %v6908 = vpop.f32.mrf.mxu0
    %v6909 = vadd.f32 0.0, %v6908
    %v6910 = vpop.f32.mrf.mxu0
    %6911 = vdwg.mxu0
    %6912 = vmatpush.bf16.msra.mxu0 %v4187
    %6913 = vmatpush.bf16.msra.mxu0 %v4183
    %6914 = vmatpush.bf16.msra.mxu0 %v4179
    %6915 = vmatpush.bf16.msra.mxu0 %v4175
    %6916 = vmatpush.bf16.msra.mxu0 %v4171
    %6917 = vmatpush.bf16.msra.mxu0 %v4167
    %6918 = vmatpush.bf16.msra.mxu0 %v4163
    %6919 = vmatpush.bf16.msra.mxu0 %v4159
    %6920 = vmatmul.bf16.gmra.mxu0 %v6790
    %v6921 = vpop.f32.mrf.mxu0
    %v6922 = vadd.f32 %v6909, %v6921
    %v6923 = vpop.f32.mrf.mxu0
    %6924 = vdwg.mxu0
    %6925 = vmatpush.bf16.msra.mxu0 %v4156
    %6926 = vmatpush.bf16.msra.mxu0 %v4152
    %6927 = vmatpush.bf16.msra.mxu0 %v4148
    %6928 = vmatpush.bf16.msra.mxu0 %v4144
    %6929 = vmatpush.bf16.msra.mxu0 %v4140
    %6930 = vmatpush.bf16.msra.mxu0 %v4136
    %6931 = vmatpush.bf16.msra.mxu0 %v4132
    %6932 = vmatpush.bf16.msra.mxu0 %v4128
    %6933 = vmatmul.bf16.gmra.mxu0 %v6789
    %v6934 = vpop.f32.mrf.mxu0
    %v6935 = vadd.f32 0.0, %v6934
    %v6936 = vpop.f32.mrf.mxu0
    %6937 = vdwg.mxu0
    %6938 = vmatpush.bf16.msra.mxu0 %v4188
    %6939 = vmatpush.bf16.msra.mxu0 %v4184
    %6940 = vmatpush.bf16.msra.mxu0 %v4180
    %6941 = vmatpush.bf16.msra.mxu0 %v4176
    %6942 = vmatpush.bf16.msra.mxu0 %v4172
    %6943 = vmatpush.bf16.msra.mxu0 %v4168
    %6944 = vmatpush.bf16.msra.mxu0 %v4164
    %6945 = vmatpush.bf16.msra.mxu0 %v4160
    %6946 = vmatmul.bf16.gmra.mxu0 %v6790
    %v6947 = vpop.f32.mrf.mxu0
    %v6948 = vadd.f32 %v6935, %v6947
    %v6949 = vpop.f32.mrf.mxu0
    %6950 = vdwg.mxu0
    %6951 = vmatpush.bf16.msra.mxu0 %v4157
    %6952 = vmatpush.bf16.msra.mxu0 %v4153
    %6953 = vmatpush.bf16.msra.mxu0 %v4149
    %6954 = vmatpush.bf16.msra.mxu0 %v4145
    %6955 = vmatpush.bf16.msra.mxu0 %v4141
    %6956 = vmatpush.bf16.msra.mxu0 %v4137
    %6957 = vmatpush.bf16.msra.mxu0 %v4133
    %6958 = vmatpush.bf16.msra.mxu0 %v4129
    %6959 = vmatmul.bf16.gmra.mxu0 %v6789
    %v6960 = vpop.f32.mrf.mxu0
    %v6961 = vadd.f32 0.0, %v6960
    %v6962 = vpop.f32.mrf.mxu0
    %6963 = vdwg.mxu0
    %6964 = vmatpush.bf16.msra.mxu0 %v4189
    %6965 = vmatpush.bf16.msra.mxu0 %v4185
    %6966 = vmatpush.bf16.msra.mxu0 %v4181
    %6967 = vmatpush.bf16.msra.mxu0 %v4177
    %6968 = vmatpush.bf16.msra.mxu0 %v4173
    %6969 = vmatpush.bf16.msra.mxu0 %v4169
    %6970 = vmatpush.bf16.msra.mxu0 %v4165
    %6971 = vmatpush.bf16.msra.mxu0 %v4161
    %6972 = vmatmul.bf16.gmra.mxu0 %v6790
    %v6973 = vpop.f32.mrf.mxu0
    %v6974 = vadd.f32 %v6961, %v6973
    %v6975 = vpop.f32.mrf.mxu0
    %6976 = vdwg.mxu0
    %6977 = vmatpush.bf16.msra.mxu0 %v4158
    %6978 = vmatpush.bf16.msra.mxu0 %v4154
    %6979 = vmatpush.bf16.msra.mxu0 %v4150
    %6980 = vmatpush.bf16.msra.mxu0 %v4146
    %6981 = vmatpush.bf16.msra.mxu0 %v4142
    %6982 = vmatpush.bf16.msra.mxu0 %v4138
    %6983 = vmatpush.bf16.msra.mxu0 %v4134
    %6984 = vmatpush.bf16.msra.mxu0 %v4130
    %6985 = vmatmul.bf16.gmra.mxu0 %v6789
    %v6986 = vpop.f32.mrf.mxu0
    %v6987 = vadd.f32 0.0, %v6986
    %v6988 = vpop.f32.mrf.mxu0
    %6989 = vdwg.mxu0
    %6990 = vmatpush.bf16.msra.mxu0 %v4190
    %6991 = vmatpush.bf16.msra.mxu0 %v4186
    %6992 = vmatpush.bf16.msra.mxu0 %v4182
    %6993 = vmatpush.bf16.msra.mxu0 %v4178
    %6994 = vmatpush.bf16.msra.mxu0 %v4174
    %6995 = vmatpush.bf16.msra.mxu0 %v4170
    %6996 = vmatpush.bf16.msra.mxu0 %v4166
    %6997 = vmatpush.bf16.msra.mxu0 %v4162
    %6998 = vmatmul.bf16.gmra.mxu0 %v6790
    %v6999 = vpop.f32.mrf.mxu0
    %v7000 = vadd.f32 %v6987, %v6999
    %v7001 = vpop.f32.mrf.mxu0
    %7002 = vdwg.mxu0
    %7003 = vmatpush.bf16.msra.mxu0 %v4579
    %7004 = vmatpush.bf16.msra.mxu0 %v4575
    %7005 = vmatpush.bf16.msra.mxu0 %v4571
    %7006 = vmatpush.bf16.msra.mxu0 %v4567
    %7007 = vmatpush.bf16.msra.mxu0 %v4563
    %7008 = vmatpush.bf16.msra.mxu0 %v4559
    %7009 = vmatpush.bf16.msra.mxu0 %v4555
    %7010 = vmatpush.bf16.msra.mxu0 %v4551
    %7011 = vmatmul.bf16.gmra.mxu0 %v6180
    %v7012 = vpop.f32.mrf.mxu0
    %v7013 = vadd.f32 %v6922, %v7012
    %v7014 = vpop.f32.mrf.mxu0
    %7015 = vdwg.mxu0
    %7016 = vmatpush.bf16.msra.mxu0 %v4611
    %7017 = vmatpush.bf16.msra.mxu0 %v4607
    %7018 = vmatpush.bf16.msra.mxu0 %v4603
    %7019 = vmatpush.bf16.msra.mxu0 %v4599
    %7020 = vmatpush.bf16.msra.mxu0 %v4595
    %7021 = vmatpush.bf16.msra.mxu0 %v4591
    %7022 = vmatpush.bf16.msra.mxu0 %v4587
    %7023 = vmatpush.bf16.msra.mxu0 %v4583
    %7024 = vmatmul.bf16.gmra.mxu0 %v6181
    %v7025 = vpop.f32.mrf.mxu0
    %v7026 = vadd.f32 %v7013, %v7025
    %v7027 = vpop.f32.mrf.mxu0
    %7028 = vdwg.mxu0
    %7029 = vmatpush.bf16.msra.mxu0 %v4580
    %7030 = vmatpush.bf16.msra.mxu0 %v4576
    %7031 = vmatpush.bf16.msra.mxu0 %v4572
    %7032 = vmatpush.bf16.msra.mxu0 %v4568
    %7033 = vmatpush.bf16.msra.mxu0 %v4564
    %7034 = vmatpush.bf16.msra.mxu0 %v4560
    %7035 = vmatpush.bf16.msra.mxu0 %v4556
    %7036 = vmatpush.bf16.msra.mxu0 %v4552
    %7037 = vmatmul.bf16.gmra.mxu0 %v6180
    %v7038 = vpop.f32.mrf.mxu0
    %v7039 = vadd.f32 %v6948, %v7038
    %v7040 = vpop.f32.mrf.mxu0
    %7041 = vdwg.mxu0
    %7042 = vmatpush.bf16.msra.mxu0 %v4612
    %7043 = vmatpush.bf16.msra.mxu0 %v4608
    %7044 = vmatpush.bf16.msra.mxu0 %v4604
    %7045 = vmatpush.bf16.msra.mxu0 %v4600
    %7046 = vmatpush.bf16.msra.mxu0 %v4596
    %7047 = vmatpush.bf16.msra.mxu0 %v4592
    %7048 = vmatpush.bf16.msra.mxu0 %v4588
    %7049 = vmatpush.bf16.msra.mxu0 %v4584
    %7050 = vmatmul.bf16.gmra.mxu0 %v6181
    %v7051 = vpop.f32.mrf.mxu0
    %v7052 = vadd.f32 %v7039, %v7051
    %v7053 = vpop.f32.mrf.mxu0
    %7054 = vdwg.mxu0
    %7055 = vmatpush.bf16.msra.mxu0 %v4581
    %7056 = vmatpush.bf16.msra.mxu0 %v4577
    %7057 = vmatpush.bf16.msra.mxu0 %v4573
    %7058 = vmatpush.bf16.msra.mxu0 %v4569
    %7059 = vmatpush.bf16.msra.mxu0 %v4565
    %7060 = vmatpush.bf16.msra.mxu0 %v4561
    %7061 = vmatpush.bf16.msra.mxu0 %v4557
    %7062 = vmatpush.bf16.msra.mxu0 %v4553
    %7063 = vmatmul.bf16.gmra.mxu0 %v6180
    %v7064 = vpop.f32.mrf.mxu0
    %v7065 = vadd.f32 %v6974, %v7064
    %v7066 = vpop.f32.mrf.mxu0
    %7067 = vdwg.mxu0
    %7068 = vmatpush.bf16.msra.mxu0 %v4613
    %7069 = vmatpush.bf16.msra.mxu0 %v4609
    %7070 = vmatpush.bf16.msra.mxu0 %v4605
    %7071 = vmatpush.bf16.msra.mxu0 %v4601
    %7072 = vmatpush.bf16.msra.mxu0 %v4597
    %7073 = vmatpush.bf16.msra.mxu0 %v4593
    %7074 = vmatpush.bf16.msra.mxu0 %v4589
    %7075 = vmatpush.bf16.msra.mxu0 %v4585
    %7076 = vmatmul.bf16.gmra.mxu0 %v6181
    %v7077 = vpop.f32.mrf.mxu0
    %v7078 = vadd.f32 %v7065, %v7077
    %v7079 = vpop.f32.mrf.mxu0
    %7080 = vdwg.mxu0
    %7081 = vmatpush.bf16.msra.mxu0 %v4582
    %7082 = vmatpush.bf16.msra.mxu0 %v4578
    %7083 = vmatpush.bf16.msra.mxu0 %v4574
    %7084 = vmatpush.bf16.msra.mxu0 %v4570
    %7085 = vmatpush.bf16.msra.mxu0 %v4566
    %7086 = vmatpush.bf16.msra.mxu0 %v4562
    %7087 = vmatpush.bf16.msra.mxu0 %v4558
    %7088 = vmatpush.bf16.msra.mxu0 %v4554
    %7089 = vmatmul.bf16.gmra.mxu0 %v6180
    %v7090 = vpop.f32.mrf.mxu0
    %v7091 = vadd.f32 %v7000, %v7090
    %v7092 = vpop.f32.mrf.mxu0
    %7093 = vdwg.mxu0
    %7094 = vmatpush.bf16.msra.mxu0 %v4614
    %7095 = vmatpush.bf16.msra.mxu0 %v4610
    %7096 = vmatpush.bf16.msra.mxu0 %v4606
    %7097 = vmatpush.bf16.msra.mxu0 %v4602
    %7098 = vmatpush.bf16.msra.mxu0 %v4598
    %7099 = vmatpush.bf16.msra.mxu0 %v4594
    %7100 = vmatpush.bf16.msra.mxu0 %v4590
    %7101 = vmatpush.bf16.msra.mxu0 %v4586
    %7102 = vmatmul.bf16.gmra.mxu0 %v6181
    %v7103 = vpop.f32.mrf.mxu0
    %v7104 = vadd.f32 %v7091, %v7103
    %v7105 = vpop.f32.mrf.mxu0
    %7106 = vdwg.mxu0
    %v7107 = vld [vmem:[#allocation2 + $0x70] sm:$0xff]
    %v7108 = vld [vmem:[#allocation2 + $0x78] sm:$0xff]
    %v7109 = vpack.c.bf16 %v7107, %v7107
    %v7110 = vpack.c.bf16 %v7108, %v7108
    %7111 = vmatpush.bf16.msra.mxu0 %v5072
    %7112 = vmatpush.bf16.msra.mxu0 %v5068
    %7113 = vmatpush.bf16.msra.mxu0 %v5064
    %7114 = vmatpush.bf16.msra.mxu0 %v5060
    %7115 = vmatpush.bf16.msra.mxu0 %v5056
    %7116 = vmatpush.bf16.msra.mxu0 %v5052
    %7117 = vmatpush.bf16.msra.mxu0 %v5048
    %7118 = vmatpush.bf16.msra.mxu0 %v5044
    %7119 = vmatmul.bf16.gmra.mxu0 %v7109
    %v7120 = vpop.f32.mrf.mxu0
    %v7121 = vadd.f32 0.0, %v7120
    %v7122 = vpop.f32.mrf.mxu0
    %7123 = vdwg.mxu0
    %7124 = vmatpush.bf16.msra.mxu0 %v5104
    %7125 = vmatpush.bf16.msra.mxu0 %v5100
    %7126 = vmatpush.bf16.msra.mxu0 %v5096
    %7127 = vmatpush.bf16.msra.mxu0 %v5092
    %7128 = vmatpush.bf16.msra.mxu0 %v5088
    %7129 = vmatpush.bf16.msra.mxu0 %v5084
    %7130 = vmatpush.bf16.msra.mxu0 %v5080
    %7131 = vmatpush.bf16.msra.mxu0 %v5076
    %7132 = vmatmul.bf16.gmra.mxu0 %v7110
    %v7133 = vpop.f32.mrf.mxu0
    %v7134 = vadd.f32 %v7121, %v7133
    %v7135 = vpop.f32.mrf.mxu0
    %7136 = vdwg.mxu0
    %7137 = vmatpush.bf16.msra.mxu0 %v5073
    %7138 = vmatpush.bf16.msra.mxu0 %v5069
    %7139 = vmatpush.bf16.msra.mxu0 %v5065
    %7140 = vmatpush.bf16.msra.mxu0 %v5061
    %7141 = vmatpush.bf16.msra.mxu0 %v5057
    %7142 = vmatpush.bf16.msra.mxu0 %v5053
    %7143 = vmatpush.bf16.msra.mxu0 %v5049
    %7144 = vmatpush.bf16.msra.mxu0 %v5045
    %7145 = vmatmul.bf16.gmra.mxu0 %v7109
    %v7146 = vpop.f32.mrf.mxu0
    %v7147 = vadd.f32 0.0, %v7146
    %v7148 = vpop.f32.mrf.mxu0
    %7149 = vdwg.mxu0
    %7150 = vmatpush.bf16.msra.mxu0 %v5105
    %7151 = vmatpush.bf16.msra.mxu0 %v5101
    %7152 = vmatpush.bf16.msra.mxu0 %v5097
    %7153 = vmatpush.bf16.msra.mxu0 %v5093
    %7154 = vmatpush.bf16.msra.mxu0 %v5089
    %7155 = vmatpush.bf16.msra.mxu0 %v5085
    %7156 = vmatpush.bf16.msra.mxu0 %v5081
    %7157 = vmatpush.bf16.msra.mxu0 %v5077
    %7158 = vmatmul.bf16.gmra.mxu0 %v7110
    %v7159 = vpop.f32.mrf.mxu0
    %v7160 = vadd.f32 %v7147, %v7159
    %v7161 = vpop.f32.mrf.mxu0
    %7162 = vdwg.mxu0
    %7163 = vmatpush.bf16.msra.mxu0 %v5074
    %7164 = vmatpush.bf16.msra.mxu0 %v5070
    %7165 = vmatpush.bf16.msra.mxu0 %v5066
    %7166 = vmatpush.bf16.msra.mxu0 %v5062
    %7167 = vmatpush.bf16.msra.mxu0 %v5058
    %7168 = vmatpush.bf16.msra.mxu0 %v5054
    %7169 = vmatpush.bf16.msra.mxu0 %v5050
    %7170 = vmatpush.bf16.msra.mxu0 %v5046
    %7171 = vmatmul.bf16.gmra.mxu0 %v7109
    %v7172 = vpop.f32.mrf.mxu0
    %v7173 = vadd.f32 0.0, %v7172
    %v7174 = vpop.f32.mrf.mxu0
    %7175 = vdwg.mxu0
    %7176 = vmatpush.bf16.msra.mxu0 %v5106
    %7177 = vmatpush.bf16.msra.mxu0 %v5102
    %7178 = vmatpush.bf16.msra.mxu0 %v5098
    %7179 = vmatpush.bf16.msra.mxu0 %v5094
    %7180 = vmatpush.bf16.msra.mxu0 %v5090
    %7181 = vmatpush.bf16.msra.mxu0 %v5086
    %7182 = vmatpush.bf16.msra.mxu0 %v5082
    %7183 = vmatpush.bf16.msra.mxu0 %v5078
    %7184 = vmatmul.bf16.gmra.mxu0 %v7110
    %v7185 = vpop.f32.mrf.mxu0
    %v7186 = vadd.f32 %v7173, %v7185
    %v7187 = vpop.f32.mrf.mxu0
    %7188 = vdwg.mxu0
    %7189 = vmatpush.bf16.msra.mxu0 %v5075
    %7190 = vmatpush.bf16.msra.mxu0 %v5071
    %7191 = vmatpush.bf16.msra.mxu0 %v5067
    %7192 = vmatpush.bf16.msra.mxu0 %v5063
    %7193 = vmatpush.bf16.msra.mxu0 %v5059
    %7194 = vmatpush.bf16.msra.mxu0 %v5055
    %7195 = vmatpush.bf16.msra.mxu0 %v5051
    %7196 = vmatpush.bf16.msra.mxu0 %v5047
    %7197 = vmatmul.bf16.gmra.mxu0 %v7109
    %v7198 = vpop.f32.mrf.mxu0
    %v7199 = vadd.f32 0.0, %v7198
    %v7200 = vpop.f32.mrf.mxu0
    %7201 = vdwg.mxu0
    %7202 = vmatpush.bf16.msra.mxu0 %v5107
    %7203 = vmatpush.bf16.msra.mxu0 %v5103
    %7204 = vmatpush.bf16.msra.mxu0 %v5099
    %7205 = vmatpush.bf16.msra.mxu0 %v5095
    %7206 = vmatpush.bf16.msra.mxu0 %v5091
    %7207 = vmatpush.bf16.msra.mxu0 %v5087
    %7208 = vmatpush.bf16.msra.mxu0 %v5083
    %7209 = vmatpush.bf16.msra.mxu0 %v5079
    %7210 = vmatmul.bf16.gmra.mxu0 %v7110
    %v7211 = vpop.f32.mrf.mxu0
    %v7212 = vadd.f32 %v7199, %v7211
    %v7213 = vpop.f32.mrf.mxu0
    %7214 = vdwg.mxu0
    %v7215 = vadd.f32 %v7026, %v7134
    %v7216 = vadd.f32 %v7052, %v7160
    %v7217 = vadd.f32 %v7078, %v7186
    %v7218 = vadd.f32 %v7104, %v7212
    %v7219 = vmax.f32 %v6895, %v7215
    %v7220 = vmax.f32 %v6896, %v7216
    %v7221 = vmax.f32 %v6897, %v7217
    %v7222 = vmax.f32 %v6898, %v7218
    %v7223 = vmax.f32 %v7219, %v7221
    %v7224 = vmax.f32 %v7220, %v7222
    %v7225 = vadd.f32 %v7223, %v5608
    %v7226 = vadd.f32 %v7224, %v5609
    %v7227 = vmax.f32 %v7225, 0.0
    %v7228 = vmax.f32 %v7226, 0.0
    %v7229 = vpack.c.bf16 %v7227, %v7227
    %v7230 = vpack.c.bf16 %v7228, %v7228
    %s7231 = scalar_lea.vmem [#allocation5], 256
    %v7232 = vld [vmem:[%s7231] sm:$0xf]
    %v7233 = vld [vmem:[%s7231 + $0x4] sm:$0xf]
    %v7234 = vld [vmem:[%s7231 + $0x8] sm:$0xf]
    %v7235 = vld [vmem:[%s7231 + $0xc] sm:$0xf]
    %v7236 = vld [vmem:[%s7231 + $0x10] sm:$0xf]
    %v7237 = vld [vmem:[%s7231 + $0x14] sm:$0xf]
    %v7238 = vld [vmem:[%s7231 + $0x18] sm:$0xf]
    %v7239 = vld [vmem:[%s7231 + $0x1c] sm:$0xf]
    %v7240 = vld [vmem:[%s7231 + $0x20] sm:$0xf]
    %v7241 = vld [vmem:[%s7231 + $0x24] sm:$0xf]
    %v7242 = vld [vmem:[%s7231 + $0x28] sm:$0xf]
    %v7243 = vld [vmem:[%s7231 + $0x2c] sm:$0xf]
    %v7244 = vld [vmem:[%s7231 + $0x30] sm:$0xf]
    %v7245 = vld [vmem:[%s7231 + $0x34] sm:$0xf]
    %v7246 = vld [vmem:[%s7231 + $0x38] sm:$0xf]
    %v7247 = vld [vmem:[%s7231 + $0x3c] sm:$0xf]
    %v7248 = vld [vmem:[%s7231 + $0x40] sm:$0xf]
    %v7249 = vld [vmem:[%s7231 + $0x44] sm:$0xf]
    %v7250 = vld [vmem:[%s7231 + $0x48] sm:$0xf]
    %v7251 = vld [vmem:[%s7231 + $0x4c] sm:$0xf]
    %v7252 = vld [vmem:[%s7231 + $0x50] sm:$0xf]
    %v7253 = vld [vmem:[%s7231 + $0x54] sm:$0xf]
    %v7254 = vld [vmem:[%s7231 + $0x58] sm:$0xf]
    %v7255 = vld [vmem:[%s7231 + $0x5c] sm:$0xf]
    %v7256 = vld [vmem:[%s7231 + $0x60] sm:$0xf]
    %v7257 = vld [vmem:[%s7231 + $0x64] sm:$0xf]
    %v7258 = vld [vmem:[%s7231 + $0x68] sm:$0xf]
    %v7259 = vld [vmem:[%s7231 + $0x6c] sm:$0xf]
    %v7260 = vld [vmem:[%s7231 + $0x70] sm:$0xf]
    %v7261 = vld [vmem:[%s7231 + $0x74] sm:$0xf]
    %v7262 = vld [vmem:[%s7231 + $0x78] sm:$0xf]
    %v7263 = vld [vmem:[%s7231 + $0x7c] sm:$0xf]
    %v7296 = vunpack.c.l.b16 %v7232
    %v7297 = vunpack.c.l.b16 %v7233
    %v7298 = vunpack.c.l.b16 %v7234
    %v7299 = vunpack.c.l.b16 %v7235
    %v7300 = vunpack.c.l.b16 %v7236
    %v7301 = vunpack.c.l.b16 %v7237
    %v7302 = vunpack.c.l.b16 %v7238
    %v7303 = vunpack.c.l.b16 %v7239
    %v7304 = vunpack.c.l.b16 %v7240
    %v7305 = vunpack.c.l.b16 %v7241
    %v7306 = vunpack.c.l.b16 %v7242
    %v7307 = vunpack.c.l.b16 %v7243
    %v7308 = vunpack.c.l.b16 %v7244
    %v7309 = vunpack.c.l.b16 %v7245
    %v7310 = vunpack.c.l.b16 %v7246
    %v7311 = vunpack.c.l.b16 %v7247
    %v7312 = vunpack.c.l.b16 %v7248
    %v7313 = vunpack.c.l.b16 %v7249
    %v7314 = vunpack.c.l.b16 %v7250
    %v7315 = vunpack.c.l.b16 %v7251
    %v7316 = vunpack.c.l.b16 %v7252
    %v7317 = vunpack.c.l.b16 %v7253
    %v7318 = vunpack.c.l.b16 %v7254
    %v7319 = vunpack.c.l.b16 %v7255
    %v7320 = vunpack.c.l.b16 %v7256
    %v7321 = vunpack.c.l.b16 %v7257
    %v7322 = vunpack.c.l.b16 %v7258
    %v7323 = vunpack.c.l.b16 %v7259
    %v7324 = vunpack.c.l.b16 %v7260
    %v7325 = vunpack.c.l.b16 %v7261
    %v7326 = vunpack.c.l.b16 %v7262
    %v7327 = vunpack.c.l.b16 %v7263
    %v7328 = vpack.c.b16 %v7297, %v7296
    %v7329 = vpack.c.b16 %v7299, %v7298
    %v7330 = vpack.c.b16 %v7301, %v7300
    %v7331 = vpack.c.b16 %v7303, %v7302
    %v7332 = vpack.c.b16 %v7305, %v7304
    %v7333 = vpack.c.b16 %v7307, %v7306
    %v7334 = vpack.c.b16 %v7309, %v7308
    %v7335 = vpack.c.b16 %v7311, %v7310
    %v7336 = vpack.c.b16 %v7313, %v7312
    %v7337 = vpack.c.b16 %v7315, %v7314
    %v7338 = vpack.c.b16 %v7317, %v7316
    %v7339 = vpack.c.b16 %v7319, %v7318
    %v7340 = vpack.c.b16 %v7321, %v7320
    %v7341 = vpack.c.b16 %v7323, %v7322
    %v7342 = vpack.c.b16 %v7325, %v7324
    %v7343 = vpack.c.b16 %v7327, %v7326
    %7360 = vmatpush.bf16.msra.mxu0 %v7335
    %7361 = vmatpush.bf16.msra.mxu0 %v7334
    %7362 = vmatpush.bf16.msra.mxu0 %v7333
    %7363 = vmatpush.bf16.msra.mxu0 %v7332
    %7364 = vmatpush.bf16.msra.mxu0 %v7331
    %7365 = vmatpush.bf16.msra.mxu0 %v7330
    %7366 = vmatpush.bf16.msra.mxu0 %v7329
    %7367 = vmatpush.bf16.msra.mxu0 %v7328
    %7368 = vmatmul.bf16.gmra.mxu0 %v7229
    %v7369 = vpop.f32.mrf.mxu0
    %v7370 = vadd.f32 0.0, %v7369
    %v7371 = vpop.f32.mrf.mxu0
    %7372 = vdwg.mxu0
    %7373 = vmatpush.bf16.msra.mxu0 %v7343
    %7374 = vmatpush.bf16.msra.mxu0 %v7342
    %7375 = vmatpush.bf16.msra.mxu0 %v7341
    %7376 = vmatpush.bf16.msra.mxu0 %v7340
    %7377 = vmatpush.bf16.msra.mxu0 %v7339
    %7378 = vmatpush.bf16.msra.mxu0 %v7338
    %7379 = vmatpush.bf16.msra.mxu0 %v7337
    %7380 = vmatpush.bf16.msra.mxu0 %v7336
    %7381 = vmatmul.bf16.gmra.mxu0 %v7230
    %v7382 = vpop.f32.mrf.mxu0
    %v7383 = vadd.f32 %v7370, %v7382
    %v7384 = vpop.f32.mrf.mxu0
    %7385 = vdwg.mxu0
    %v7386 = vadd.f32 %v6576, %v7383
    %7387 = vmatpush.bf16.msra.mxu0 %v4155
    %7388 = vmatpush.bf16.msra.mxu0 %v4151
    %7389 = vmatpush.bf16.msra.mxu0 %v4147
    %7390 = vmatpush.bf16.msra.mxu0 %v4143
    %7391 = vmatpush.bf16.msra.mxu0 %v4139
    %7392 = vmatpush.bf16.msra.mxu0 %v4135
    %7393 = vmatpush.bf16.msra.mxu0 %v4131
    %7394 = vmatpush.bf16.msra.mxu0 %v4127
    %7395 = vmatmul.bf16.gmra.mxu0 %v7109
    %v7396 = vpop.f32.mrf.mxu0
    %v7397 = vadd.f32 0.0, %v7396
    %v7398 = vpop.f32.mrf.mxu0
    %7399 = vdwg.mxu0
    %7400 = vmatpush.bf16.msra.mxu0 %v4187
    %7401 = vmatpush.bf16.msra.mxu0 %v4183
    %7402 = vmatpush.bf16.msra.mxu0 %v4179
    %7403 = vmatpush.bf16.msra.mxu0 %v4175
    %7404 = vmatpush.bf16.msra.mxu0 %v4171
    %7405 = vmatpush.bf16.msra.mxu0 %v4167
    %7406 = vmatpush.bf16.msra.mxu0 %v4163
    %7407 = vmatpush.bf16.msra.mxu0 %v4159
    %7408 = vmatmul.bf16.gmra.mxu0 %v7110
    %v7409 = vpop.f32.mrf.mxu0
    %v7410 = vadd.f32 %v7397, %v7409
    %v7411 = vpop.f32.mrf.mxu0
    %7412 = vdwg.mxu0
    %7413 = vmatpush.bf16.msra.mxu0 %v4156
    %7414 = vmatpush.bf16.msra.mxu0 %v4152
    %7415 = vmatpush.bf16.msra.mxu0 %v4148
    %7416 = vmatpush.bf16.msra.mxu0 %v4144
    %7417 = vmatpush.bf16.msra.mxu0 %v4140
    %7418 = vmatpush.bf16.msra.mxu0 %v4136
    %7419 = vmatpush.bf16.msra.mxu0 %v4132
    %7420 = vmatpush.bf16.msra.mxu0 %v4128
    %7421 = vmatmul.bf16.gmra.mxu0 %v7109
    %v7422 = vpop.f32.mrf.mxu0
    %v7423 = vadd.f32 0.0, %v7422
    %v7424 = vpop.f32.mrf.mxu0
    %7425 = vdwg.mxu0
    %7426 = vmatpush.bf16.msra.mxu0 %v4188
    %7427 = vmatpush.bf16.msra.mxu0 %v4184
    %7428 = vmatpush.bf16.msra.mxu0 %v4180
    %7429 = vmatpush.bf16.msra.mxu0 %v4176
    %7430 = vmatpush.bf16.msra.mxu0 %v4172
    %7431 = vmatpush.bf16.msra.mxu0 %v4168
    %7432 = vmatpush.bf16.msra.mxu0 %v4164
    %7433 = vmatpush.bf16.msra.mxu0 %v4160
    %7434 = vmatmul.bf16.gmra.mxu0 %v7110
    %v7435 = vpop.f32.mrf.mxu0
    %v7436 = vadd.f32 %v7423, %v7435
    %v7437 = vpop.f32.mrf.mxu0
    %7438 = vdwg.mxu0
    %7439 = vmatpush.bf16.msra.mxu0 %v4157
    %7440 = vmatpush.bf16.msra.mxu0 %v4153
    %7441 = vmatpush.bf16.msra.mxu0 %v4149
    %7442 = vmatpush.bf16.msra.mxu0 %v4145
    %7443 = vmatpush.bf16.msra.mxu0 %v4141
    %7444 = vmatpush.bf16.msra.mxu0 %v4137
    %7445 = vmatpush.bf16.msra.mxu0 %v4133
    %7446 = vmatpush.bf16.msra.mxu0 %v4129
    %7447 = vmatmul.bf16.gmra.mxu0 %v7109
    %v7448 = vpop.f32.mrf.mxu0
    %v7449 = vadd.f32 0.0, %v7448
    %v7450 = vpop.f32.mrf.mxu0
    %7451 = vdwg.mxu0
    %7452 = vmatpush.bf16.msra.mxu0 %v4189
    %7453 = vmatpush.bf16.msra.mxu0 %v4185
    %7454 = vmatpush.bf16.msra.mxu0 %v4181
    %7455 = vmatpush.bf16.msra.mxu0 %v4177
    %7456 = vmatpush.bf16.msra.mxu0 %v4173
    %7457 = vmatpush.bf16.msra.mxu0 %v4169
    %7458 = vmatpush.bf16.msra.mxu0 %v4165
    %7459 = vmatpush.bf16.msra.mxu0 %v4161
    %7460 = vmatmul.bf16.gmra.mxu0 %v7110
    %v7461 = vpop.f32.mrf.mxu0
    %v7462 = vadd.f32 %v7449, %v7461
    %v7463 = vpop.f32.mrf.mxu0
    %7464 = vdwg.mxu0
    %7465 = vmatpush.bf16.msra.mxu0 %v4158
    %7466 = vmatpush.bf16.msra.mxu0 %v4154
    %7467 = vmatpush.bf16.msra.mxu0 %v4150
    %7468 = vmatpush.bf16.msra.mxu0 %v4146
    %7469 = vmatpush.bf16.msra.mxu0 %v4142
    %7470 = vmatpush.bf16.msra.mxu0 %v4138
    %7471 = vmatpush.bf16.msra.mxu0 %v4134
    %7472 = vmatpush.bf16.msra.mxu0 %v4130
    %7473 = vmatmul.bf16.gmra.mxu0 %v7109
    %v7474 = vpop.f32.mrf.mxu0
    %v7475 = vadd.f32 0.0, %v7474
    %v7476 = vpop.f32.mrf.mxu0
    %7477 = vdwg.mxu0
    %7478 = vmatpush.bf16.msra.mxu0 %v4190
    %7479 = vmatpush.bf16.msra.mxu0 %v4186
    %7480 = vmatpush.bf16.msra.mxu0 %v4182
    %7481 = vmatpush.bf16.msra.mxu0 %v4178
    %7482 = vmatpush.bf16.msra.mxu0 %v4174
    %7483 = vmatpush.bf16.msra.mxu0 %v4170
    %7484 = vmatpush.bf16.msra.mxu0 %v4166
    %7485 = vmatpush.bf16.msra.mxu0 %v4162
    %7486 = vmatmul.bf16.gmra.mxu0 %v7110
    %v7487 = vpop.f32.mrf.mxu0
    %v7488 = vadd.f32 %v7475, %v7487
    %v7489 = vpop.f32.mrf.mxu0
    %7490 = vdwg.mxu0
    %7491 = vmatpush.bf16.msra.mxu0 %v4579
    %7492 = vmatpush.bf16.msra.mxu0 %v4575
    %7493 = vmatpush.bf16.msra.mxu0 %v4571
    %7494 = vmatpush.bf16.msra.mxu0 %v4567
    %7495 = vmatpush.bf16.msra.mxu0 %v4563
    %7496 = vmatpush.bf16.msra.mxu0 %v4559
    %7497 = vmatpush.bf16.msra.mxu0 %v4555
    %7498 = vmatpush.bf16.msra.mxu0 %v4551
    %7499 = vmatmul.bf16.gmra.mxu0 %v6789
    %v7500 = vpop.f32.mrf.mxu0
    %v7501 = vadd.f32 %v7410, %v7500
    %v7502 = vpop.f32.mrf.mxu0
    %7503 = vdwg.mxu0
    %7504 = vmatpush.bf16.msra.mxu0 %v4611
    %7505 = vmatpush.bf16.msra.mxu0 %v4607
    %7506 = vmatpush.bf16.msra.mxu0 %v4603
    %7507 = vmatpush.bf16.msra.mxu0 %v4599
    %7508 = vmatpush.bf16.msra.mxu0 %v4595
    %7509 = vmatpush.bf16.msra.mxu0 %v4591
    %7510 = vmatpush.bf16.msra.mxu0 %v4587
    %7511 = vmatpush.bf16.msra.mxu0 %v4583
    %7512 = vmatmul.bf16.gmra.mxu0 %v6790
    %v7513 = vpop.f32.mrf.mxu0
    %v7514 = vadd.f32 %v7501, %v7513
    %v7515 = vpop.f32.mrf.mxu0
    %7516 = vdwg.mxu0
    %7517 = vmatpush.bf16.msra.mxu0 %v4580
    %7518 = vmatpush.bf16.msra.mxu0 %v4576
    %7519 = vmatpush.bf16.msra.mxu0 %v4572
    %7520 = vmatpush.bf16.msra.mxu0 %v4568
    %7521 = vmatpush.bf16.msra.mxu0 %v4564
    %7522 = vmatpush.bf16.msra.mxu0 %v4560
    %7523 = vmatpush.bf16.msra.mxu0 %v4556
    %7524 = vmatpush.bf16.msra.mxu0 %v4552
    %7525 = vmatmul.bf16.gmra.mxu0 %v6789
    %v7526 = vpop.f32.mrf.mxu0
    %v7527 = vadd.f32 %v7436, %v7526
    %v7528 = vpop.f32.mrf.mxu0
    %7529 = vdwg.mxu0
    %7530 = vmatpush.bf16.msra.mxu0 %v4612
    %7531 = vmatpush.bf16.msra.mxu0 %v4608
    %7532 = vmatpush.bf16.msra.mxu0 %v4604
    %7533 = vmatpush.bf16.msra.mxu0 %v4600
    %7534 = vmatpush.bf16.msra.mxu0 %v4596
    %7535 = vmatpush.bf16.msra.mxu0 %v4592
    %7536 = vmatpush.bf16.msra.mxu0 %v4588
    %7537 = vmatpush.bf16.msra.mxu0 %v4584
    %7538 = vmatmul.bf16.gmra.mxu0 %v6790
    %v7539 = vpop.f32.mrf.mxu0
    %v7540 = vadd.f32 %v7527, %v7539
    %v7541 = vpop.f32.mrf.mxu0
    %7542 = vdwg.mxu0
    %7543 = vmatpush.bf16.msra.mxu0 %v4581
    %7544 = vmatpush.bf16.msra.mxu0 %v4577
    %7545 = vmatpush.bf16.msra.mxu0 %v4573
    %7546 = vmatpush.bf16.msra.mxu0 %v4569
    %7547 = vmatpush.bf16.msra.mxu0 %v4565
    %7548 = vmatpush.bf16.msra.mxu0 %v4561
    %7549 = vmatpush.bf16.msra.mxu0 %v4557
    %7550 = vmatpush.bf16.msra.mxu0 %v4553
    %7551 = vmatmul.bf16.gmra.mxu0 %v6789
    %v7552 = vpop.f32.mrf.mxu0
    %v7553 = vadd.f32 %v7462, %v7552
    %v7554 = vpop.f32.mrf.mxu0
    %7555 = vdwg.mxu0
    %7556 = vmatpush.bf16.msra.mxu0 %v4613
    %7557 = vmatpush.bf16.msra.mxu0 %v4609
    %7558 = vmatpush.bf16.msra.mxu0 %v4605
    %7559 = vmatpush.bf16.msra.mxu0 %v4601
    %7560 = vmatpush.bf16.msra.mxu0 %v4597
    %7561 = vmatpush.bf16.msra.mxu0 %v4593
    %7562 = vmatpush.bf16.msra.mxu0 %v4589
    %7563 = vmatpush.bf16.msra.mxu0 %v4585
    %7564 = vmatmul.bf16.gmra.mxu0 %v6790
    %v7565 = vpop.f32.mrf.mxu0
    %v7566 = vadd.f32 %v7553, %v7565
    %v7567 = vpop.f32.mrf.mxu0
    %7568 = vdwg.mxu0
    %7569 = vmatpush.bf16.msra.mxu0 %v4582
    %7570 = vmatpush.bf16.msra.mxu0 %v4578
    %7571 = vmatpush.bf16.msra.mxu0 %v4574
    %7572 = vmatpush.bf16.msra.mxu0 %v4570
    %7573 = vmatpush.bf16.msra.mxu0 %v4566
    %7574 = vmatpush.bf16.msra.mxu0 %v4562
    %7575 = vmatpush.bf16.msra.mxu0 %v4558
    %7576 = vmatpush.bf16.msra.mxu0 %v4554
    %7577 = vmatmul.bf16.gmra.mxu0 %v6789
    %v7578 = vpop.f32.mrf.mxu0
    %v7579 = vadd.f32 %v7488, %v7578
    %v7580 = vpop.f32.mrf.mxu0
    %7581 = vdwg.mxu0
    %7582 = vmatpush.bf16.msra.mxu0 %v4614
    %7583 = vmatpush.bf16.msra.mxu0 %v4610
    %7584 = vmatpush.bf16.msra.mxu0 %v4606
    %7585 = vmatpush.bf16.msra.mxu0 %v4602
    %7586 = vmatpush.bf16.msra.mxu0 %v4598
    %7587 = vmatpush.bf16.msra.mxu0 %v4594
    %7588 = vmatpush.bf16.msra.mxu0 %v4590
    %7589 = vmatpush.bf16.msra.mxu0 %v4586
    %7590 = vmatmul.bf16.gmra.mxu0 %v6790
    %v7591 = vpop.f32.mrf.mxu0
    %v7592 = vadd.f32 %v7579, %v7591
    %v7593 = vpop.f32.mrf.mxu0
    %7594 = vdwg.mxu0
    %v7595 = vld [vmem:[#allocation2 + $0x80] sm:$0xff]
    %v7596 = vld [vmem:[#allocation2 + $0x88] sm:$0xff]
    %v7597 = vpack.c.bf16 %v7595, %v7595
    %v7598 = vpack.c.bf16 %v7596, %v7596
    %7599 = vmatpush.bf16.msra.mxu0 %v5072
    %7600 = vmatpush.bf16.msra.mxu0 %v5068
    %7601 = vmatpush.bf16.msra.mxu0 %v5064
    %7602 = vmatpush.bf16.msra.mxu0 %v5060
    %7603 = vmatpush.bf16.msra.mxu0 %v5056
    %7604 = vmatpush.bf16.msra.mxu0 %v5052
    %7605 = vmatpush.bf16.msra.mxu0 %v5048
    %7606 = vmatpush.bf16.msra.mxu0 %v5044
    %7607 = vmatmul.bf16.gmra.mxu0 %v7597
    %v7608 = vpop.f32.mrf.mxu0
    %v7609 = vadd.f32 0.0, %v7608
    %v7610 = vpop.f32.mrf.mxu0
    %7611 = vdwg.mxu0
    %7612 = vmatpush.bf16.msra.mxu0 %v5104
    %7613 = vmatpush.bf16.msra.mxu0 %v5100
    %7614 = vmatpush.bf16.msra.mxu0 %v5096
    %7615 = vmatpush.bf16.msra.mxu0 %v5092
    %7616 = vmatpush.bf16.msra.mxu0 %v5088
    %7617 = vmatpush.bf16.msra.mxu0 %v5084
    %7618 = vmatpush.bf16.msra.mxu0 %v5080
    %7619 = vmatpush.bf16.msra.mxu0 %v5076
    %7620 = vmatmul.bf16.gmra.mxu0 %v7598
    %v7621 = vpop.f32.mrf.mxu0
    %v7622 = vadd.f32 %v7609, %v7621
    %v7623 = vpop.f32.mrf.mxu0
    %7624 = vdwg.mxu0
    %7625 = vmatpush.bf16.msra.mxu0 %v5073
    %7626 = vmatpush.bf16.msra.mxu0 %v5069
    %7627 = vmatpush.bf16.msra.mxu0 %v5065
    %7628 = vmatpush.bf16.msra.mxu0 %v5061
    %7629 = vmatpush.bf16.msra.mxu0 %v5057
    %7630 = vmatpush.bf16.msra.mxu0 %v5053
    %7631 = vmatpush.bf16.msra.mxu0 %v5049
    %7632 = vmatpush.bf16.msra.mxu0 %v5045
    %7633 = vmatmul.bf16.gmra.mxu0 %v7597
    %v7634 = vpop.f32.mrf.mxu0
    %v7635 = vadd.f32 0.0, %v7634
    %v7636 = vpop.f32.mrf.mxu0
    %7637 = vdwg.mxu0
    %7638 = vmatpush.bf16.msra.mxu0 %v5105
    %7639 = vmatpush.bf16.msra.mxu0 %v5101
    %7640 = vmatpush.bf16.msra.mxu0 %v5097
    %7641 = vmatpush.bf16.msra.mxu0 %v5093
    %7642 = vmatpush.bf16.msra.mxu0 %v5089
    %7643 = vmatpush.bf16.msra.mxu0 %v5085
    %7644 = vmatpush.bf16.msra.mxu0 %v5081
    %7645 = vmatpush.bf16.msra.mxu0 %v5077
    %7646 = vmatmul.bf16.gmra.mxu0 %v7598
    %v7647 = vpop.f32.mrf.mxu0
    %v7648 = vadd.f32 %v7635, %v7647
    %v7649 = vpop.f32.mrf.mxu0
    %7650 = vdwg.mxu0
    %7651 = vmatpush.bf16.msra.mxu0 %v5074
    %7652 = vmatpush.bf16.msra.mxu0 %v5070
    %7653 = vmatpush.bf16.msra.mxu0 %v5066
    %7654 = vmatpush.bf16.msra.mxu0 %v5062
    %7655 = vmatpush.bf16.msra.mxu0 %v5058
    %7656 = vmatpush.bf16.msra.mxu0 %v5054
    %7657 = vmatpush.bf16.msra.mxu0 %v5050
    %7658 = vmatpush.bf16.msra.mxu0 %v5046
    %7659 = vmatmul.bf16.gmra.mxu0 %v7597
    %v7660 = vpop.f32.mrf.mxu0
    %v7661 = vadd.f32 0.0, %v7660
    %v7662 = vpop.f32.mrf.mxu0
    %7663 = vdwg.mxu0
    %7664 = vmatpush.bf16.msra.mxu0 %v5106
    %7665 = vmatpush.bf16.msra.mxu0 %v5102
    %7666 = vmatpush.bf16.msra.mxu0 %v5098
    %7667 = vmatpush.bf16.msra.mxu0 %v5094
    %7668 = vmatpush.bf16.msra.mxu0 %v5090
    %7669 = vmatpush.bf16.msra.mxu0 %v5086
    %7670 = vmatpush.bf16.msra.mxu0 %v5082
    %7671 = vmatpush.bf16.msra.mxu0 %v5078
    %7672 = vmatmul.bf16.gmra.mxu0 %v7598
    %v7673 = vpop.f32.mrf.mxu0
    %v7674 = vadd.f32 %v7661, %v7673
    %v7675 = vpop.f32.mrf.mxu0
    %7676 = vdwg.mxu0
    %7677 = vmatpush.bf16.msra.mxu0 %v5075
    %7678 = vmatpush.bf16.msra.mxu0 %v5071
    %7679 = vmatpush.bf16.msra.mxu0 %v5067
    %7680 = vmatpush.bf16.msra.mxu0 %v5063
    %7681 = vmatpush.bf16.msra.mxu0 %v5059
    %7682 = vmatpush.bf16.msra.mxu0 %v5055
    %7683 = vmatpush.bf16.msra.mxu0 %v5051
    %7684 = vmatpush.bf16.msra.mxu0 %v5047
    %7685 = vmatmul.bf16.gmra.mxu0 %v7597
    %v7686 = vpop.f32.mrf.mxu0
    %v7687 = vadd.f32 0.0, %v7686
    %v7688 = vpop.f32.mrf.mxu0
    %7689 = vdwg.mxu0
    %7690 = vmatpush.bf16.msra.mxu0 %v5107
    %7691 = vmatpush.bf16.msra.mxu0 %v5103
    %7692 = vmatpush.bf16.msra.mxu0 %v5099
    %7693 = vmatpush.bf16.msra.mxu0 %v5095
    %7694 = vmatpush.bf16.msra.mxu0 %v5091
    %7695 = vmatpush.bf16.msra.mxu0 %v5087
    %7696 = vmatpush.bf16.msra.mxu0 %v5083
    %7697 = vmatpush.bf16.msra.mxu0 %v5079
    %7698 = vmatmul.bf16.gmra.mxu0 %v7598
    %v7699 = vpop.f32.mrf.mxu0
    %v7700 = vadd.f32 %v7687, %v7699
    %v7701 = vpop.f32.mrf.mxu0
    %7702 = vdwg.mxu0
    %v7703 = vadd.f32 %v7514, %v7622
    %v7704 = vadd.f32 %v7540, %v7648
    %v7705 = vadd.f32 %v7566, %v7674
    %v7706 = vadd.f32 %v7592, %v7700
    %7707 = vmatpush.bf16.msra.mxu0 %v4155
    %7708 = vmatpush.bf16.msra.mxu0 %v4151
    %7709 = vmatpush.bf16.msra.mxu0 %v4147
    %7710 = vmatpush.bf16.msra.mxu0 %v4143
    %7711 = vmatpush.bf16.msra.mxu0 %v4139
    %7712 = vmatpush.bf16.msra.mxu0 %v4135
    %7713 = vmatpush.bf16.msra.mxu0 %v4131
    %7714 = vmatpush.bf16.msra.mxu0 %v4127
    %7715 = vmatmul.bf16.gmra.mxu0 %v7597
    %v7716 = vpop.f32.mrf.mxu0
    %v7717 = vadd.f32 0.0, %v7716
    %v7718 = vpop.f32.mrf.mxu0
    %7719 = vdwg.mxu0
    %7720 = vmatpush.bf16.msra.mxu0 %v4187
    %7721 = vmatpush.bf16.msra.mxu0 %v4183
    %7722 = vmatpush.bf16.msra.mxu0 %v4179
    %7723 = vmatpush.bf16.msra.mxu0 %v4175
    %7724 = vmatpush.bf16.msra.mxu0 %v4171
    %7725 = vmatpush.bf16.msra.mxu0 %v4167
    %7726 = vmatpush.bf16.msra.mxu0 %v4163
    %7727 = vmatpush.bf16.msra.mxu0 %v4159
    %7728 = vmatmul.bf16.gmra.mxu0 %v7598
    %v7729 = vpop.f32.mrf.mxu0
    %v7730 = vadd.f32 %v7717, %v7729
    %v7731 = vpop.f32.mrf.mxu0
    %7732 = vdwg.mxu0
    %7733 = vmatpush.bf16.msra.mxu0 %v4156
    %7734 = vmatpush.bf16.msra.mxu0 %v4152
    %7735 = vmatpush.bf16.msra.mxu0 %v4148
    %7736 = vmatpush.bf16.msra.mxu0 %v4144
    %7737 = vmatpush.bf16.msra.mxu0 %v4140
    %7738 = vmatpush.bf16.msra.mxu0 %v4136
    %7739 = vmatpush.bf16.msra.mxu0 %v4132
    %7740 = vmatpush.bf16.msra.mxu0 %v4128
    %7741 = vmatmul.bf16.gmra.mxu0 %v7597
    %v7742 = vpop.f32.mrf.mxu0
    %v7743 = vadd.f32 0.0, %v7742
    %v7744 = vpop.f32.mrf.mxu0
    %7745 = vdwg.mxu0
    %7746 = vmatpush.bf16.msra.mxu0 %v4188
    %7747 = vmatpush.bf16.msra.mxu0 %v4184
    %7748 = vmatpush.bf16.msra.mxu0 %v4180
    %7749 = vmatpush.bf16.msra.mxu0 %v4176
    %7750 = vmatpush.bf16.msra.mxu0 %v4172
    %7751 = vmatpush.bf16.msra.mxu0 %v4168
    %7752 = vmatpush.bf16.msra.mxu0 %v4164
    %7753 = vmatpush.bf16.msra.mxu0 %v4160
    %7754 = vmatmul.bf16.gmra.mxu0 %v7598
    %v7755 = vpop.f32.mrf.mxu0
    %v7756 = vadd.f32 %v7743, %v7755
    %v7757 = vpop.f32.mrf.mxu0
    %7758 = vdwg.mxu0
    %7759 = vmatpush.bf16.msra.mxu0 %v4157
    %7760 = vmatpush.bf16.msra.mxu0 %v4153
    %7761 = vmatpush.bf16.msra.mxu0 %v4149
    %7762 = vmatpush.bf16.msra.mxu0 %v4145
    %7763 = vmatpush.bf16.msra.mxu0 %v4141
    %7764 = vmatpush.bf16.msra.mxu0 %v4137
    %7765 = vmatpush.bf16.msra.mxu0 %v4133
    %7766 = vmatpush.bf16.msra.mxu0 %v4129
    %7767 = vmatmul.bf16.gmra.mxu0 %v7597
    %v7768 = vpop.f32.mrf.mxu0
    %v7769 = vadd.f32 0.0, %v7768
    %v7770 = vpop.f32.mrf.mxu0
    %7771 = vdwg.mxu0
    %7772 = vmatpush.bf16.msra.mxu0 %v4189
    %7773 = vmatpush.bf16.msra.mxu0 %v4185
    %7774 = vmatpush.bf16.msra.mxu0 %v4181
    %7775 = vmatpush.bf16.msra.mxu0 %v4177
    %7776 = vmatpush.bf16.msra.mxu0 %v4173
    %7777 = vmatpush.bf16.msra.mxu0 %v4169
    %7778 = vmatpush.bf16.msra.mxu0 %v4165
    %7779 = vmatpush.bf16.msra.mxu0 %v4161
    %7780 = vmatmul.bf16.gmra.mxu0 %v7598
    %v7781 = vpop.f32.mrf.mxu0
    %v7782 = vadd.f32 %v7769, %v7781
    %v7783 = vpop.f32.mrf.mxu0
    %7784 = vdwg.mxu0
    %7785 = vmatpush.bf16.msra.mxu0 %v4158
    %7786 = vmatpush.bf16.msra.mxu0 %v4154
    %7787 = vmatpush.bf16.msra.mxu0 %v4150
    %7788 = vmatpush.bf16.msra.mxu0 %v4146
    %7789 = vmatpush.bf16.msra.mxu0 %v4142
    %7790 = vmatpush.bf16.msra.mxu0 %v4138
    %7791 = vmatpush.bf16.msra.mxu0 %v4134
    %7792 = vmatpush.bf16.msra.mxu0 %v4130
    %7793 = vmatmul.bf16.gmra.mxu0 %v7597
    %v7794 = vpop.f32.mrf.mxu0
    %v7795 = vadd.f32 0.0, %v7794
    %v7796 = vpop.f32.mrf.mxu0
    %7797 = vdwg.mxu0
    %7798 = vmatpush.bf16.msra.mxu0 %v4190
    %7799 = vmatpush.bf16.msra.mxu0 %v4186
    %7800 = vmatpush.bf16.msra.mxu0 %v4182
    %7801 = vmatpush.bf16.msra.mxu0 %v4178
    %7802 = vmatpush.bf16.msra.mxu0 %v4174
    %7803 = vmatpush.bf16.msra.mxu0 %v4170
    %7804 = vmatpush.bf16.msra.mxu0 %v4166
    %7805 = vmatpush.bf16.msra.mxu0 %v4162
    %7806 = vmatmul.bf16.gmra.mxu0 %v7598
    %v7807 = vpop.f32.mrf.mxu0
    %v7808 = vadd.f32 %v7795, %v7807
    %v7809 = vpop.f32.mrf.mxu0
    %7810 = vdwg.mxu0
    %7811 = vmatpush.bf16.msra.mxu0 %v4579
    %7812 = vmatpush.bf16.msra.mxu0 %v4575
    %7813 = vmatpush.bf16.msra.mxu0 %v4571
    %7814 = vmatpush.bf16.msra.mxu0 %v4567
    %7815 = vmatpush.bf16.msra.mxu0 %v4563
    %7816 = vmatpush.bf16.msra.mxu0 %v4559
    %7817 = vmatpush.bf16.msra.mxu0 %v4555
    %7818 = vmatpush.bf16.msra.mxu0 %v4551
    %7819 = vmatmul.bf16.gmra.mxu0 %v7109
    %v7820 = vpop.f32.mrf.mxu0
    %v7821 = vadd.f32 %v7730, %v7820
    %v7822 = vpop.f32.mrf.mxu0
    %7823 = vdwg.mxu0
    %7824 = vmatpush.bf16.msra.mxu0 %v4611
    %7825 = vmatpush.bf16.msra.mxu0 %v4607
    %7826 = vmatpush.bf16.msra.mxu0 %v4603
    %7827 = vmatpush.bf16.msra.mxu0 %v4599
    %7828 = vmatpush.bf16.msra.mxu0 %v4595
    %7829 = vmatpush.bf16.msra.mxu0 %v4591
    %7830 = vmatpush.bf16.msra.mxu0 %v4587
    %7831 = vmatpush.bf16.msra.mxu0 %v4583
    %7832 = vmatmul.bf16.gmra.mxu0 %v7110
    %v7833 = vpop.f32.mrf.mxu0
    %v7834 = vadd.f32 %v7821, %v7833
    %v7835 = vpop.f32.mrf.mxu0
    %7836 = vdwg.mxu0
    %7837 = vmatpush.bf16.msra.mxu0 %v4580
    %7838 = vmatpush.bf16.msra.mxu0 %v4576
    %7839 = vmatpush.bf16.msra.mxu0 %v4572
    %7840 = vmatpush.bf16.msra.mxu0 %v4568
    %7841 = vmatpush.bf16.msra.mxu0 %v4564
    %7842 = vmatpush.bf16.msra.mxu0 %v4560
    %7843 = vmatpush.bf16.msra.mxu0 %v4556
    %7844 = vmatpush.bf16.msra.mxu0 %v4552
    %7845 = vmatmul.bf16.gmra.mxu0 %v7109
    %v7846 = vpop.f32.mrf.mxu0
    %v7847 = vadd.f32 %v7756, %v7846
    %v7848 = vpop.f32.mrf.mxu0
    %7849 = vdwg.mxu0
    %7850 = vmatpush.bf16.msra.mxu0 %v4612
    %7851 = vmatpush.bf16.msra.mxu0 %v4608
    %7852 = vmatpush.bf16.msra.mxu0 %v4604
    %7853 = vmatpush.bf16.msra.mxu0 %v4600
    %7854 = vmatpush.bf16.msra.mxu0 %v4596
    %7855 = vmatpush.bf16.msra.mxu0 %v4592
    %7856 = vmatpush.bf16.msra.mxu0 %v4588
    %7857 = vmatpush.bf16.msra.mxu0 %v4584
    %7858 = vmatmul.bf16.gmra.mxu0 %v7110
    %v7859 = vpop.f32.mrf.mxu0
    %v7860 = vadd.f32 %v7847, %v7859
    %v7861 = vpop.f32.mrf.mxu0
    %7862 = vdwg.mxu0
    %7863 = vmatpush.bf16.msra.mxu0 %v4581
    %7864 = vmatpush.bf16.msra.mxu0 %v4577
    %7865 = vmatpush.bf16.msra.mxu0 %v4573
    %7866 = vmatpush.bf16.msra.mxu0 %v4569
    %7867 = vmatpush.bf16.msra.mxu0 %v4565
    %7868 = vmatpush.bf16.msra.mxu0 %v4561
    %7869 = vmatpush.bf16.msra.mxu0 %v4557
    %7870 = vmatpush.bf16.msra.mxu0 %v4553
    %7871 = vmatmul.bf16.gmra.mxu0 %v7109
    %v7872 = vpop.f32.mrf.mxu0
    %v7873 = vadd.f32 %v7782, %v7872
    %v7874 = vpop.f32.mrf.mxu0
    %7875 = vdwg.mxu0
    %7876 = vmatpush.bf16.msra.mxu0 %v4613
    %7877 = vmatpush.bf16.msra.mxu0 %v4609
    %7878 = vmatpush.bf16.msra.mxu0 %v4605
    %7879 = vmatpush.bf16.msra.mxu0 %v4601
    %7880 = vmatpush.bf16.msra.mxu0 %v4597
    %7881 = vmatpush.bf16.msra.mxu0 %v4593
    %7882 = vmatpush.bf16.msra.mxu0 %v4589
    %7883 = vmatpush.bf16.msra.mxu0 %v4585
    %7884 = vmatmul.bf16.gmra.mxu0 %v7110
    %v7885 = vpop.f32.mrf.mxu0
    %v7886 = vadd.f32 %v7873, %v7885
    %v7887 = vpop.f32.mrf.mxu0
    %7888 = vdwg.mxu0
    %7889 = vmatpush.bf16.msra.mxu0 %v4582
    %7890 = vmatpush.bf16.msra.mxu0 %v4578
    %7891 = vmatpush.bf16.msra.mxu0 %v4574
    %7892 = vmatpush.bf16.msra.mxu0 %v4570
    %7893 = vmatpush.bf16.msra.mxu0 %v4566
    %7894 = vmatpush.bf16.msra.mxu0 %v4562
    %7895 = vmatpush.bf16.msra.mxu0 %v4558
    %7896 = vmatpush.bf16.msra.mxu0 %v4554
    %7897 = vmatmul.bf16.gmra.mxu0 %v7109
    %v7898 = vpop.f32.mrf.mxu0
    %v7899 = vadd.f32 %v7808, %v7898
    %v7900 = vpop.f32.mrf.mxu0
    %7901 = vdwg.mxu0
    %7902 = vmatpush.bf16.msra.mxu0 %v4614
    %7903 = vmatpush.bf16.msra.mxu0 %v4610
    %7904 = vmatpush.bf16.msra.mxu0 %v4606
    %7905 = vmatpush.bf16.msra.mxu0 %v4602
    %7906 = vmatpush.bf16.msra.mxu0 %v4598
    %7907 = vmatpush.bf16.msra.mxu0 %v4594
    %7908 = vmatpush.bf16.msra.mxu0 %v4590
    %7909 = vmatpush.bf16.msra.mxu0 %v4586
    %7910 = vmatmul.bf16.gmra.mxu0 %v7110
    %v7911 = vpop.f32.mrf.mxu0
    %v7912 = vadd.f32 %v7899, %v7911
    %v7913 = vpop.f32.mrf.mxu0
    %7914 = vdwg.mxu0
    %v7915 = vld [vmem:[#allocation2 + $0x90] sm:$0xff]
    %v7916 = vld [vmem:[#allocation2 + $0x98] sm:$0xff]
    %v7917 = vpack.c.bf16 %v7915, %v7915
    %v7918 = vpack.c.bf16 %v7916, %v7916
    %7919 = vmatpush.bf16.msra.mxu0 %v5072
    %7920 = vmatpush.bf16.msra.mxu0 %v5068
    %7921 = vmatpush.bf16.msra.mxu0 %v5064
    %7922 = vmatpush.bf16.msra.mxu0 %v5060
    %7923 = vmatpush.bf16.msra.mxu0 %v5056
    %7924 = vmatpush.bf16.msra.mxu0 %v5052
    %7925 = vmatpush.bf16.msra.mxu0 %v5048
    %7926 = vmatpush.bf16.msra.mxu0 %v5044
    %7927 = vmatmul.bf16.gmra.mxu0 %v7917
    %v7928 = vpop.f32.mrf.mxu0
    %v7929 = vadd.f32 0.0, %v7928
    %v7930 = vpop.f32.mrf.mxu0
    %7931 = vdwg.mxu0
    %7932 = vmatpush.bf16.msra.mxu0 %v5104
    %7933 = vmatpush.bf16.msra.mxu0 %v5100
    %7934 = vmatpush.bf16.msra.mxu0 %v5096
    %7935 = vmatpush.bf16.msra.mxu0 %v5092
    %7936 = vmatpush.bf16.msra.mxu0 %v5088
    %7937 = vmatpush.bf16.msra.mxu0 %v5084
    %7938 = vmatpush.bf16.msra.mxu0 %v5080
    %7939 = vmatpush.bf16.msra.mxu0 %v5076
    %7940 = vmatmul.bf16.gmra.mxu0 %v7918
    %v7941 = vpop.f32.mrf.mxu0
    %v7942 = vadd.f32 %v7929, %v7941
    %v7943 = vpop.f32.mrf.mxu0
    %7944 = vdwg.mxu0
    %7945 = vmatpush.bf16.msra.mxu0 %v5073
    %7946 = vmatpush.bf16.msra.mxu0 %v5069
    %7947 = vmatpush.bf16.msra.mxu0 %v5065
    %7948 = vmatpush.bf16.msra.mxu0 %v5061
    %7949 = vmatpush.bf16.msra.mxu0 %v5057
    %7950 = vmatpush.bf16.msra.mxu0 %v5053
    %7951 = vmatpush.bf16.msra.mxu0 %v5049
    %7952 = vmatpush.bf16.msra.mxu0 %v5045
    %7953 = vmatmul.bf16.gmra.mxu0 %v7917
    %v7954 = vpop.f32.mrf.mxu0
    %v7955 = vadd.f32 0.0, %v7954
    %v7956 = vpop.f32.mrf.mxu0
    %7957 = vdwg.mxu0
    %7958 = vmatpush.bf16.msra.mxu0 %v5105
    %7959 = vmatpush.bf16.msra.mxu0 %v5101
    %7960 = vmatpush.bf16.msra.mxu0 %v5097
    %7961 = vmatpush.bf16.msra.mxu0 %v5093
    %7962 = vmatpush.bf16.msra.mxu0 %v5089
    %7963 = vmatpush.bf16.msra.mxu0 %v5085
    %7964 = vmatpush.bf16.msra.mxu0 %v5081
    %7965 = vmatpush.bf16.msra.mxu0 %v5077
    %7966 = vmatmul.bf16.gmra.mxu0 %v7918
    %v7967 = vpop.f32.mrf.mxu0
    %v7968 = vadd.f32 %v7955, %v7967
    %v7969 = vpop.f32.mrf.mxu0
    %7970 = vdwg.mxu0
    %7971 = vmatpush.bf16.msra.mxu0 %v5074
    %7972 = vmatpush.bf16.msra.mxu0 %v5070
    %7973 = vmatpush.bf16.msra.mxu0 %v5066
    %7974 = vmatpush.bf16.msra.mxu0 %v5062
    %7975 = vmatpush.bf16.msra.mxu0 %v5058
    %7976 = vmatpush.bf16.msra.mxu0 %v5054
    %7977 = vmatpush.bf16.msra.mxu0 %v5050
    %7978 = vmatpush.bf16.msra.mxu0 %v5046
    %7979 = vmatmul.bf16.gmra.mxu0 %v7917
    %v7980 = vpop.f32.mrf.mxu0
    %v7981 = vadd.f32 0.0, %v7980
    %v7982 = vpop.f32.mrf.mxu0
    %7983 = vdwg.mxu0
    %7984 = vmatpush.bf16.msra.mxu0 %v5106
    %7985 = vmatpush.bf16.msra.mxu0 %v5102
    %7986 = vmatpush.bf16.msra.mxu0 %v5098
    %7987 = vmatpush.bf16.msra.mxu0 %v5094
    %7988 = vmatpush.bf16.msra.mxu0 %v5090
    %7989 = vmatpush.bf16.msra.mxu0 %v5086
    %7990 = vmatpush.bf16.msra.mxu0 %v5082
    %7991 = vmatpush.bf16.msra.mxu0 %v5078
    %7992 = vmatmul.bf16.gmra.mxu0 %v7918
    %v7993 = vpop.f32.mrf.mxu0
    %v7994 = vadd.f32 %v7981, %v7993
    %v7995 = vpop.f32.mrf.mxu0
    %7996 = vdwg.mxu0
    %7997 = vmatpush.bf16.msra.mxu0 %v5075
    %7998 = vmatpush.bf16.msra.mxu0 %v5071
    %7999 = vmatpush.bf16.msra.mxu0 %v5067
    %8000 = vmatpush.bf16.msra.mxu0 %v5063
    %8001 = vmatpush.bf16.msra.mxu0 %v5059
    %8002 = vmatpush.bf16.msra.mxu0 %v5055
    %8003 = vmatpush.bf16.msra.mxu0 %v5051
    %8004 = vmatpush.bf16.msra.mxu0 %v5047
    %8005 = vmatmul.bf16.gmra.mxu0 %v7917
    %v8006 = vpop.f32.mrf.mxu0
    %v8007 = vadd.f32 0.0, %v8006
    %v8008 = vpop.f32.mrf.mxu0
    %8009 = vdwg.mxu0
    %8010 = vmatpush.bf16.msra.mxu0 %v5107
    %8011 = vmatpush.bf16.msra.mxu0 %v5103
    %8012 = vmatpush.bf16.msra.mxu0 %v5099
    %8013 = vmatpush.bf16.msra.mxu0 %v5095
    %8014 = vmatpush.bf16.msra.mxu0 %v5091
    %8015 = vmatpush.bf16.msra.mxu0 %v5087
    %8016 = vmatpush.bf16.msra.mxu0 %v5083
    %8017 = vmatpush.bf16.msra.mxu0 %v5079
    %8018 = vmatmul.bf16.gmra.mxu0 %v7918
    %v8019 = vpop.f32.mrf.mxu0
    %v8020 = vadd.f32 %v8007, %v8019
    %v8021 = vpop.f32.mrf.mxu0
    %8022 = vdwg.mxu0
    %v8023 = vadd.f32 %v7834, %v7942
    %v8024 = vadd.f32 %v7860, %v7968
    %v8025 = vadd.f32 %v7886, %v7994
    %v8026 = vadd.f32 %v7912, %v8020
    %v8027 = vmax.f32 %v7703, %v8023
    %v8028 = vmax.f32 %v7704, %v8024
    %v8029 = vmax.f32 %v7705, %v8025
    %v8030 = vmax.f32 %v7706, %v8026
    %v8031 = vmax.f32 %v8027, %v8029
    %v8032 = vmax.f32 %v8028, %v8030
    %v8033 = vadd.f32 %v8031, %v5608
    %v8034 = vadd.f32 %v8032, %v5609
    %v8035 = vmax.f32 %v8033, 0.0
    %v8036 = vmax.f32 %v8034, 0.0
    %v8037 = vpack.c.bf16 %v8035, %v8035
    %v8038 = vpack.c.bf16 %v8036, %v8036
    %s8039 = scalar_lea.vmem [#allocation5], 384
    %v8040 = vld [vmem:[%s8039] sm:$0xf]
    %v8041 = vld [vmem:[%s8039 + $0x4] sm:$0xf]
    %v8042 = vld [vmem:[%s8039 + $0x8] sm:$0xf]
    %v8043 = vld [vmem:[%s8039 + $0xc] sm:$0xf]
    %v8044 = vld [vmem:[%s8039 + $0x10] sm:$0xf]
    %v8045 = vld [vmem:[%s8039 + $0x14] sm:$0xf]
    %v8046 = vld [vmem:[%s8039 + $0x18] sm:$0xf]
    %v8047 = vld [vmem:[%s8039 + $0x1c] sm:$0xf]
    %v8048 = vld [vmem:[%s8039 + $0x20] sm:$0xf]
    %v8049 = vld [vmem:[%s8039 + $0x24] sm:$0xf]
    %v8050 = vld [vmem:[%s8039 + $0x28] sm:$0xf]
    %v8051 = vld [vmem:[%s8039 + $0x2c] sm:$0xf]
    %v8052 = vld [vmem:[%s8039 + $0x30] sm:$0xf]
    %v8053 = vld [vmem:[%s8039 + $0x34] sm:$0xf]
    %v8054 = vld [vmem:[%s8039 + $0x38] sm:$0xf]
    %v8055 = vld [vmem:[%s8039 + $0x3c] sm:$0xf]
    %v8056 = vld [vmem:[%s8039 + $0x40] sm:$0xf]
    %v8057 = vld [vmem:[%s8039 + $0x44] sm:$0xf]
    %v8058 = vld [vmem:[%s8039 + $0x48] sm:$0xf]
    %v8059 = vld [vmem:[%s8039 + $0x4c] sm:$0xf]
    %v8060 = vld [vmem:[%s8039 + $0x50] sm:$0xf]
    %v8061 = vld [vmem:[%s8039 + $0x54] sm:$0xf]
    %v8062 = vld [vmem:[%s8039 + $0x58] sm:$0xf]
    %v8063 = vld [vmem:[%s8039 + $0x5c] sm:$0xf]
    %v8064 = vld [vmem:[%s8039 + $0x60] sm:$0xf]
    %v8065 = vld [vmem:[%s8039 + $0x64] sm:$0xf]
    %v8066 = vld [vmem:[%s8039 + $0x68] sm:$0xf]
    %v8067 = vld [vmem:[%s8039 + $0x6c] sm:$0xf]
    %v8068 = vld [vmem:[%s8039 + $0x70] sm:$0xf]
    %v8069 = vld [vmem:[%s8039 + $0x74] sm:$0xf]
    %v8070 = vld [vmem:[%s8039 + $0x78] sm:$0xf]
    %v8071 = vld [vmem:[%s8039 + $0x7c] sm:$0xf]
    %v8104 = vunpack.c.l.b16 %v8040
    %v8105 = vunpack.c.l.b16 %v8041
    %v8106 = vunpack.c.l.b16 %v8042
    %v8107 = vunpack.c.l.b16 %v8043
    %v8108 = vunpack.c.l.b16 %v8044
    %v8109 = vunpack.c.l.b16 %v8045
    %v8110 = vunpack.c.l.b16 %v8046
    %v8111 = vunpack.c.l.b16 %v8047
    %v8112 = vunpack.c.l.b16 %v8048
    %v8113 = vunpack.c.l.b16 %v8049
    %v8114 = vunpack.c.l.b16 %v8050
    %v8115 = vunpack.c.l.b16 %v8051
    %v8116 = vunpack.c.l.b16 %v8052
    %v8117 = vunpack.c.l.b16 %v8053
    %v8118 = vunpack.c.l.b16 %v8054
    %v8119 = vunpack.c.l.b16 %v8055
    %v8120 = vunpack.c.l.b16 %v8056
    %v8121 = vunpack.c.l.b16 %v8057
    %v8122 = vunpack.c.l.b16 %v8058
    %v8123 = vunpack.c.l.b16 %v8059
    %v8124 = vunpack.c.l.b16 %v8060
    %v8125 = vunpack.c.l.b16 %v8061
    %v8126 = vunpack.c.l.b16 %v8062
    %v8127 = vunpack.c.l.b16 %v8063
    %v8128 = vunpack.c.l.b16 %v8064
    %v8129 = vunpack.c.l.b16 %v8065
    %v8130 = vunpack.c.l.b16 %v8066
    %v8131 = vunpack.c.l.b16 %v8067
    %v8132 = vunpack.c.l.b16 %v8068
    %v8133 = vunpack.c.l.b16 %v8069
    %v8134 = vunpack.c.l.b16 %v8070
    %v8135 = vunpack.c.l.b16 %v8071
    %v8136 = vpack.c.b16 %v8105, %v8104
    %v8137 = vpack.c.b16 %v8107, %v8106
    %v8138 = vpack.c.b16 %v8109, %v8108
    %v8139 = vpack.c.b16 %v8111, %v8110
    %v8140 = vpack.c.b16 %v8113, %v8112
    %v8141 = vpack.c.b16 %v8115, %v8114
    %v8142 = vpack.c.b16 %v8117, %v8116
    %v8143 = vpack.c.b16 %v8119, %v8118
    %v8144 = vpack.c.b16 %v8121, %v8120
    %v8145 = vpack.c.b16 %v8123, %v8122
    %v8146 = vpack.c.b16 %v8125, %v8124
    %v8147 = vpack.c.b16 %v8127, %v8126
    %v8148 = vpack.c.b16 %v8129, %v8128
    %v8149 = vpack.c.b16 %v8131, %v8130
    %v8150 = vpack.c.b16 %v8133, %v8132
    %v8151 = vpack.c.b16 %v8135, %v8134
    %8168 = vmatpush.bf16.msra.mxu0 %v8143
    %8169 = vmatpush.bf16.msra.mxu0 %v8142
    %8170 = vmatpush.bf16.msra.mxu0 %v8141
    %8171 = vmatpush.bf16.msra.mxu0 %v8140
    %8172 = vmatpush.bf16.msra.mxu0 %v8139
    %8173 = vmatpush.bf16.msra.mxu0 %v8138
    %8174 = vmatpush.bf16.msra.mxu0 %v8137
    %8175 = vmatpush.bf16.msra.mxu0 %v8136
    %8176 = vmatmul.bf16.gmra.mxu0 %v8037
    %v8177 = vpop.f32.mrf.mxu0
    %v8178 = vadd.f32 0.0, %v8177
    %v8179 = vpop.f32.mrf.mxu0
    %8180 = vdwg.mxu0
    %8181 = vmatpush.bf16.msra.mxu0 %v8151
    %8182 = vmatpush.bf16.msra.mxu0 %v8150
    %8183 = vmatpush.bf16.msra.mxu0 %v8149
    %8184 = vmatpush.bf16.msra.mxu0 %v8148
    %8185 = vmatpush.bf16.msra.mxu0 %v8147
    %8186 = vmatpush.bf16.msra.mxu0 %v8146
    %8187 = vmatpush.bf16.msra.mxu0 %v8145
    %8188 = vmatpush.bf16.msra.mxu0 %v8144
    %8189 = vmatmul.bf16.gmra.mxu0 %v8038
    %v8190 = vpop.f32.mrf.mxu0
    %v8191 = vadd.f32 %v8178, %v8190
    %v8192 = vpop.f32.mrf.mxu0
    %8193 = vdwg.mxu0
    %v8194 = vadd.f32 %v7386, %v8191
    %8195 = vmatpush.bf16.msra.mxu0 %v4155
    %8196 = vmatpush.bf16.msra.mxu0 %v4151
    %8197 = vmatpush.bf16.msra.mxu0 %v4147
    %8198 = vmatpush.bf16.msra.mxu0 %v4143
    %8199 = vmatpush.bf16.msra.mxu0 %v4139
    %8200 = vmatpush.bf16.msra.mxu0 %v4135
    %8201 = vmatpush.bf16.msra.mxu0 %v4131
    %8202 = vmatpush.bf16.msra.mxu0 %v4127
    %8203 = vmatmul.bf16.gmra.mxu0 %v7917
    %v8204 = vpop.f32.mrf.mxu0
    %v8205 = vadd.f32 0.0, %v8204
    %v8206 = vpop.f32.mrf.mxu0
    %8207 = vdwg.mxu0
    %8208 = vmatpush.bf16.msra.mxu0 %v4187
    %8209 = vmatpush.bf16.msra.mxu0 %v4183
    %8210 = vmatpush.bf16.msra.mxu0 %v4179
    %8211 = vmatpush.bf16.msra.mxu0 %v4175
    %8212 = vmatpush.bf16.msra.mxu0 %v4171
    %8213 = vmatpush.bf16.msra.mxu0 %v4167
    %8214 = vmatpush.bf16.msra.mxu0 %v4163
    %8215 = vmatpush.bf16.msra.mxu0 %v4159
    %8216 = vmatmul.bf16.gmra.mxu0 %v7918
    %v8217 = vpop.f32.mrf.mxu0
    %v8218 = vadd.f32 %v8205, %v8217
    %v8219 = vpop.f32.mrf.mxu0
    %8220 = vdwg.mxu0
    %8221 = vmatpush.bf16.msra.mxu0 %v4156
    %8222 = vmatpush.bf16.msra.mxu0 %v4152
    %8223 = vmatpush.bf16.msra.mxu0 %v4148
    %8224 = vmatpush.bf16.msra.mxu0 %v4144
    %8225 = vmatpush.bf16.msra.mxu0 %v4140
    %8226 = vmatpush.bf16.msra.mxu0 %v4136
    %8227 = vmatpush.bf16.msra.mxu0 %v4132
    %8228 = vmatpush.bf16.msra.mxu0 %v4128
    %8229 = vmatmul.bf16.gmra.mxu0 %v7917
    %v8230 = vpop.f32.mrf.mxu0
    %v8231 = vadd.f32 0.0, %v8230
    %v8232 = vpop.f32.mrf.mxu0
    %8233 = vdwg.mxu0
    %8234 = vmatpush.bf16.msra.mxu0 %v4188
    %8235 = vmatpush.bf16.msra.mxu0 %v4184
    %8236 = vmatpush.bf16.msra.mxu0 %v4180
    %8237 = vmatpush.bf16.msra.mxu0 %v4176
    %8238 = vmatpush.bf16.msra.mxu0 %v4172
    %8239 = vmatpush.bf16.msra.mxu0 %v4168
    %8240 = vmatpush.bf16.msra.mxu0 %v4164
    %8241 = vmatpush.bf16.msra.mxu0 %v4160
    %8242 = vmatmul.bf16.gmra.mxu0 %v7918
    %v8243 = vpop.f32.mrf.mxu0
    %v8244 = vadd.f32 %v8231, %v8243
    %v8245 = vpop.f32.mrf.mxu0
    %8246 = vdwg.mxu0
    %8247 = vmatpush.bf16.msra.mxu0 %v4157
    %8248 = vmatpush.bf16.msra.mxu0 %v4153
    %8249 = vmatpush.bf16.msra.mxu0 %v4149
    %8250 = vmatpush.bf16.msra.mxu0 %v4145
    %8251 = vmatpush.bf16.msra.mxu0 %v4141
    %8252 = vmatpush.bf16.msra.mxu0 %v4137
    %8253 = vmatpush.bf16.msra.mxu0 %v4133
    %8254 = vmatpush.bf16.msra.mxu0 %v4129
    %8255 = vmatmul.bf16.gmra.mxu0 %v7917
    %v8256 = vpop.f32.mrf.mxu0
    %v8257 = vadd.f32 0.0, %v8256
    %v8258 = vpop.f32.mrf.mxu0
    %8259 = vdwg.mxu0
    %8260 = vmatpush.bf16.msra.mxu0 %v4189
    %8261 = vmatpush.bf16.msra.mxu0 %v4185
    %8262 = vmatpush.bf16.msra.mxu0 %v4181
    %8263 = vmatpush.bf16.msra.mxu0 %v4177
    %8264 = vmatpush.bf16.msra.mxu0 %v4173
    %8265 = vmatpush.bf16.msra.mxu0 %v4169
    %8266 = vmatpush.bf16.msra.mxu0 %v4165
    %8267 = vmatpush.bf16.msra.mxu0 %v4161
    %8268 = vmatmul.bf16.gmra.mxu0 %v7918
    %v8269 = vpop.f32.mrf.mxu0
    %v8270 = vadd.f32 %v8257, %v8269
    %v8271 = vpop.f32.mrf.mxu0
    %8272 = vdwg.mxu0
    %8273 = vmatpush.bf16.msra.mxu0 %v4158
    %8274 = vmatpush.bf16.msra.mxu0 %v4154
    %8275 = vmatpush.bf16.msra.mxu0 %v4150
    %8276 = vmatpush.bf16.msra.mxu0 %v4146
    %8277 = vmatpush.bf16.msra.mxu0 %v4142
    %8278 = vmatpush.bf16.msra.mxu0 %v4138
    %8279 = vmatpush.bf16.msra.mxu0 %v4134
    %8280 = vmatpush.bf16.msra.mxu0 %v4130
    %8281 = vmatmul.bf16.gmra.mxu0 %v7917
    %v8282 = vpop.f32.mrf.mxu0
    %v8283 = vadd.f32 0.0, %v8282
    %v8284 = vpop.f32.mrf.mxu0
    %8285 = vdwg.mxu0
    %8286 = vmatpush.bf16.msra.mxu0 %v4190
    %8287 = vmatpush.bf16.msra.mxu0 %v4186
    %8288 = vmatpush.bf16.msra.mxu0 %v4182
    %8289 = vmatpush.bf16.msra.mxu0 %v4178
    %8290 = vmatpush.bf16.msra.mxu0 %v4174
    %8291 = vmatpush.bf16.msra.mxu0 %v4170
    %8292 = vmatpush.bf16.msra.mxu0 %v4166
    %8293 = vmatpush.bf16.msra.mxu0 %v4162
    %8294 = vmatmul.bf16.gmra.mxu0 %v7918
    %v8295 = vpop.f32.mrf.mxu0
    %v8296 = vadd.f32 %v8283, %v8295
    %v8297 = vpop.f32.mrf.mxu0
    %8298 = vdwg.mxu0
    %8299 = vmatpush.bf16.msra.mxu0 %v4579
    %8300 = vmatpush.bf16.msra.mxu0 %v4575
    %8301 = vmatpush.bf16.msra.mxu0 %v4571
    %8302 = vmatpush.bf16.msra.mxu0 %v4567
    %8303 = vmatpush.bf16.msra.mxu0 %v4563
    %8304 = vmatpush.bf16.msra.mxu0 %v4559
    %8305 = vmatpush.bf16.msra.mxu0 %v4555
    %8306 = vmatpush.bf16.msra.mxu0 %v4551
    %8307 = vmatmul.bf16.gmra.mxu0 %v7597
    %v8308 = vpop.f32.mrf.mxu0
    %v8309 = vadd.f32 %v8218, %v8308
    %v8310 = vpop.f32.mrf.mxu0
    %8311 = vdwg.mxu0
    %8312 = vmatpush.bf16.msra.mxu0 %v4611
    %8313 = vmatpush.bf16.msra.mxu0 %v4607
    %8314 = vmatpush.bf16.msra.mxu0 %v4603
    %8315 = vmatpush.bf16.msra.mxu0 %v4599
    %8316 = vmatpush.bf16.msra.mxu0 %v4595
    %8317 = vmatpush.bf16.msra.mxu0 %v4591
    %8318 = vmatpush.bf16.msra.mxu0 %v4587
    %8319 = vmatpush.bf16.msra.mxu0 %v4583
    %8320 = vmatmul.bf16.gmra.mxu0 %v7598
    %v8321 = vpop.f32.mrf.mxu0
    %v8322 = vadd.f32 %v8309, %v8321
    %v8323 = vpop.f32.mrf.mxu0
    %8324 = vdwg.mxu0
    %8325 = vmatpush.bf16.msra.mxu0 %v4580
    %8326 = vmatpush.bf16.msra.mxu0 %v4576
    %8327 = vmatpush.bf16.msra.mxu0 %v4572
    %8328 = vmatpush.bf16.msra.mxu0 %v4568
    %8329 = vmatpush.bf16.msra.mxu0 %v4564
    %8330 = vmatpush.bf16.msra.mxu0 %v4560
    %8331 = vmatpush.bf16.msra.mxu0 %v4556
    %8332 = vmatpush.bf16.msra.mxu0 %v4552
    %8333 = vmatmul.bf16.gmra.mxu0 %v7597
    %v8334 = vpop.f32.mrf.mxu0
    %v8335 = vadd.f32 %v8244, %v8334
    %v8336 = vpop.f32.mrf.mxu0
    %8337 = vdwg.mxu0
    %8338 = vmatpush.bf16.msra.mxu0 %v4612
    %8339 = vmatpush.bf16.msra.mxu0 %v4608
    %8340 = vmatpush.bf16.msra.mxu0 %v4604
    %8341 = vmatpush.bf16.msra.mxu0 %v4600
    %8342 = vmatpush.bf16.msra.mxu0 %v4596
    %8343 = vmatpush.bf16.msra.mxu0 %v4592
    %8344 = vmatpush.bf16.msra.mxu0 %v4588
    %8345 = vmatpush.bf16.msra.mxu0 %v4584
    %8346 = vmatmul.bf16.gmra.mxu0 %v7598
    %v8347 = vpop.f32.mrf.mxu0
    %v8348 = vadd.f32 %v8335, %v8347
    %v8349 = vpop.f32.mrf.mxu0
    %8350 = vdwg.mxu0
    %8351 = vmatpush.bf16.msra.mxu0 %v4581
    %8352 = vmatpush.bf16.msra.mxu0 %v4577
    %8353 = vmatpush.bf16.msra.mxu0 %v4573
    %8354 = vmatpush.bf16.msra.mxu0 %v4569
    %8355 = vmatpush.bf16.msra.mxu0 %v4565
    %8356 = vmatpush.bf16.msra.mxu0 %v4561
    %8357 = vmatpush.bf16.msra.mxu0 %v4557
    %8358 = vmatpush.bf16.msra.mxu0 %v4553
    %8359 = vmatmul.bf16.gmra.mxu0 %v7597
    %v8360 = vpop.f32.mrf.mxu0
    %v8361 = vadd.f32 %v8270, %v8360
    %v8362 = vpop.f32.mrf.mxu0
    %8363 = vdwg.mxu0
    %8364 = vmatpush.bf16.msra.mxu0 %v4613
    %8365 = vmatpush.bf16.msra.mxu0 %v4609
    %8366 = vmatpush.bf16.msra.mxu0 %v4605
    %8367 = vmatpush.bf16.msra.mxu0 %v4601
    %8368 = vmatpush.bf16.msra.mxu0 %v4597
    %8369 = vmatpush.bf16.msra.mxu0 %v4593
    %8370 = vmatpush.bf16.msra.mxu0 %v4589
    %8371 = vmatpush.bf16.msra.mxu0 %v4585
    %8372 = vmatmul.bf16.gmra.mxu0 %v7598
    %v8373 = vpop.f32.mrf.mxu0
    %v8374 = vadd.f32 %v8361, %v8373
    %v8375 = vpop.f32.mrf.mxu0
    %8376 = vdwg.mxu0
    %8377 = vmatpush.bf16.msra.mxu0 %v4582
    %8378 = vmatpush.bf16.msra.mxu0 %v4578
    %8379 = vmatpush.bf16.msra.mxu0 %v4574
    %8380 = vmatpush.bf16.msra.mxu0 %v4570
    %8381 = vmatpush.bf16.msra.mxu0 %v4566
    %8382 = vmatpush.bf16.msra.mxu0 %v4562
    %8383 = vmatpush.bf16.msra.mxu0 %v4558
    %8384 = vmatpush.bf16.msra.mxu0 %v4554
    %8385 = vmatmul.bf16.gmra.mxu0 %v7597
    %v8386 = vpop.f32.mrf.mxu0
    %v8387 = vadd.f32 %v8296, %v8386
    %v8388 = vpop.f32.mrf.mxu0
    %8389 = vdwg.mxu0
    %8390 = vmatpush.bf16.msra.mxu0 %v4614
    %8391 = vmatpush.bf16.msra.mxu0 %v4610
    %8392 = vmatpush.bf16.msra.mxu0 %v4606
    %8393 = vmatpush.bf16.msra.mxu0 %v4602
    %8394 = vmatpush.bf16.msra.mxu0 %v4598
    %8395 = vmatpush.bf16.msra.mxu0 %v4594
    %8396 = vmatpush.bf16.msra.mxu0 %v4590
    %8397 = vmatpush.bf16.msra.mxu0 %v4586
    %8398 = vmatmul.bf16.gmra.mxu0 %v7598
    %v8399 = vpop.f32.mrf.mxu0
    %v8400 = vadd.f32 %v8387, %v8399
    %v8401 = vpop.f32.mrf.mxu0
    %8402 = vdwg.mxu0
    %v8403 = vld [vmem:[#allocation2 + $0xa0] sm:$0xff]
    %v8404 = vld [vmem:[#allocation2 + $0xa8] sm:$0xff]
    %v8405 = vpack.c.bf16 %v8403, %v8403
    %v8406 = vpack.c.bf16 %v8404, %v8404
    %8407 = vmatpush.bf16.msra.mxu0 %v5072
    %8408 = vmatpush.bf16.msra.mxu0 %v5068
    %8409 = vmatpush.bf16.msra.mxu0 %v5064
    %8410 = vmatpush.bf16.msra.mxu0 %v5060
    %8411 = vmatpush.bf16.msra.mxu0 %v5056
    %8412 = vmatpush.bf16.msra.mxu0 %v5052
    %8413 = vmatpush.bf16.msra.mxu0 %v5048
    %8414 = vmatpush.bf16.msra.mxu0 %v5044
    %8415 = vmatmul.bf16.gmra.mxu0 %v8405
    %v8416 = vpop.f32.mrf.mxu0
    %v8417 = vadd.f32 0.0, %v8416
    %v8418 = vpop.f32.mrf.mxu0
    %8419 = vdwg.mxu0
    %8420 = vmatpush.bf16.msra.mxu0 %v5104
    %8421 = vmatpush.bf16.msra.mxu0 %v5100
    %8422 = vmatpush.bf16.msra.mxu0 %v5096
    %8423 = vmatpush.bf16.msra.mxu0 %v5092
    %8424 = vmatpush.bf16.msra.mxu0 %v5088
    %8425 = vmatpush.bf16.msra.mxu0 %v5084
    %8426 = vmatpush.bf16.msra.mxu0 %v5080
    %8427 = vmatpush.bf16.msra.mxu0 %v5076
    %8428 = vmatmul.bf16.gmra.mxu0 %v8406
    %v8429 = vpop.f32.mrf.mxu0
    %v8430 = vadd.f32 %v8417, %v8429
    %v8431 = vpop.f32.mrf.mxu0
    %8432 = vdwg.mxu0
    %8433 = vmatpush.bf16.msra.mxu0 %v5073
    %8434 = vmatpush.bf16.msra.mxu0 %v5069
    %8435 = vmatpush.bf16.msra.mxu0 %v5065
    %8436 = vmatpush.bf16.msra.mxu0 %v5061
    %8437 = vmatpush.bf16.msra.mxu0 %v5057
    %8438 = vmatpush.bf16.msra.mxu0 %v5053
    %8439 = vmatpush.bf16.msra.mxu0 %v5049
    %8440 = vmatpush.bf16.msra.mxu0 %v5045
    %8441 = vmatmul.bf16.gmra.mxu0 %v8405
    %v8442 = vpop.f32.mrf.mxu0
    %v8443 = vadd.f32 0.0, %v8442
    %v8444 = vpop.f32.mrf.mxu0
    %8445 = vdwg.mxu0
    %8446 = vmatpush.bf16.msra.mxu0 %v5105
    %8447 = vmatpush.bf16.msra.mxu0 %v5101
    %8448 = vmatpush.bf16.msra.mxu0 %v5097
    %8449 = vmatpush.bf16.msra.mxu0 %v5093
    %8450 = vmatpush.bf16.msra.mxu0 %v5089
    %8451 = vmatpush.bf16.msra.mxu0 %v5085
    %8452 = vmatpush.bf16.msra.mxu0 %v5081
    %8453 = vmatpush.bf16.msra.mxu0 %v5077
    %8454 = vmatmul.bf16.gmra.mxu0 %v8406
    %v8455 = vpop.f32.mrf.mxu0
    %v8456 = vadd.f32 %v8443, %v8455
    %v8457 = vpop.f32.mrf.mxu0
    %8458 = vdwg.mxu0
    %8459 = vmatpush.bf16.msra.mxu0 %v5074
    %8460 = vmatpush.bf16.msra.mxu0 %v5070
    %8461 = vmatpush.bf16.msra.mxu0 %v5066
    %8462 = vmatpush.bf16.msra.mxu0 %v5062
    %8463 = vmatpush.bf16.msra.mxu0 %v5058
    %8464 = vmatpush.bf16.msra.mxu0 %v5054
    %8465 = vmatpush.bf16.msra.mxu0 %v5050
    %8466 = vmatpush.bf16.msra.mxu0 %v5046
    %8467 = vmatmul.bf16.gmra.mxu0 %v8405
    %v8468 = vpop.f32.mrf.mxu0
    %v8469 = vadd.f32 0.0, %v8468
    %v8470 = vpop.f32.mrf.mxu0
    %8471 = vdwg.mxu0
    %8472 = vmatpush.bf16.msra.mxu0 %v5106
    %8473 = vmatpush.bf16.msra.mxu0 %v5102
    %8474 = vmatpush.bf16.msra.mxu0 %v5098
    %8475 = vmatpush.bf16.msra.mxu0 %v5094
    %8476 = vmatpush.bf16.msra.mxu0 %v5090
    %8477 = vmatpush.bf16.msra.mxu0 %v5086
    %8478 = vmatpush.bf16.msra.mxu0 %v5082
    %8479 = vmatpush.bf16.msra.mxu0 %v5078
    %8480 = vmatmul.bf16.gmra.mxu0 %v8406
    %v8481 = vpop.f32.mrf.mxu0
    %v8482 = vadd.f32 %v8469, %v8481
    %v8483 = vpop.f32.mrf.mxu0
    %8484 = vdwg.mxu0
    %8485 = vmatpush.bf16.msra.mxu0 %v5075
    %8486 = vmatpush.bf16.msra.mxu0 %v5071
    %8487 = vmatpush.bf16.msra.mxu0 %v5067
    %8488 = vmatpush.bf16.msra.mxu0 %v5063
    %8489 = vmatpush.bf16.msra.mxu0 %v5059
    %8490 = vmatpush.bf16.msra.mxu0 %v5055
    %8491 = vmatpush.bf16.msra.mxu0 %v5051
    %8492 = vmatpush.bf16.msra.mxu0 %v5047
    %8493 = vmatmul.bf16.gmra.mxu0 %v8405
    %v8494 = vpop.f32.mrf.mxu0
    %v8495 = vadd.f32 0.0, %v8494
    %v8496 = vpop.f32.mrf.mxu0
    %8497 = vdwg.mxu0
    %8498 = vmatpush.bf16.msra.mxu0 %v5107
    %8499 = vmatpush.bf16.msra.mxu0 %v5103
    %8500 = vmatpush.bf16.msra.mxu0 %v5099
    %8501 = vmatpush.bf16.msra.mxu0 %v5095
    %8502 = vmatpush.bf16.msra.mxu0 %v5091
    %8503 = vmatpush.bf16.msra.mxu0 %v5087
    %8504 = vmatpush.bf16.msra.mxu0 %v5083
    %8505 = vmatpush.bf16.msra.mxu0 %v5079
    %8506 = vmatmul.bf16.gmra.mxu0 %v8406
    %v8507 = vpop.f32.mrf.mxu0
    %v8508 = vadd.f32 %v8495, %v8507
    %v8509 = vpop.f32.mrf.mxu0
    %8510 = vdwg.mxu0
    %v8511 = vadd.f32 %v8322, %v8430
    %v8512 = vadd.f32 %v8348, %v8456
    %v8513 = vadd.f32 %v8374, %v8482
    %v8514 = vadd.f32 %v8400, %v8508
    %8515 = vmatpush.bf16.msra.mxu0 %v4155
    %8516 = vmatpush.bf16.msra.mxu0 %v4151
    %8517 = vmatpush.bf16.msra.mxu0 %v4147
    %8518 = vmatpush.bf16.msra.mxu0 %v4143
    %8519 = vmatpush.bf16.msra.mxu0 %v4139
    %8520 = vmatpush.bf16.msra.mxu0 %v4135
    %8521 = vmatpush.bf16.msra.mxu0 %v4131
    %8522 = vmatpush.bf16.msra.mxu0 %v4127
    %8523 = vmatmul.bf16.gmra.mxu0 %v8405
    %v8524 = vpop.f32.mrf.mxu0
    %v8525 = vadd.f32 0.0, %v8524
    %v8526 = vpop.f32.mrf.mxu0
    %8527 = vdwg.mxu0
    %8528 = vmatpush.bf16.msra.mxu0 %v4187
    %8529 = vmatpush.bf16.msra.mxu0 %v4183
    %8530 = vmatpush.bf16.msra.mxu0 %v4179
    %8531 = vmatpush.bf16.msra.mxu0 %v4175
    %8532 = vmatpush.bf16.msra.mxu0 %v4171
    %8533 = vmatpush.bf16.msra.mxu0 %v4167
    %8534 = vmatpush.bf16.msra.mxu0 %v4163
    %8535 = vmatpush.bf16.msra.mxu0 %v4159
    %8536 = vmatmul.bf16.gmra.mxu0 %v8406
    %v8537 = vpop.f32.mrf.mxu0
    %v8538 = vadd.f32 %v8525, %v8537
    %v8539 = vpop.f32.mrf.mxu0
    %8540 = vdwg.mxu0
    %8541 = vmatpush.bf16.msra.mxu0 %v4156
    %8542 = vmatpush.bf16.msra.mxu0 %v4152
    %8543 = vmatpush.bf16.msra.mxu0 %v4148
    %8544 = vmatpush.bf16.msra.mxu0 %v4144
    %8545 = vmatpush.bf16.msra.mxu0 %v4140
    %8546 = vmatpush.bf16.msra.mxu0 %v4136
    %8547 = vmatpush.bf16.msra.mxu0 %v4132
    %8548 = vmatpush.bf16.msra.mxu0 %v4128
    %8549 = vmatmul.bf16.gmra.mxu0 %v8405
    %v8550 = vpop.f32.mrf.mxu0
    %v8551 = vadd.f32 0.0, %v8550
    %v8552 = vpop.f32.mrf.mxu0
    %8553 = vdwg.mxu0
    %8554 = vmatpush.bf16.msra.mxu0 %v4188
    %8555 = vmatpush.bf16.msra.mxu0 %v4184
    %8556 = vmatpush.bf16.msra.mxu0 %v4180
    %8557 = vmatpush.bf16.msra.mxu0 %v4176
    %8558 = vmatpush.bf16.msra.mxu0 %v4172
    %8559 = vmatpush.bf16.msra.mxu0 %v4168
    %8560 = vmatpush.bf16.msra.mxu0 %v4164
    %8561 = vmatpush.bf16.msra.mxu0 %v4160
    %8562 = vmatmul.bf16.gmra.mxu0 %v8406
    %v8563 = vpop.f32.mrf.mxu0
    %v8564 = vadd.f32 %v8551, %v8563
    %v8565 = vpop.f32.mrf.mxu0
    %8566 = vdwg.mxu0
    %8567 = vmatpush.bf16.msra.mxu0 %v4157
    %8568 = vmatpush.bf16.msra.mxu0 %v4153
    %8569 = vmatpush.bf16.msra.mxu0 %v4149
    %8570 = vmatpush.bf16.msra.mxu0 %v4145
    %8571 = vmatpush.bf16.msra.mxu0 %v4141
    %8572 = vmatpush.bf16.msra.mxu0 %v4137
    %8573 = vmatpush.bf16.msra.mxu0 %v4133
    %8574 = vmatpush.bf16.msra.mxu0 %v4129
    %8575 = vmatmul.bf16.gmra.mxu0 %v8405
    %v8576 = vpop.f32.mrf.mxu0
    %v8577 = vadd.f32 0.0, %v8576
    %v8578 = vpop.f32.mrf.mxu0
    %8579 = vdwg.mxu0
    %8580 = vmatpush.bf16.msra.mxu0 %v4189
    %8581 = vmatpush.bf16.msra.mxu0 %v4185
    %8582 = vmatpush.bf16.msra.mxu0 %v4181
    %8583 = vmatpush.bf16.msra.mxu0 %v4177
    %8584 = vmatpush.bf16.msra.mxu0 %v4173
    %8585 = vmatpush.bf16.msra.mxu0 %v4169
    %8586 = vmatpush.bf16.msra.mxu0 %v4165
    %8587 = vmatpush.bf16.msra.mxu0 %v4161
    %8588 = vmatmul.bf16.gmra.mxu0 %v8406
    %v8589 = vpop.f32.mrf.mxu0
    %v8590 = vadd.f32 %v8577, %v8589
    %v8591 = vpop.f32.mrf.mxu0
    %8592 = vdwg.mxu0
    %8593 = vmatpush.bf16.msra.mxu0 %v4158
    %8594 = vmatpush.bf16.msra.mxu0 %v4154
    %8595 = vmatpush.bf16.msra.mxu0 %v4150
    %8596 = vmatpush.bf16.msra.mxu0 %v4146
    %8597 = vmatpush.bf16.msra.mxu0 %v4142
    %8598 = vmatpush.bf16.msra.mxu0 %v4138
    %8599 = vmatpush.bf16.msra.mxu0 %v4134
    %8600 = vmatpush.bf16.msra.mxu0 %v4130
    %8601 = vmatmul.bf16.gmra.mxu0 %v8405
    %v8602 = vpop.f32.mrf.mxu0
    %v8603 = vadd.f32 0.0, %v8602
    %v8604 = vpop.f32.mrf.mxu0
    %8605 = vdwg.mxu0
    %8606 = vmatpush.bf16.msra.mxu0 %v4190
    %8607 = vmatpush.bf16.msra.mxu0 %v4186
    %8608 = vmatpush.bf16.msra.mxu0 %v4182
    %8609 = vmatpush.bf16.msra.mxu0 %v4178
    %8610 = vmatpush.bf16.msra.mxu0 %v4174
    %8611 = vmatpush.bf16.msra.mxu0 %v4170
    %8612 = vmatpush.bf16.msra.mxu0 %v4166
    %8613 = vmatpush.bf16.msra.mxu0 %v4162
    %8614 = vmatmul.bf16.gmra.mxu0 %v8406
    %v8615 = vpop.f32.mrf.mxu0
    %v8616 = vadd.f32 %v8603, %v8615
    %v8617 = vpop.f32.mrf.mxu0
    %8618 = vdwg.mxu0
    %8619 = vmatpush.bf16.msra.mxu0 %v4579
    %8620 = vmatpush.bf16.msra.mxu0 %v4575
    %8621 = vmatpush.bf16.msra.mxu0 %v4571
    %8622 = vmatpush.bf16.msra.mxu0 %v4567
    %8623 = vmatpush.bf16.msra.mxu0 %v4563
    %8624 = vmatpush.bf16.msra.mxu0 %v4559
    %8625 = vmatpush.bf16.msra.mxu0 %v4555
    %8626 = vmatpush.bf16.msra.mxu0 %v4551
    %8627 = vmatmul.bf16.gmra.mxu0 %v7917
    %v8628 = vpop.f32.mrf.mxu0
    %v8629 = vadd.f32 %v8538, %v8628
    %v8630 = vpop.f32.mrf.mxu0
    %8631 = vdwg.mxu0
    %8632 = vmatpush.bf16.msra.mxu0 %v4611
    %8633 = vmatpush.bf16.msra.mxu0 %v4607
    %8634 = vmatpush.bf16.msra.mxu0 %v4603
    %8635 = vmatpush.bf16.msra.mxu0 %v4599
    %8636 = vmatpush.bf16.msra.mxu0 %v4595
    %8637 = vmatpush.bf16.msra.mxu0 %v4591
    %8638 = vmatpush.bf16.msra.mxu0 %v4587
    %8639 = vmatpush.bf16.msra.mxu0 %v4583
    %8640 = vmatmul.bf16.gmra.mxu0 %v7918
    %v8641 = vpop.f32.mrf.mxu0
    %v8642 = vadd.f32 %v8629, %v8641
    %v8643 = vpop.f32.mrf.mxu0
    %8644 = vdwg.mxu0
    %8645 = vmatpush.bf16.msra.mxu0 %v4580
    %8646 = vmatpush.bf16.msra.mxu0 %v4576
    %8647 = vmatpush.bf16.msra.mxu0 %v4572
    %8648 = vmatpush.bf16.msra.mxu0 %v4568
    %8649 = vmatpush.bf16.msra.mxu0 %v4564
    %8650 = vmatpush.bf16.msra.mxu0 %v4560
    %8651 = vmatpush.bf16.msra.mxu0 %v4556
    %8652 = vmatpush.bf16.msra.mxu0 %v4552
    %8653 = vmatmul.bf16.gmra.mxu0 %v7917
    %v8654 = vpop.f32.mrf.mxu0
    %v8655 = vadd.f32 %v8564, %v8654
    %v8656 = vpop.f32.mrf.mxu0
    %8657 = vdwg.mxu0
    %8658 = vmatpush.bf16.msra.mxu0 %v4612
    %8659 = vmatpush.bf16.msra.mxu0 %v4608
    %8660 = vmatpush.bf16.msra.mxu0 %v4604
    %8661 = vmatpush.bf16.msra.mxu0 %v4600
    %8662 = vmatpush.bf16.msra.mxu0 %v4596
    %8663 = vmatpush.bf16.msra.mxu0 %v4592
    %8664 = vmatpush.bf16.msra.mxu0 %v4588
    %8665 = vmatpush.bf16.msra.mxu0 %v4584
    %8666 = vmatmul.bf16.gmra.mxu0 %v7918
    %v8667 = vpop.f32.mrf.mxu0
    %v8668 = vadd.f32 %v8655, %v8667
    %v8669 = vpop.f32.mrf.mxu0
    %8670 = vdwg.mxu0
    %8671 = vmatpush.bf16.msra.mxu0 %v4581
    %8672 = vmatpush.bf16.msra.mxu0 %v4577
    %8673 = vmatpush.bf16.msra.mxu0 %v4573
    %8674 = vmatpush.bf16.msra.mxu0 %v4569
    %8675 = vmatpush.bf16.msra.mxu0 %v4565
    %8676 = vmatpush.bf16.msra.mxu0 %v4561
    %8677 = vmatpush.bf16.msra.mxu0 %v4557
    %8678 = vmatpush.bf16.msra.mxu0 %v4553
    %8679 = vmatmul.bf16.gmra.mxu0 %v7917
    %v8680 = vpop.f32.mrf.mxu0
    %v8681 = vadd.f32 %v8590, %v8680
    %v8682 = vpop.f32.mrf.mxu0
    %8683 = vdwg.mxu0
    %8684 = vmatpush.bf16.msra.mxu0 %v4613
    %8685 = vmatpush.bf16.msra.mxu0 %v4609
    %8686 = vmatpush.bf16.msra.mxu0 %v4605
    %8687 = vmatpush.bf16.msra.mxu0 %v4601
    %8688 = vmatpush.bf16.msra.mxu0 %v4597
    %8689 = vmatpush.bf16.msra.mxu0 %v4593
    %8690 = vmatpush.bf16.msra.mxu0 %v4589
    %8691 = vmatpush.bf16.msra.mxu0 %v4585
    %8692 = vmatmul.bf16.gmra.mxu0 %v7918
    %v8693 = vpop.f32.mrf.mxu0
    %v8694 = vadd.f32 %v8681, %v8693
    %v8695 = vpop.f32.mrf.mxu0
    %8696 = vdwg.mxu0
    %8697 = vmatpush.bf16.msra.mxu0 %v4582
    %8698 = vmatpush.bf16.msra.mxu0 %v4578
    %8699 = vmatpush.bf16.msra.mxu0 %v4574
    %8700 = vmatpush.bf16.msra.mxu0 %v4570
    %8701 = vmatpush.bf16.msra.mxu0 %v4566
    %8702 = vmatpush.bf16.msra.mxu0 %v4562
    %8703 = vmatpush.bf16.msra.mxu0 %v4558
    %8704 = vmatpush.bf16.msra.mxu0 %v4554
    %8705 = vmatmul.bf16.gmra.mxu0 %v7917
    %v8706 = vpop.f32.mrf.mxu0
    %v8707 = vadd.f32 %v8616, %v8706
    %v8708 = vpop.f32.mrf.mxu0
    %8709 = vdwg.mxu0
    %8710 = vmatpush.bf16.msra.mxu0 %v4614
    %8711 = vmatpush.bf16.msra.mxu0 %v4610
    %8712 = vmatpush.bf16.msra.mxu0 %v4606
    %8713 = vmatpush.bf16.msra.mxu0 %v4602
    %8714 = vmatpush.bf16.msra.mxu0 %v4598
    %8715 = vmatpush.bf16.msra.mxu0 %v4594
    %8716 = vmatpush.bf16.msra.mxu0 %v4590
    %8717 = vmatpush.bf16.msra.mxu0 %v4586
    %8718 = vmatmul.bf16.gmra.mxu0 %v7918
    %v8719 = vpop.f32.mrf.mxu0
    %v8720 = vadd.f32 %v8707, %v8719
    %v8721 = vpop.f32.mrf.mxu0
    %8722 = vdwg.mxu0
    %v8723 = vld [vmem:[#allocation2 + $0xb0] sm:$0xff]
    %v8724 = vld [vmem:[#allocation2 + $0xb8] sm:$0xff]
    %v8725 = vpack.c.bf16 %v8723, %v8723
    %v8726 = vpack.c.bf16 %v8724, %v8724
    %8727 = vmatpush.bf16.msra.mxu0 %v5072
    %8728 = vmatpush.bf16.msra.mxu0 %v5068
    %8729 = vmatpush.bf16.msra.mxu0 %v5064
    %8730 = vmatpush.bf16.msra.mxu0 %v5060
    %8731 = vmatpush.bf16.msra.mxu0 %v5056
    %8732 = vmatpush.bf16.msra.mxu0 %v5052
    %8733 = vmatpush.bf16.msra.mxu0 %v5048
    %8734 = vmatpush.bf16.msra.mxu0 %v5044
    %8735 = vmatmul.bf16.gmra.mxu0 %v8725
    %v8736 = vpop.f32.mrf.mxu0
    %v8737 = vadd.f32 0.0, %v8736
    %v8738 = vpop.f32.mrf.mxu0
    %8739 = vdwg.mxu0
    %8740 = vmatpush.bf16.msra.mxu0 %v5104
    %8741 = vmatpush.bf16.msra.mxu0 %v5100
    %8742 = vmatpush.bf16.msra.mxu0 %v5096
    %8743 = vmatpush.bf16.msra.mxu0 %v5092
    %8744 = vmatpush.bf16.msra.mxu0 %v5088
    %8745 = vmatpush.bf16.msra.mxu0 %v5084
    %8746 = vmatpush.bf16.msra.mxu0 %v5080
    %8747 = vmatpush.bf16.msra.mxu0 %v5076
    %8748 = vmatmul.bf16.gmra.mxu0 %v8726
    %v8749 = vpop.f32.mrf.mxu0
    %v8750 = vadd.f32 %v8737, %v8749
    %v8751 = vpop.f32.mrf.mxu0
    %8752 = vdwg.mxu0
    %8753 = vmatpush.bf16.msra.mxu0 %v5073
    %8754 = vmatpush.bf16.msra.mxu0 %v5069
    %8755 = vmatpush.bf16.msra.mxu0 %v5065
    %8756 = vmatpush.bf16.msra.mxu0 %v5061
    %8757 = vmatpush.bf16.msra.mxu0 %v5057
    %8758 = vmatpush.bf16.msra.mxu0 %v5053
    %8759 = vmatpush.bf16.msra.mxu0 %v5049
    %8760 = vmatpush.bf16.msra.mxu0 %v5045
    %8761 = vmatmul.bf16.gmra.mxu0 %v8725
    %v8762 = vpop.f32.mrf.mxu0
    %v8763 = vadd.f32 0.0, %v8762
    %v8764 = vpop.f32.mrf.mxu0
    %8765 = vdwg.mxu0
    %8766 = vmatpush.bf16.msra.mxu0 %v5105
    %8767 = vmatpush.bf16.msra.mxu0 %v5101
    %8768 = vmatpush.bf16.msra.mxu0 %v5097
    %8769 = vmatpush.bf16.msra.mxu0 %v5093
    %8770 = vmatpush.bf16.msra.mxu0 %v5089
    %8771 = vmatpush.bf16.msra.mxu0 %v5085
    %8772 = vmatpush.bf16.msra.mxu0 %v5081
    %8773 = vmatpush.bf16.msra.mxu0 %v5077
    %8774 = vmatmul.bf16.gmra.mxu0 %v8726
    %v8775 = vpop.f32.mrf.mxu0
    %v8776 = vadd.f32 %v8763, %v8775
    %v8777 = vpop.f32.mrf.mxu0
    %8778 = vdwg.mxu0
    %8779 = vmatpush.bf16.msra.mxu0 %v5074
    %8780 = vmatpush.bf16.msra.mxu0 %v5070
    %8781 = vmatpush.bf16.msra.mxu0 %v5066
    %8782 = vmatpush.bf16.msra.mxu0 %v5062
    %8783 = vmatpush.bf16.msra.mxu0 %v5058
    %8784 = vmatpush.bf16.msra.mxu0 %v5054
    %8785 = vmatpush.bf16.msra.mxu0 %v5050
    %8786 = vmatpush.bf16.msra.mxu0 %v5046
    %8787 = vmatmul.bf16.gmra.mxu0 %v8725
    %v8788 = vpop.f32.mrf.mxu0
    %v8789 = vadd.f32 0.0, %v8788
    %v8790 = vpop.f32.mrf.mxu0
    %8791 = vdwg.mxu0
    %8792 = vmatpush.bf16.msra.mxu0 %v5106
    %8793 = vmatpush.bf16.msra.mxu0 %v5102
    %8794 = vmatpush.bf16.msra.mxu0 %v5098
    %8795 = vmatpush.bf16.msra.mxu0 %v5094
    %8796 = vmatpush.bf16.msra.mxu0 %v5090
    %8797 = vmatpush.bf16.msra.mxu0 %v5086
    %8798 = vmatpush.bf16.msra.mxu0 %v5082
    %8799 = vmatpush.bf16.msra.mxu0 %v5078
    %8800 = vmatmul.bf16.gmra.mxu0 %v8726
    %v8801 = vpop.f32.mrf.mxu0
    %v8802 = vadd.f32 %v8789, %v8801
    %v8803 = vpop.f32.mrf.mxu0
    %8804 = vdwg.mxu0
    %8805 = vmatpush.bf16.msra.mxu0 %v5075
    %8806 = vmatpush.bf16.msra.mxu0 %v5071
    %8807 = vmatpush.bf16.msra.mxu0 %v5067
    %8808 = vmatpush.bf16.msra.mxu0 %v5063
    %8809 = vmatpush.bf16.msra.mxu0 %v5059
    %8810 = vmatpush.bf16.msra.mxu0 %v5055
    %8811 = vmatpush.bf16.msra.mxu0 %v5051
    %8812 = vmatpush.bf16.msra.mxu0 %v5047
    %8813 = vmatmul.bf16.gmra.mxu0 %v8725
    %v8814 = vpop.f32.mrf.mxu0
    %v8815 = vadd.f32 0.0, %v8814
    %v8816 = vpop.f32.mrf.mxu0
    %8817 = vdwg.mxu0
    %8818 = vmatpush.bf16.msra.mxu0 %v5107
    %8819 = vmatpush.bf16.msra.mxu0 %v5103
    %8820 = vmatpush.bf16.msra.mxu0 %v5099
    %8821 = vmatpush.bf16.msra.mxu0 %v5095
    %8822 = vmatpush.bf16.msra.mxu0 %v5091
    %8823 = vmatpush.bf16.msra.mxu0 %v5087
    %8824 = vmatpush.bf16.msra.mxu0 %v5083
    %8825 = vmatpush.bf16.msra.mxu0 %v5079
    %8826 = vmatmul.bf16.gmra.mxu0 %v8726
    %v8827 = vpop.f32.mrf.mxu0
    %v8828 = vadd.f32 %v8815, %v8827
    %v8829 = vpop.f32.mrf.mxu0
    %8830 = vdwg.mxu0
    %v8831 = vadd.f32 %v8642, %v8750
    %v8832 = vadd.f32 %v8668, %v8776
    %v8833 = vadd.f32 %v8694, %v8802
    %v8834 = vadd.f32 %v8720, %v8828
    %v8835 = vmax.f32 %v8511, %v8831
    %v8836 = vmax.f32 %v8512, %v8832
    %v8837 = vmax.f32 %v8513, %v8833
    %v8838 = vmax.f32 %v8514, %v8834
    %v8839 = vmax.f32 %v8835, %v8837
    %v8840 = vmax.f32 %v8836, %v8838
    %v8841 = vadd.f32 %v8839, %v5608
    %v8842 = vadd.f32 %v8840, %v5609
    %v8843 = vmax.f32 %v8841, 0.0
    %v8844 = vmax.f32 %v8842, 0.0
    %v8845 = vpack.c.bf16 %v8843, %v8843
    %v8846 = vpack.c.bf16 %v8844, %v8844
    %s8847 = scalar_lea.vmem [#allocation5], 512
    %v8848 = vld [vmem:[%s8847] sm:$0xf]
    %v8849 = vld [vmem:[%s8847 + $0x4] sm:$0xf]
    %v8850 = vld [vmem:[%s8847 + $0x8] sm:$0xf]
    %v8851 = vld [vmem:[%s8847 + $0xc] sm:$0xf]
    %v8852 = vld [vmem:[%s8847 + $0x10] sm:$0xf]
    %v8853 = vld [vmem:[%s8847 + $0x14] sm:$0xf]
    %v8854 = vld [vmem:[%s8847 + $0x18] sm:$0xf]
    %v8855 = vld [vmem:[%s8847 + $0x1c] sm:$0xf]
    %v8856 = vld [vmem:[%s8847 + $0x20] sm:$0xf]
    %v8857 = vld [vmem:[%s8847 + $0x24] sm:$0xf]
    %v8858 = vld [vmem:[%s8847 + $0x28] sm:$0xf]
    %v8859 = vld [vmem:[%s8847 + $0x2c] sm:$0xf]
    %v8860 = vld [vmem:[%s8847 + $0x30] sm:$0xf]
    %v8861 = vld [vmem:[%s8847 + $0x34] sm:$0xf]
    %v8862 = vld [vmem:[%s8847 + $0x38] sm:$0xf]
    %v8863 = vld [vmem:[%s8847 + $0x3c] sm:$0xf]
    %v8864 = vld [vmem:[%s8847 + $0x40] sm:$0xf]
    %v8865 = vld [vmem:[%s8847 + $0x44] sm:$0xf]
    %v8866 = vld [vmem:[%s8847 + $0x48] sm:$0xf]
    %v8867 = vld [vmem:[%s8847 + $0x4c] sm:$0xf]
    %v8868 = vld [vmem:[%s8847 + $0x50] sm:$0xf]
    %v8869 = vld [vmem:[%s8847 + $0x54] sm:$0xf]
    %v8870 = vld [vmem:[%s8847 + $0x58] sm:$0xf]
    %v8871 = vld [vmem:[%s8847 + $0x5c] sm:$0xf]
    %v8872 = vld [vmem:[%s8847 + $0x60] sm:$0xf]
    %v8873 = vld [vmem:[%s8847 + $0x64] sm:$0xf]
    %v8874 = vld [vmem:[%s8847 + $0x68] sm:$0xf]
    %v8875 = vld [vmem:[%s8847 + $0x6c] sm:$0xf]
    %v8876 = vld [vmem:[%s8847 + $0x70] sm:$0xf]
    %v8877 = vld [vmem:[%s8847 + $0x74] sm:$0xf]
    %v8878 = vld [vmem:[%s8847 + $0x78] sm:$0xf]
    %v8879 = vld [vmem:[%s8847 + $0x7c] sm:$0xf]
    %v8912 = vunpack.c.l.b16 %v8848
    %v8913 = vunpack.c.l.b16 %v8849
    %v8914 = vunpack.c.l.b16 %v8850
    %v8915 = vunpack.c.l.b16 %v8851
    %v8916 = vunpack.c.l.b16 %v8852
    %v8917 = vunpack.c.l.b16 %v8853
    %v8918 = vunpack.c.l.b16 %v8854
    %v8919 = vunpack.c.l.b16 %v8855
    %v8920 = vunpack.c.l.b16 %v8856
    %v8921 = vunpack.c.l.b16 %v8857
    %v8922 = vunpack.c.l.b16 %v8858
    %v8923 = vunpack.c.l.b16 %v8859
    %v8924 = vunpack.c.l.b16 %v8860
    %v8925 = vunpack.c.l.b16 %v8861
    %v8926 = vunpack.c.l.b16 %v8862
    %v8927 = vunpack.c.l.b16 %v8863
    %v8928 = vunpack.c.l.b16 %v8864
    %v8929 = vunpack.c.l.b16 %v8865
    %v8930 = vunpack.c.l.b16 %v8866
    %v8931 = vunpack.c.l.b16 %v8867
    %v8932 = vunpack.c.l.b16 %v8868
    %v8933 = vunpack.c.l.b16 %v8869
    %v8934 = vunpack.c.l.b16 %v8870
    %v8935 = vunpack.c.l.b16 %v8871
    %v8936 = vunpack.c.l.b16 %v8872
    %v8937 = vunpack.c.l.b16 %v8873
    %v8938 = vunpack.c.l.b16 %v8874
    %v8939 = vunpack.c.l.b16 %v8875
    %v8940 = vunpack.c.l.b16 %v8876
    %v8941 = vunpack.c.l.b16 %v8877
    %v8942 = vunpack.c.l.b16 %v8878
    %v8943 = vunpack.c.l.b16 %v8879
    %v8944 = vpack.c.b16 %v8913, %v8912
    %v8945 = vpack.c.b16 %v8915, %v8914
    %v8946 = vpack.c.b16 %v8917, %v8916
    %v8947 = vpack.c.b16 %v8919, %v8918
    %v8948 = vpack.c.b16 %v8921, %v8920
    %v8949 = vpack.c.b16 %v8923, %v8922
    %v8950 = vpack.c.b16 %v8925, %v8924
    %v8951 = vpack.c.b16 %v8927, %v8926
    %v8952 = vpack.c.b16 %v8929, %v8928
    %v8953 = vpack.c.b16 %v8931, %v8930
    %v8954 = vpack.c.b16 %v8933, %v8932
    %v8955 = vpack.c.b16 %v8935, %v8934
    %v8956 = vpack.c.b16 %v8937, %v8936
    %v8957 = vpack.c.b16 %v8939, %v8938
    %v8958 = vpack.c.b16 %v8941, %v8940
    %v8959 = vpack.c.b16 %v8943, %v8942
    %8976 = vmatpush.bf16.msra.mxu0 %v8951
    %8977 = vmatpush.bf16.msra.mxu0 %v8950
    %8978 = vmatpush.bf16.msra.mxu0 %v8949
    %8979 = vmatpush.bf16.msra.mxu0 %v8948
    %8980 = vmatpush.bf16.msra.mxu0 %v8947
    %8981 = vmatpush.bf16.msra.mxu0 %v8946
    %8982 = vmatpush.bf16.msra.mxu0 %v8945
    %8983 = vmatpush.bf16.msra.mxu0 %v8944
    %8984 = vmatmul.bf16.gmra.mxu0 %v8845
    %v8985 = vpop.f32.mrf.mxu0
    %v8986 = vadd.f32 0.0, %v8985
    %v8987 = vpop.f32.mrf.mxu0
    %8988 = vdwg.mxu0
    %8989 = vmatpush.bf16.msra.mxu0 %v8959
    %8990 = vmatpush.bf16.msra.mxu0 %v8958
    %8991 = vmatpush.bf16.msra.mxu0 %v8957
    %8992 = vmatpush.bf16.msra.mxu0 %v8956
    %8993 = vmatpush.bf16.msra.mxu0 %v8955
    %8994 = vmatpush.bf16.msra.mxu0 %v8954
    %8995 = vmatpush.bf16.msra.mxu0 %v8953
    %8996 = vmatpush.bf16.msra.mxu0 %v8952
    %8997 = vmatmul.bf16.gmra.mxu0 %v8846
    %v8998 = vpop.f32.mrf.mxu0
    %v8999 = vadd.f32 %v8986, %v8998
    %v9000 = vpop.f32.mrf.mxu0
    %9001 = vdwg.mxu0
    %v9002 = vadd.f32 %v8194, %v8999
    %v9003 = vld [vmem:[%s6] sm:$0x1]
    %v9005 = vperm.slane %v9003, 0
    %v9007 = vadd.f32 %v9002, %v9005
    %v9008 = vmax.f32 %v9007, 0.0
    %v9009 = vpack.c.bf16 %v9008, %v9008
    %v9010 = vld [vmem:[%s7] sm:$0xf]
    %v9011 = vld [vmem:[%s7 + $0x4] sm:$0xf]
    %v9012 = vld [vmem:[%s7 + $0x8] sm:$0xf]
    %v9013 = vld [vmem:[%s7 + $0xc] sm:$0xf]
    %v9014 = vld [vmem:[%s7 + $0x10] sm:$0xf]
    %v9015 = vld [vmem:[%s7 + $0x14] sm:$0xf]
    %v9016 = vld [vmem:[%s7 + $0x18] sm:$0xf]
    %v9017 = vld [vmem:[%s7 + $0x1c] sm:$0xf]
    %v9018 = vld [vmem:[%s7 + $0x20] sm:$0xf]
    %v9019 = vld [vmem:[%s7 + $0x24] sm:$0xf]
    %v9020 = vld [vmem:[%s7 + $0x28] sm:$0xf]
    %v9021 = vld [vmem:[%s7 + $0x2c] sm:$0xf]
    %v9022 = vld [vmem:[%s7 + $0x30] sm:$0xf]
    %v9023 = vld [vmem:[%s7 + $0x34] sm:$0xf]
    %v9024 = vld [vmem:[%s7 + $0x38] sm:$0xf]
    %v9025 = vld [vmem:[%s7 + $0x3c] sm:$0xf]
    %v9026 = vld [vmem:[%s8] sm:$0x1]
    %v9028 = vperm.slane %v9026, 0
    %v9046 = vunpack.c.l.b16 %v9010
    %v9047 = vunpack.c.l.b16 %v9011
    %v9048 = vunpack.c.l.b16 %v9012
    %v9049 = vunpack.c.l.b16 %v9013
    %v9050 = vunpack.c.l.b16 %v9014
    %v9051 = vunpack.c.l.b16 %v9015
    %v9052 = vunpack.c.l.b16 %v9016
    %v9053 = vunpack.c.l.b16 %v9017
    %v9054 = vunpack.c.l.b16 %v9018
    %v9055 = vunpack.c.l.b16 %v9019
    %v9056 = vunpack.c.l.b16 %v9020
    %v9057 = vunpack.c.l.b16 %v9021
    %v9058 = vunpack.c.l.b16 %v9022
    %v9059 = vunpack.c.l.b16 %v9023
    %v9060 = vunpack.c.l.b16 %v9024
    %v9061 = vunpack.c.l.b16 %v9025
    %v9062 = vpack.c.b16 %v9047, %v9046
    %v9063 = vpack.c.b16 %v9049, %v9048
    %v9064 = vpack.c.b16 %v9051, %v9050
    %v9065 = vpack.c.b16 %v9053, %v9052
    %v9066 = vpack.c.b16 %v9055, %v9054
    %v9067 = vpack.c.b16 %v9057, %v9056
    %v9068 = vpack.c.b16 %v9059, %v9058
    %v9069 = vpack.c.b16 %v9061, %v9060
    %9078 = vmatpush.bf16.msra.mxu0 %v9069
    %9079 = vmatpush.bf16.msra.mxu0 %v9068
    %9080 = vmatpush.bf16.msra.mxu0 %v9067
    %9081 = vmatpush.bf16.msra.mxu0 %v9066
    %9082 = vmatpush.bf16.msra.mxu0 %v9065
    %9083 = vmatpush.bf16.msra.mxu0 %v9064
    %9084 = vmatpush.bf16.msra.mxu0 %v9063
    %9085 = vmatpush.bf16.msra.mxu0 %v9062
    %9086 = vmatmul.bf16.gmra.mxu0 %v9009
    %v9087 = vpop.f32.mrf.mxu0
    %v9088 = vadd.f32 %v9028, %v9087
    %v9089 = vpop.f32.mrf.mxu0
    %9090 = vdwg.mxu0
    %vm9091 = vcmask 80896
    %9092 = vst.msk [vmem:[%s9] sm:$0xff] %vm9091, %v9088
    // Predicated region
    $region46: #{cnn_forward.1} parent=1 // pred_check
      _
    $region47: #{cnn_forward.1} parent=1 // pred_check_branch
      %9094 = sbr.rel (0) target = $region49
    $region48: #{cnn_forward.1} parent=1 // pred_region
      _
    $region49: #{cnn_forward.1} parent=1 // pred_fallthru
      _
    // Predicated region
    $region50: #{cnn_forward.1} parent=1 // pred_check
      _
    $region51: #{cnn_forward.1} parent=1 // pred_check_branch
      %9096 = sbr.rel (0) target = $region53
    $region52: #{cnn_forward.1} parent=1 // pred_region
      _
    $region53: #{cnn_forward.1} parent=1 // pred_fallthru
      _
    %9097 = vsyncpa [#allocation4], 1
    %9098 = vsyncpa [#allocation6], 1

</llo_original>
